<compile_context>
chip_gen: v7x
topology: tpu7x:2x2x1
jax: 0.10.0
libtpu: 0.0.40
codegen_flags: <defaults>
</compile_context>

<pallas_src>
import functools

import jax
import jax.numpy as jnp
from jax import lax
from jax.experimental import pallas as pl
from jax.experimental.pallas import tpu as pltpu


_LEAKY_SLOPE = 0.01            # nn.LeakyReLU default negative_slope
_BN_EPS = 1e-5                 # nn.BatchNorm2d default eps
_VMEM_LIMIT = 64 * 1024 * 1024  # <= physical VMEM on v5e/v6e/v7x


def _round_up(n, m):
    return (n + m - 1) // m * m


def _full_spec(shape):
    """BlockSpec covering the full array (single-step grid)."""
    rank = len(shape)
    return pl.BlockSpec(shape, lambda i, _r=rank: (0,) * _r)


# ---------------------------------------------------------------------------
# Kernel 1: 4x4 / stride-2 / pad-1 conv + ReLU
#   (input pre-arranged by a 2x2 space-to-depth in the wrapper, so the conv
#    becomes a 2x2 *valid* conv = 4 shifted matmuls on the flat buffer)
# ---------------------------------------------------------------------------

def _s2conv_kernel(x_ref, w_ref, b_ref, o_ref, *, ws, nrows):
    cout = o_ref.shape[1]
    acc = jnp.zeros((nrows, cout), jnp.float32)
    for t, (q, p) in enumerate(((0, 0), (0, 1), (1, 0), (1, 1))):
        xs = x_ref[pl.ds(q * ws + p, nrows), :]           # bf16 row-shifted tap
        acc = acc + jnp.dot(xs, w_ref[t],
                            preferred_element_type=jnp.float32)
    o_ref[...] = jnp.maximum(acc + b_ref[...], 0.0)        # fused bias + ReLU


def _conv4x4s2_relu(x_nhwc, w_hwio, b_vec):
    b, h, w, cin = x_nhwc.shape
    # TODO(synk): odd spatial dims would need an extra pad row/col here.
    assert h % 2 == 0 and w % 2 == 0, "even spatial dims required"
    cout = w_hwio.shape[3]
    ho, wo = h // 2, w // 2
    hs, ws = ho + 1, wo + 1

    # zero-pad(p=1) + 2x2 space-to-depth (cheap layout glue, ~1x activation)
    xp = jnp.pad(x_nhwc, ((0, 0), (1, 1), (1, 1), (0, 0)))
    xs = xp.reshape(b, hs, 2, ws, 2, cin).transpose(0, 1, 3, 2, 4, 5)
    xs = xs.reshape(b * hs * ws, 4 * cin)

    nout = b * hs * ws
    nout8 = _round_up(nout, 8)
    nin = _round_up(nout8 + ws + 1, 8)                 # margin for tap shifts
    xflat = jnp.pad(xs, ((0, nin - nout), (0, 0))).astype(jnp.bfloat16)

    # weights (4,4,cin,cout) -> (tap=2q+p, (r,s,cin), cout), matching s2d layout
    w2 = w_hwio.reshape(2, 2, 2, 2, cin, cout).transpose(0, 2, 1, 3, 4, 5)
    w2 = w2.reshape(4, 4 * cin, cout).astype(jnp.bfloat16)
    bias = b_vec.reshape(1, cout).astype(jnp.float32)

    out = pl.pallas_call(
        functools.partial(_s2conv_kernel, ws=ws, nrows=nout8),
        out_shape=jax.ShapeDtypeStruct((nout8, cout), jnp.float32),
        grid_spec=pltpu.PrefetchScalarGridSpec(
            num_scalar_prefetch=0, grid=(1,),
            in_specs=[_full_spec((nin, 4 * cin)),
                      _full_spec((4, 4 * cin, cout)),
                      _full_spec((1, cout))],
            out_specs=_full_spec((nout8, cout))),
        compiler_params=pltpu.CompilerParams(
            dimension_semantics=("arbitrary",),
            vmem_limit_bytes=_VMEM_LIMIT),
    )(xflat, w2, bias)

    return out[:nout].reshape(b, hs, ws, cout)[:, :ho, :wo, :]


# ---------------------------------------------------------------------------
# Kernel 2: conv3 (3x3,s1,p1) + full ResidualStack + final ReLU, fully fused.
#   Activation layout: flattened padded images (B*Hp*Wp, C) with zero-margin
#   rows so every 3x3 tap is a static row-shifted slice.  Garbage at the
#   spatial-pad rows is excluded from BN statistics and re-zeroed via `mask`.
# ---------------------------------------------------------------------------

def _stack_kernel(x_ref, mask_ref, w3_ref, b3_ref,
                  w1s_ref, g1s_ref, b1s_ref, w2s_ref, g2s_ref, b2s_ref,
                  o_ref, pad_ref, *,
                  num_layers, wp, margin, np_rows, n_valid, slope, eps):
    taps = tuple((dh, dw) for dh in (-1, 0, 1) for dw in (-1, 0, 1))

    def conv3x3(src_ref, tap_w, cout):
        acc = jnp.zeros((np_rows, cout), jnp.float32)
        for t, (dh, dw) in enumerate(taps):
            xs = src_ref[pl.ds(margin + dh * wp + dw, np_rows), :]
            acc = acc + jnp.dot(xs, tap_w(t),
                                preferred_element_type=jnp.float32)
        return acc

    mask = mask_ref[...]                 # 1.0 at interior pixels, 0.0 at pads
    c = o_ref.shape[1]
    cres = w1s_ref.shape[3]
    inv_n = 1.0 / float(n_valid)

    # conv3 + bias (bf16 operands, f32 accumulation), pads re-zeroed
    h = conv3x3(x_ref, lambda t: w3_ref[t], c) + b3_ref[...]
    h = h * mask

    # zero the padded scratch once; margins / pad rows stay zero all layers
    pad_ref[...] = jnp.zeros(pad_ref.shape, pad_ref.dtype)

    for i in range(num_layers):
        # identity branch = LeakyReLU(x) (PyTorch inplace relu1 aliases x)
        a = jnp.where(h >= 0.0, h, slope * h)
        pad_ref[pl.ds(margin, np_rows), :] = a
        t1 = conv3x3(pad_ref, lambda t, i=i: w1s_ref[i, t], cres)

        # BatchNorm1 (training mode, biased var) — exact, centered, in VMEM
        m1 = jnp.sum(t1 * mask, axis=0, keepdims=True) * inv_n
        d1 = (t1 - m1) * mask
        v1 = jnp.sum(d1 * d1, axis=0, keepdims=True) * inv_n
        y1 = d1 * (g1s_ref[i] * lax.rsqrt(v1 + eps)) + b1s_ref[i]

        # LeakyReLU -> 1x1 conv (plain channel matmul)
        a2 = jnp.where(y1 >= 0.0, y1, slope * y1)
        t2 = jnp.dot(a2, w2s_ref[i], preferred_element_type=jnp.float32)

        # BatchNorm2
        m2 = jnp.sum(t2 * mask, axis=0, keepdims=True) * inv_n
        d2 = (t2 - m2) * mask
        v2 = jnp.sum(d2 * d2, axis=0, keepdims=True) * inv_n
        y2 = d2 * (g2s_ref[i] * lax.rsqrt(v2 + eps)) + b2s_ref[i]

        h = (y2 + a) * mask              # residual add, re-zero pad rows

    o_ref[...] = jnp.maximum(h, 0.0)     # ResidualStack's trailing F.relu


def _conv3_residual_stack(x_nhwc, params):
    b, h, w, c = x_nhwc.shape
    hp, wp = h + 2, w + 2
    np_rows = b * hp * wp
    n_valid = b * h * w
    margin = _round_up(wp + 1, 8)                      # 8-aligned interior start
    nf = _round_up(margin + np_rows + wp + 1, 8)

    # padded + flattened conv3 input, with zero margin rows, bf16 for the MXU
    xp = jnp.pad(x_nhwc, ((0, 0), (1, 1), (1, 1), (0, 0))).reshape(np_rows, c)
    xflat = jnp.pad(xp, ((margin, nf - margin - np_rows), (0, 0)))
    xflat = xflat.astype(jnp.bfloat16)

    rows = jnp.arange(np_rows, dtype=jnp.int32)
    hh = (rows // wp) % hp
    ww = rows % wp
    mask = (((hh >= 1) & (hh <= h) & (ww >= 1) & (ww <= w))
            .astype(jnp.float32).reshape(np_rows, 1))

    w3 = params["c3_w"].reshape(9, c, c).astype(jnp.bfloat16)
    b3 = params["c3_b"].reshape(1, c).astype(jnp.float32)

    res = params["res"]
    num_layers = len(res)
    if num_layers == 0:                                # degenerate stack
        cres = 1
        w1s = jnp.zeros((1, 9, c, cres), jnp.float32)
        g1s = jnp.zeros((1, 1, cres), jnp.float32)
        b1s = jnp.zeros((1, 1, cres), jnp.float32)
        w2s = jnp.zeros((1, cres, c), jnp.float32)
        g2s = jnp.zeros((1, 1, c), jnp.float32)
        b2s = jnp.zeros((1, 1, c), jnp.float32)
    else:
        cres = res[0]["w1"].shape[3]
        w1s = jnp.stack([rp["w1"].reshape(9, c, cres) for rp in res]
                        ).astype(jnp.float32)
        g1s = jnp.stack([rp["g1"].reshape(1, cres) for rp in res]
                        ).astype(jnp.float32)
        b1s = jnp.stack([rp["b1"].reshape(1, cres) for rp in res]
                        ).astype(jnp.float32)
        w2s = jnp.stack([rp["w2"].reshape(cres, c) for rp in res]
                        ).astype(jnp.float32)
        g2s = jnp.stack([rp["g2"].reshape(1, c) for rp in res]
                        ).astype(jnp.float32)
        b2s = jnp.stack([rp["b2"].reshape(1, c) for rp in res]
                        ).astype(jnp.float32)

    kern = functools.partial(
        _stack_kernel, num_layers=num_layers, wp=wp, margin=margin,
        np_rows=np_rows, n_valid=n_valid, slope=_LEAKY_SLOPE, eps=_BN_EPS)

    out = pl.pallas_call(
        kern,
        out_shape=jax.ShapeDtypeStruct((np_rows, c), jnp.float32),
        grid_spec=pltpu.PrefetchScalarGridSpec(
            num_scalar_prefetch=0, grid=(1,),
            in_specs=[_full_spec(xflat.shape), _full_spec(mask.shape),
                      _full_spec(w3.shape), _full_spec(b3.shape),
                      _full_spec(w1s.shape), _full_spec(g1s.shape),
                      _full_spec(b1s.shape), _full_spec(w2s.shape),
                      _full_spec(g2s.shape), _full_spec(b2s.shape)],
            out_specs=_full_spec((np_rows, c)),
            scratch_shapes=[pltpu.VMEM((nf, c), jnp.float32)]),
        compiler_params=pltpu.CompilerParams(
            dimension_semantics=("arbitrary",),
            vmem_limit_bytes=_VMEM_LIMIT),
    )(xflat, mask, w3, b3, w1s, g1s, b1s, w2s, g2s, b2s)

    return out.reshape(b, hp, wp, c)[:, 1:-1, 1:-1, :]


# ---------------------------------------------------------------------------
# Encoder forward
# ---------------------------------------------------------------------------

@jax.jit
def encoder_forward(x_nchw, params):
    """Forward pass of the PyTorch `Encoder` module (NCHW in, NCHW out)."""
    x = jnp.transpose(x_nchw, (0, 2, 3, 1)).astype(jnp.float32)     # -> NHWC
    x = _conv4x4s2_relu(x, params["c1_w"], params["c1_b"])
    x = _conv4x4s2_relu(x, params["c2_w"], params["c2_b"])
    x = _conv3_residual_stack(x, params)       # conv3 + res-stack + final ReLU
    return jnp.transpose(x, (0, 3, 1, 2))                           # -> NCHW


# ---------------------------------------------------------------------------
# Pure-JAX reference (validation only)
# ---------------------------------------------------------------------------

def _leaky(x, slope=_LEAKY_SLOPE):
    return jnp.where(x >= 0.0, x, slope * x)


def encoder_reference(x_nchw, params):
    dn = ("NHWC", "HWIO", "NHWC")

    def conv(x, w, b, stride, pad):
        y = lax.conv_general_dilated(
            x, w, (stride, stride), [(pad, pad), (pad, pad)],
            dimension_numbers=dn, precision=lax.Precision.HIGHEST)
        return y if b is None else y + b

    def bn(x, gamma, beta):
        mean = jnp.mean(x, axis=(0, 1, 2))
        var = jnp.mean(jnp.square(x - mean), axis=(0, 1, 2))
        return (x - mean) * lax.rsqrt(var + _BN_EPS) * gamma + beta

    x = jnp.transpose(x_nchw, (0, 2, 3, 1)).astype(jnp.float32)
    x = jax.nn.relu(conv(x, params["c1_w"], params["c1_b"], 2, 1))
    x = jax.nn.relu(conv(x, params["c2_w"], params["c2_b"], 2, 1))
    x = conv(x, params["c3_w"], params["c3_b"], 1, 1)
    for rp in params["res"]:
        a = _leaky(x)                  # inplace LeakyReLU rewrites the identity
        h = bn(conv(a, rp["w1"], None, 1, 1), rp["g1"], rp["b1"])
        h = bn(conv(_leaky(h), rp["w2"], None, 1, 0), rp["g2"], rp["b2"])
        x = h + a
    x = jax.nn.relu(x)
    return jnp.transpose(x, (0, 3, 1, 2))


# ---------------------------------------------------------------------------
# Demo
# ---------------------------------------------------------------------------

if __name__ == "__main__":
    batch, in_channels, hin, win = 2, 4, 16, 16
    num_hiddens = 32
    num_residual_layers = 2
    num_residual_hiddens = 8

    key = jax.random.PRNGKey(0)
    keys = jax.random.split(key, 8)

    def conv_w(k, kh, kw, cin, cout):
        bound = 1.0 / float(kh * kw * cin) ** 0.5       # PyTorch-style U(-b, b)
        return jax.random.uniform(k, (kh, kw, cin, cout), jnp.float32,
                                  -bound, bound)

    params = {
        "c1_w": conv_w(keys[0], 4, 4, in_channels, num_hiddens // 2),
        "c1_b": 0.1 * jax.random.normal(keys[1], (num_hiddens // 2,),
                                        jnp.float32),
        "c2_w": conv_w(keys[2], 4, 4, num_hiddens // 2, num_hiddens),
        "c2_b": 0.1 * jax.random.normal(keys[3], (num_hiddens,), jnp.float32),
        "c3_w": conv_w(keys[4], 3, 3, num_hiddens, num_hiddens),
        "c3_b": 0.1 * jax.random.normal(keys[5], (num_hiddens,), jnp.float32),
        "res": [],
    }
    res_keys = jax.random.split(keys[6], num_residual_layers)
    for i in range(num_residual_layers):
        k1, k2 = jax.random.split(res_keys[i])
        params["res"].append({
            "w1": conv_w(k1, 3, 3, num_hiddens, num_residual_hiddens),
            "g1": jnp.ones((num_residual_hiddens,), jnp.float32),  # BN defaults
            "b1": jnp.zeros((num_residual_hiddens,), jnp.float32),
            "w2": conv_w(k2, 1, 1, num_residual_hiddens, num_hiddens),
            "g2": jnp.ones((num_hiddens,), jnp.float32),
            "b2": jnp.zeros((num_hiddens,), jnp.float32),
        })

    x = jax.random.normal(keys[7], (batch, in_channels, hin, win), jnp.float32)

    out = jax.block_until_ready(encoder_forward(x, params))
    assert out.shape == (batch, num_hiddens, hin // 4, win // 4), out.shape
    assert bool(jnp.all(jnp.isfinite(out)))

    # Validate against a pure-JAX f32 reference.  The kernel intentionally
    # uses bf16 MXU operands on the HBM-facing convs, so compare relative to
    # the output's dynamic range.
    ref = jax.block_until_ready(encoder_reference(x, params))
    max_err = float(jnp.max(jnp.abs(out - ref)))
    scale = float(jnp.max(jnp.abs(ref))) + 1e-6
    assert max_err / scale < 5e-2, (
        f"mismatch vs reference: max abs err={max_err}, ref scale={scale}")

    print("KERNEL_OK")
</pallas_src>

<mosaic_0001>
module attributes {stable_mosaic.version = 11 : i64} {
  func.func @_s2conv_kernel(%arg0: i32, %arg1: memref<184x16xbf16, #tpu.memory_space<vmem>>, %arg2: memref<4x16x16xbf16, #tpu.memory_space<vmem>>, %arg3: memref<1x16xf32, #tpu.memory_space<vmem>>, %arg4: memref<168x16xf32, #tpu.memory_space<vmem>>) attributes {dimension_semantics = [#tpu.dimension_semantics<arbitrary>], iteration_bounds = array<i64: 1>, scalar_prefetch = 0 : i64, scratch_operands = 0 : i64, tpu.core_type = #tpu.core_type<tc>, window_params = [{pipeline_mode = #tpu.pipeline_mode<synchronous>, transform_indices = @transform_0, window_bounds = array<i64: 184, 16>}, {pipeline_mode = #tpu.pipeline_mode<synchronous>, transform_indices = @transform_1, window_bounds = array<i64: 4, 16, 16>}, {pipeline_mode = #tpu.pipeline_mode<synchronous>, transform_indices = @transform_2, window_bounds = array<i64: 1, 16>}, {pipeline_mode = #tpu.pipeline_mode<synchronous>, transform_indices = @transform_3, window_bounds = array<i64: 168, 16>}]} {
    %cst = arith.constant 0.000000e+00 : f32
    %0 = vector.broadcast %cst : f32 to vector<168x16xf32>
    %c0 = arith.constant 0 : index
    %c0_0 = arith.constant 0 : index
    %1 = vector.load %arg1[%c0, %c0_0] : memref<184x16xbf16, #tpu.memory_space<vmem>>, vector<168x16xbf16>
    %c0_1 = arith.constant 0 : index
    %c0_2 = arith.constant 0 : index
    %c0_3 = arith.constant 0 : index
    %2 = vector.load %arg2[%c0_1, %c0_2, %c0_3] : memref<4x16x16xbf16, #tpu.memory_space<vmem>>, vector<1x16x16xbf16>
    %3 = vector.shape_cast %2 : vector<1x16x16xbf16> to vector<16x16xbf16>
    %cst_4 = arith.constant dense<0.000000e+00> : vector<168x16xf32>
    %4 = tpu.matmul %1, %3, %cst_4 {dimension_numbers = #tpu.dot_dimension_numbers<[1], [0], [0], [1], [0, 0, 1, 1], [], []>} : vector<168x16xbf16>, vector<16x16xbf16>, vector<168x16xf32> -> vector<168x16xf32>
    %5 = arith.addf %0, %4 : vector<168x16xf32>
    %c1 = arith.constant 1 : index
    %c0_5 = arith.constant 0 : index
    %6 = vector.load %arg1[%c1, %c0_5] : memref<184x16xbf16, #tpu.memory_space<vmem>>, vector<168x16xbf16>
    %c1_6 = arith.constant 1 : index
    %c0_7 = arith.constant 0 : index
    %c0_8 = arith.constant 0 : index
    %7 = vector.load %arg2[%c1_6, %c0_7, %c0_8] : memref<4x16x16xbf16, #tpu.memory_space<vmem>>, vector<1x16x16xbf16>
    %8 = vector.shape_cast %7 : vector<1x16x16xbf16> to vector<16x16xbf16>
    %cst_9 = arith.constant dense<0.000000e+00> : vector<168x16xf32>
    %9 = tpu.matmul %6, %8, %cst_9 {dimension_numbers = #tpu.dot_dimension_numbers<[1], [0], [0], [1], [0, 0, 1, 1], [], []>} : vector<168x16xbf16>, vector<16x16xbf16>, vector<168x16xf32> -> vector<168x16xf32>
    %10 = arith.addf %5, %9 : vector<168x16xf32>
    %c9 = arith.constant 9 : index
    %c0_10 = arith.constant 0 : index
    %11 = vector.load %arg1[%c9, %c0_10] : memref<184x16xbf16, #tpu.memory_space<vmem>>, vector<168x16xbf16>
    %c2 = arith.constant 2 : index
    %c0_11 = arith.constant 0 : index
    %c0_12 = arith.constant 0 : index
    %12 = vector.load %arg2[%c2, %c0_11, %c0_12] : memref<4x16x16xbf16, #tpu.memory_space<vmem>>, vector<1x16x16xbf16>
    %13 = vector.shape_cast %12 : vector<1x16x16xbf16> to vector<16x16xbf16>
    %cst_13 = arith.constant dense<0.000000e+00> : vector<168x16xf32>
    %14 = tpu.matmul %11, %13, %cst_13 {dimension_numbers = #tpu.dot_dimension_numbers<[1], [0], [0], [1], [0, 0, 1, 1], [], []>} : vector<168x16xbf16>, vector<16x16xbf16>, vector<168x16xf32> -> vector<168x16xf32>
    %15 = arith.addf %10, %14 : vector<168x16xf32>
    %c10 = arith.constant 10 : index
    %c0_14 = arith.constant 0 : index
    %16 = vector.load %arg1[%c10, %c0_14] : memref<184x16xbf16, #tpu.memory_space<vmem>>, vector<168x16xbf16>
    %c3 = arith.constant 3 : index
    %c0_15 = arith.constant 0 : index
    %c0_16 = arith.constant 0 : index
    %17 = vector.load %arg2[%c3, %c0_15, %c0_16] : memref<4x16x16xbf16, #tpu.memory_space<vmem>>, vector<1x16x16xbf16>
    %18 = vector.shape_cast %17 : vector<1x16x16xbf16> to vector<16x16xbf16>
    %cst_17 = arith.constant dense<0.000000e+00> : vector<168x16xf32>
    %19 = tpu.matmul %16, %18, %cst_17 {dimension_numbers = #tpu.dot_dimension_numbers<[1], [0], [0], [1], [0, 0, 1, 1], [], []>} : vector<168x16xbf16>, vector<16x16xbf16>, vector<168x16xf32> -> vector<168x16xf32>
    %20 = arith.addf %15, %19 : vector<168x16xf32>
    %c0_18 = arith.constant 0 : index
    %c0_19 = arith.constant 0 : index
    %21 = vector.load %arg3[%c0_18, %c0_19] : memref<1x16xf32, #tpu.memory_space<vmem>>, vector<1x16xf32>
    %22 = vector.broadcast %21 : vector<1x16xf32> to vector<168x16xf32>
    %23 = arith.addf %20, %22 : vector<168x16xf32>
    %cst_20 = arith.constant 0.000000e+00 : f32
    %24 = vector.broadcast %cst_20 : f32 to vector<168x16xf32>
    %25 = arith.maximumf %23, %24 : vector<168x16xf32>
    %c0_21 = arith.constant 0 : index
    %c0_22 = arith.constant 0 : index
    %26 = vector.load %arg4[%c0_21, %c0_22] : memref<168x16xf32, #tpu.memory_space<vmem>>, vector<168x16xf32>
    tpu.vector_store %arg4[%c0_21, %c0_22], %25 {strides = array<i32>} : memref<168x16xf32, #tpu.memory_space<vmem>>, vector<168x16xf32>,
    return
  }
  func.func @transform_0(%arg0: i32) -> (i32, i32) {
    %c0_i32 = arith.constant 0 : i32
    %c0_i32_0 = arith.constant 0 : i32
    %c0_i32_1 = arith.constant 0 : i32
    return %c0_i32, %c0_i32_0 : i32, i32
  }
  func.func @transform_1(%arg0: i32) -> (i32, i32, i32) {
    %c0_i32 = arith.constant 0 : i32
    %c0_i32_0 = arith.constant 0 : i32
    %c0_i32_1 = arith.constant 0 : i32
    %c0_i32_2 = arith.constant 0 : i32
    return %c0_i32, %c0_i32_0, %c0_i32_1 : i32, i32, i32
  }
  func.func @transform_2(%arg0: i32) -> (i32, i32) {
    %c0_i32 = arith.constant 0 : i32
    %c0_i32_0 = arith.constant 0 : i32
    %c0_i32_1 = arith.constant 0 : i32
    return %c0_i32, %c0_i32_0 : i32, i32
  }
  func.func @transform_3(%arg0: i32) -> (i32, i32) {
    %c0_i32 = arith.constant 0 : i32
    %c0_i32_0 = arith.constant 0 : i32
    %c0_i32_1 = arith.constant 0 : i32
    return %c0_i32, %c0_i32_0 : i32, i32
  }
}

module attributes {stable_mosaic.version = 11 : i64} {
  func.func @_s2conv_kernel(%arg0: i32, %arg1: memref<64x64xbf16, #tpu.memory_space<vmem>>, %arg2: memref<4x64x32xbf16, #tpu.memory_space<vmem>>, %arg3: memref<1x32xf32, #tpu.memory_space<vmem>>, %arg4: memref<56x32xf32, #tpu.memory_space<vmem>>) attributes {dimension_semantics = [#tpu.dimension_semantics<arbitrary>], iteration_bounds = array<i64: 1>, scalar_prefetch = 0 : i64, scratch_operands = 0 : i64, tpu.core_type = #tpu.core_type<tc>, window_params = [{pipeline_mode = #tpu.pipeline_mode<synchronous>, transform_indices = @transform_0, window_bounds = array<i64: 64, 64>}, {pipeline_mode = #tpu.pipeline_mode<synchronous>, transform_indices = @transform_1, window_bounds = array<i64: 4, 64, 32>}, {pipeline_mode = #tpu.pipeline_mode<synchronous>, transform_indices = @transform_2, window_bounds = array<i64: 1, 32>}, {pipeline_mode = #tpu.pipeline_mode<synchronous>, transform_indices = @transform_3, window_bounds = array<i64: 56, 32>}]} {
    %cst = arith.constant 0.000000e+00 : f32
    %0 = vector.broadcast %cst : f32 to vector<56x32xf32>
    %c0 = arith.constant 0 : index
    %c0_0 = arith.constant 0 : index
    %1 = vector.load %arg1[%c0, %c0_0] : memref<64x64xbf16, #tpu.memory_space<vmem>>, vector<56x64xbf16>
    %c0_1 = arith.constant 0 : index
    %c0_2 = arith.constant 0 : index
    %c0_3 = arith.constant 0 : index
    %2 = vector.load %arg2[%c0_1, %c0_2, %c0_3] : memref<4x64x32xbf16, #tpu.memory_space<vmem>>, vector<1x64x32xbf16>
    %3 = vector.shape_cast %2 : vector<1x64x32xbf16> to vector<64x32xbf16>
    %cst_4 = arith.constant dense<0.000000e+00> : vector<56x32xf32>
    %4 = tpu.matmul %1, %3, %cst_4 {dimension_numbers = #tpu.dot_dimension_numbers<[1], [0], [0], [1], [0, 0, 1, 1], [], []>} : vector<56x64xbf16>, vector<64x32xbf16>, vector<56x32xf32> -> vector<56x32xf32>
    %5 = arith.addf %0, %4 : vector<56x32xf32>
    %c1 = arith.constant 1 : index
    %c0_5 = arith.constant 0 : index
    %6 = vector.load %arg1[%c1, %c0_5] : memref<64x64xbf16, #tpu.memory_space<vmem>>, vector<56x64xbf16>
    %c1_6 = arith.constant 1 : index
    %c0_7 = arith.constant 0 : index
    %c0_8 = arith.constant 0 : index
    %7 = vector.load %arg2[%c1_6, %c0_7, %c0_8] : memref<4x64x32xbf16, #tpu.memory_space<vmem>>, vector<1x64x32xbf16>
    %8 = vector.shape_cast %7 : vector<1x64x32xbf16> to vector<64x32xbf16>
    %cst_9 = arith.constant dense<0.000000e+00> : vector<56x32xf32>
    %9 = tpu.matmul %6, %8, %cst_9 {dimension_numbers = #tpu.dot_dimension_numbers<[1], [0], [0], [1], [0, 0, 1, 1], [], []>} : vector<56x64xbf16>, vector<64x32xbf16>, vector<56x32xf32> -> vector<56x32xf32>
    %10 = arith.addf %5, %9 : vector<56x32xf32>
    %c5 = arith.constant 5 : index
    %c0_10 = arith.constant 0 : index
    %11 = vector.load %arg1[%c5, %c0_10] : memref<64x64xbf16, #tpu.memory_space<vmem>>, vector<56x64xbf16>
    %c2 = arith.constant 2 : index
    %c0_11 = arith.constant 0 : index
    %c0_12 = arith.constant 0 : index
    %12 = vector.load %arg2[%c2, %c0_11, %c0_12] : memref<4x64x32xbf16, #tpu.memory_space<vmem>>, vector<1x64x32xbf16>
    %13 = vector.shape_cast %12 : vector<1x64x32xbf16> to vector<64x32xbf16>
    %cst_13 = arith.constant dense<0.000000e+00> : vector<56x32xf32>
    %14 = tpu.matmul %11, %13, %cst_13 {dimension_numbers = #tpu.dot_dimension_numbers<[1], [0], [0], [1], [0, 0, 1, 1], [], []>} : vector<56x64xbf16>, vector<64x32xbf16>, vector<56x32xf32> -> vector<56x32xf32>
    %15 = arith.addf %10, %14 : vector<56x32xf32>
    %c6 = arith.constant 6 : index
    %c0_14 = arith.constant 0 : index
    %16 = vector.load %arg1[%c6, %c0_14] : memref<64x64xbf16, #tpu.memory_space<vmem>>, vector<56x64xbf16>
    %c3 = arith.constant 3 : index
    %c0_15 = arith.constant 0 : index
    %c0_16 = arith.constant 0 : index
    %17 = vector.load %arg2[%c3, %c0_15, %c0_16] : memref<4x64x32xbf16, #tpu.memory_space<vmem>>, vector<1x64x32xbf16>
    %18 = vector.shape_cast %17 : vector<1x64x32xbf16> to vector<64x32xbf16>
    %cst_17 = arith.constant dense<0.000000e+00> : vector<56x32xf32>
    %19 = tpu.matmul %16, %18, %cst_17 {dimension_numbers = #tpu.dot_dimension_numbers<[1], [0], [0], [1], [0, 0, 1, 1], [], []>} : vector<56x64xbf16>, vector<64x32xbf16>, vector<56x32xf32> -> vector<56x32xf32>
    %20 = arith.addf %15, %19 : vector<56x32xf32>
    %c0_18 = arith.constant 0 : index
    %c0_19 = arith.constant 0 : index
    %21 = vector.load %arg3[%c0_18, %c0_19] : memref<1x32xf32, #tpu.memory_space<vmem>>, vector<1x32xf32>
    %22 = vector.broadcast %21 : vector<1x32xf32> to vector<56x32xf32>
    %23 = arith.addf %20, %22 : vector<56x32xf32>
    %cst_20 = arith.constant 0.000000e+00 : f32
    %24 = vector.broadcast %cst_20 : f32 to vector<56x32xf32>
    %25 = arith.maximumf %23, %24 : vector<56x32xf32>
    %c0_21 = arith.constant 0 : index
    %c0_22 = arith.constant 0 : index
    %26 = vector.load %arg4[%c0_21, %c0_22] : memref<56x32xf32, #tpu.memory_space<vmem>>, vector<56x32xf32>
    tpu.vector_store %arg4[%c0_21, %c0_22], %25 {strides = array<i32>} : memref<56x32xf32, #tpu.memory_space<vmem>>, vector<56x32xf32>,
    return
  }
  func.func @transform_0(%arg0: i32) -> (i32, i32) {
    %c0_i32 = arith.constant 0 : i32
    %c0_i32_0 = arith.constant 0 : i32
    %c0_i32_1 = arith.constant 0 : i32
    return %c0_i32, %c0_i32_0 : i32, i32
  }
  func.func @transform_1(%arg0: i32) -> (i32, i32, i32) {
    %c0_i32 = arith.constant 0 : i32
    %c0_i32_0 = arith.constant 0 : i32
    %c0_i32_1 = arith.constant 0 : i32
    %c0_i32_2 = arith.constant 0 : i32
    return %c0_i32, %c0_i32_0, %c0_i32_1 : i32, i32, i32
  }
  func.func @transform_2(%arg0: i32) -> (i32, i32) {
    %c0_i32 = arith.constant 0 : i32
    %c0_i32_0 = arith.constant 0 : i32
    %c0_i32_1 = arith.constant 0 : i32
    return %c0_i32, %c0_i32_0 : i32, i32
  }
  func.func @transform_3(%arg0: i32) -> (i32, i32) {
    %c0_i32 = arith.constant 0 : i32
    %c0_i32_0 = arith.constant 0 : i32
    %c0_i32_1 = arith.constant 0 : i32
    return %c0_i32, %c0_i32_0 : i32, i32
  }
}

module attributes {stable_mosaic.version = 11 : i64} {
  func.func @_stack_kernel(%arg0: i32, %arg1: memref<88x32xbf16, #tpu.memory_space<vmem>>, %arg2: memref<72x1xf32, #tpu.memory_space<vmem>>, %arg3: memref<9x32x32xbf16, #tpu.memory_space<vmem>>, %arg4: memref<1x32xf32, #tpu.memory_space<vmem>>, %arg5: memref<2x9x32x8xf32, #tpu.memory_space<vmem>>, %arg6: memref<2x1x8xf32, #tpu.memory_space<vmem>>, %arg7: memref<2x1x8xf32, #tpu.memory_space<vmem>>, %arg8: memref<2x8x32xf32, #tpu.memory_space<vmem>>, %arg9: memref<2x1x32xf32, #tpu.memory_space<vmem>>, %arg10: memref<2x1x32xf32, #tpu.memory_space<vmem>>, %arg11: memref<72x32xf32, #tpu.memory_space<vmem>>, %arg12: memref<88x32xf32, #tpu.memory_space<vmem>>) attributes {dimension_semantics = [#tpu.dimension_semantics<arbitrary>], iteration_bounds = array<i64: 1>, scalar_prefetch = 0 : i64, scratch_operands = 1 : i64, tpu.core_type = #tpu.core_type<tc>, window_params = [{pipeline_mode = #tpu.pipeline_mode<synchronous>, transform_indices = @transform_0, window_bounds = array<i64: 88, 32>}, {pipeline_mode = #tpu.pipeline_mode<synchronous>, transform_indices = @transform_1, window_bounds = array<i64: 72, 1>}, {pipeline_mode = #tpu.pipeline_mode<synchronous>, transform_indices = @transform_2, window_bounds = array<i64: 9, 32, 32>}, {pipeline_mode = #tpu.pipeline_mode<synchronous>, transform_indices = @transform_3, window_bounds = array<i64: 1, 32>}, {pipeline_mode = #tpu.pipeline_mode<synchronous>, transform_indices = @transform_4, window_bounds = array<i64: 2, 9, 32, 8>}, {pipeline_mode = #tpu.pipeline_mode<synchronous>, transform_indices = @transform_5, window_bounds = array<i64: 2, 1, 8>}, {pipeline_mode = #tpu.pipeline_mode<synchronous>, transform_indices = @transform_6, window_bounds = array<i64: 2, 1, 8>}, {pipeline_mode = #tpu.pipeline_mode<synchronous>, transform_indices = @transform_7, window_bounds = array<i64: 2, 8, 32>}, {pipeline_mode = #tpu.pipeline_mode<synchronous>, transform_indices = @transform_8, window_bounds = array<i64: 2, 1, 32>}, {pipeline_mode = #tpu.pipeline_mode<synchronous>, transform_indices = @transform_9, window_bounds = array<i64: 2, 1, 32>}, {pipeline_mode = #tpu.pipeline_mode<synchronous>, transform_indices = @transform_10, window_bounds = array<i64: 72, 32>}]} {
    %c0 = arith.constant 0 : index
    %c0_0 = arith.constant 0 : index
    %0 = vector.load %arg2[%c0, %c0_0] : memref<72x1xf32, #tpu.memory_space<vmem>>, vector<72x1xf32>
    %cst = arith.constant 0.000000e+00 : f32
    %1 = vector.broadcast %cst : f32 to vector<72x32xf32>
    %c1 = arith.constant 1 : index
    %c0_1 = arith.constant 0 : index
    %2 = vector.load %arg1[%c1, %c0_1] : memref<88x32xbf16, #tpu.memory_space<vmem>>, vector<72x32xbf16>
    %c0_2 = arith.constant 0 : index
    %c0_3 = arith.constant 0 : index
    %c0_4 = arith.constant 0 : index
    %3 = vector.load %arg3[%c0_2, %c0_3, %c0_4] : memref<9x32x32xbf16, #tpu.memory_space<vmem>>, vector<1x32x32xbf16>
    %4 = vector.shape_cast %3 : vector<1x32x32xbf16> to vector<32x32xbf16>
    %cst_5 = arith.constant dense<0.000000e+00> : vector<72x32xf32>
    %5 = tpu.matmul %2, %4, %cst_5 {dimension_numbers = #tpu.dot_dimension_numbers<[1], [0], [0], [1], [0, 0, 1, 1], [], []>} : vector<72x32xbf16>, vector<32x32xbf16>, vector<72x32xf32> -> vector<72x32xf32>
    %6 = arith.addf %1, %5 : vector<72x32xf32>
    %c2 = arith.constant 2 : index
    %c0_6 = arith.constant 0 : index
    %7 = vector.load %arg1[%c2, %c0_6] : memref<88x32xbf16, #tpu.memory_space<vmem>>, vector<72x32xbf16>
    %c1_7 = arith.constant 1 : index
    %c0_8 = arith.constant 0 : index
    %c0_9 = arith.constant 0 : index
    %8 = vector.load %arg3[%c1_7, %c0_8, %c0_9] : memref<9x32x32xbf16, #tpu.memory_space<vmem>>, vector<1x32x32xbf16>
    %9 = vector.shape_cast %8 : vector<1x32x32xbf16> to vector<32x32xbf16>
    %cst_10 = arith.constant dense<0.000000e+00> : vector<72x32xf32>
    %10 = tpu.matmul %7, %9, %cst_10 {dimension_numbers = #tpu.dot_dimension_numbers<[1], [0], [0], [1], [0, 0, 1, 1], [], []>} : vector<72x32xbf16>, vector<32x32xbf16>, vector<72x32xf32> -> vector<72x32xf32>
    %11 = arith.addf %6, %10 : vector<72x32xf32>
    %c3 = arith.constant 3 : index
    %c0_11 = arith.constant 0 : index
    %12 = vector.load %arg1[%c3, %c0_11] : memref<88x32xbf16, #tpu.memory_space<vmem>>, vector<72x32xbf16>
    %c2_12 = arith.constant 2 : index
    %c0_13 = arith.constant 0 : index
    %c0_14 = arith.constant 0 : index
    %13 = vector.load %arg3[%c2_12, %c0_13, %c0_14] : memref<9x32x32xbf16, #tpu.memory_space<vmem>>, vector<1x32x32xbf16>
    %14 = vector.shape_cast %13 : vector<1x32x32xbf16> to vector<32x32xbf16>
    %cst_15 = arith.constant dense<0.000000e+00> : vector<72x32xf32>
    %15 = tpu.matmul %12, %14, %cst_15 {dimension_numbers = #tpu.dot_dimension_numbers<[1], [0], [0], [1], [0, 0, 1, 1], [], []>} : vector<72x32xbf16>, vector<32x32xbf16>, vector<72x32xf32> -> vector<72x32xf32>
    %16 = arith.addf %11, %15 : vector<72x32xf32>
    %c7 = arith.constant 7 : index
    %c0_16 = arith.constant 0 : index
    %17 = vector.load %arg1[%c7, %c0_16] : memref<88x32xbf16, #tpu.memory_space<vmem>>, vector<72x32xbf16>
    %c3_17 = arith.constant 3 : index
    %c0_18 = arith.constant 0 : index
    %c0_19 = arith.constant 0 : index
    %18 = vector.load %arg3[%c3_17, %c0_18, %c0_19] : memref<9x32x32xbf16, #tpu.memory_space<vmem>>, vector<1x32x32xbf16>
    %19 = vector.shape_cast %18 : vector<1x32x32xbf16> to vector<32x32xbf16>
    %cst_20 = arith.constant dense<0.000000e+00> : vector<72x32xf32>
    %20 = tpu.matmul %17, %19, %cst_20 {dimension_numbers = #tpu.dot_dimension_numbers<[1], [0], [0], [1], [0, 0, 1, 1], [], []>} : vector<72x32xbf16>, vector<32x32xbf16>, vector<72x32xf32> -> vector<72x32xf32>
    %21 = arith.addf %16, %20 : vector<72x32xf32>
    %c8 = arith.constant 8 : index
    %c0_21 = arith.constant 0 : index
    %22 = vector.load %arg1[%c8, %c0_21] : memref<88x32xbf16, #tpu.memory_space<vmem>>, vector<72x32xbf16>
    %c4 = arith.constant 4 : index
    %c0_22 = arith.constant 0 : index
    %c0_23 = arith.constant 0 : index
    %23 = vector.load %arg3[%c4, %c0_22, %c0_23] : memref<9x32x32xbf16, #tpu.memory_space<vmem>>, vector<1x32x32xbf16>
    %24 = vector.shape_cast %23 : vector<1x32x32xbf16> to vector<32x32xbf16>
    %cst_24 = arith.constant dense<0.000000e+00> : vector<72x32xf32>
    %25 = tpu.matmul %22, %24, %cst_24 {dimension_numbers = #tpu.dot_dimension_numbers<[1], [0], [0], [1], [0, 0, 1, 1], [], []>} : vector<72x32xbf16>, vector<32x32xbf16>, vector<72x32xf32> -> vector<72x32xf32>
    %26 = arith.addf %21, %25 : vector<72x32xf32>
    %c9 = arith.constant 9 : index
    %c0_25 = arith.constant 0 : index
    %27 = vector.load %arg1[%c9, %c0_25] : memref<88x32xbf16, #tpu.memory_space<vmem>>, vector<72x32xbf16>
    %c5 = arith.constant 5 : index
    %c0_26 = arith.constant 0 : index
    %c0_27 = arith.constant 0 : index
    %28 = vector.load %arg3[%c5, %c0_26, %c0_27] : memref<9x32x32xbf16, #tpu.memory_space<vmem>>, vector<1x32x32xbf16>
    %29 = vector.shape_cast %28 : vector<1x32x32xbf16> to vector<32x32xbf16>
    %cst_28 = arith.constant dense<0.000000e+00> : vector<72x32xf32>
    %30 = tpu.matmul %27, %29, %cst_28 {dimension_numbers = #tpu.dot_dimension_numbers<[1], [0], [0], [1], [0, 0, 1, 1], [], []>} : vector<72x32xbf16>, vector<32x32xbf16>, vector<72x32xf32> -> vector<72x32xf32>
    %31 = arith.addf %26, %30 : vector<72x32xf32>
    %c13 = arith.constant 13 : index
    %c0_29 = arith.constant 0 : index
    %32 = vector.load %arg1[%c13, %c0_29] : memref<88x32xbf16, #tpu.memory_space<vmem>>, vector<72x32xbf16>
    %c6 = arith.constant 6 : index
    %c0_30 = arith.constant 0 : index
    %c0_31 = arith.constant 0 : index
    %33 = vector.load %arg3[%c6, %c0_30, %c0_31] : memref<9x32x32xbf16, #tpu.memory_space<vmem>>, vector<1x32x32xbf16>
    %34 = vector.shape_cast %33 : vector<1x32x32xbf16> to vector<32x32xbf16>
    %cst_32 = arith.constant dense<0.000000e+00> : vector<72x32xf32>
    %35 = tpu.matmul %32, %34, %cst_32 {dimension_numbers = #tpu.dot_dimension_numbers<[1], [0], [0], [1], [0, 0, 1, 1], [], []>} : vector<72x32xbf16>, vector<32x32xbf16>, vector<72x32xf32> -> vector<72x32xf32>
    %36 = arith.addf %31, %35 : vector<72x32xf32>
    %c14 = arith.constant 14 : index
    %c0_33 = arith.constant 0 : index
    %37 = vector.load %arg1[%c14, %c0_33] : memref<88x32xbf16, #tpu.memory_space<vmem>>, vector<72x32xbf16>
    %c7_34 = arith.constant 7 : index
    %c0_35 = arith.constant 0 : index
    %c0_36 = arith.constant 0 : index
    %38 = vector.load %arg3[%c7_34, %c0_35, %c0_36] : memref<9x32x32xbf16, #tpu.memory_space<vmem>>, vector<1x32x32xbf16>
    %39 = vector.shape_cast %38 : vector<1x32x32xbf16> to vector<32x32xbf16>
    %cst_37 = arith.constant dense<0.000000e+00> : vector<72x32xf32>
    %40 = tpu.matmul %37, %39, %cst_37 {dimension_numbers = #tpu.dot_dimension_numbers<[1], [0], [0], [1], [0, 0, 1, 1], [], []>} : vector<72x32xbf16>, vector<32x32xbf16>, vector<72x32xf32> -> vector<72x32xf32>
    %41 = arith.addf %36, %40 : vector<72x32xf32>
    %c15 = arith.constant 15 : index
    %c0_38 = arith.constant 0 : index
    %42 = vector.load %arg1[%c15, %c0_38] : memref<88x32xbf16, #tpu.memory_space<vmem>>, vector<72x32xbf16>
    %c8_39 = arith.constant 8 : index
    %c0_40 = arith.constant 0 : index
    %c0_41 = arith.constant 0 : index
    %43 = vector.load %arg3[%c8_39, %c0_40, %c0_41] : memref<9x32x32xbf16, #tpu.memory_space<vmem>>, vector<1x32x32xbf16>
    %44 = vector.shape_cast %43 : vector<1x32x32xbf16> to vector<32x32xbf16>
    %cst_42 = arith.constant dense<0.000000e+00> : vector<72x32xf32>
    %45 = tpu.matmul %42, %44, %cst_42 {dimension_numbers = #tpu.dot_dimension_numbers<[1], [0], [0], [1], [0, 0, 1, 1], [], []>} : vector<72x32xbf16>, vector<32x32xbf16>, vector<72x32xf32> -> vector<72x32xf32>
    %46 = arith.addf %41, %45 : vector<72x32xf32>
    %c0_43 = arith.constant 0 : index
    %c0_44 = arith.constant 0 : index
    %47 = vector.load %arg4[%c0_43, %c0_44] : memref<1x32xf32, #tpu.memory_space<vmem>>, vector<1x32xf32>
    %48 = vector.broadcast %47 : vector<1x32xf32> to vector<72x32xf32>
    %49 = arith.addf %46, %48 : vector<72x32xf32>
    %50 = vector.broadcast %0 : vector<72x1xf32> to vector<72x32xf32>
    %51 = arith.mulf %49, %50 : vector<72x32xf32>
    %cst_45 = arith.constant 0.000000e+00 : f32
    %52 = vector.broadcast %cst_45 : f32 to vector<88x32xf32>
    %c0_46 = arith.constant 0 : index
    %c0_47 = arith.constant 0 : index
    %53 = vector.load %arg12[%c0_46, %c0_47] : memref<88x32xf32, #tpu.memory_space<vmem>>, vector<88x32xf32>
    tpu.vector_store %arg12[%c0_46, %c0_47], %52 {strides = array<i32>} : memref<88x32xf32, #tpu.memory_space<vmem>>, vector<88x32xf32>,
    %cst_48 = arith.constant 0.000000e+00 : f32
    %54 = vector.broadcast %cst_48 : f32 to vector<72x32xf32>
    %55 = arith.cmpf oge, %51, %54 : vector<72x32xf32>
    %cst_49 = arith.constant 0.00999999977 : f32
    %56 = vector.broadcast %cst_49 : f32 to vector<72x32xf32>
    %57 = arith.mulf %56, %51 : vector<72x32xf32>
    %58 = arith.select %55, %51, %57 : vector<72x32xi1>, vector<72x32xf32>
    %c8_50 = arith.constant 8 : index
    %c0_51 = arith.constant 0 : index
    %59 = vector.load %arg12[%c8_50, %c0_51] : memref<88x32xf32, #tpu.memory_space<vmem>>, vector<72x32xf32>
    tpu.vector_store %arg12[%c8_50, %c0_51], %58 {strides = array<i32>} : memref<88x32xf32, #tpu.memory_space<vmem>>, vector<72x32xf32>,
    %cst_52 = arith.constant 0.000000e+00 : f32
    %60 = vector.broadcast %cst_52 : f32 to vector<72x8xf32>
    %c1_53 = arith.constant 1 : index
    %c0_54 = arith.constant 0 : index
    %61 = vector.load %arg12[%c1_53, %c0_54] : memref<88x32xf32, #tpu.memory_space<vmem>>, vector<72x32xf32>
    %c0_55 = arith.constant 0 : index
    %c0_56 = arith.constant 0 : index
    %c0_57 = arith.constant 0 : index
    %c0_58 = arith.constant 0 : index
    %62 = vector.load %arg5[%c0_55, %c0_56, %c0_57, %c0_58] : memref<2x9x32x8xf32, #tpu.memory_space<vmem>>, vector<1x1x32x8xf32>
    %63 = vector.shape_cast %62 : vector<1x1x32x8xf32> to vector<32x8xf32>
    %cst_59 = arith.constant dense<0.000000e+00> : vector<72x8xf32>
    %64 = tpu.matmul %61, %63, %cst_59 {dimension_numbers = #tpu.dot_dimension_numbers<[1], [0], [0], [1], [0, 0, 1, 1], [], []>} : vector<72x32xf32>, vector<32x8xf32>, vector<72x8xf32> -> vector<72x8xf32>
    %65 = arith.addf %60, %64 : vector<72x8xf32>
    %c2_60 = arith.constant 2 : index
    %c0_61 = arith.constant 0 : index
    %66 = vector.load %arg12[%c2_60, %c0_61] : memref<88x32xf32, #tpu.memory_space<vmem>>, vector<72x32xf32>
    %c0_62 = arith.constant 0 : index
    %c1_63 = arith.constant 1 : index
    %c0_64 = arith.constant 0 : index
    %c0_65 = arith.constant 0 : index
    %67 = vector.load %arg5[%c0_62, %c1_63, %c0_64, %c0_65] : memref<2x9x32x8xf32, #tpu.memory_space<vmem>>, vector<1x1x32x8xf32>
    %68 = vector.shape_cast %67 : vector<1x1x32x8xf32> to vector<32x8xf32>
    %cst_66 = arith.constant dense<0.000000e+00> : vector<72x8xf32>
    %69 = tpu.matmul %66, %68, %cst_66 {dimension_numbers = #tpu.dot_dimension_numbers<[1], [0], [0], [1], [0, 0, 1, 1], [], []>} : vector<72x32xf32>, vector<32x8xf32>, vector<72x8xf32> -> vector<72x8xf32>
    %70 = arith.addf %65, %69 : vector<72x8xf32>
    %c3_67 = arith.constant 3 : index
    %c0_68 = arith.constant 0 : index
    %71 = vector.load %arg12[%c3_67, %c0_68] : memref<88x32xf32, #tpu.memory_space<vmem>>, vector<72x32xf32>
    %c0_69 = arith.constant 0 : index
    %c2_70 = arith.constant 2 : index
    %c0_71 = arith.constant 0 : index
    %c0_72 = arith.constant 0 : index
    %72 = vector.load %arg5[%c0_69, %c2_70, %c0_71, %c0_72] : memref<2x9x32x8xf32, #tpu.memory_space<vmem>>, vector<1x1x32x8xf32>
    %73 = vector.shape_cast %72 : vector<1x1x32x8xf32> to vector<32x8xf32>
    %cst_73 = arith.constant dense<0.000000e+00> : vector<72x8xf32>
    %74 = tpu.matmul %71, %73, %cst_73 {dimension_numbers = #tpu.dot_dimension_numbers<[1], [0], [0], [1], [0, 0, 1, 1], [], []>} : vector<72x32xf32>, vector<32x8xf32>, vector<72x8xf32> -> vector<72x8xf32>
    %75 = arith.addf %70, %74 : vector<72x8xf32>
    %c7_74 = arith.constant 7 : index
    %c0_75 = arith.constant 0 : index
    %76 = vector.load %arg12[%c7_74, %c0_75] : memref<88x32xf32, #tpu.memory_space<vmem>>, vector<72x32xf32>
    %c0_76 = arith.constant 0 : index
    %c3_77 = arith.constant 3 : index
    %c0_78 = arith.constant 0 : index
    %c0_79 = arith.constant 0 : index
    %77 = vector.load %arg5[%c0_76, %c3_77, %c0_78, %c0_79] : memref<2x9x32x8xf32, #tpu.memory_space<vmem>>, vector<1x1x32x8xf32>
    %78 = vector.shape_cast %77 : vector<1x1x32x8xf32> to vector<32x8xf32>
    %cst_80 = arith.constant dense<0.000000e+00> : vector<72x8xf32>
    %79 = tpu.matmul %76, %78, %cst_80 {dimension_numbers = #tpu.dot_dimension_numbers<[1], [0], [0], [1], [0, 0, 1, 1], [], []>} : vector<72x32xf32>, vector<32x8xf32>, vector<72x8xf32> -> vector<72x8xf32>
    %80 = arith.addf %75, %79 : vector<72x8xf32>
    %c8_81 = arith.constant 8 : index
    %c0_82 = arith.constant 0 : index
    %81 = vector.load %arg12[%c8_81, %c0_82] : memref<88x32xf32, #tpu.memory_space<vmem>>, vector<72x32xf32>
    %c0_83 = arith.constant 0 : index
    %c4_84 = arith.constant 4 : index
    %c0_85 = arith.constant 0 : index
    %c0_86 = arith.constant 0 : index
    %82 = vector.load %arg5[%c0_83, %c4_84, %c0_85, %c0_86] : memref<2x9x32x8xf32, #tpu.memory_space<vmem>>, vector<1x1x32x8xf32>
    %83 = vector.shape_cast %82 : vector<1x1x32x8xf32> to vector<32x8xf32>
    %cst_87 = arith.constant dense<0.000000e+00> : vector<72x8xf32>
    %84 = tpu.matmul %81, %83, %cst_87 {dimension_numbers = #tpu.dot_dimension_numbers<[1], [0], [0], [1], [0, 0, 1, 1], [], []>} : vector<72x32xf32>, vector<32x8xf32>, vector<72x8xf32> -> vector<72x8xf32>
    %85 = arith.addf %80, %84 : vector<72x8xf32>
    %c9_88 = arith.constant 9 : index
    %c0_89 = arith.constant 0 : index
    %86 = vector.load %arg12[%c9_88, %c0_89] : memref<88x32xf32, #tpu.memory_space<vmem>>, vector<72x32xf32>
    %c0_90 = arith.constant 0 : index
    %c5_91 = arith.constant 5 : index
    %c0_92 = arith.constant 0 : index
    %c0_93 = arith.constant 0 : index
    %87 = vector.load %arg5[%c0_90, %c5_91, %c0_92, %c0_93] : memref<2x9x32x8xf32, #tpu.memory_space<vmem>>, vector<1x1x32x8xf32>
    %88 = vector.shape_cast %87 : vector<1x1x32x8xf32> to vector<32x8xf32>
    %cst_94 = arith.constant dense<0.000000e+00> : vector<72x8xf32>
    %89 = tpu.matmul %86, %88, %cst_94 {dimension_numbers = #tpu.dot_dimension_numbers<[1], [0], [0], [1], [0, 0, 1, 1], [], []>} : vector<72x32xf32>, vector<32x8xf32>, vector<72x8xf32> -> vector<72x8xf32>
    %90 = arith.addf %85, %89 : vector<72x8xf32>
    %c13_95 = arith.constant 13 : index
    %c0_96 = arith.constant 0 : index
    %91 = vector.load %arg12[%c13_95, %c0_96] : memref<88x32xf32, #tpu.memory_space<vmem>>, vector<72x32xf32>
    %c0_97 = arith.constant 0 : index
    %c6_98 = arith.constant 6 : index
    %c0_99 = arith.constant 0 : index
    %c0_100 = arith.constant 0 : index
    %92 = vector.load %arg5[%c0_97, %c6_98, %c0_99, %c0_100] : memref<2x9x32x8xf32, #tpu.memory_space<vmem>>, vector<1x1x32x8xf32>
    %93 = vector.shape_cast %92 : vector<1x1x32x8xf32> to vector<32x8xf32>
    %cst_101 = arith.constant dense<0.000000e+00> : vector<72x8xf32>
    %94 = tpu.matmul %91, %93, %cst_101 {dimension_numbers = #tpu.dot_dimension_numbers<[1], [0], [0], [1], [0, 0, 1, 1], [], []>} : vector<72x32xf32>, vector<32x8xf32>, vector<72x8xf32> -> vector<72x8xf32>
    %95 = arith.addf %90, %94 : vector<72x8xf32>
    %c14_102 = arith.constant 14 : index
    %c0_103 = arith.constant 0 : index
    %96 = vector.load %arg12[%c14_102, %c0_103] : memref<88x32xf32, #tpu.memory_space<vmem>>, vector<72x32xf32>
    %c0_104 = arith.constant 0 : index
    %c7_105 = arith.constant 7 : index
    %c0_106 = arith.constant 0 : index
    %c0_107 = arith.constant 0 : index
    %97 = vector.load %arg5[%c0_104, %c7_105, %c0_106, %c0_107] : memref<2x9x32x8xf32, #tpu.memory_space<vmem>>, vector<1x1x32x8xf32>
    %98 = vector.shape_cast %97 : vector<1x1x32x8xf32> to vector<32x8xf32>
    %cst_108 = arith.constant dense<0.000000e+00> : vector<72x8xf32>
    %99 = tpu.matmul %96, %98, %cst_108 {dimension_numbers = #tpu.dot_dimension_numbers<[1], [0], [0], [1], [0, 0, 1, 1], [], []>} : vector<72x32xf32>, vector<32x8xf32>, vector<72x8xf32> -> vector<72x8xf32>
    %100 = arith.addf %95, %99 : vector<72x8xf32>
    %c15_109 = arith.constant 15 : index
    %c0_110 = arith.constant 0 : index
    %101 = vector.load %arg12[%c15_109, %c0_110] : memref<88x32xf32, #tpu.memory_space<vmem>>, vector<72x32xf32>
    %c0_111 = arith.constant 0 : index
    %c8_112 = arith.constant 8 : index
    %c0_113 = arith.constant 0 : index
    %c0_114 = arith.constant 0 : index
    %102 = vector.load %arg5[%c0_111, %c8_112, %c0_113, %c0_114] : memref<2x9x32x8xf32, #tpu.memory_space<vmem>>, vector<1x1x32x8xf32>
    %103 = vector.shape_cast %102 : vector<1x1x32x8xf32> to vector<32x8xf32>
    %cst_115 = arith.constant dense<0.000000e+00> : vector<72x8xf32>
    %104 = tpu.matmul %101, %103, %cst_115 {dimension_numbers = #tpu.dot_dimension_numbers<[1], [0], [0], [1], [0, 0, 1, 1], [], []>} : vector<72x32xf32>, vector<32x8xf32>, vector<72x8xf32> -> vector<72x8xf32>
    %105 = arith.addf %100, %104 : vector<72x8xf32>
    %106 = vector.broadcast %0 : vector<72x1xf32> to vector<72x8xf32>
    %107 = arith.mulf %105, %106 : vector<72x8xf32>
    %cst_116 = arith.constant dense<0.000000e+00> : vector<8xf32>
    %108 = vector.multi_reduction <add>, %107, %cst_116 [0] : vector<72x8xf32> to vector<8xf32>
    %109 = vector.shape_cast %108 : vector<8xf32> to vector<1x8xf32>
    %cst_117 = arith.constant 3.125000e-02 : f32
    %110 = vector.broadcast %cst_117 : f32 to vector<1x8xf32>
    %111 = arith.mulf %109, %110 : vector<1x8xf32>
    %112 = vector.broadcast %111 : vector<1x8xf32> to vector<72x8xf32>
    %113 = arith.subf %105, %112 : vector<72x8xf32>
    %114 = vector.broadcast %0 : vector<72x1xf32> to vector<72x8xf32>
    %115 = arith.mulf %113, %114 : vector<72x8xf32>
    %116 = arith.mulf %115, %115 : vector<72x8xf32>
    %cst_118 = arith.constant dense<0.000000e+00> : vector<8xf32>
    %117 = vector.multi_reduction <add>, %116, %cst_118 [0] : vector<72x8xf32> to vector<8xf32>
    %118 = vector.shape_cast %117 : vector<8xf32> to vector<1x8xf32>
    %cst_119 = arith.constant 3.125000e-02 : f32
    %119 = vector.broadcast %cst_119 : f32 to vector<1x8xf32>
    %120 = arith.mulf %118, %119 : vector<1x8xf32>
    %c0_120 = arith.constant 0 : index
    %c0_121 = arith.constant 0 : index
    %c0_122 = arith.constant 0 : index
    %121 = vector.load %arg6[%c0_120, %c0_121, %c0_122] : memref<2x1x8xf32, #tpu.memory_space<vmem>>, vector<1x1x8xf32>
    %122 = vector.shape_cast %121 : vector<1x1x8xf32> to vector<1x8xf32>
    %cst_123 = arith.constant 9.99999974E-6 : f32
    %123 = vector.broadcast %cst_123 : f32 to vector<1x8xf32>
    %124 = arith.addf %120, %123 : vector<1x8xf32>
    %125 = math.rsqrt %124 : vector<1x8xf32>
    %126 = arith.mulf %122, %125 : vector<1x8xf32>
    %127 = vector.broadcast %126 : vector<1x8xf32> to vector<72x8xf32>
    %128 = arith.mulf %115, %127 : vector<72x8xf32>
    %c0_124 = arith.constant 0 : index
    %c0_125 = arith.constant 0 : index
    %c0_126 = arith.constant 0 : index
    %129 = vector.load %arg7[%c0_124, %c0_125, %c0_126] : memref<2x1x8xf32, #tpu.memory_space<vmem>>, vector<1x1x8xf32>
    %130 = vector.shape_cast %129 : vector<1x1x8xf32> to vector<1x8xf32>
    %131 = vector.broadcast %130 : vector<1x8xf32> to vector<72x8xf32>
    %132 = arith.addf %128, %131 : vector<72x8xf32>
    %cst_127 = arith.constant 0.000000e+00 : f32
    %133 = vector.broadcast %cst_127 : f32 to vector<72x8xf32>
    %134 = arith.cmpf oge, %132, %133 : vector<72x8xf32>
    %cst_128 = arith.constant 0.00999999977 : f32
    %135 = vector.broadcast %cst_128 : f32 to vector<72x8xf32>
    %136 = arith.mulf %135, %132 : vector<72x8xf32>
    %137 = arith.select %134, %132, %136 : vector<72x8xi1>, vector<72x8xf32>
    %c0_129 = arith.constant 0 : index
    %c0_130 = arith.constant 0 : index
    %c0_131 = arith.constant 0 : index
    %138 = vector.load %arg8[%c0_129, %c0_130, %c0_131] : memref<2x8x32xf32, #tpu.memory_space<vmem>>, vector<1x8x32xf32>
    %139 = vector.shape_cast %138 : vector<1x8x32xf32> to vector<8x32xf32>
    %cst_132 = arith.constant dense<0.000000e+00> : vector<72x32xf32>
    %140 = tpu.matmul %137, %139, %cst_132 {dimension_numbers = #tpu.dot_dimension_numbers<[1], [0], [0], [1], [0, 0, 1, 1], [], []>} : vector<72x8xf32>, vector<8x32xf32>, vector<72x32xf32> -> vector<72x32xf32>
    %141 = vector.broadcast %0 : vector<72x1xf32> to vector<72x32xf32>
    %142 = arith.mulf %140, %141 : vector<72x32xf32>
    %cst_133 = arith.constant dense<0.000000e+00> : vector<32xf32>
    %143 = vector.multi_reduction <add>, %142, %cst_133 [0] : vector<72x32xf32> to vector<32xf32>
    %144 = vector.shape_cast %143 : vector<32xf32> to vector<1x32xf32>
    %cst_134 = arith.constant 3.125000e-02 : f32
    %145 = vector.broadcast %cst_134 : f32 to vector<1x32xf32>
    %146 = arith.mulf %144, %145 : vector<1x32xf32>
    %147 = vector.broadcast %146 : vector<1x32xf32> to vector<72x32xf32>
    %148 = arith.subf %140, %147 : vector<72x32xf32>
    %149 = vector.broadcast %0 : vector<72x1xf32> to vector<72x32xf32>
    %150 = arith.mulf %148, %149 : vector<72x32xf32>
    %151 = arith.mulf %150, %150 : vector<72x32xf32>
    %cst_135 = arith.constant dense<0.000000e+00> : vector<32xf32>
    %152 = vector.multi_reduction <add>, %151, %cst_135 [0] : vector<72x32xf32> to vector<32xf32>
    %153 = vector.shape_cast %152 : vector<32xf32> to vector<1x32xf32>
    %cst_136 = arith.constant 3.125000e-02 : f32
    %154 = vector.broadcast %cst_136 : f32 to vector<1x32xf32>
    %155 = arith.mulf %153, %154 : vector<1x32xf32>
    %c0_137 = arith.constant 0 : index
    %c0_138 = arith.constant 0 : index
    %c0_139 = arith.constant 0 : index
    %156 = vector.load %arg9[%c0_137, %c0_138, %c0_139] : memref<2x1x32xf32, #tpu.memory_space<vmem>>, vector<1x1x32xf32>
    %157 = vector.shape_cast %156 : vector<1x1x32xf32> to vector<1x32xf32>
    %cst_140 = arith.constant 9.99999974E-6 : f32
    %158 = vector.broadcast %cst_140 : f32 to vector<1x32xf32>
    %159 = arith.addf %155, %158 : vector<1x32xf32>
    %160 = math.rsqrt %159 : vector<1x32xf32>
    %161 = arith.mulf %157, %160 : vector<1x32xf32>
    %162 = vector.broadcast %161 : vector<1x32xf32> to vector<72x32xf32>
    %163 = arith.mulf %150, %162 : vector<72x32xf32>
    %c0_141 = arith.constant 0 : index
    %c0_142 = arith.constant 0 : index
    %c0_143 = arith.constant 0 : index
    %164 = vector.load %arg10[%c0_141, %c0_142, %c0_143] : memref<2x1x32xf32, #tpu.memory_space<vmem>>, vector<1x1x32xf32>
    %165 = vector.shape_cast %164 : vector<1x1x32xf32> to vector<1x32xf32>
    %166 = vector.broadcast %165 : vector<1x32xf32> to vector<72x32xf32>
    %167 = arith.addf %163, %166 : vector<72x32xf32>
    %168 = arith.addf %167, %58 : vector<72x32xf32>
    %169 = vector.broadcast %0 : vector<72x1xf32> to vector<72x32xf32>
    %170 = arith.mulf %168, %169 : vector<72x32xf32>
    %cst_144 = arith.constant 0.000000e+00 : f32
    %171 = vector.broadcast %cst_144 : f32 to vector<72x32xf32>
    %172 = arith.cmpf oge, %170, %171 : vector<72x32xf32>
    %cst_145 = arith.constant 0.00999999977 : f32
    %173 = vector.broadcast %cst_145 : f32 to vector<72x32xf32>
    %174 = arith.mulf %173, %170 : vector<72x32xf32>
    %175 = arith.select %172, %170, %174 : vector<72x32xi1>, vector<72x32xf32>
    %c8_146 = arith.constant 8 : index
    %c0_147 = arith.constant 0 : index
    %176 = vector.load %arg12[%c8_146, %c0_147] : memref<88x32xf32, #tpu.memory_space<vmem>>, vector<72x32xf32>
    tpu.vector_store %arg12[%c8_146, %c0_147], %175 {strides = array<i32>} : memref<88x32xf32, #tpu.memory_space<vmem>>, vector<72x32xf32>,
    %cst_148 = arith.constant 0.000000e+00 : f32
    %177 = vector.broadcast %cst_148 : f32 to vector<72x8xf32>
    %c1_149 = arith.constant 1 : index
    %c0_150 = arith.constant 0 : index
    %178 = vector.load %arg12[%c1_149, %c0_150] : memref<88x32xf32, #tpu.memory_space<vmem>>, vector<72x32xf32>
    %c1_151 = arith.constant 1 : index
    %c0_152 = arith.constant 0 : index
    %c0_153 = arith.constant 0 : index
    %c0_154 = arith.constant 0 : index
    %179 = vector.load %arg5[%c1_151, %c0_152, %c0_153, %c0_154] : memref<2x9x32x8xf32, #tpu.memory_space<vmem>>, vector<1x1x32x8xf32>
    %180 = vector.shape_cast %179 : vector<1x1x32x8xf32> to vector<32x8xf32>
    %cst_155 = arith.constant dense<0.000000e+00> : vector<72x8xf32>
    %181 = tpu.matmul %178, %180, %cst_155 {dimension_numbers = #tpu.dot_dimension_numbers<[1], [0], [0], [1], [0, 0, 1, 1], [], []>} : vector<72x32xf32>, vector<32x8xf32>, vector<72x8xf32> -> vector<72x8xf32>
    %182 = arith.addf %177, %181 : vector<72x8xf32>
    %c2_156 = arith.constant 2 : index
    %c0_157 = arith.constant 0 : index
    %183 = vector.load %arg12[%c2_156, %c0_157] : memref<88x32xf32, #tpu.memory_space<vmem>>, vector<72x32xf32>
    %c1_158 = arith.constant 1 : index
    %c1_159 = arith.constant 1 : index
    %c0_160 = arith.constant 0 : index
    %c0_161 = arith.constant 0 : index
    %184 = vector.load %arg5[%c1_158, %c1_159, %c0_160, %c0_161] : memref<2x9x32x8xf32, #tpu.memory_space<vmem>>, vector<1x1x32x8xf32>
    %185 = vector.shape_cast %184 : vector<1x1x32x8xf32> to vector<32x8xf32>
    %cst_162 = arith.constant dense<0.000000e+00> : vector<72x8xf32>
    %186 = tpu.matmul %183, %185, %cst_162 {dimension_numbers = #tpu.dot_dimension_numbers<[1], [0], [0], [1], [0, 0, 1, 1], [], []>} : vector<72x32xf32>, vector<32x8xf32>, vector<72x8xf32> -> vector<72x8xf32>
    %187 = arith.addf %182, %186 : vector<72x8xf32>
    %c3_163 = arith.constant 3 : index
    %c0_164 = arith.constant 0 : index
    %188 = vector.load %arg12[%c3_163, %c0_164] : memref<88x32xf32, #tpu.memory_space<vmem>>, vector<72x32xf32>
    %c1_165 = arith.constant 1 : index
    %c2_166 = arith.constant 2 : index
    %c0_167 = arith.constant 0 : index
    %c0_168 = arith.constant 0 : index
    %189 = vector.load %arg5[%c1_165, %c2_166, %c0_167, %c0_168] : memref<2x9x32x8xf32, #tpu.memory_space<vmem>>, vector<1x1x32x8xf32>
    %190 = vector.shape_cast %189 : vector<1x1x32x8xf32> to vector<32x8xf32>
    %cst_169 = arith.constant dense<0.000000e+00> : vector<72x8xf32>
    %191 = tpu.matmul %188, %190, %cst_169 {dimension_numbers = #tpu.dot_dimension_numbers<[1], [0], [0], [1], [0, 0, 1, 1], [], []>} : vector<72x32xf32>, vector<32x8xf32>, vector<72x8xf32> -> vector<72x8xf32>
    %192 = arith.addf %187, %191 : vector<72x8xf32>
    %c7_170 = arith.constant 7 : index
    %c0_171 = arith.constant 0 : index
    %193 = vector.load %arg12[%c7_170, %c0_171] : memref<88x32xf32, #tpu.memory_space<vmem>>, vector<72x32xf32>
    %c1_172 = arith.constant 1 : index
    %c3_173 = arith.constant 3 : index
    %c0_174 = arith.constant 0 : index
    %c0_175 = arith.constant 0 : index
    %194 = vector.load %arg5[%c1_172, %c3_173, %c0_174, %c0_175] : memref<2x9x32x8xf32, #tpu.memory_space<vmem>>, vector<1x1x32x8xf32>
    %195 = vector.shape_cast %194 : vector<1x1x32x8xf32> to vector<32x8xf32>
    %cst_176 = arith.constant dense<0.000000e+00> : vector<72x8xf32>
    %196 = tpu.matmul %193, %195, %cst_176 {dimension_numbers = #tpu.dot_dimension_numbers<[1], [0], [0], [1], [0, 0, 1, 1], [], []>} : vector<72x32xf32>, vector<32x8xf32>, vector<72x8xf32> -> vector<72x8xf32>
    %197 = arith.addf %192, %196 : vector<72x8xf32>
    %c8_177 = arith.constant 8 : index
    %c0_178 = arith.constant 0 : index
    %198 = vector.load %arg12[%c8_177, %c0_178] : memref<88x32xf32, #tpu.memory_space<vmem>>, vector<72x32xf32>
    %c1_179 = arith.constant 1 : index
    %c4_180 = arith.constant 4 : index
    %c0_181 = arith.constant 0 : index
    %c0_182 = arith.constant 0 : index
    %199 = vector.load %arg5[%c1_179, %c4_180, %c0_181, %c0_182] : memref<2x9x32x8xf32, #tpu.memory_space<vmem>>, vector<1x1x32x8xf32>
    %200 = vector.shape_cast %199 : vector<1x1x32x8xf32> to vector<32x8xf32>
    %cst_183 = arith.constant dense<0.000000e+00> : vector<72x8xf32>
    %201 = tpu.matmul %198, %200, %cst_183 {dimension_numbers = #tpu.dot_dimension_numbers<[1], [0], [0], [1], [0, 0, 1, 1], [], []>} : vector<72x32xf32>, vector<32x8xf32>, vector<72x8xf32> -> vector<72x8xf32>
    %202 = arith.addf %197, %201 : vector<72x8xf32>
    %c9_184 = arith.constant 9 : index
    %c0_185 = arith.constant 0 : index
    %203 = vector.load %arg12[%c9_184, %c0_185] : memref<88x32xf32, #tpu.memory_space<vmem>>, vector<72x32xf32>
    %c1_186 = arith.constant 1 : index
    %c5_187 = arith.constant 5 : index
    %c0_188 = arith.constant 0 : index
    %c0_189 = arith.constant 0 : index
    %204 = vector.load %arg5[%c1_186, %c5_187, %c0_188, %c0_189] : memref<2x9x32x8xf32, #tpu.memory_space<vmem>>, vector<1x1x32x8xf32>
    %205 = vector.shape_cast %204 : vector<1x1x32x8xf32> to vector<32x8xf32>
    %cst_190 = arith.constant dense<0.000000e+00> : vector<72x8xf32>
    %206 = tpu.matmul %203, %205, %cst_190 {dimension_numbers = #tpu.dot_dimension_numbers<[1], [0], [0], [1], [0, 0, 1, 1], [], []>} : vector<72x32xf32>, vector<32x8xf32>, vector<72x8xf32> -> vector<72x8xf32>
    %207 = arith.addf %202, %206 : vector<72x8xf32>
    %c13_191 = arith.constant 13 : index
    %c0_192 = arith.constant 0 : index
    %208 = vector.load %arg12[%c13_191, %c0_192] : memref<88x32xf32, #tpu.memory_space<vmem>>, vector<72x32xf32>
    %c1_193 = arith.constant 1 : index
    %c6_194 = arith.constant 6 : index
    %c0_195 = arith.constant 0 : index
    %c0_196 = arith.constant 0 : index
    %209 = vector.load %arg5[%c1_193, %c6_194, %c0_195, %c0_196] : memref<2x9x32x8xf32, #tpu.memory_space<vmem>>, vector<1x1x32x8xf32>
    %210 = vector.shape_cast %209 : vector<1x1x32x8xf32> to vector<32x8xf32>
    %cst_197 = arith.constant dense<0.000000e+00> : vector<72x8xf32>
    %211 = tpu.matmul %208, %210, %cst_197 {dimension_numbers = #tpu.dot_dimension_numbers<[1], [0], [0], [1], [0, 0, 1, 1], [], []>} : vector<72x32xf32>, vector<32x8xf32>, vector<72x8xf32> -> vector<72x8xf32>
    %212 = arith.addf %207, %211 : vector<72x8xf32>
    %c14_198 = arith.constant 14 : index
    %c0_199 = arith.constant 0 : index
    %213 = vector.load %arg12[%c14_198, %c0_199] : memref<88x32xf32, #tpu.memory_space<vmem>>, vector<72x32xf32>
    %c1_200 = arith.constant 1 : index
    %c7_201 = arith.constant 7 : index
    %c0_202 = arith.constant 0 : index
    %c0_203 = arith.constant 0 : index
    %214 = vector.load %arg5[%c1_200, %c7_201, %c0_202, %c0_203] : memref<2x9x32x8xf32, #tpu.memory_space<vmem>>, vector<1x1x32x8xf32>
    %215 = vector.shape_cast %214 : vector<1x1x32x8xf32> to vector<32x8xf32>
    %cst_204 = arith.constant dense<0.000000e+00> : vector<72x8xf32>
    %216 = tpu.matmul %213, %215, %cst_204 {dimension_numbers = #tpu.dot_dimension_numbers<[1], [0], [0], [1], [0, 0, 1, 1], [], []>} : vector<72x32xf32>, vector<32x8xf32>, vector<72x8xf32> -> vector<72x8xf32>
    %217 = arith.addf %212, %216 : vector<72x8xf32>
    %c15_205 = arith.constant 15 : index
    %c0_206 = arith.constant 0 : index
    %218 = vector.load %arg12[%c15_205, %c0_206] : memref<88x32xf32, #tpu.memory_space<vmem>>, vector<72x32xf32>
    %c1_207 = arith.constant 1 : index
    %c8_208 = arith.constant 8 : index
    %c0_209 = arith.constant 0 : index
    %c0_210 = arith.constant 0 : index
    %219 = vector.load %arg5[%c1_207, %c8_208, %c0_209, %c0_210] : memref<2x9x32x8xf32, #tpu.memory_space<vmem>>, vector<1x1x32x8xf32>
    %220 = vector.shape_cast %219 : vector<1x1x32x8xf32> to vector<32x8xf32>
    %cst_211 = arith.constant dense<0.000000e+00> : vector<72x8xf32>
    %221 = tpu.matmul %218, %220, %cst_211 {dimension_numbers = #tpu.dot_dimension_numbers<[1], [0], [0], [1], [0, 0, 1, 1], [], []>} : vector<72x32xf32>, vector<32x8xf32>, vector<72x8xf32> -> vector<72x8xf32>
    %222 = arith.addf %217, %221 : vector<72x8xf32>
    %223 = vector.broadcast %0 : vector<72x1xf32> to vector<72x8xf32>
    %224 = arith.mulf %222, %223 : vector<72x8xf32>
    %cst_212 = arith.constant dense<0.000000e+00> : vector<8xf32>
    %225 = vector.multi_reduction <add>, %224, %cst_212 [0] : vector<72x8xf32> to vector<8xf32>
    %226 = vector.shape_cast %225 : vector<8xf32> to vector<1x8xf32>
    %cst_213 = arith.constant 3.125000e-02 : f32
    %227 = vector.broadcast %cst_213 : f32 to vector<1x8xf32>
    %228 = arith.mulf %226, %227 : vector<1x8xf32>
    %229 = vector.broadcast %228 : vector<1x8xf32> to vector<72x8xf32>
    %230 = arith.subf %222, %229 : vector<72x8xf32>
    %231 = vector.broadcast %0 : vector<72x1xf32> to vector<72x8xf32>
    %232 = arith.mulf %230, %231 : vector<72x8xf32>
    %233 = arith.mulf %232, %232 : vector<72x8xf32>
    %cst_214 = arith.constant dense<0.000000e+00> : vector<8xf32>
    %234 = vector.multi_reduction <add>, %233, %cst_214 [0] : vector<72x8xf32> to vector<8xf32>
    %235 = vector.shape_cast %234 : vector<8xf32> to vector<1x8xf32>
    %cst_215 = arith.constant 3.125000e-02 : f32
    %236 = vector.broadcast %cst_215 : f32 to vector<1x8xf32>
    %237 = arith.mulf %235, %236 : vector<1x8xf32>
    %c1_216 = arith.constant 1 : index
    %c0_217 = arith.constant 0 : index
    %c0_218 = arith.constant 0 : index
    %238 = vector.load %arg6[%c1_216, %c0_217, %c0_218] : memref<2x1x8xf32, #tpu.memory_space<vmem>>, vector<1x1x8xf32>
    %239 = vector.shape_cast %238 : vector<1x1x8xf32> to vector<1x8xf32>
    %cst_219 = arith.constant 9.99999974E-6 : f32
    %240 = vector.broadcast %cst_219 : f32 to vector<1x8xf32>
    %241 = arith.addf %237, %240 : vector<1x8xf32>
    %242 = math.rsqrt %241 : vector<1x8xf32>
    %243 = arith.mulf %239, %242 : vector<1x8xf32>
    %244 = vector.broadcast %243 : vector<1x8xf32> to vector<72x8xf32>
    %245 = arith.mulf %232, %244 : vector<72x8xf32>
    %c1_220 = arith.constant 1 : index
    %c0_221 = arith.constant 0 : index
    %c0_222 = arith.constant 0 : index
    %246 = vector.load %arg7[%c1_220, %c0_221, %c0_222] : memref<2x1x8xf32, #tpu.memory_space<vmem>>, vector<1x1x8xf32>
    %247 = vector.shape_cast %246 : vector<1x1x8xf32> to vector<1x8xf32>
    %248 = vector.broadcast %247 : vector<1x8xf32> to vector<72x8xf32>
    %249 = arith.addf %245, %248 : vector<72x8xf32>
    %cst_223 = arith.constant 0.000000e+00 : f32
    %250 = vector.broadcast %cst_223 : f32 to vector<72x8xf32>
    %251 = arith.cmpf oge, %249, %250 : vector<72x8xf32>
    %cst_224 = arith.constant 0.00999999977 : f32
    %252 = vector.broadcast %cst_224 : f32 to vector<72x8xf32>
    %253 = arith.mulf %252, %249 : vector<72x8xf32>
    %254 = arith.select %251, %249, %253 : vector<72x8xi1>, vector<72x8xf32>
    %c1_225 = arith.constant 1 : index
    %c0_226 = arith.constant 0 : index
    %c0_227 = arith.constant 0 : index
    %255 = vector.load %arg8[%c1_225, %c0_226, %c0_227] : memref<2x8x32xf32, #tpu.memory_space<vmem>>, vector<1x8x32xf32>
    %256 = vector.shape_cast %255 : vector<1x8x32xf32> to vector<8x32xf32>
    %cst_228 = arith.constant dense<0.000000e+00> : vector<72x32xf32>
    %257 = tpu.matmul %254, %256, %cst_228 {dimension_numbers = #tpu.dot_dimension_numbers<[1], [0], [0], [1], [0, 0, 1, 1], [], []>} : vector<72x8xf32>, vector<8x32xf32>, vector<72x32xf32> -> vector<72x32xf32>
    %258 = vector.broadcast %0 : vector<72x1xf32> to vector<72x32xf32>
    %259 = arith.mulf %257, %258 : vector<72x32xf32>
    %cst_229 = arith.constant dense<0.000000e+00> : vector<32xf32>
    %260 = vector.multi_reduction <add>, %259, %cst_229 [0] : vector<72x32xf32> to vector<32xf32>
    %261 = vector.shape_cast %260 : vector<32xf32> to vector<1x32xf32>
    %cst_230 = arith.constant 3.125000e-02 : f32
    %262 = vector.broadcast %cst_230 : f32 to vector<1x32xf32>
    %263 = arith.mulf %261, %262 : vector<1x32xf32>
    %264 = vector.broadcast %263 : vector<1x32xf32> to vector<72x32xf32>
    %265 = arith.subf %257, %264 : vector<72x32xf32>
    %266 = vector.broadcast %0 : vector<72x1xf32> to vector<72x32xf32>
    %267 = arith.mulf %265, %266 : vector<72x32xf32>
    %268 = arith.mulf %267, %267 : vector<72x32xf32>
    %cst_231 = arith.constant dense<0.000000e+00> : vector<32xf32>
    %269 = vector.multi_reduction <add>, %268, %cst_231 [0] : vector<72x32xf32> to vector<32xf32>
    %270 = vector.shape_cast %269 : vector<32xf32> to vector<1x32xf32>
    %cst_232 = arith.constant 3.125000e-02 : f32
    %271 = vector.broadcast %cst_232 : f32 to vector<1x32xf32>
    %272 = arith.mulf %270, %271 : vector<1x32xf32>
    %c1_233 = arith.constant 1 : index
    %c0_234 = arith.constant 0 : index
    %c0_235 = arith.constant 0 : index
    %273 = vector.load %arg9[%c1_233, %c0_234, %c0_235] : memref<2x1x32xf32, #tpu.memory_space<vmem>>, vector<1x1x32xf32>
    %274 = vector.shape_cast %273 : vector<1x1x32xf32> to vector<1x32xf32>
    %cst_236 = arith.constant 9.99999974E-6 : f32
    %275 = vector.broadcast %cst_236 : f32 to vector<1x32xf32>
    %276 = arith.addf %272, %275 : vector<1x32xf32>
    %277 = math.rsqrt %276 : vector<1x32xf32>
    %278 = arith.mulf %274, %277 : vector<1x32xf32>
    %279 = vector.broadcast %278 : vector<1x32xf32> to vector<72x32xf32>
    %280 = arith.mulf %267, %279 : vector<72x32xf32>
    %c1_237 = arith.constant 1 : index
    %c0_238 = arith.constant 0 : index
    %c0_239 = arith.constant 0 : index
    %281 = vector.load %arg10[%c1_237, %c0_238, %c0_239] : memref<2x1x32xf32, #tpu.memory_space<vmem>>, vector<1x1x32xf32>
    %282 = vector.shape_cast %281 : vector<1x1x32xf32> to vector<1x32xf32>
    %283 = vector.broadcast %282 : vector<1x32xf32> to vector<72x32xf32>
    %284 = arith.addf %280, %283 : vector<72x32xf32>
    %285 = arith.addf %284, %175 : vector<72x32xf32>
    %286 = vector.broadcast %0 : vector<72x1xf32> to vector<72x32xf32>
    %287 = arith.mulf %285, %286 : vector<72x32xf32>
    %cst_240 = arith.constant 0.000000e+00 : f32
    %288 = vector.broadcast %cst_240 : f32 to vector<72x32xf32>
    %289 = arith.maximumf %287, %288 : vector<72x32xf32>
    %c0_241 = arith.constant 0 : index
    %c0_242 = arith.constant 0 : index
    %290 = vector.load %arg11[%c0_241, %c0_242] : memref<72x32xf32, #tpu.memory_space<vmem>>, vector<72x32xf32>
    tpu.vector_store %arg11[%c0_241, %c0_242], %289 {strides = array<i32>} : memref<72x32xf32, #tpu.memory_space<vmem>>, vector<72x32xf32>,
    return
  }
  func.func @transform_0(%arg0: i32) -> (i32, i32) {
    %c0_i32 = arith.constant 0 : i32
    %c0_i32_0 = arith.constant 0 : i32
    %c0_i32_1 = arith.constant 0 : i32
    return %c0_i32, %c0_i32_0 : i32, i32
  }
  func.func @transform_1(%arg0: i32) -> (i32, i32) {
    %c0_i32 = arith.constant 0 : i32
    %c0_i32_0 = arith.constant 0 : i32
    %c0_i32_1 = arith.constant 0 : i32
    return %c0_i32, %c0_i32_0 : i32, i32
  }
  func.func @transform_2(%arg0: i32) -> (i32, i32, i32) {
    %c0_i32 = arith.constant 0 : i32
    %c0_i32_0 = arith.constant 0 : i32
    %c0_i32_1 = arith.constant 0 : i32
    %c0_i32_2 = arith.constant 0 : i32
    return %c0_i32, %c0_i32_0, %c0_i32_1 : i32, i32, i32
  }
  func.func @transform_3(%arg0: i32) -> (i32, i32) {
    %c0_i32 = arith.constant 0 : i32
    %c0_i32_0 = arith.constant 0 : i32
    %c0_i32_1 = arith.constant 0 : i32
    return %c0_i32, %c0_i32_0 : i32, i32
  }
  func.func @transform_4(%arg0: i32) -> (i32, i32, i32, i32) {
    %c0_i32 = arith.constant 0 : i32
    %c0_i32_0 = arith.constant 0 : i32
    %c0_i32_1 = arith.constant 0 : i32
    %c0_i32_2 = arith.constant 0 : i32
    %c0_i32_3 = arith.constant 0 : i32
    return %c0_i32, %c0_i32_0, %c0_i32_1, %c0_i32_2 : i32, i32, i32, i32
  }
  func.func @transform_5(%arg0: i32) -> (i32, i32, i32) {
    %c0_i32 = arith.constant 0 : i32
    %c0_i32_0 = arith.constant 0 : i32
    %c0_i32_1 = arith.constant 0 : i32
    %c0_i32_2 = arith.constant 0 : i32
    return %c0_i32, %c0_i32_0, %c0_i32_1 : i32, i32, i32
  }
  func.func @transform_6(%arg0: i32) -> (i32, i32, i32) {
    %c0_i32 = arith.constant 0 : i32
    %c0_i32_0 = arith.constant 0 : i32
    %c0_i32_1 = arith.constant 0 : i32
    %c0_i32_2 = arith.constant 0 : i32
    return %c0_i32, %c0_i32_0, %c0_i32_1 : i32, i32, i32
  }
  func.func @transform_7(%arg0: i32) -> (i32, i32, i32) {
    %c0_i32 = arith.constant 0 : i32
    %c0_i32_0 = arith.constant 0 : i32
    %c0_i32_1 = arith.constant 0 : i32
    %c0_i32_2 = arith.constant 0 : i32
    return %c0_i32, %c0_i32_0, %c0_i32_1 : i32, i32, i32
  }
  func.func @transform_8(%arg0: i32) -> (i32, i32, i32) {
    %c0_i32 = arith.constant 0 : i32
    %c0_i32_0 = arith.constant 0 : i32
    %c0_i32_1 = arith.constant 0 : i32
    %c0_i32_2 = arith.constant 0 : i32
    return %c0_i32, %c0_i32_0, %c0_i32_1 : i32, i32, i32
  }
  func.func @transform_9(%arg0: i32) -> (i32, i32, i32) {
    %c0_i32 = arith.constant 0 : i32
    %c0_i32_0 = arith.constant 0 : i32
    %c0_i32_1 = arith.constant 0 : i32
    %c0_i32_2 = arith.constant 0 : i32
    return %c0_i32, %c0_i32_0, %c0_i32_1 : i32, i32, i32
  }
  func.func @transform_10(%arg0: i32) -> (i32, i32) {
    %c0_i32 = arith.constant 0 : i32
    %c0_i32_0 = arith.constant 0 : i32
    %c0_i32_1 = arith.constant 0 : i32
    return %c0_i32, %c0_i32_0 : i32, i32
  }
}

</mosaic_0001>

<llo_original>
// kernel: encoder_forward.3
$region0: #{encoder_forward.3}
  #allocation0 [shape = 'u32[]', space=smem, size = 0x4, offset = 0x4, fixed_abs, tag = 'smem constant byte address 0x4 - core index']
  #allocation1 [shape = 'u32[144,128]{1,0:T(1,128)}', space=vmem, size = 0x12000, scoped, tag = 'internal scratch']
  %s0 = inlined_call_operand.hbm [shape: bf16[184,16], index: 0, kind: input, shape index: {}]
  %s1 = inlined_call_operand.hbm [shape: bf16[4,16,16], index: 1, kind: input, shape index: {}]
  %s2 = inlined_call_operand.hbm [shape: f32[1,16], index: 2, kind: input, shape index: {}]
  %s3 = inlined_call_operand.hbm [shape: f32[168,16], index: 3, kind: output, shape index: {}]
  %s4 = sld [smem:[#allocation0]]
  $region34: #{encoder_forward.3} parent=0
    _
  %s6 = ssub.s32 1, %s4
  %s7 = scalar_select 0, %s6, %s4
  $region1: #{encoder_forward.3} parent=0
    #allocation2 [shape = 'u8[47104]{0}', space=vmem, size = 0xb800, scoped, tag = 'input window, operand 0, single buffered']
    #allocation3 [shape = 's32[1]{0}', space=sflag, size = 0x4, scoped, tag = 'scoped memory for encoder_forward.3']
    #allocation4 [shape = 's32[1]{0}', space=sflag, size = 0x4, scoped, tag = 'scoped memory for encoder_forward.3']
    #allocation5 [shape = 'u8[16384]{0}', space=vmem, size = 0x4000, scoped, tag = 'input window, operand 1, single buffered']
    #allocation6 [shape = 's32[1]{0}', space=sflag, size = 0x4, scoped, tag = 'scoped memory for encoder_forward.3']
    #allocation7 [shape = 'u8[512]{0}', space=vmem, size = 0x400, scoped, tag = 'input window, operand 2, single buffered']
    #allocation8 [shape = 'u8[86016]{0}', space=vmem, size = 0x15000, scoped, tag = 'output window, operand 0, single buffered']
    %8 = vsyncpa [#allocation3], 0
    %9 = vsyncpa [#allocation6], 0
    %10 = vsyncpa [#allocation4], 0
    // Predicated region
    $region2: #{encoder_forward.3} parent=1 // pred_check
      _
    $region3: #{encoder_forward.3} parent=1 // pred_check_branch
      %12 = sbr.rel (0) target = $region5
    $region4: #{encoder_forward.3} parent=1 // pred_region
      %s14 = ssub.s32 1472, 1472
      %15 = vsyncadd [#allocation3], %s14
      %s16 = sshll.u32 [#allocation2], 4
      %s17 = int_to_ptr.vmem [resolvable:$true] %s16
      %22 = dma.hbm_to_vmem [thread:$0]  %s0, 1472, %s17, [#allocation3], 64, 64, 4
    $region5: #{encoder_forward.3} parent=1 // pred_fallthru
      _
    // Predicated region
    $region6: #{encoder_forward.3} parent=1 // pred_check
      _
    $region7: #{encoder_forward.3} parent=1 // pred_check_branch
      %24 = sbr.rel (0) target = $region9
    $region8: #{encoder_forward.3} parent=1 // pred_region
      %s26 = ssub.s32 512, 512
      %27 = vsyncadd [#allocation6], %s26
      %s28 = sshll.u32 [#allocation5], 4
      %s29 = int_to_ptr.vmem [resolvable:$true] %s28
      %34 = dma.hbm_to_vmem [thread:$0]  %s1, 512, %s29, [#allocation6], 64, 64, 4
    $region9: #{encoder_forward.3} parent=1 // pred_fallthru
      _
    // Predicated region
    $region10: #{encoder_forward.3} parent=1 // pred_check
      _
    $region11: #{encoder_forward.3} parent=1 // pred_check_branch
      %36 = sbr.rel (0) target = $region13
    $region12: #{encoder_forward.3} parent=1 // pred_region
      %s38 = ssub.s32 16, 16
      %39 = vsyncadd [#allocation6], %s38
      %s41 = sshll.u32 [#allocation7], 4
      %s42 = int_to_ptr.vmem [resolvable:$true] %s41
      %44 = dma.hbm_to_vmem [thread:$0]  %s2, 16, %s42, [#allocation6]
    $region13: #{encoder_forward.3} parent=1 // pred_fallthru
      _
    // Predicated region
    $region14: #{encoder_forward.3} parent=1 // pred_check
      _
    $region15: #{encoder_forward.3} parent=1 // pred_check_branch
      %46 = sbr.rel (0) target = $region17
    $region16: #{encoder_forward.3} parent=1 // pred_region
      %47 = dma.done [#allocation3], 1472
    $region17: #{encoder_forward.3} parent=1 // pred_fallthru
      _
    // Predicated region
    $region18: #{encoder_forward.3} parent=1 // pred_check
      _
    $region19: #{encoder_forward.3} parent=1 // pred_check_branch
      %49 = sbr.rel (0) target = $region21
    $region20: #{encoder_forward.3} parent=1 // pred_region
      %50 = dma.done [#allocation6], 512
    $region21: #{encoder_forward.3} parent=1 // pred_fallthru
      _
    // Predicated region
    $region22: #{encoder_forward.3} parent=1 // pred_check
      _
    $region23: #{encoder_forward.3} parent=1 // pred_check_branch
      %52 = sbr.rel (0) target = $region25
    $region24: #{encoder_forward.3} parent=1 // pred_region
      %53 = dma.done [#allocation6], 16
    $region25: #{encoder_forward.3} parent=1 // pred_fallthru
      _
    %v55 = vld [vmem:[#allocation2] sm:$0xf]
    %v56 = vld [vmem:[#allocation2 + $0x4] sm:$0xf]
    %v57 = vld [vmem:[#allocation2 + $0x8] sm:$0xf]
    %v58 = vld [vmem:[#allocation2 + $0xc] sm:$0xf]
    %v59 = vld [vmem:[#allocation2 + $0x10] sm:$0xf]
    %v60 = vld [vmem:[#allocation2 + $0x14] sm:$0xf]
    %v61 = vld [vmem:[#allocation2 + $0x18] sm:$0xf]
    %v62 = vld [vmem:[#allocation2 + $0x1c] sm:$0xf]
    %v63 = vld [vmem:[#allocation2 + $0x20] sm:$0xf]
    %v64 = vld [vmem:[#allocation2 + $0x24] sm:$0xf]
    %v65 = vld [vmem:[#allocation2 + $0x28] sm:$0xf]
    %v66 = vld [vmem:[#allocation2 + $0x2c] sm:$0xf]
    %v67 = vld [vmem:[#allocation2 + $0x30] sm:$0xf]
    %v68 = vld [vmem:[#allocation2 + $0x34] sm:$0xf]
    %v69 = vld [vmem:[#allocation2 + $0x38] sm:$0xf]
    %v70 = vld [vmem:[#allocation2 + $0x3c] sm:$0xf]
    %v71 = vld [vmem:[#allocation2 + $0x40] sm:$0xf]
    %v72 = vld [vmem:[#allocation2 + $0x44] sm:$0xf]
    %v73 = vld [vmem:[#allocation2 + $0x48] sm:$0xf]
    %v74 = vld [vmem:[#allocation2 + $0x4c] sm:$0xf]
    %v75 = vld [vmem:[#allocation2 + $0x50] sm:$0xf]
    %v76 = vld [vmem:[#allocation5] sm:$0xf]
    %v77 = vld [vmem:[#allocation5 + $0x4] sm:$0xf]
    %v78 = vld [vmem:[#allocation2 + $0x54] sm:$0x1]
    %s79 = scalar_lea.vmem [#allocation5], 8
    %v80 = vld [vmem:[%s79] sm:$0xf]
    %v81 = vld [vmem:[%s79 + $0x4] sm:$0xf]
    %v104 = vunpack.c.l.b16 %v55
    %v105 = vunpack.c.l.b16 %v56
    %v106 = vunpack.c.l.b16 %v57
    %v107 = vunpack.c.l.b16 %v58
    %v108 = vunpack.c.l.b16 %v59
    %v109 = vunpack.c.l.b16 %v60
    %v110 = vunpack.c.l.b16 %v61
    %v111 = vunpack.c.l.b16 %v62
    %v112 = vunpack.c.l.b16 %v63
    %v113 = vunpack.c.l.b16 %v64
    %v114 = vunpack.c.l.b16 %v65
    %v115 = vunpack.c.l.b16 %v66
    %v116 = vunpack.c.l.b16 %v67
    %v117 = vunpack.c.l.b16 %v68
    %v118 = vunpack.c.l.b16 %v69
    %v119 = vunpack.c.l.b16 %v70
    %v120 = vunpack.c.l.b16 %v71
    %v121 = vunpack.c.l.b16 %v72
    %v122 = vunpack.c.l.b16 %v73
    %v123 = vunpack.c.l.b16 %v74
    %v124 = vunpack.c.l.b16 %v75
    %v125 = vunpack.c.l.b16 %v78
    %v126 = vpack.c.b16 %v105, %v104
    %v127 = vpack.c.b16 %v107, %v106
    %v128 = vpack.c.b16 %v109, %v108
    %v129 = vpack.c.b16 %v111, %v110
    %v130 = vpack.c.b16 %v113, %v112
    %v131 = vpack.c.b16 %v115, %v114
    %v132 = vpack.c.b16 %v117, %v116
    %v133 = vpack.c.b16 %v119, %v118
    %v134 = vpack.c.b16 %v121, %v120
    %v135 = vpack.c.b16 %v123, %v122
    %v136 = vpack.c.b16 %v125, %v124
    %vm137 = vsmask.f32 7424
    %v139 = vshrl.u32 %v126, 16
    %v141 = vshll.u32 %v126, 16
    %v143 = vrot.slane %v141, 1
    %v144 = vor.u32 %v139, %v143
    %v146 = vshll.u32 %v127, 16
    %v148 = vrot.slane %v146, 1
    %v149 = vsel %vm137, %v144, %v148
    %v150 = vshrl.u32 %v127, 16
    %v152 = vor.u32 %v150, %v148
    %v154 = vshll.u32 %v128, 16
    %v156 = vrot.slane %v154, 1
    %v157 = vsel %vm137, %v152, %v156
    %v158 = vshrl.u32 %v128, 16
    %v160 = vor.u32 %v158, %v156
    %v162 = vshll.u32 %v129, 16
    %v164 = vrot.slane %v162, 1
    %v165 = vsel %vm137, %v160, %v164
    %v166 = vshrl.u32 %v129, 16
    %v168 = vor.u32 %v166, %v164
    %v170 = vshll.u32 %v130, 16
    %v172 = vrot.slane %v170, 1
    %v173 = vsel %vm137, %v168, %v172
    %v174 = vshrl.u32 %v130, 16
    %v176 = vor.u32 %v174, %v172
    %v178 = vshll.u32 %v131, 16
    %v180 = vrot.slane %v178, 1
    %v181 = vsel %vm137, %v176, %v180
    %v182 = vshrl.u32 %v131, 16
    %v184 = vor.u32 %v182, %v180
    %v186 = vshll.u32 %v132, 16
    %v188 = vrot.slane %v186, 1
    %v189 = vsel %vm137, %v184, %v188
    %v190 = vshrl.u32 %v132, 16
    %v192 = vor.u32 %v190, %v188
    %v194 = vshll.u32 %v133, 16
    %v196 = vrot.slane %v194, 1
    %v197 = vsel %vm137, %v192, %v196
    %v198 = vshrl.u32 %v133, 16
    %v200 = vor.u32 %v198, %v196
    %v202 = vshll.u32 %v134, 16
    %v204 = vrot.slane %v202, 1
    %v205 = vsel %vm137, %v200, %v204
    %v206 = vshrl.u32 %v134, 16
    %v208 = vor.u32 %v206, %v204
    %v210 = vshll.u32 %v135, 16
    %v212 = vrot.slane %v210, 1
    %v213 = vsel %vm137, %v208, %v212
    %v214 = vshrl.u32 %v135, 16
    %v216 = vor.u32 %v214, %v212
    %v218 = vshll.u32 %v136, 16
    %v220 = vrot.slane %v218, 1
    %v221 = vsel %vm137, %v216, %v220
    %v222 = vshrl.u32 %v136, 16
    %v224 = vor.u32 %v222, %v220
    %v227 = vunpack.c.l.b16 %v80
    %v228 = vunpack.c.l.b16 %v81
    %v229 = vpack.c.b16 %v228, %v227
    %vm231 = vcmask 130048
    %v233 = vsel %vm231, %v149, 0
    %v236 = vsel %vm231, %v157, 0
    %v239 = vsel %vm231, %v165, 0
    %v242 = vsel %vm231, %v173, 0
    %v245 = vsel %vm231, %v181, 0
    %v248 = vsel %vm231, %v189, 0
    %v251 = vsel %vm231, %v197, 0
    %v254 = vsel %vm231, %v205, 0
    %v257 = vsel %vm231, %v213, 0
    %v260 = vsel %vm231, %v221, 0
    %v263 = vsel %vm231, %v224, 0
    %265 = vmatprep.subr.bf16.mxu0 0
    %266 = vmatpush1.bf16.msra.mxu0 %v229
    %267 = vmatprep.subr.bf16.mxu0 0
    %268 = vmatpush1.bf16.msra.mxu0 0
    %269 = vmatprep.subr.bf16.mxu0 0
    %270 = vmatpush1.bf16.msra.mxu0 0
    %271 = vmatprep.subr.bf16.mxu0 0
    %272 = vmatpush1.bf16.msra.mxu0 0
    %273 = vmatprep.subr.bf16.mxu0 0
    %274 = vmatpush1.bf16.msra.mxu0 0
    %275 = vmatprep.subr.bf16.mxu0 0
    %276 = vmatpush1.bf16.msra.mxu0 0
    %277 = vmatprep.subr.bf16.mxu0 0
    %278 = vmatpush1.bf16.msra.mxu0 0
    %279 = vmatprep.subr.bf16.mxu0 0
    %280 = vmatpush1.bf16.msra.mxu0 0
    %281 = vmatprep.subr.bf16.mxu0 0
    %282 = vmatpush1.bf16.msra.mxu0 0
    %283 = vmatprep.subr.bf16.mxu0 0
    %284 = vmatpush1.bf16.msra.mxu0 0
    %285 = vmatprep.subr.bf16.mxu0 0
    %286 = vmatpush1.bf16.msra.mxu0 0
    %287 = vmatprep.subr.bf16.mxu0 0
    %288 = vmatpush1.bf16.msra.mxu0 0
    %289 = vmatprep.subr.bf16.mxu0 0
    %290 = vmatpush1.bf16.msra.mxu0 0
    %291 = vmatprep.subr.bf16.mxu0 0
    %292 = vmatpush1.bf16.msra.mxu0 0
    %293 = vmatprep.subr.bf16.mxu0 0
    %294 = vmatpush1.bf16.msra.mxu0 0
    %295 = vmatprep.subr.bf16.mxu0 0
    %296 = vmatpush1.bf16.msra.mxu0 0
    %297 = vmatprep.mubr.bf16.mxu0 0
    %298 = vmatmul.mubr.bf16.gmra.mrb[0].mxu0 %v233
    %v299 = vpop.f32.mrb[0].mxu0
    %v300 = vadd.f32 0.0, %v299
    %v301 = vpop.f32.mrb[0].mxu0
    %v302 = vpop.f32.mrb[0].mxu0
    %v303 = vadd.f32 0.0, %v302
    %v304 = vpop.f32.mrb[0].mxu0
    %305 = vmatprep.mubr.bf16.mxu0 0
    %306 = vmatmul.mubr.bf16.gmra.mrb[0].mxu0 %v236
    %v307 = vpop.f32.mrb[0].mxu0
    %v308 = vadd.f32 0.0, %v307
    %v309 = vpop.f32.mrb[0].mxu0
    %v310 = vpop.f32.mrb[0].mxu0
    %v311 = vadd.f32 0.0, %v310
    %v312 = vpop.f32.mrb[0].mxu0
    %313 = vmatprep.mubr.bf16.mxu0 0
    %314 = vmatmul.mubr.bf16.gmra.mrb[0].mxu0 %v239
    %v315 = vpop.f32.mrb[0].mxu0
    %v316 = vadd.f32 0.0, %v315
    %v317 = vpop.f32.mrb[0].mxu0
    %v318 = vpop.f32.mrb[0].mxu0
    %v319 = vadd.f32 0.0, %v318
    %v320 = vpop.f32.mrb[0].mxu0
    %321 = vmatprep.mubr.bf16.mxu0 0
    %322 = vmatmul.mubr.bf16.gmra.mrb[0].mxu0 %v242
    %v323 = vpop.f32.mrb[0].mxu0
    %v324 = vadd.f32 0.0, %v323
    %v325 = vpop.f32.mrb[0].mxu0
    %v326 = vpop.f32.mrb[0].mxu0
    %v327 = vadd.f32 0.0, %v326
    %v328 = vpop.f32.mrb[0].mxu0
    %329 = vmatprep.mubr.bf16.mxu0 0
    %330 = vmatmul.mubr.bf16.gmra.mrb[0].mxu0 %v245
    %v331 = vpop.f32.mrb[0].mxu0
    %v332 = vadd.f32 0.0, %v331
    %v333 = vpop.f32.mrb[0].mxu0
    %v334 = vpop.f32.mrb[0].mxu0
    %v335 = vadd.f32 0.0, %v334
    %v336 = vpop.f32.mrb[0].mxu0
    %337 = vmatprep.mubr.bf16.mxu0 0
    %338 = vmatmul.mubr.bf16.gmra.mrb[0].mxu0 %v248
    %v339 = vpop.f32.mrb[0].mxu0
    %v340 = vadd.f32 0.0, %v339
    %v341 = vpop.f32.mrb[0].mxu0
    %v342 = vpop.f32.mrb[0].mxu0
    %v343 = vadd.f32 0.0, %v342
    %v344 = vpop.f32.mrb[0].mxu0
    %345 = vmatprep.mubr.bf16.mxu0 0
    %346 = vmatmul.mubr.bf16.gmra.mrb[0].mxu0 %v251
    %v347 = vpop.f32.mrb[0].mxu0
    %v348 = vadd.f32 0.0, %v347
    %v349 = vpop.f32.mrb[0].mxu0
    %v350 = vpop.f32.mrb[0].mxu0
    %v351 = vadd.f32 0.0, %v350
    %v352 = vpop.f32.mrb[0].mxu0
    %353 = vmatprep.mubr.bf16.mxu0 0
    %354 = vmatmul.mubr.bf16.gmra.mrb[0].mxu0 %v254
    %v355 = vpop.f32.mrb[0].mxu0
    %v356 = vadd.f32 0.0, %v355
    %v357 = vpop.f32.mrb[0].mxu0
    %v358 = vpop.f32.mrb[0].mxu0
    %v359 = vadd.f32 0.0, %v358
    %v360 = vpop.f32.mrb[0].mxu0
    %361 = vmatprep.mubr.bf16.mxu0 0
    %362 = vmatmul.mubr.bf16.gmra.mrb[0].mxu0 %v257
    %v363 = vpop.f32.mrb[0].mxu0
    %v364 = vadd.f32 0.0, %v363
    %v365 = vpop.f32.mrb[0].mxu0
    %v366 = vpop.f32.mrb[0].mxu0
    %v367 = vadd.f32 0.0, %v366
    %v368 = vpop.f32.mrb[0].mxu0
    %369 = vmatprep.mubr.bf16.mxu0 0
    %370 = vmatmul.mubr.bf16.gmra.mrb[0].mxu0 %v260
    %v371 = vpop.f32.mrb[0].mxu0
    %v372 = vadd.f32 0.0, %v371
    %v373 = vpop.f32.mrb[0].mxu0
    %v374 = vpop.f32.mrb[0].mxu0
    %v375 = vadd.f32 0.0, %v374
    %v376 = vpop.f32.mrb[0].mxu0
    %377 = vmatprep.mubr.bf16.mxu0 0
    %378 = vmatmul.mubr.bf16.gmra.mrb[0].mxu0 %v263
    %v379 = vpop.f32.mrb[0].mxu0
    %v380 = vadd.f32 0.0, %v379
    %v381 = vpop.f32.mrb[0].mxu0
    %v382 = vpop.f32.mrb[0].mxu0
    %v383 = vpop.f32.mrb[0].mxu0
    %384 = vdwg.mxu0
    %v385 = vpack.c.b16 %v124, %v124
    %v388 = vunpack.c.l.b16 %v76
    %v389 = vunpack.c.l.b16 %v77
    %v390 = vpack.c.b16 %v389, %v388
    %v392 = vsel %vm231, %v126, 0
    %v394 = vsel %vm231, %v127, 0
    %v396 = vsel %vm231, %v128, 0
    %v398 = vsel %vm231, %v129, 0
    %v400 = vsel %vm231, %v130, 0
    %v402 = vsel %vm231, %v131, 0
    %v404 = vsel %vm231, %v132, 0
    %v406 = vsel %vm231, %v133, 0
    %v408 = vsel %vm231, %v134, 0
    %v410 = vsel %vm231, %v135, 0
    %v413 = vsel %vm231, %v385, 0
    %415 = vmatprep.subr.bf16.mxu0 0
    %416 = vmatpush1.bf16.msra.mxu0 %v390
    %417 = vmatprep.subr.bf16.mxu0 0
    %418 = vmatpush1.bf16.msra.mxu0 0
    %419 = vmatprep.subr.bf16.mxu0 0
    %420 = vmatpush1.bf16.msra.mxu0 0
    %421 = vmatprep.subr.bf16.mxu0 0
    %422 = vmatpush1.bf16.msra.mxu0 0
    %423 = vmatprep.subr.bf16.mxu0 0
    %424 = vmatpush1.bf16.msra.mxu0 0
    %425 = vmatprep.subr.bf16.mxu0 0
    %426 = vmatpush1.bf16.msra.mxu0 0
    %427 = vmatprep.subr.bf16.mxu0 0
    %428 = vmatpush1.bf16.msra.mxu0 0
    %429 = vmatprep.subr.bf16.mxu0 0
    %430 = vmatpush1.bf16.msra.mxu0 0
    %431 = vmatprep.subr.bf16.mxu0 0
    %432 = vmatpush1.bf16.msra.mxu0 0
    %433 = vmatprep.subr.bf16.mxu0 0
    %434 = vmatpush1.bf16.msra.mxu0 0
    %435 = vmatprep.subr.bf16.mxu0 0
    %436 = vmatpush1.bf16.msra.mxu0 0
    %437 = vmatprep.subr.bf16.mxu0 0
    %438 = vmatpush1.bf16.msra.mxu0 0
    %439 = vmatprep.subr.bf16.mxu0 0
    %440 = vmatpush1.bf16.msra.mxu0 0
    %441 = vmatprep.subr.bf16.mxu0 0
    %442 = vmatpush1.bf16.msra.mxu0 0
    %443 = vmatprep.subr.bf16.mxu0 0
    %444 = vmatpush1.bf16.msra.mxu0 0
    %445 = vmatprep.subr.bf16.mxu0 0
    %446 = vmatpush1.bf16.msra.mxu0 0
    %447 = vmatprep.mubr.bf16.mxu0 0
    %448 = vmatmul.mubr.bf16.gmra.mrb[0].mxu0 %v392
    %v449 = vpop.f32.mrb[0].mxu0
    %v450 = vadd.f32 %v300, %v449
    %v451 = vpop.f32.mrb[0].mxu0
    %v452 = vpop.f32.mrb[0].mxu0
    %v453 = vadd.f32 %v303, %v452
    %v454 = vpop.f32.mrb[0].mxu0
    %455 = vmatprep.mubr.bf16.mxu0 0
    %456 = vmatmul.mubr.bf16.gmra.mrb[0].mxu0 %v394
    %v457 = vpop.f32.mrb[0].mxu0
    %v458 = vadd.f32 %v308, %v457
    %v459 = vpop.f32.mrb[0].mxu0
    %v460 = vpop.f32.mrb[0].mxu0
    %v461 = vadd.f32 %v311, %v460
    %v462 = vpop.f32.mrb[0].mxu0
    %463 = vmatprep.mubr.bf16.mxu0 0
    %464 = vmatmul.mubr.bf16.gmra.mrb[0].mxu0 %v396
    %v465 = vpop.f32.mrb[0].mxu0
    %v466 = vadd.f32 %v316, %v465
    %v467 = vpop.f32.mrb[0].mxu0
    %v468 = vpop.f32.mrb[0].mxu0
    %v469 = vadd.f32 %v319, %v468
    %v470 = vpop.f32.mrb[0].mxu0
    %471 = vmatprep.mubr.bf16.mxu0 0
    %472 = vmatmul.mubr.bf16.gmra.mrb[0].mxu0 %v398
    %v473 = vpop.f32.mrb[0].mxu0
    %v474 = vadd.f32 %v324, %v473
    %v475 = vpop.f32.mrb[0].mxu0
    %v476 = vpop.f32.mrb[0].mxu0
    %v477 = vadd.f32 %v327, %v476
    %v478 = vpop.f32.mrb[0].mxu0
    %479 = vmatprep.mubr.bf16.mxu0 0
    %480 = vmatmul.mubr.bf16.gmra.mrb[0].mxu0 %v400
    %v481 = vpop.f32.mrb[0].mxu0
    %v482 = vadd.f32 %v332, %v481
    %v483 = vpop.f32.mrb[0].mxu0
    %v484 = vpop.f32.mrb[0].mxu0
    %v485 = vadd.f32 %v335, %v484
    %v486 = vpop.f32.mrb[0].mxu0
    %487 = vmatprep.mubr.bf16.mxu0 0
    %488 = vmatmul.mubr.bf16.gmra.mrb[0].mxu0 %v402
    %v489 = vpop.f32.mrb[0].mxu0
    %v490 = vadd.f32 %v340, %v489
    %v491 = vpop.f32.mrb[0].mxu0
    %v492 = vpop.f32.mrb[0].mxu0
    %v493 = vadd.f32 %v343, %v492
    %v494 = vpop.f32.mrb[0].mxu0
    %495 = vmatprep.mubr.bf16.mxu0 0
    %496 = vmatmul.mubr.bf16.gmra.mrb[0].mxu0 %v404
    %v497 = vpop.f32.mrb[0].mxu0
    %v498 = vadd.f32 %v348, %v497
    %v499 = vpop.f32.mrb[0].mxu0
    %v500 = vpop.f32.mrb[0].mxu0
    %v501 = vadd.f32 %v351, %v500
    %v502 = vpop.f32.mrb[0].mxu0
    %503 = vmatprep.mubr.bf16.mxu0 0
    %504 = vmatmul.mubr.bf16.gmra.mrb[0].mxu0 %v406
    %v505 = vpop.f32.mrb[0].mxu0
    %v506 = vadd.f32 %v356, %v505
    %v507 = vpop.f32.mrb[0].mxu0
    %v508 = vpop.f32.mrb[0].mxu0
    %v509 = vadd.f32 %v359, %v508
    %v510 = vpop.f32.mrb[0].mxu0
    %511 = vmatprep.mubr.bf16.mxu0 0
    %512 = vmatmul.mubr.bf16.gmra.mrb[0].mxu0 %v408
    %v513 = vpop.f32.mrb[0].mxu0
    %v514 = vadd.f32 %v364, %v513
    %v515 = vpop.f32.mrb[0].mxu0
    %v516 = vpop.f32.mrb[0].mxu0
    %v517 = vadd.f32 %v367, %v516
    %v518 = vpop.f32.mrb[0].mxu0
    %519 = vmatprep.mubr.bf16.mxu0 0
    %520 = vmatmul.mubr.bf16.gmra.mrb[0].mxu0 %v410
    %v521 = vpop.f32.mrb[0].mxu0
    %v522 = vadd.f32 %v372, %v521
    %v523 = vpop.f32.mrb[0].mxu0
    %v524 = vpop.f32.mrb[0].mxu0
    %v525 = vadd.f32 %v375, %v524
    %v526 = vpop.f32.mrb[0].mxu0
    %527 = vmatprep.mubr.bf16.mxu0 0
    %528 = vmatmul.mubr.bf16.gmra.mrb[0].mxu0 %v413
    %v529 = vpop.f32.mrb[0].mxu0
    %v530 = vadd.f32 %v380, %v529
    %v531 = vpop.f32.mrb[0].mxu0
    %v532 = vpop.f32.mrb[0].mxu0
    %v533 = vpop.f32.mrb[0].mxu0
    %534 = vdwg.mxu0
    %v535 = vld [vmem:[#allocation2 + $0x4] sm:$0xf]
    %v536 = vld [vmem:[#allocation2 + $0x8] sm:$0xf]
    %v537 = vld [vmem:[#allocation2 + $0xc] sm:$0xf]
    %v538 = vld [vmem:[#allocation2 + $0x10] sm:$0xf]
    %v539 = vld [vmem:[#allocation2 + $0x14] sm:$0xf]
    %v540 = vld [vmem:[#allocation2 + $0x18] sm:$0xf]
    %v541 = vld [vmem:[#allocation2 + $0x1c] sm:$0xf]
    %v542 = vld [vmem:[#allocation2 + $0x20] sm:$0xf]
    %v543 = vld [vmem:[#allocation2 + $0x24] sm:$0xf]
    %v544 = vld [vmem:[#allocation2 + $0x28] sm:$0xf]
    %v545 = vld [vmem:[#allocation2 + $0x2c] sm:$0xf]
    %v546 = vld [vmem:[#allocation2 + $0x30] sm:$0xf]
    %v547 = vld [vmem:[#allocation2 + $0x34] sm:$0xf]
    %v548 = vld [vmem:[#allocation2 + $0x38] sm:$0xf]
    %v549 = vld [vmem:[#allocation2 + $0x3c] sm:$0xf]
    %v550 = vld [vmem:[#allocation2 + $0x40] sm:$0xf]
    %v551 = vld [vmem:[#allocation2 + $0x44] sm:$0xf]
    %v552 = vld [vmem:[#allocation2 + $0x48] sm:$0xf]
    %v553 = vld [vmem:[#allocation2 + $0x4c] sm:$0xf]
    %v554 = vld [vmem:[#allocation2 + $0x50] sm:$0xf]
    %v555 = vld [vmem:[#allocation2 + $0x54] sm:$0xf]
    %v556 = vld [vmem:[#allocation2 + $0x58] sm:$0x1]
    %s557 = scalar_lea.vmem [#allocation5], 16
    %v558 = vld [vmem:[%s557] sm:$0xf]
    %v559 = vld [vmem:[%s557 + $0x4] sm:$0xf]
    %v582 = vunpack.c.l.b16 %v535
    %v583 = vunpack.c.l.b16 %v536
    %v584 = vunpack.c.l.b16 %v537
    %v585 = vunpack.c.l.b16 %v538
    %v586 = vunpack.c.l.b16 %v539
    %v587 = vunpack.c.l.b16 %v540
    %v588 = vunpack.c.l.b16 %v541
    %v589 = vunpack.c.l.b16 %v542
    %v590 = vunpack.c.l.b16 %v543
    %v591 = vunpack.c.l.b16 %v544
    %v592 = vunpack.c.l.b16 %v545
    %v593 = vunpack.c.l.b16 %v546
    %v594 = vunpack.c.l.b16 %v547
    %v595 = vunpack.c.l.b16 %v548
    %v596 = vunpack.c.l.b16 %v549
    %v597 = vunpack.c.l.b16 %v550
    %v598 = vunpack.c.l.b16 %v551
    %v599 = vunpack.c.l.b16 %v552
    %v600 = vunpack.c.l.b16 %v553
    %v601 = vunpack.c.l.b16 %v554
    %v602 = vunpack.c.l.b16 %v555
    %v603 = vunpack.c.l.b16 %v556
    %v604 = vpack.c.b16 %v583, %v582
    %v605 = vpack.c.b16 %v585, %v584
    %v606 = vpack.c.b16 %v587, %v586
    %v607 = vpack.c.b16 %v589, %v588
    %v608 = vpack.c.b16 %v591, %v590
    %v609 = vpack.c.b16 %v593, %v592
    %v610 = vpack.c.b16 %v595, %v594
    %v611 = vpack.c.b16 %v597, %v596
    %v612 = vpack.c.b16 %v599, %v598
    %v613 = vpack.c.b16 %v601, %v600
    %v614 = vpack.c.b16 %v603, %v602
    %v616 = vshrl.u32 %v604, 16
    %v618 = vshll.u32 %v604, 16
    %v620 = vrot.slane %v618, 1
    %v621 = vor.u32 %v616, %v620
    %v623 = vshll.u32 %v605, 16
    %v625 = vrot.slane %v623, 1
    %v626 = vsel %vm137, %v621, %v625
    %v627 = vshrl.u32 %v605, 16
    %v629 = vor.u32 %v627, %v625
    %v631 = vshll.u32 %v606, 16
    %v633 = vrot.slane %v631, 1
    %v634 = vsel %vm137, %v629, %v633
    %v635 = vshrl.u32 %v606, 16
    %v637 = vor.u32 %v635, %v633
    %v639 = vshll.u32 %v607, 16
    %v641 = vrot.slane %v639, 1
    %v642 = vsel %vm137, %v637, %v641
    %v643 = vshrl.u32 %v607, 16
    %v645 = vor.u32 %v643, %v641
    %v647 = vshll.u32 %v608, 16
    %v649 = vrot.slane %v647, 1
    %v650 = vsel %vm137, %v645, %v649
    %v651 = vshrl.u32 %v608, 16
    %v653 = vor.u32 %v651, %v649
    %v655 = vshll.u32 %v609, 16
    %v657 = vrot.slane %v655, 1
    %v658 = vsel %vm137, %v653, %v657
    %v659 = vshrl.u32 %v609, 16
    %v661 = vor.u32 %v659, %v657
    %v663 = vshll.u32 %v610, 16
    %v665 = vrot.slane %v663, 1
    %v666 = vsel %vm137, %v661, %v665
    %v667 = vshrl.u32 %v610, 16
    %v669 = vor.u32 %v667, %v665
    %v671 = vshll.u32 %v611, 16
    %v673 = vrot.slane %v671, 1
    %v674 = vsel %vm137, %v669, %v673
    %v675 = vshrl.u32 %v611, 16
    %v677 = vor.u32 %v675, %v673
    %v679 = vshll.u32 %v612, 16
    %v681 = vrot.slane %v679, 1
    %v682 = vsel %vm137, %v677, %v681
    %v683 = vshrl.u32 %v612, 16
    %v685 = vor.u32 %v683, %v681
    %v687 = vshll.u32 %v613, 16
    %v689 = vrot.slane %v687, 1
    %v690 = vsel %vm137, %v685, %v689
    %v691 = vshrl.u32 %v613, 16
    %v693 = vor.u32 %v691, %v689
    %v695 = vshll.u32 %v614, 16
    %v697 = vrot.slane %v695, 1
    %v698 = vsel %vm137, %v693, %v697
    %v699 = vshrl.u32 %v614, 16
    %v701 = vor.u32 %v699, %v697
    %v704 = vunpack.c.l.b16 %v558
    %v705 = vunpack.c.l.b16 %v559
    %v706 = vpack.c.b16 %v705, %v704
    %v709 = vsel %vm231, %v626, 0
    %v712 = vsel %vm231, %v634, 0
    %v715 = vsel %vm231, %v642, 0
    %v718 = vsel %vm231, %v650, 0
    %v721 = vsel %vm231, %v658, 0
    %v724 = vsel %vm231, %v666, 0
    %v727 = vsel %vm231, %v674, 0
    %v730 = vsel %vm231, %v682, 0
    %v733 = vsel %vm231, %v690, 0
    %v736 = vsel %vm231, %v698, 0
    %v739 = vsel %vm231, %v701, 0
    %741 = vmatprep.subr.bf16.mxu0 0
    %742 = vmatpush1.bf16.msra.mxu0 %v706
    %743 = vmatprep.subr.bf16.mxu0 0
    %744 = vmatpush1.bf16.msra.mxu0 0
    %745 = vmatprep.subr.bf16.mxu0 0
    %746 = vmatpush1.bf16.msra.mxu0 0
    %747 = vmatprep.subr.bf16.mxu0 0
    %748 = vmatpush1.bf16.msra.mxu0 0
    %749 = vmatprep.subr.bf16.mxu0 0
    %750 = vmatpush1.bf16.msra.mxu0 0
    %751 = vmatprep.subr.bf16.mxu0 0
    %752 = vmatpush1.bf16.msra.mxu0 0
    %753 = vmatprep.subr.bf16.mxu0 0
    %754 = vmatpush1.bf16.msra.mxu0 0
    %755 = vmatprep.subr.bf16.mxu0 0
    %756 = vmatpush1.bf16.msra.mxu0 0
    %757 = vmatprep.subr.bf16.mxu0 0
    %758 = vmatpush1.bf16.msra.mxu0 0
    %759 = vmatprep.subr.bf16.mxu0 0
    %760 = vmatpush1.bf16.msra.mxu0 0
    %761 = vmatprep.subr.bf16.mxu0 0
    %762 = vmatpush1.bf16.msra.mxu0 0
    %763 = vmatprep.subr.bf16.mxu0 0
    %764 = vmatpush1.bf16.msra.mxu0 0
    %765 = vmatprep.subr.bf16.mxu0 0
    %766 = vmatpush1.bf16.msra.mxu0 0
    %767 = vmatprep.subr.bf16.mxu0 0
    %768 = vmatpush1.bf16.msra.mxu0 0
    %769 = vmatprep.subr.bf16.mxu0 0
    %770 = vmatpush1.bf16.msra.mxu0 0
    %771 = vmatprep.subr.bf16.mxu0 0
    %772 = vmatpush1.bf16.msra.mxu0 0
    %773 = vmatprep.mubr.bf16.mxu0 0
    %774 = vmatmul.mubr.bf16.gmra.mrb[0].mxu0 %v709
    %v775 = vpop.f32.mrb[0].mxu0
    %v776 = vadd.f32 0.0, %v775
    %v777 = vpop.f32.mrb[0].mxu0
    %v778 = vpop.f32.mrb[0].mxu0
    %v779 = vadd.f32 0.0, %v778
    %v780 = vpop.f32.mrb[0].mxu0
    %781 = vmatprep.mubr.bf16.mxu0 0
    %782 = vmatmul.mubr.bf16.gmra.mrb[0].mxu0 %v712
    %v783 = vpop.f32.mrb[0].mxu0
    %v784 = vadd.f32 0.0, %v783
    %v785 = vpop.f32.mrb[0].mxu0
    %v786 = vpop.f32.mrb[0].mxu0
    %v787 = vadd.f32 0.0, %v786
    %v788 = vpop.f32.mrb[0].mxu0
    %789 = vmatprep.mubr.bf16.mxu0 0
    %790 = vmatmul.mubr.bf16.gmra.mrb[0].mxu0 %v715
    %v791 = vpop.f32.mrb[0].mxu0
    %v792 = vadd.f32 0.0, %v791
    %v793 = vpop.f32.mrb[0].mxu0
    %v794 = vpop.f32.mrb[0].mxu0
    %v795 = vadd.f32 0.0, %v794
    %v796 = vpop.f32.mrb[0].mxu0
    %797 = vmatprep.mubr.bf16.mxu0 0
    %798 = vmatmul.mubr.bf16.gmra.mrb[0].mxu0 %v718
    %v799 = vpop.f32.mrb[0].mxu0
    %v800 = vadd.f32 0.0, %v799
    %v801 = vpop.f32.mrb[0].mxu0
    %v802 = vpop.f32.mrb[0].mxu0
    %v803 = vadd.f32 0.0, %v802
    %v804 = vpop.f32.mrb[0].mxu0
    %805 = vmatprep.mubr.bf16.mxu0 0
    %806 = vmatmul.mubr.bf16.gmra.mrb[0].mxu0 %v721
    %v807 = vpop.f32.mrb[0].mxu0
    %v808 = vadd.f32 0.0, %v807
    %v809 = vpop.f32.mrb[0].mxu0
    %v810 = vpop.f32.mrb[0].mxu0
    %v811 = vadd.f32 0.0, %v810
    %v812 = vpop.f32.mrb[0].mxu0
    %813 = vmatprep.mubr.bf16.mxu0 0
    %814 = vmatmul.mubr.bf16.gmra.mrb[0].mxu0 %v724
    %v815 = vpop.f32.mrb[0].mxu0
    %v816 = vadd.f32 0.0, %v815
    %v817 = vpop.f32.mrb[0].mxu0
    %v818 = vpop.f32.mrb[0].mxu0
    %v819 = vadd.f32 0.0, %v818
    %v820 = vpop.f32.mrb[0].mxu0
    %821 = vmatprep.mubr.bf16.mxu0 0
    %822 = vmatmul.mubr.bf16.gmra.mrb[0].mxu0 %v727
    %v823 = vpop.f32.mrb[0].mxu0
    %v824 = vadd.f32 0.0, %v823
    %v825 = vpop.f32.mrb[0].mxu0
    %v826 = vpop.f32.mrb[0].mxu0
    %v827 = vadd.f32 0.0, %v826
    %v828 = vpop.f32.mrb[0].mxu0
    %829 = vmatprep.mubr.bf16.mxu0 0
    %830 = vmatmul.mubr.bf16.gmra.mrb[0].mxu0 %v730
    %v831 = vpop.f32.mrb[0].mxu0
    %v832 = vadd.f32 0.0, %v831
    %v833 = vpop.f32.mrb[0].mxu0
    %v834 = vpop.f32.mrb[0].mxu0
    %v835 = vadd.f32 0.0, %v834
    %v836 = vpop.f32.mrb[0].mxu0
    %837 = vmatprep.mubr.bf16.mxu0 0
    %838 = vmatmul.mubr.bf16.gmra.mrb[0].mxu0 %v733
    %v839 = vpop.f32.mrb[0].mxu0
    %v840 = vadd.f32 0.0, %v839
    %v841 = vpop.f32.mrb[0].mxu0
    %v842 = vpop.f32.mrb[0].mxu0
    %v843 = vadd.f32 0.0, %v842
    %v844 = vpop.f32.mrb[0].mxu0
    %845 = vmatprep.mubr.bf16.mxu0 0
    %846 = vmatmul.mubr.bf16.gmra.mrb[0].mxu0 %v736
    %v847 = vpop.f32.mrb[0].mxu0
    %v848 = vadd.f32 0.0, %v847
    %v849 = vpop.f32.mrb[0].mxu0
    %v850 = vpop.f32.mrb[0].mxu0
    %v851 = vadd.f32 0.0, %v850
    %v852 = vpop.f32.mrb[0].mxu0
    %853 = vmatprep.mubr.bf16.mxu0 0
    %854 = vmatmul.mubr.bf16.gmra.mrb[0].mxu0 %v739
    %v855 = vpop.f32.mrb[0].mxu0
    %v856 = vadd.f32 0.0, %v855
    %v857 = vpop.f32.mrb[0].mxu0
    %v858 = vpop.f32.mrb[0].mxu0
    %v859 = vpop.f32.mrb[0].mxu0
    %860 = vdwg.mxu0
    %v861 = vadd.f32 %v450, %v776
    %v862 = vadd.f32 %v453, %v779
    %v863 = vadd.f32 %v458, %v784
    %v864 = vadd.f32 %v461, %v787
    %v865 = vadd.f32 %v466, %v792
    %v866 = vadd.f32 %v469, %v795
    %v867 = vadd.f32 %v474, %v800
    %v868 = vadd.f32 %v477, %v803
    %v869 = vadd.f32 %v482, %v808
    %v870 = vadd.f32 %v485, %v811
    %v871 = vadd.f32 %v490, %v816
    %v872 = vadd.f32 %v493, %v819
    %v873 = vadd.f32 %v498, %v824
    %v874 = vadd.f32 %v501, %v827
    %v875 = vadd.f32 %v506, %v832
    %v876 = vadd.f32 %v509, %v835
    %v877 = vadd.f32 %v514, %v840
    %v878 = vadd.f32 %v517, %v843
    %v879 = vadd.f32 %v522, %v848
    %v880 = vadd.f32 %v525, %v851
    %v881 = vadd.f32 %v530, %v856
    %v882 = vld [vmem:[#allocation2 + $0x4] sm:$0xe]
    %s883 = scalar_lea.vmem [#allocation5], 24
    %v884 = vld [vmem:[%s883] sm:$0xf]
    %v885 = vld [vmem:[%s883 + $0x4] sm:$0xf]
    %v887 = vunpack.c.l.b16 %v882
    %v888 = vpack.c.b16 %v583, %v887
    %vm889 = vcmask 1046528
    %v890 = vrot.slane %v888, 1
    %v891 = vrot.slane %v605, 1
    %v892 = vsel %vm889, %v890, %v891
    %v893 = vrot.slane %v606, 1
    %v894 = vsel %vm889, %v891, %v893
    %v895 = vrot.slane %v607, 1
    %v896 = vsel %vm889, %v893, %v895
    %v897 = vrot.slane %v608, 1
    %v898 = vsel %vm889, %v895, %v897
    %v899 = vrot.slane %v609, 1
    %v900 = vsel %vm889, %v897, %v899
    %v901 = vrot.slane %v610, 1
    %v902 = vsel %vm889, %v899, %v901
    %v903 = vrot.slane %v611, 1
    %v904 = vsel %vm889, %v901, %v903
    %v905 = vrot.slane %v612, 1
    %v906 = vsel %vm889, %v903, %v905
    %v907 = vrot.slane %v613, 1
    %v908 = vsel %vm889, %v905, %v907
    %v909 = vrot.slane %v614, 1
    %v910 = vsel %vm889, %v907, %v909
    %v913 = vunpack.c.l.b16 %v884
    %v914 = vunpack.c.l.b16 %v885
    %v915 = vpack.c.b16 %v914, %v913
    %v918 = vsel %vm231, %v892, 0
    %v921 = vsel %vm231, %v894, 0
    %v924 = vsel %vm231, %v896, 0
    %v927 = vsel %vm231, %v898, 0
    %v930 = vsel %vm231, %v900, 0
    %v933 = vsel %vm231, %v902, 0
    %v936 = vsel %vm231, %v904, 0
    %v939 = vsel %vm231, %v906, 0
    %v942 = vsel %vm231, %v908, 0
    %v945 = vsel %vm231, %v910, 0
    %v948 = vsel %vm231, %v909, 0
    %950 = vmatprep.subr.bf16.mxu0 0
    %951 = vmatpush1.bf16.msra.mxu0 %v915
    %952 = vmatprep.subr.bf16.mxu0 0
    %953 = vmatpush1.bf16.msra.mxu0 0
    %954 = vmatprep.subr.bf16.mxu0 0
    %955 = vmatpush1.bf16.msra.mxu0 0
    %956 = vmatprep.subr.bf16.mxu0 0
    %957 = vmatpush1.bf16.msra.mxu0 0
    %958 = vmatprep.subr.bf16.mxu0 0
    %959 = vmatpush1.bf16.msra.mxu0 0
    %960 = vmatprep.subr.bf16.mxu0 0
    %961 = vmatpush1.bf16.msra.mxu0 0
    %962 = vmatprep.subr.bf16.mxu0 0
    %963 = vmatpush1.bf16.msra.mxu0 0
    %964 = vmatprep.subr.bf16.mxu0 0
    %965 = vmatpush1.bf16.msra.mxu0 0
    %966 = vmatprep.subr.bf16.mxu0 0
    %967 = vmatpush1.bf16.msra.mxu0 0
    %968 = vmatprep.subr.bf16.mxu0 0
    %969 = vmatpush1.bf16.msra.mxu0 0
    %970 = vmatprep.subr.bf16.mxu0 0
    %971 = vmatpush1.bf16.msra.mxu0 0
    %972 = vmatprep.subr.bf16.mxu0 0
    %973 = vmatpush1.bf16.msra.mxu0 0
    %974 = vmatprep.subr.bf16.mxu0 0
    %975 = vmatpush1.bf16.msra.mxu0 0
    %976 = vmatprep.subr.bf16.mxu0 0
    %977 = vmatpush1.bf16.msra.mxu0 0
    %978 = vmatprep.subr.bf16.mxu0 0
    %979 = vmatpush1.bf16.msra.mxu0 0
    %980 = vmatprep.subr.bf16.mxu0 0
    %981 = vmatpush1.bf16.msra.mxu0 0
    %982 = vmatprep.mubr.bf16.mxu0 0
    %983 = vmatmul.mubr.bf16.gmra.mrb[0].mxu0 %v918
    %v984 = vpop.f32.mrb[0].mxu0
    %v985 = vadd.f32 0.0, %v984
    %v986 = vpop.f32.mrb[0].mxu0
    %v987 = vpop.f32.mrb[0].mxu0
    %v988 = vadd.f32 0.0, %v987
    %v989 = vpop.f32.mrb[0].mxu0
    %990 = vmatprep.mubr.bf16.mxu0 0
    %991 = vmatmul.mubr.bf16.gmra.mrb[0].mxu0 %v921
    %v992 = vpop.f32.mrb[0].mxu0
    %v993 = vadd.f32 0.0, %v992
    %v994 = vpop.f32.mrb[0].mxu0
    %v995 = vpop.f32.mrb[0].mxu0
    %v996 = vadd.f32 0.0, %v995
    %v997 = vpop.f32.mrb[0].mxu0
    %998 = vmatprep.mubr.bf16.mxu0 0
    %999 = vmatmul.mubr.bf16.gmra.mrb[0].mxu0 %v924
    %v1000 = vpop.f32.mrb[0].mxu0
    %v1001 = vadd.f32 0.0, %v1000
    %v1002 = vpop.f32.mrb[0].mxu0
    %v1003 = vpop.f32.mrb[0].mxu0
    %v1004 = vadd.f32 0.0, %v1003
    %v1005 = vpop.f32.mrb[0].mxu0
    %1006 = vmatprep.mubr.bf16.mxu0 0
    %1007 = vmatmul.mubr.bf16.gmra.mrb[0].mxu0 %v927
    %v1008 = vpop.f32.mrb[0].mxu0
    %v1009 = vadd.f32 0.0, %v1008
    %v1010 = vpop.f32.mrb[0].mxu0
    %v1011 = vpop.f32.mrb[0].mxu0
    %v1012 = vadd.f32 0.0, %v1011
    %v1013 = vpop.f32.mrb[0].mxu0
    %1014 = vmatprep.mubr.bf16.mxu0 0
    %1015 = vmatmul.mubr.bf16.gmra.mrb[0].mxu0 %v930
    %v1016 = vpop.f32.mrb[0].mxu0
    %v1017 = vadd.f32 0.0, %v1016
    %v1018 = vpop.f32.mrb[0].mxu0
    %v1019 = vpop.f32.mrb[0].mxu0
    %v1020 = vadd.f32 0.0, %v1019
    %v1021 = vpop.f32.mrb[0].mxu0
    %1022 = vmatprep.mubr.bf16.mxu0 0
    %1023 = vmatmul.mubr.bf16.gmra.mrb[0].mxu0 %v933
    %v1024 = vpop.f32.mrb[0].mxu0
    %v1025 = vadd.f32 0.0, %v1024
    %v1026 = vpop.f32.mrb[0].mxu0
    %v1027 = vpop.f32.mrb[0].mxu0
    %v1028 = vadd.f32 0.0, %v1027
    %v1029 = vpop.f32.mrb[0].mxu0
    %1030 = vmatprep.mubr.bf16.mxu0 0
    %1031 = vmatmul.mubr.bf16.gmra.mrb[0].mxu0 %v936
    %v1032 = vpop.f32.mrb[0].mxu0
    %v1033 = vadd.f32 0.0, %v1032
    %v1034 = vpop.f32.mrb[0].mxu0
    %v1035 = vpop.f32.mrb[0].mxu0
    %v1036 = vadd.f32 0.0, %v1035
    %v1037 = vpop.f32.mrb[0].mxu0
    %1038 = vmatprep.mubr.bf16.mxu0 0
    %1039 = vmatmul.mubr.bf16.gmra.mrb[0].mxu0 %v939
    %v1040 = vpop.f32.mrb[0].mxu0
    %v1041 = vadd.f32 0.0, %v1040
    %v1042 = vpop.f32.mrb[0].mxu0
    %v1043 = vpop.f32.mrb[0].mxu0
    %v1044 = vadd.f32 0.0, %v1043
    %v1045 = vpop.f32.mrb[0].mxu0
    %1046 = vmatprep.mubr.bf16.mxu0 0
    %1047 = vmatmul.mubr.bf16.gmra.mrb[0].mxu0 %v942
    %v1048 = vpop.f32.mrb[0].mxu0
    %v1049 = vadd.f32 0.0, %v1048
    %v1050 = vpop.f32.mrb[0].mxu0
    %v1051 = vpop.f32.mrb[0].mxu0
    %v1052 = vadd.f32 0.0, %v1051
    %v1053 = vpop.f32.mrb[0].mxu0
    %1054 = vmatprep.mubr.bf16.mxu0 0
    %1055 = vmatmul.mubr.bf16.gmra.mrb[0].mxu0 %v945
    %v1056 = vpop.f32.mrb[0].mxu0
    %v1057 = vadd.f32 0.0, %v1056
    %v1058 = vpop.f32.mrb[0].mxu0
    %v1059 = vpop.f32.mrb[0].mxu0
    %v1060 = vadd.f32 0.0, %v1059
    %v1061 = vpop.f32.mrb[0].mxu0
    %1062 = vmatprep.mubr.bf16.mxu0 0
    %1063 = vmatmul.mubr.bf16.gmra.mrb[0].mxu0 %v948
    %v1064 = vpop.f32.mrb[0].mxu0
    %v1065 = vadd.f32 0.0, %v1064
    %v1066 = vpop.f32.mrb[0].mxu0
    %v1067 = vpop.f32.mrb[0].mxu0
    %v1068 = vpop.f32.mrb[0].mxu0
    %1069 = vdwg.mxu0
    %v1070 = vadd.f32 %v861, %v985
    %v1071 = vadd.f32 %v862, %v988
    %v1072 = vadd.f32 %v863, %v993
    %v1073 = vadd.f32 %v864, %v996
    %v1074 = vadd.f32 %v865, %v1001
    %v1075 = vadd.f32 %v866, %v1004
    %v1076 = vadd.f32 %v867, %v1009
    %v1077 = vadd.f32 %v868, %v1012
    %v1078 = vadd.f32 %v869, %v1017
    %v1079 = vadd.f32 %v870, %v1020
    %v1080 = vadd.f32 %v871, %v1025
    %v1081 = vadd.f32 %v872, %v1028
    %v1082 = vadd.f32 %v873, %v1033
    %v1083 = vadd.f32 %v874, %v1036
    %v1084 = vadd.f32 %v875, %v1041
    %v1085 = vadd.f32 %v876, %v1044
    %v1086 = vadd.f32 %v877, %v1049
    %v1087 = vadd.f32 %v878, %v1052
    %v1088 = vadd.f32 %v879, %v1057
    %v1089 = vadd.f32 %v880, %v1060
    %v1090 = vadd.f32 %v881, %v1065
    %v1091 = vld [vmem:[#allocation7] sm:$0x1]
    %v1093 = vlaneseq
    %v1094 = vshrl.u32 %v1093, 7
    %v1095 = vsub.s32 0, %v1094
    %v1096 = vrot.slane %v1091, %v1095
    %v1098 = vadd.f32 %v1070, %v1096
    %v1099 = vadd.f32 %v1071, %v1096
    %v1100 = vadd.f32 %v1072, %v1096
    %v1101 = vadd.f32 %v1073, %v1096
    %v1102 = vadd.f32 %v1074, %v1096
    %v1103 = vadd.f32 %v1075, %v1096
    %v1104 = vadd.f32 %v1076, %v1096
    %v1105 = vadd.f32 %v1077, %v1096
    %v1106 = vadd.f32 %v1078, %v1096
    %v1107 = vadd.f32 %v1079, %v1096
    %v1108 = vadd.f32 %v1080, %v1096
    %v1109 = vadd.f32 %v1081, %v1096
    %v1110 = vadd.f32 %v1082, %v1096
    %v1111 = vadd.f32 %v1083, %v1096
    %v1112 = vadd.f32 %v1084, %v1096
    %v1113 = vadd.f32 %v1085, %v1096
    %v1114 = vadd.f32 %v1086, %v1096
    %v1115 = vadd.f32 %v1087, %v1096
    %v1116 = vadd.f32 %v1088, %v1096
    %v1117 = vadd.f32 %v1089, %v1096
    %v1118 = vadd.f32 %v1090, %v1096
    %v1119 = vmax.f32 %v1098, 0.0
    %v1120 = vmax.f32 %v1099, 0.0
    %v1121 = vmax.f32 %v1100, 0.0
    %v1122 = vmax.f32 %v1101, 0.0
    %v1123 = vmax.f32 %v1102, 0.0
    %v1124 = vmax.f32 %v1103, 0.0
    %v1125 = vmax.f32 %v1104, 0.0
    %v1126 = vmax.f32 %v1105, 0.0
    %v1127 = vmax.f32 %v1106, 0.0
    %v1128 = vmax.f32 %v1107, 0.0
    %v1129 = vmax.f32 %v1108, 0.0
    %v1130 = vmax.f32 %v1109, 0.0
    %v1131 = vmax.f32 %v1110, 0.0
    %v1132 = vmax.f32 %v1111, 0.0
    %v1133 = vmax.f32 %v1112, 0.0
    %v1134 = vmax.f32 %v1113, 0.0
    %v1135 = vmax.f32 %v1114, 0.0
    %v1136 = vmax.f32 %v1115, 0.0
    %v1137 = vmax.f32 %v1116, 0.0
    %v1138 = vmax.f32 %v1117, 0.0
    %v1139 = vmax.f32 %v1118, 0.0
    %1140 = vst.msk [vmem:[#allocation8] sm:$0xff] %vm231, %v1119
    %1141 = vst.msk [vmem:[#allocation8 + $0x8] sm:$0xff] %vm231, %v1120
    %1142 = vst.msk [vmem:[#allocation8 + $0x10] sm:$0xff] %vm231, %v1121
    %1143 = vst.msk [vmem:[#allocation8 + $0x18] sm:$0xff] %vm231, %v1122
    %1144 = vst.msk [vmem:[#allocation8 + $0x20] sm:$0xff] %vm231, %v1123
    %1145 = vst.msk [vmem:[#allocation8 + $0x28] sm:$0xff] %vm231, %v1124
    %1146 = vst.msk [vmem:[#allocation8 + $0x30] sm:$0xff] %vm231, %v1125
    %1147 = vst.msk [vmem:[#allocation8 + $0x38] sm:$0xff] %vm231, %v1126
    %1148 = vst.msk [vmem:[#allocation8 + $0x40] sm:$0xff] %vm231, %v1127
    %1149 = vst.msk [vmem:[#allocation8 + $0x48] sm:$0xff] %vm231, %v1128
    %1150 = vst.msk [vmem:[#allocation8 + $0x50] sm:$0xff] %vm231, %v1129
    %1151 = vst.msk [vmem:[#allocation8 + $0x58] sm:$0xff] %vm231, %v1130
    %1152 = vst.msk [vmem:[#allocation8 + $0x60] sm:$0xff] %vm231, %v1131
    %1153 = vst.msk [vmem:[#allocation8 + $0x68] sm:$0xff] %vm231, %v1132
    %1154 = vst.msk [vmem:[#allocation8 + $0x70] sm:$0xff] %vm231, %v1133
    %1155 = vst.msk [vmem:[#allocation8 + $0x78] sm:$0xff] %vm231, %v1134
    %1156 = vst.msk [vmem:[#allocation8 + $0x80] sm:$0xff] %vm231, %v1135
    %1157 = vst.msk [vmem:[#allocation8 + $0x88] sm:$0xff] %vm231, %v1136
    %1158 = vst.msk [vmem:[#allocation8 + $0x90] sm:$0xff] %vm231, %v1137
    %1159 = vst.msk [vmem:[#allocation8 + $0x98] sm:$0xff] %vm231, %v1138
    %1160 = vst.msk [vmem:[#allocation8 + $0xa0] sm:$0xff] %vm231, %v1139
    // Predicated region
    $region26: #{encoder_forward.3} parent=1 // pred_check
      _
    $region27: #{encoder_forward.3} parent=1 // pred_check_branch
      %1162 = sbr.rel (0) target = $region29
    $region28: #{encoder_forward.3} parent=1 // pred_region
      %s1164 = ssub.s32 2688, 2688
      %1165 = vsyncadd [#allocation4], %s1164
      %s1166 = sshll.u32 [#allocation8], 4
      %s1167 = int_to_ptr.vmem [resolvable:$true] %s1166
      %1172 = dma.vmem_to_hbm [thread:$0]  %s1167, 2688, %s3, [#allocation4], 128, 128, 8
    $region29: #{encoder_forward.3} parent=1 // pred_fallthru
      _
    // Predicated region
    $region30: #{encoder_forward.3} parent=1 // pred_check
      _
    $region31: #{encoder_forward.3} parent=1 // pred_check_branch
      %1174 = sbr.rel (0) target = $region33
    $region32: #{encoder_forward.3} parent=1 // pred_region
      %1175 = dma.done [#allocation4], 2688
    $region33: #{encoder_forward.3} parent=1 // pred_fallthru
      _
    %1176 = vsyncpa [#allocation3], 1
    %1177 = vsyncpa [#allocation6], 1
    %1178 = vsyncpa [#allocation4], 1

// kernel: encoder_forward.4
$region0: #{encoder_forward.4}
  #allocation0 [shape = 'u32[]', space=smem, size = 0x4, offset = 0x4, fixed_abs, tag = 'smem constant byte address 0x4 - core index']
  #allocation1 [shape = 'u32[144,128]{1,0:T(1,128)}', space=vmem, size = 0x12000, scoped, tag = 'internal scratch']
  %s0 = inlined_call_operand.hbm [shape: bf16[64,64], index: 0, kind: input, shape index: {}]
  %s1 = inlined_call_operand.hbm [shape: bf16[4,64,32], index: 1, kind: input, shape index: {}]
  %s2 = inlined_call_operand.hbm [shape: f32[1,32], index: 2, kind: input, shape index: {}]
  %s3 = inlined_call_operand.hbm [shape: f32[56,32], index: 3, kind: output, shape index: {}]
  %s4 = sld [smem:[#allocation0]]
  $region34: #{encoder_forward.4} parent=0
    _
  %s6 = ssub.s32 1, %s4
  %s7 = scalar_select 0, %s6, %s4
  $region1: #{encoder_forward.4} parent=0
    #allocation2 [shape = 'u8[16384]{0}', space=vmem, size = 0x4000, scoped, tag = 'input window, operand 0, single buffered']
    #allocation3 [shape = 's32[1]{0}', space=sflag, size = 0x4, scoped, tag = 'scoped memory for encoder_forward.4']
    #allocation4 [shape = 's32[1]{0}', space=sflag, size = 0x4, scoped, tag = 'scoped memory for encoder_forward.4']
    #allocation5 [shape = 'u8[65536]{0}', space=vmem, size = 0x10000, scoped, tag = 'input window, operand 1, single buffered']
    #allocation6 [shape = 's32[1]{0}', space=sflag, size = 0x4, scoped, tag = 'scoped memory for encoder_forward.4']
    #allocation7 [shape = 'u8[512]{0}', space=vmem, size = 0x400, scoped, tag = 'input window, operand 2, single buffered']
    #allocation8 [shape = 'u8[28672]{0}', space=vmem, size = 0x7000, scoped, tag = 'output window, operand 0, single buffered']
    %8 = vsyncpa [#allocation3], 0
    %9 = vsyncpa [#allocation6], 0
    %10 = vsyncpa [#allocation4], 0
    // Predicated region
    $region2: #{encoder_forward.4} parent=1 // pred_check
      _
    $region3: #{encoder_forward.4} parent=1 // pred_check_branch
      %12 = sbr.rel (0) target = $region5
    $region4: #{encoder_forward.4} parent=1 // pred_region
      %s14 = ssub.s32 512, 512
      %15 = vsyncadd [#allocation3], %s14
      %s16 = sshll.u32 [#allocation2], 4
      %s17 = int_to_ptr.vmem [resolvable:$true] %s16
      %22 = dma.hbm_to_vmem [thread:$0]  %s0, 512, %s17, [#allocation3], 64, 64, 4
    $region5: #{encoder_forward.4} parent=1 // pred_fallthru
      _
    // Predicated region
    $region6: #{encoder_forward.4} parent=1 // pred_check
      _
    $region7: #{encoder_forward.4} parent=1 // pred_check_branch
      %24 = sbr.rel (0) target = $region9
    $region8: #{encoder_forward.4} parent=1 // pred_region
      %s26 = ssub.s32 2048, 2048
      %27 = vsyncadd [#allocation6], %s26
      %s28 = sshll.u32 [#allocation5], 4
      %s29 = int_to_ptr.vmem [resolvable:$true] %s28
      %34 = dma.hbm_to_vmem [thread:$0]  %s1, 2048, %s29, [#allocation6], 64, 64, 4
    $region9: #{encoder_forward.4} parent=1 // pred_fallthru
      _
    // Predicated region
    $region10: #{encoder_forward.4} parent=1 // pred_check
      _
    $region11: #{encoder_forward.4} parent=1 // pred_check_branch
      %36 = sbr.rel (0) target = $region13
    $region12: #{encoder_forward.4} parent=1 // pred_region
      %s38 = ssub.s32 16, 16
      %39 = vsyncadd [#allocation6], %s38
      %s41 = sshll.u32 [#allocation7], 4
      %s42 = int_to_ptr.vmem [resolvable:$true] %s41
      %44 = dma.hbm_to_vmem [thread:$0]  %s2, 16, %s42, [#allocation6]
    $region13: #{encoder_forward.4} parent=1 // pred_fallthru
      _
    // Predicated region
    $region14: #{encoder_forward.4} parent=1 // pred_check
      _
    $region15: #{encoder_forward.4} parent=1 // pred_check_branch
      %46 = sbr.rel (0) target = $region17
    $region16: #{encoder_forward.4} parent=1 // pred_region
      %47 = dma.done [#allocation3], 512
    $region17: #{encoder_forward.4} parent=1 // pred_fallthru
      _
    // Predicated region
    $region18: #{encoder_forward.4} parent=1 // pred_check
      _
    $region19: #{encoder_forward.4} parent=1 // pred_check_branch
      %49 = sbr.rel (0) target = $region21
    $region20: #{encoder_forward.4} parent=1 // pred_region
      %50 = dma.done [#allocation6], 2048
    $region21: #{encoder_forward.4} parent=1 // pred_fallthru
      _
    // Predicated region
    $region22: #{encoder_forward.4} parent=1 // pred_check
      _
    $region23: #{encoder_forward.4} parent=1 // pred_check_branch
      %52 = sbr.rel (0) target = $region25
    $region24: #{encoder_forward.4} parent=1 // pred_region
      %53 = dma.done [#allocation6], 16
    $region25: #{encoder_forward.4} parent=1 // pred_fallthru
      _
    %v55 = vld [vmem:[#allocation2] sm:$0xf]
    %v56 = vld [vmem:[#allocation2 + $0x4] sm:$0xf]
    %v57 = vld [vmem:[#allocation2 + $0x8] sm:$0xf]
    %v58 = vld [vmem:[#allocation2 + $0xc] sm:$0xf]
    %v59 = vld [vmem:[#allocation2 + $0x10] sm:$0xf]
    %v60 = vld [vmem:[#allocation2 + $0x14] sm:$0xf]
    %v61 = vld [vmem:[#allocation2 + $0x18] sm:$0xf]
    %v62 = vld [vmem:[#allocation5] sm:$0xf]
    %v63 = vld [vmem:[#allocation5 + $0x4] sm:$0xf]
    %v64 = vld [vmem:[#allocation5 + $0x8] sm:$0xf]
    %v65 = vld [vmem:[#allocation5 + $0xc] sm:$0xf]
    %v66 = vld [vmem:[#allocation5 + $0x10] sm:$0xf]
    %v67 = vld [vmem:[#allocation5 + $0x14] sm:$0xf]
    %v68 = vld [vmem:[#allocation5 + $0x18] sm:$0xf]
    %v69 = vld [vmem:[#allocation5 + $0x1c] sm:$0xf]
    %v70 = vld [vmem:[#allocation2 + $0x1c] sm:$0x1]
    %s71 = scalar_lea.vmem [#allocation5], 32
    %v72 = vld [vmem:[%s71] sm:$0xf]
    %v73 = vld [vmem:[%s71 + $0x4] sm:$0xf]
    %v74 = vld [vmem:[%s71 + $0x8] sm:$0xf]
    %v75 = vld [vmem:[%s71 + $0xc] sm:$0xf]
    %v76 = vld [vmem:[%s71 + $0x10] sm:$0xf]
    %v77 = vld [vmem:[%s71 + $0x14] sm:$0xf]
    %v78 = vld [vmem:[%s71 + $0x18] sm:$0xf]
    %v79 = vld [vmem:[%s71 + $0x1c] sm:$0xf]
    %v88 = vunpack.c.l.b16 %v55
    %v89 = vunpack.c.l.b16 %v56
    %v90 = vunpack.c.l.b16 %v57
    %v91 = vunpack.c.l.b16 %v58
    %v92 = vunpack.c.l.b16 %v59
    %v93 = vunpack.c.l.b16 %v60
    %v94 = vunpack.c.l.b16 %v61
    %v95 = vunpack.c.l.b16 %v70
    %v96 = vpack.c.b16 %v89, %v88
    %v97 = vpack.c.b16 %v91, %v90
    %v98 = vpack.c.b16 %v93, %v92
    %v99 = vpack.c.b16 %v95, %v94
    %vm100 = vsmask.f32 7424
    %v102 = vshrl.u32 %v96, 16
    %v104 = vshll.u32 %v96, 16
    %v106 = vrot.slane %v104, 1
    %v107 = vor.u32 %v102, %v106
    %v109 = vshll.u32 %v97, 16
    %v111 = vrot.slane %v109, 1
    %v112 = vsel %vm100, %v107, %v111
    %v113 = vshrl.u32 %v97, 16
    %v115 = vor.u32 %v113, %v111
    %v117 = vshll.u32 %v98, 16
    %v119 = vrot.slane %v117, 1
    %v120 = vsel %vm100, %v115, %v119
    %v121 = vshrl.u32 %v98, 16
    %v123 = vor.u32 %v121, %v119
    %v125 = vshll.u32 %v99, 16
    %v127 = vrot.slane %v125, 1
    %v128 = vsel %vm100, %v123, %v127
    %v129 = vshrl.u32 %v99, 16
    %v131 = vor.u32 %v129, %v127
    %v140 = vunpack.c.l.b16 %v72
    %v141 = vunpack.c.l.b16 %v73
    %v142 = vunpack.c.l.b16 %v74
    %v143 = vunpack.c.l.b16 %v75
    %v144 = vunpack.c.l.b16 %v76
    %v145 = vunpack.c.l.b16 %v77
    %v146 = vunpack.c.l.b16 %v78
    %v147 = vunpack.c.l.b16 %v79
    %v148 = vpack.c.b16 %v141, %v140
    %v149 = vpack.c.b16 %v143, %v142
    %v150 = vpack.c.b16 %v145, %v144
    %v151 = vpack.c.b16 %v147, %v146
    %vm156 = vcmask 523264
    %v158 = vsel %vm156, %v112, 0
    %v161 = vsel %vm156, %v120, 0
    %v164 = vsel %vm156, %v128, 0
    %v167 = vsel %vm156, %v131, 0
    %169 = vmatprep.subr.bf16.mxu0 0
    %170 = vmatpush1.bf16.msra.mxu0 %v148
    %171 = vmatprep.subr.bf16.mxu0 0
    %172 = vmatpush1.bf16.msra.mxu0 %v149
    %173 = vmatprep.subr.bf16.mxu0 0
    %174 = vmatpush1.bf16.msra.mxu0 %v150
    %175 = vmatprep.subr.bf16.mxu0 0
    %176 = vmatpush1.bf16.msra.mxu0 %v151
    %177 = vmatprep.subr.bf16.mxu0 0
    %178 = vmatpush1.bf16.msra.mxu0 0
    %179 = vmatprep.subr.bf16.mxu0 0
    %180 = vmatpush1.bf16.msra.mxu0 0
    %181 = vmatprep.subr.bf16.mxu0 0
    %182 = vmatpush1.bf16.msra.mxu0 0
    %183 = vmatprep.subr.bf16.mxu0 0
    %184 = vmatpush1.bf16.msra.mxu0 0
    %185 = vmatprep.subr.bf16.mxu0 0
    %186 = vmatpush1.bf16.msra.mxu0 0
    %187 = vmatprep.subr.bf16.mxu0 0
    %188 = vmatpush1.bf16.msra.mxu0 0
    %189 = vmatprep.subr.bf16.mxu0 0
    %190 = vmatpush1.bf16.msra.mxu0 0
    %191 = vmatprep.subr.bf16.mxu0 0
    %192 = vmatpush1.bf16.msra.mxu0 0
    %193 = vmatprep.subr.bf16.mxu0 0
    %194 = vmatpush1.bf16.msra.mxu0 0
    %195 = vmatprep.subr.bf16.mxu0 0
    %196 = vmatpush1.bf16.msra.mxu0 0
    %197 = vmatprep.subr.bf16.mxu0 0
    %198 = vmatpush1.bf16.msra.mxu0 0
    %199 = vmatprep.subr.bf16.mxu0 0
    %200 = vmatpush1.bf16.msra.mxu0 0
    %201 = vmatprep.mubr.bf16.mxu0 0
    %202 = vmatmul.mubr.bf16.gmra.mrb[0].mxu0 %v158
    %v203 = vpop.f32.mrb[0].mxu0
    %v204 = vadd.f32 0.0, %v203
    %v205 = vpop.f32.mrb[0].mxu0
    %v206 = vpop.f32.mrb[0].mxu0
    %v207 = vadd.f32 0.0, %v206
    %v208 = vpop.f32.mrb[0].mxu0
    %209 = vmatprep.mubr.bf16.mxu0 0
    %210 = vmatmul.mubr.bf16.gmra.mrb[0].mxu0 %v161
    %v211 = vpop.f32.mrb[0].mxu0
    %v212 = vadd.f32 0.0, %v211
    %v213 = vpop.f32.mrb[0].mxu0
    %v214 = vpop.f32.mrb[0].mxu0
    %v215 = vadd.f32 0.0, %v214
    %v216 = vpop.f32.mrb[0].mxu0
    %217 = vmatprep.mubr.bf16.mxu0 0
    %218 = vmatmul.mubr.bf16.gmra.mrb[0].mxu0 %v164
    %v219 = vpop.f32.mrb[0].mxu0
    %v220 = vadd.f32 0.0, %v219
    %v221 = vpop.f32.mrb[0].mxu0
    %v222 = vpop.f32.mrb[0].mxu0
    %v223 = vadd.f32 0.0, %v222
    %v224 = vpop.f32.mrb[0].mxu0
    %225 = vmatprep.mubr.bf16.mxu0 0
    %226 = vmatmul.mubr.bf16.gmra.mrb[0].mxu0 %v167
    %v227 = vpop.f32.mrb[0].mxu0
    %v228 = vadd.f32 0.0, %v227
    %v229 = vpop.f32.mrb[0].mxu0
    %v230 = vpop.f32.mrb[0].mxu0
    %v231 = vpop.f32.mrb[0].mxu0
    %232 = vdwg.mxu0
    %v233 = vpack.c.b16 %v94, %v94
    %v242 = vunpack.c.l.b16 %v62
    %v243 = vunpack.c.l.b16 %v63
    %v244 = vunpack.c.l.b16 %v64
    %v245 = vunpack.c.l.b16 %v65
    %v246 = vunpack.c.l.b16 %v66
    %v247 = vunpack.c.l.b16 %v67
    %v248 = vunpack.c.l.b16 %v68
    %v249 = vunpack.c.l.b16 %v69
    %v250 = vpack.c.b16 %v243, %v242
    %v251 = vpack.c.b16 %v245, %v244
    %v252 = vpack.c.b16 %v247, %v246
    %v253 = vpack.c.b16 %v249, %v248
    %v258 = vsel %vm156, %v96, 0
    %v260 = vsel %vm156, %v97, 0
    %v262 = vsel %vm156, %v98, 0
    %v265 = vsel %vm156, %v233, 0
    %267 = vmatprep.subr.bf16.mxu0 0
    %268 = vmatpush1.bf16.msra.mxu0 %v250
    %269 = vmatprep.subr.bf16.mxu0 0
    %270 = vmatpush1.bf16.msra.mxu0 %v251
    %271 = vmatprep.subr.bf16.mxu0 0
    %272 = vmatpush1.bf16.msra.mxu0 %v252
    %273 = vmatprep.subr.bf16.mxu0 0
    %274 = vmatpush1.bf16.msra.mxu0 %v253
    %275 = vmatprep.subr.bf16.mxu0 0
    %276 = vmatpush1.bf16.msra.mxu0 0
    %277 = vmatprep.subr.bf16.mxu0 0
    %278 = vmatpush1.bf16.msra.mxu0 0
    %279 = vmatprep.subr.bf16.mxu0 0
    %280 = vmatpush1.bf16.msra.mxu0 0
    %281 = vmatprep.subr.bf16.mxu0 0
    %282 = vmatpush1.bf16.msra.mxu0 0
    %283 = vmatprep.subr.bf16.mxu0 0
    %284 = vmatpush1.bf16.msra.mxu0 0
    %285 = vmatprep.subr.bf16.mxu0 0
    %286 = vmatpush1.bf16.msra.mxu0 0
    %287 = vmatprep.subr.bf16.mxu0 0
    %288 = vmatpush1.bf16.msra.mxu0 0
    %289 = vmatprep.subr.bf16.mxu0 0
    %290 = vmatpush1.bf16.msra.mxu0 0
    %291 = vmatprep.subr.bf16.mxu0 0
    %292 = vmatpush1.bf16.msra.mxu0 0
    %293 = vmatprep.subr.bf16.mxu0 0
    %294 = vmatpush1.bf16.msra.mxu0 0
    %295 = vmatprep.subr.bf16.mxu0 0
    %296 = vmatpush1.bf16.msra.mxu0 0
    %297 = vmatprep.subr.bf16.mxu0 0
    %298 = vmatpush1.bf16.msra.mxu0 0
    %299 = vmatprep.mubr.bf16.mxu0 0
    %300 = vmatmul.mubr.bf16.gmra.mrb[0].mxu0 %v258
    %v301 = vpop.f32.mrb[0].mxu0
    %v302 = vadd.f32 %v204, %v301
    %v303 = vpop.f32.mrb[0].mxu0
    %v304 = vpop.f32.mrb[0].mxu0
    %v305 = vadd.f32 %v207, %v304
    %v306 = vpop.f32.mrb[0].mxu0
    %307 = vmatprep.mubr.bf16.mxu0 0
    %308 = vmatmul.mubr.bf16.gmra.mrb[0].mxu0 %v260
    %v309 = vpop.f32.mrb[0].mxu0
    %v310 = vadd.f32 %v212, %v309
    %v311 = vpop.f32.mrb[0].mxu0
    %v312 = vpop.f32.mrb[0].mxu0
    %v313 = vadd.f32 %v215, %v312
    %v314 = vpop.f32.mrb[0].mxu0
    %315 = vmatprep.mubr.bf16.mxu0 0
    %316 = vmatmul.mubr.bf16.gmra.mrb[0].mxu0 %v262
    %v317 = vpop.f32.mrb[0].mxu0
    %v318 = vadd.f32 %v220, %v317
    %v319 = vpop.f32.mrb[0].mxu0
    %v320 = vpop.f32.mrb[0].mxu0
    %v321 = vadd.f32 %v223, %v320
    %v322 = vpop.f32.mrb[0].mxu0
    %323 = vmatprep.mubr.bf16.mxu0 0
    %324 = vmatmul.mubr.bf16.gmra.mrb[0].mxu0 %v265
    %v325 = vpop.f32.mrb[0].mxu0
    %v326 = vadd.f32 %v228, %v325
    %v327 = vpop.f32.mrb[0].mxu0
    %v328 = vpop.f32.mrb[0].mxu0
    %v329 = vpop.f32.mrb[0].mxu0
    %330 = vdwg.mxu0
    %v331 = vld [vmem:[#allocation2] sm:$0xc]
    %v332 = vld [vmem:[#allocation2 + $0x1c] sm:$0x7]
    %s333 = scalar_lea.vmem [#allocation5], 64
    %v334 = vld [vmem:[%s333] sm:$0xf]
    %v335 = vld [vmem:[%s333 + $0x4] sm:$0xf]
    %v336 = vld [vmem:[%s333 + $0x8] sm:$0xf]
    %v337 = vld [vmem:[%s333 + $0xc] sm:$0xf]
    %v338 = vld [vmem:[%s333 + $0x10] sm:$0xf]
    %v339 = vld [vmem:[%s333 + $0x14] sm:$0xf]
    %v340 = vld [vmem:[%s333 + $0x18] sm:$0xf]
    %v341 = vld [vmem:[%s333 + $0x1c] sm:$0xf]
    %v344 = vunpack.c.l.b16 %v331
    %v345 = vunpack.c.l.b16 %v332
    %v346 = vpack.c.b16 %v89, %v344
    %v347 = vpack.c.b16 %v345, %v94
    %vm348 = vsmask.f32 5376
    %v350 = vshrl.u32 %v346, 16
    %v352 = vrot.slane %v350, 2
    %v353 = vshll.u32 %v346, 16
    %v355 = vrot.slane %v353, 3
    %v356 = vor.u32 %v352, %v355
    %v357 = vrot.slane %v113, 2
    %v358 = vrot.slane %v109, 3
    %v359 = vor.u32 %v357, %v358
    %v360 = vsel %vm348, %v356, %v359
    %v361 = vrot.slane %v121, 2
    %v362 = vrot.slane %v117, 3
    %v363 = vor.u32 %v361, %v362
    %v364 = vsel %vm348, %v359, %v363
    %v366 = vshrl.u32 %v347, 16
    %v368 = vrot.slane %v366, 2
    %v369 = vshll.u32 %v347, 16
    %v371 = vrot.slane %v369, 3
    %v372 = vor.u32 %v368, %v371
    %v373 = vsel %vm348, %v363, %v372
    %v382 = vunpack.c.l.b16 %v334
    %v383 = vunpack.c.l.b16 %v335
    %v384 = vunpack.c.l.b16 %v336
    %v385 = vunpack.c.l.b16 %v337
    %v386 = vunpack.c.l.b16 %v338
    %v387 = vunpack.c.l.b16 %v339
    %v388 = vunpack.c.l.b16 %v340
    %v389 = vunpack.c.l.b16 %v341
    %v390 = vpack.c.b16 %v383, %v382
    %v391 = vpack.c.b16 %v385, %v384
    %v392 = vpack.c.b16 %v387, %v386
    %v393 = vpack.c.b16 %v389, %v388
    %v399 = vsel %vm156, %v360, 0
    %v402 = vsel %vm156, %v364, 0
    %v405 = vsel %vm156, %v373, 0
    %v408 = vsel %vm156, %v372, 0
    %410 = vmatprep.subr.bf16.mxu0 0
    %411 = vmatpush1.bf16.msra.mxu0 %v390
    %412 = vmatprep.subr.bf16.mxu0 0
    %413 = vmatpush1.bf16.msra.mxu0 %v391
    %414 = vmatprep.subr.bf16.mxu0 0
    %415 = vmatpush1.bf16.msra.mxu0 %v392
    %416 = vmatprep.subr.bf16.mxu0 0
    %417 = vmatpush1.bf16.msra.mxu0 %v393
    %418 = vmatprep.subr.bf16.mxu0 0
    %419 = vmatpush1.bf16.msra.mxu0 0
    %420 = vmatprep.subr.bf16.mxu0 0
    %421 = vmatpush1.bf16.msra.mxu0 0
    %422 = vmatprep.subr.bf16.mxu0 0
    %423 = vmatpush1.bf16.msra.mxu0 0
    %424 = vmatprep.subr.bf16.mxu0 0
    %425 = vmatpush1.bf16.msra.mxu0 0
    %426 = vmatprep.subr.bf16.mxu0 0
    %427 = vmatpush1.bf16.msra.mxu0 0
    %428 = vmatprep.subr.bf16.mxu0 0
    %429 = vmatpush1.bf16.msra.mxu0 0
    %430 = vmatprep.subr.bf16.mxu0 0
    %431 = vmatpush1.bf16.msra.mxu0 0
    %432 = vmatprep.subr.bf16.mxu0 0
    %433 = vmatpush1.bf16.msra.mxu0 0
    %434 = vmatprep.subr.bf16.mxu0 0
    %435 = vmatpush1.bf16.msra.mxu0 0
    %436 = vmatprep.subr.bf16.mxu0 0
    %437 = vmatpush1.bf16.msra.mxu0 0
    %438 = vmatprep.subr.bf16.mxu0 0
    %439 = vmatpush1.bf16.msra.mxu0 0
    %440 = vmatprep.subr.bf16.mxu0 0
    %441 = vmatpush1.bf16.msra.mxu0 0
    %442 = vmatprep.mubr.bf16.mxu0 0
    %443 = vmatmul.mubr.bf16.gmra.mrb[0].mxu0 %v399
    %v444 = vpop.f32.mrb[0].mxu0
    %v445 = vadd.f32 0.0, %v444
    %v446 = vpop.f32.mrb[0].mxu0
    %v447 = vpop.f32.mrb[0].mxu0
    %v448 = vadd.f32 0.0, %v447
    %v449 = vpop.f32.mrb[0].mxu0
    %450 = vmatprep.mubr.bf16.mxu0 0
    %451 = vmatmul.mubr.bf16.gmra.mrb[0].mxu0 %v402
    %v452 = vpop.f32.mrb[0].mxu0
    %v453 = vadd.f32 0.0, %v452
    %v454 = vpop.f32.mrb[0].mxu0
    %v455 = vpop.f32.mrb[0].mxu0
    %v456 = vadd.f32 0.0, %v455
    %v457 = vpop.f32.mrb[0].mxu0
    %458 = vmatprep.mubr.bf16.mxu0 0
    %459 = vmatmul.mubr.bf16.gmra.mrb[0].mxu0 %v405
    %v460 = vpop.f32.mrb[0].mxu0
    %v461 = vadd.f32 0.0, %v460
    %v462 = vpop.f32.mrb[0].mxu0
    %v463 = vpop.f32.mrb[0].mxu0
    %v464 = vadd.f32 0.0, %v463
    %v465 = vpop.f32.mrb[0].mxu0
    %466 = vmatprep.mubr.bf16.mxu0 0
    %467 = vmatmul.mubr.bf16.gmra.mrb[0].mxu0 %v408
    %v468 = vpop.f32.mrb[0].mxu0
    %v469 = vadd.f32 0.0, %v468
    %v470 = vpop.f32.mrb[0].mxu0
    %v471 = vpop.f32.mrb[0].mxu0
    %v472 = vpop.f32.mrb[0].mxu0
    %473 = vdwg.mxu0
    %v474 = vadd.f32 %v302, %v445
    %v475 = vadd.f32 %v305, %v448
    %v476 = vadd.f32 %v310, %v453
    %v477 = vadd.f32 %v313, %v456
    %v478 = vadd.f32 %v318, %v461
    %v479 = vadd.f32 %v321, %v464
    %v480 = vadd.f32 %v326, %v469
    %v481 = vld [vmem:[#allocation2] sm:$0x8]
    %s482 = scalar_lea.vmem [#allocation5], 96
    %v483 = vld [vmem:[%s482] sm:$0xf]
    %v484 = vld [vmem:[%s482 + $0x4] sm:$0xf]
    %v485 = vld [vmem:[%s482 + $0x8] sm:$0xf]
    %v486 = vld [vmem:[%s482 + $0xc] sm:$0xf]
    %v487 = vld [vmem:[%s482 + $0x10] sm:$0xf]
    %v488 = vld [vmem:[%s482 + $0x14] sm:$0xf]
    %v489 = vld [vmem:[%s482 + $0x18] sm:$0xf]
    %v490 = vld [vmem:[%s482 + $0x1c] sm:$0xf]
    %v492 = vunpack.c.l.b16 %v481
    %v493 = vpack.c.b16 %v89, %v492
    %vm494 = vcmask 1044480
    %v495 = vrot.slane %v493, 3
    %v496 = vrot.slane %v97, 3
    %v497 = vsel %vm494, %v495, %v496
    %v498 = vrot.slane %v98, 3
    %v499 = vsel %vm494, %v496, %v498
    %v500 = vrot.slane %v347, 3
    %v501 = vsel %vm494, %v498, %v500
    %v510 = vunpack.c.l.b16 %v483
    %v511 = vunpack.c.l.b16 %v484
    %v512 = vunpack.c.l.b16 %v485
    %v513 = vunpack.c.l.b16 %v486
    %v514 = vunpack.c.l.b16 %v487
    %v515 = vunpack.c.l.b16 %v488
    %v516 = vunpack.c.l.b16 %v489
    %v517 = vunpack.c.l.b16 %v490
    %v518 = vpack.c.b16 %v511, %v510
    %v519 = vpack.c.b16 %v513, %v512
    %v520 = vpack.c.b16 %v515, %v514
    %v521 = vpack.c.b16 %v517, %v516
    %v527 = vsel %vm156, %v497, 0
    %v530 = vsel %vm156, %v499, 0
    %v533 = vsel %vm156, %v501, 0
    %v536 = vsel %vm156, %v500, 0
    %538 = vmatprep.subr.bf16.mxu0 0
    %539 = vmatpush1.bf16.msra.mxu0 %v518
    %540 = vmatprep.subr.bf16.mxu0 0
    %541 = vmatpush1.bf16.msra.mxu0 %v519
    %542 = vmatprep.subr.bf16.mxu0 0
    %543 = vmatpush1.bf16.msra.mxu0 %v520
    %544 = vmatprep.subr.bf16.mxu0 0
    %545 = vmatpush1.bf16.msra.mxu0 %v521
    %546 = vmatprep.subr.bf16.mxu0 0
    %547 = vmatpush1.bf16.msra.mxu0 0
    %548 = vmatprep.subr.bf16.mxu0 0
    %549 = vmatpush1.bf16.msra.mxu0 0
    %550 = vmatprep.subr.bf16.mxu0 0
    %551 = vmatpush1.bf16.msra.mxu0 0
    %552 = vmatprep.subr.bf16.mxu0 0
    %553 = vmatpush1.bf16.msra.mxu0 0
    %554 = vmatprep.subr.bf16.mxu0 0
    %555 = vmatpush1.bf16.msra.mxu0 0
    %556 = vmatprep.subr.bf16.mxu0 0
    %557 = vmatpush1.bf16.msra.mxu0 0
    %558 = vmatprep.subr.bf16.mxu0 0
    %559 = vmatpush1.bf16.msra.mxu0 0
    %560 = vmatprep.subr.bf16.mxu0 0
    %561 = vmatpush1.bf16.msra.mxu0 0
    %562 = vmatprep.subr.bf16.mxu0 0
    %563 = vmatpush1.bf16.msra.mxu0 0
    %564 = vmatprep.subr.bf16.mxu0 0
    %565 = vmatpush1.bf16.msra.mxu0 0
    %566 = vmatprep.subr.bf16.mxu0 0
    %567 = vmatpush1.bf16.msra.mxu0 0
    %568 = vmatprep.subr.bf16.mxu0 0
    %569 = vmatpush1.bf16.msra.mxu0 0
    %570 = vmatprep.mubr.bf16.mxu0 0
    %571 = vmatmul.mubr.bf16.gmra.mrb[0].mxu0 %v527
    %v572 = vpop.f32.mrb[0].mxu0
    %v573 = vadd.f32 0.0, %v572
    %v574 = vpop.f32.mrb[0].mxu0
    %v575 = vpop.f32.mrb[0].mxu0
    %v576 = vadd.f32 0.0, %v575
    %v577 = vpop.f32.mrb[0].mxu0
    %578 = vmatprep.mubr.bf16.mxu0 0
    %579 = vmatmul.mubr.bf16.gmra.mrb[0].mxu0 %v530
    %v580 = vpop.f32.mrb[0].mxu0
    %v581 = vadd.f32 0.0, %v580
    %v582 = vpop.f32.mrb[0].mxu0
    %v583 = vpop.f32.mrb[0].mxu0
    %v584 = vadd.f32 0.0, %v583
    %v585 = vpop.f32.mrb[0].mxu0
    %586 = vmatprep.mubr.bf16.mxu0 0
    %587 = vmatmul.mubr.bf16.gmra.mrb[0].mxu0 %v533
    %v588 = vpop.f32.mrb[0].mxu0
    %v589 = vadd.f32 0.0, %v588
    %v590 = vpop.f32.mrb[0].mxu0
    %v591 = vpop.f32.mrb[0].mxu0
    %v592 = vadd.f32 0.0, %v591
    %v593 = vpop.f32.mrb[0].mxu0
    %594 = vmatprep.mubr.bf16.mxu0 0
    %595 = vmatmul.mubr.bf16.gmra.mrb[0].mxu0 %v536
    %v596 = vpop.f32.mrb[0].mxu0
    %v597 = vadd.f32 0.0, %v596
    %v598 = vpop.f32.mrb[0].mxu0
    %v599 = vpop.f32.mrb[0].mxu0
    %v600 = vpop.f32.mrb[0].mxu0
    %601 = vdwg.mxu0
    %v602 = vadd.f32 %v474, %v573
    %v603 = vadd.f32 %v475, %v576
    %v604 = vadd.f32 %v476, %v581
    %v605 = vadd.f32 %v477, %v584
    %v606 = vadd.f32 %v478, %v589
    %v607 = vadd.f32 %v479, %v592
    %v608 = vadd.f32 %v480, %v597
    %v609 = vld [vmem:[#allocation7] sm:$0x1]
    %v611 = vlaneseq
    %v612 = vshrl.u32 %v611, 7
    %v613 = vsub.s32 0, %v612
    %v614 = vrot.slane %v609, %v613
    %v616 = vadd.f32 %v602, %v614
    %v617 = vadd.f32 %v603, %v614
    %v618 = vadd.f32 %v604, %v614
    %v619 = vadd.f32 %v605, %v614
    %v620 = vadd.f32 %v606, %v614
    %v621 = vadd.f32 %v607, %v614
    %v622 = vadd.f32 %v608, %v614
    %v623 = vmax.f32 %v616, 0.0
    %v624 = vmax.f32 %v617, 0.0
    %v625 = vmax.f32 %v618, 0.0
    %v626 = vmax.f32 %v619, 0.0
    %v627 = vmax.f32 %v620, 0.0
    %v628 = vmax.f32 %v621, 0.0
    %v629 = vmax.f32 %v622, 0.0
    %vm630 = vcmask 261120
    %631 = vst.msk [vmem:[#allocation8] sm:$0xff] %vm630, %v623
    %632 = vst.msk [vmem:[#allocation8 + $0x8] sm:$0xff] %vm630, %v624
    %633 = vst.msk [vmem:[#allocation8 + $0x10] sm:$0xff] %vm630, %v625
    %634 = vst.msk [vmem:[#allocation8 + $0x18] sm:$0xff] %vm630, %v626
    %635 = vst.msk [vmem:[#allocation8 + $0x20] sm:$0xff] %vm630, %v627
    %636 = vst.msk [vmem:[#allocation8 + $0x28] sm:$0xff] %vm630, %v628
    %637 = vst.msk [vmem:[#allocation8 + $0x30] sm:$0xff] %vm630, %v629
    // Predicated region
    $region26: #{encoder_forward.4} parent=1 // pred_check
      _
    $region27: #{encoder_forward.4} parent=1 // pred_check_branch
      %639 = sbr.rel (0) target = $region29
    $region28: #{encoder_forward.4} parent=1 // pred_region
      %s641 = ssub.s32 896, 896
      %642 = vsyncadd [#allocation4], %s641
      %s643 = sshll.u32 [#allocation8], 4
      %s644 = int_to_ptr.vmem [resolvable:$true] %s643
      %649 = dma.vmem_to_hbm [thread:$0]  %s644, 896, %s3, [#allocation4], 128, 128, 8
    $region29: #{encoder_forward.4} parent=1 // pred_fallthru
      _
    // Predicated region
    $region30: #{encoder_forward.4} parent=1 // pred_check
      _
    $region31: #{encoder_forward.4} parent=1 // pred_check_branch
      %651 = sbr.rel (0) target = $region33
    $region32: #{encoder_forward.4} parent=1 // pred_region
      %652 = dma.done [#allocation4], 896
    $region33: #{encoder_forward.4} parent=1 // pred_fallthru
      _
    %653 = vsyncpa [#allocation3], 1
    %654 = vsyncpa [#allocation6], 1
    %655 = vsyncpa [#allocation4], 1

// kernel: encoder_forward.5
$region0: #{encoder_forward.5}
  #allocation0 [shape = 'u32[]', space=smem, size = 0x4, offset = 0x4, fixed_abs, tag = 'smem constant byte address 0x4 - core index']
  #allocation1 [shape = 'u32[144,128]{1,0:T(1,128)}', space=vmem, size = 0x12000, scoped, tag = 'internal scratch']
  #allocation2 [shape = 'f32[88,32]{1,0:T(8,128)}', space=vmem, size = 0xb000, scoped, tag = 'scratch operand']
  %s0 = inlined_call_operand.hbm [shape: bf16[88,32], index: 0, kind: input, shape index: {}]
  %s1 = inlined_call_operand.hbm [shape: f32[72,1], index: 1, kind: input, shape index: {}]
  %s2 = inlined_call_operand.hbm [shape: bf16[9,32,32], index: 2, kind: input, shape index: {}]
  %s3 = inlined_call_operand.hbm [shape: f32[1,32], index: 3, kind: input, shape index: {}]
  %s4 = inlined_call_operand.hbm [shape: f32[2,9,32,8], index: 4, kind: input, shape index: {}]
  %s5 = inlined_call_operand.hbm [shape: f32[2,1,8], index: 5, kind: input, shape index: {}]
  %s6 = inlined_call_operand.hbm [shape: f32[2,1,8], index: 6, kind: input, shape index: {}]
  %s7 = inlined_call_operand.hbm [shape: f32[2,8,32], index: 7, kind: input, shape index: {}]
  %s8 = inlined_call_operand.hbm [shape: f32[2,1,32], index: 8, kind: input, shape index: {}]
  %s9 = inlined_call_operand.hbm [shape: f32[2,1,32], index: 9, kind: input, shape index: {}]
  %s10 = inlined_call_operand.hbm [shape: f32[72,32], index: 10, kind: output, shape index: {}]
  %s11 = sld [smem:[#allocation0]]
  $region90: #{encoder_forward.5} parent=0
    _
  %s13 = ssub.s32 1, %s11
  %s14 = scalar_select 0, %s13, %s11
  $region1: #{encoder_forward.5} parent=0
    #allocation3 [shape = 'u8[22528]{0}', space=vmem, size = 0x5800, scoped, tag = 'input window, operand 0, single buffered']
    #allocation4 [shape = 's32[1]{0}', space=sflag, size = 0x4, scoped, tag = 'scoped memory for encoder_forward.5']
    #allocation5 [shape = 's32[1]{0}', space=sflag, size = 0x4, scoped, tag = 'scoped memory for encoder_forward.5']
    #allocation6 [shape = 'u8[36864]{0}', space=vmem, size = 0x9000, scoped, tag = 'input window, operand 1, single buffered']
    #allocation7 [shape = 's32[1]{0}', space=sflag, size = 0x4, scoped, tag = 'scoped memory for encoder_forward.5']
    #allocation8 [shape = 'u8[73728]{0}', space=vmem, size = 0x12000, scoped, tag = 'input window, operand 2, single buffered']
    #allocation9 [shape = 'u8[512]{0}', space=vmem, size = 0x400, scoped, tag = 'input window, operand 3, single buffered']
    #allocation10 [shape = 's32[1]{0}', space=sflag, size = 0x4, scoped, tag = 'scoped memory for encoder_forward.5']
    #allocation11 [shape = 'u8[294912]{0}', space=vmem, size = 0x48000, scoped, tag = 'input window, operand 4, single buffered']
    #allocation12 [shape = 'u8[1024]{0}', space=vmem, size = 0x400, scoped, tag = 'input window, operand 5, single buffered']
    #allocation13 [shape = 's32[1]{0}', space=sflag, size = 0x4, scoped, tag = 'scoped memory for encoder_forward.5']
    #allocation14 [shape = 'u8[1024]{0}', space=vmem, size = 0x400, scoped, tag = 'input window, operand 6, single buffered']
    #allocation15 [shape = 'u8[8192]{0}', space=vmem, size = 0x2000, scoped, tag = 'input window, operand 7, single buffered']
    #allocation16 [shape = 's32[1]{0}', space=sflag, size = 0x4, scoped, tag = 'scoped memory for encoder_forward.5']
    #allocation17 [shape = 'u8[1024]{0}', space=vmem, size = 0x400, scoped, tag = 'input window, operand 8, single buffered']
    #allocation18 [shape = 'u8[1024]{0}', space=vmem, size = 0x400, scoped, tag = 'input window, operand 9, single buffered']
    #allocation19 [shape = 's32[1]{0}', space=sflag, size = 0x4, scoped, tag = 'scoped memory for encoder_forward.5']
    #allocation20 [shape = 'u8[36864]{0}', space=vmem, size = 0x9000, scoped, tag = 'output window, operand 0, single buffered']
    %15 = vsyncpa [#allocation4], 0
    %16 = vsyncpa [#allocation7], 0
    %17 = vsyncpa [#allocation10], 0
    %18 = vsyncpa [#allocation13], 0
    %19 = vsyncpa [#allocation16], 0
    %20 = vsyncpa [#allocation19], 0
    %21 = vsyncpa [#allocation5], 0
    // Predicated region
    $region2: #{encoder_forward.5} parent=1 // pred_check
      _
    $region3: #{encoder_forward.5} parent=1 // pred_check_branch
      %23 = sbr.rel (0) target = $region5
    $region4: #{encoder_forward.5} parent=1 // pred_region
      %s25 = ssub.s32 704, 704
      %26 = vsyncadd [#allocation4], %s25
      %s27 = sshll.u32 [#allocation3], 4
      %s28 = int_to_ptr.vmem [resolvable:$true] %s27
      %33 = dma.hbm_to_vmem [thread:$0]  %s0, 704, %s28, [#allocation4], 64, 64, 4
    $region5: #{encoder_forward.5} parent=1 // pred_fallthru
      _
    // Predicated region
    $region6: #{encoder_forward.5} parent=1 // pred_check
      _
    $region7: #{encoder_forward.5} parent=1 // pred_check_branch
      %35 = sbr.rel (0) target = $region9
    $region8: #{encoder_forward.5} parent=1 // pred_region
      %s37 = ssub.s32 1152, 1152
      %38 = vsyncadd [#allocation7], %s37
      %s39 = sshll.u32 [#allocation6], 4
      %s40 = int_to_ptr.vmem [resolvable:$true] %s39
      %45 = dma.hbm_to_vmem [thread:$0]  %s1, 1152, %s40, [#allocation7], 128, 128, 8
    $region9: #{encoder_forward.5} parent=1 // pred_fallthru
      _
    // Predicated region
    $region10: #{encoder_forward.5} parent=1 // pred_check
      _
    $region11: #{encoder_forward.5} parent=1 // pred_check_branch
      %47 = sbr.rel (0) target = $region13
    $region12: #{encoder_forward.5} parent=1 // pred_region
      %s49 = ssub.s32 2304, 2304
      %50 = vsyncadd [#allocation7], %s49
      %s51 = sshll.u32 [#allocation8], 4
      %s52 = int_to_ptr.vmem [resolvable:$true] %s51
      %57 = dma.hbm_to_vmem [thread:$0]  %s2, 2304, %s52, [#allocation7], 64, 64, 4
    $region13: #{encoder_forward.5} parent=1 // pred_fallthru
      _
    // Predicated region
    $region14: #{encoder_forward.5} parent=1 // pred_check
      _
    $region15: #{encoder_forward.5} parent=1 // pred_check_branch
      %59 = sbr.rel (0) target = $region17
    $region16: #{encoder_forward.5} parent=1 // pred_region
      %s61 = ssub.s32 16, 16
      %62 = vsyncadd [#allocation10], %s61
      %s64 = sshll.u32 [#allocation9], 4
      %s65 = int_to_ptr.vmem [resolvable:$true] %s64
      %67 = dma.hbm_to_vmem [thread:$0]  %s3, 16, %s65, [#allocation10]
    $region17: #{encoder_forward.5} parent=1 // pred_fallthru
      _
    // Predicated region
    $region18: #{encoder_forward.5} parent=1 // pred_check
      _
    $region19: #{encoder_forward.5} parent=1 // pred_check_branch
      %69 = sbr.rel (0) target = $region21
    $region20: #{encoder_forward.5} parent=1 // pred_region
      %s71 = ssub.s32 9216, 9216
      %72 = vsyncadd [#allocation10], %s71
      %s73 = sshll.u32 [#allocation11], 4
      %s74 = int_to_ptr.vmem [resolvable:$true] %s73
      %79 = dma.hbm_to_vmem [thread:$0]  %s4, 9216, %s74, [#allocation10], 128, 128, 8
    $region21: #{encoder_forward.5} parent=1 // pred_fallthru
      _
    // Predicated region
    $region22: #{encoder_forward.5} parent=1 // pred_check
      _
    $region23: #{encoder_forward.5} parent=1 // pred_check_branch
      %81 = sbr.rel (0) target = $region25
    $region24: #{encoder_forward.5} parent=1 // pred_region
      %s83 = ssub.s32 32, 32
      %84 = vsyncadd [#allocation13], %s83
      %s85 = sshll.u32 [#allocation12], 4
      %s86 = int_to_ptr.vmem [resolvable:$true] %s85
      %91 = dma.hbm_to_vmem [thread:$0]  %s5, 32, %s86, [#allocation13], 16, 16, 1
    $region25: #{encoder_forward.5} parent=1 // pred_fallthru
      _
    // Predicated region
    $region26: #{encoder_forward.5} parent=1 // pred_check
      _
    $region27: #{encoder_forward.5} parent=1 // pred_check_branch
      %93 = sbr.rel (0) target = $region29
    $region28: #{encoder_forward.5} parent=1 // pred_region
      %s95 = ssub.s32 32, 32
      %96 = vsyncadd [#allocation13], %s95
      %s97 = sshll.u32 [#allocation14], 4
      %s98 = int_to_ptr.vmem [resolvable:$true] %s97
      %103 = dma.hbm_to_vmem [thread:$0]  %s6, 32, %s98, [#allocation13], 16, 16, 1
    $region29: #{encoder_forward.5} parent=1 // pred_fallthru
      _
    // Predicated region
    $region30: #{encoder_forward.5} parent=1 // pred_check
      _
    $region31: #{encoder_forward.5} parent=1 // pred_check_branch
      %105 = sbr.rel (0) target = $region33
    $region32: #{encoder_forward.5} parent=1 // pred_region
      %s107 = ssub.s32 256, 256
      %108 = vsyncadd [#allocation16], %s107
      %s109 = sshll.u32 [#allocation15], 4
      %s110 = int_to_ptr.vmem [resolvable:$true] %s109
      %115 = dma.hbm_to_vmem [thread:$0]  %s7, 256, %s110, [#allocation16], 128, 128, 8
    $region33: #{encoder_forward.5} parent=1 // pred_fallthru
      _
    // Predicated region
    $region34: #{encoder_forward.5} parent=1 // pred_check
      _
    $region35: #{encoder_forward.5} parent=1 // pred_check_branch
      %117 = sbr.rel (0) target = $region37
    $region36: #{encoder_forward.5} parent=1 // pred_region
      %s119 = ssub.s32 32, 32
      %120 = vsyncadd [#allocation16], %s119
      %s121 = sshll.u32 [#allocation17], 4
      %s122 = int_to_ptr.vmem [resolvable:$true] %s121
      %127 = dma.hbm_to_vmem [thread:$0]  %s8, 32, %s122, [#allocation16], 16, 16, 1
    $region37: #{encoder_forward.5} parent=1 // pred_fallthru
      _
    // Predicated region
    $region38: #{encoder_forward.5} parent=1 // pred_check
      _
    $region39: #{encoder_forward.5} parent=1 // pred_check_branch
      %129 = sbr.rel (0) target = $region41
    $region40: #{encoder_forward.5} parent=1 // pred_region
      %s131 = ssub.s32 32, 32
      %132 = vsyncadd [#allocation19], %s131
      %s133 = sshll.u32 [#allocation18], 4
      %s134 = int_to_ptr.vmem [resolvable:$true] %s133
      %139 = dma.hbm_to_vmem [thread:$0]  %s9, 32, %s134, [#allocation19], 16, 16, 1
    $region41: #{encoder_forward.5} parent=1 // pred_fallthru
      _
    // Predicated region
    $region42: #{encoder_forward.5} parent=1 // pred_check
      _
    $region43: #{encoder_forward.5} parent=1 // pred_check_branch
      %141 = sbr.rel (0) target = $region45
    $region44: #{encoder_forward.5} parent=1 // pred_region
      %142 = dma.done [#allocation4], 704
    $region45: #{encoder_forward.5} parent=1 // pred_fallthru
      _
    // Predicated region
    $region46: #{encoder_forward.5} parent=1 // pred_check
      _
    $region47: #{encoder_forward.5} parent=1 // pred_check_branch
      %144 = sbr.rel (0) target = $region49
    $region48: #{encoder_forward.5} parent=1 // pred_region
      %145 = dma.done [#allocation7], 1152
    $region49: #{encoder_forward.5} parent=1 // pred_fallthru
      _
    // Predicated region
    $region50: #{encoder_forward.5} parent=1 // pred_check
      _
    $region51: #{encoder_forward.5} parent=1 // pred_check_branch
      %147 = sbr.rel (0) target = $region53
    $region52: #{encoder_forward.5} parent=1 // pred_region
      %148 = dma.done [#allocation7], 2304
    $region53: #{encoder_forward.5} parent=1 // pred_fallthru
      _
    // Predicated region
    $region54: #{encoder_forward.5} parent=1 // pred_check
      _
    $region55: #{encoder_forward.5} parent=1 // pred_check_branch
      %150 = sbr.rel (0) target = $region57
    $region56: #{encoder_forward.5} parent=1 // pred_region
      %151 = dma.done [#allocation10], 16
    $region57: #{encoder_forward.5} parent=1 // pred_fallthru
      _
    // Predicated region
    $region58: #{encoder_forward.5} parent=1 // pred_check
      _
    $region59: #{encoder_forward.5} parent=1 // pred_check_branch
      %153 = sbr.rel (0) target = $region61
    $region60: #{encoder_forward.5} parent=1 // pred_region
      %154 = dma.done [#allocation10], 9216
    $region61: #{encoder_forward.5} parent=1 // pred_fallthru
      _
    // Predicated region
    $region62: #{encoder_forward.5} parent=1 // pred_check
      _
    $region63: #{encoder_forward.5} parent=1 // pred_check_branch
      %156 = sbr.rel (0) target = $region65
    $region64: #{encoder_forward.5} parent=1 // pred_region
      %157 = dma.done [#allocation13], 32
    $region65: #{encoder_forward.5} parent=1 // pred_fallthru
      _
    // Predicated region
    $region66: #{encoder_forward.5} parent=1 // pred_check
      _
    $region67: #{encoder_forward.5} parent=1 // pred_check_branch
      %159 = sbr.rel (0) target = $region69
    $region68: #{encoder_forward.5} parent=1 // pred_region
      %160 = dma.done [#allocation13], 32
    $region69: #{encoder_forward.5} parent=1 // pred_fallthru
      _
    // Predicated region
    $region70: #{encoder_forward.5} parent=1 // pred_check
      _
    $region71: #{encoder_forward.5} parent=1 // pred_check_branch
      %162 = sbr.rel (0) target = $region73
    $region72: #{encoder_forward.5} parent=1 // pred_region
      %163 = dma.done [#allocation16], 256
    $region73: #{encoder_forward.5} parent=1 // pred_fallthru
      _
    // Predicated region
    $region74: #{encoder_forward.5} parent=1 // pred_check
      _
    $region75: #{encoder_forward.5} parent=1 // pred_check_branch
      %165 = sbr.rel (0) target = $region77
    $region76: #{encoder_forward.5} parent=1 // pred_region
      %166 = dma.done [#allocation16], 32
    $region77: #{encoder_forward.5} parent=1 // pred_fallthru
      _
    // Predicated region
    $region78: #{encoder_forward.5} parent=1 // pred_check
      _
    $region79: #{encoder_forward.5} parent=1 // pred_check_branch
      %168 = sbr.rel (0) target = $region81
    $region80: #{encoder_forward.5} parent=1 // pred_region
      %169 = dma.done [#allocation19], 32
    $region81: #{encoder_forward.5} parent=1 // pred_fallthru
      _
    %v171 = vld [vmem:[#allocation6] sm:$0xff]
    %v172 = vld [vmem:[#allocation6 + $0x8] sm:$0xff]
    %v173 = vld [vmem:[#allocation6 + $0x10] sm:$0xff]
    %v174 = vld [vmem:[#allocation6 + $0x18] sm:$0xff]
    %v175 = vld [vmem:[#allocation6 + $0x20] sm:$0xff]
    %v176 = vld [vmem:[#allocation6 + $0x28] sm:$0xff]
    %v177 = vld [vmem:[#allocation6 + $0x30] sm:$0xff]
    %v178 = vld [vmem:[#allocation6 + $0x38] sm:$0xff]
    %v179 = vld [vmem:[#allocation6 + $0x40] sm:$0xff]
    %v180 = vld [vmem:[#allocation3] sm:$0xf]
    %v181 = vld [vmem:[#allocation3 + $0x4] sm:$0xf]
    %v182 = vld [vmem:[#allocation3 + $0x8] sm:$0xf]
    %v183 = vld [vmem:[#allocation3 + $0xc] sm:$0xf]
    %v184 = vld [vmem:[#allocation3 + $0x10] sm:$0xf]
    %v185 = vld [vmem:[#allocation3 + $0x14] sm:$0xf]
    %v186 = vld [vmem:[#allocation3 + $0x18] sm:$0xf]
    %v187 = vld [vmem:[#allocation3 + $0x1c] sm:$0xf]
    %v188 = vld [vmem:[#allocation3 + $0x20] sm:$0xf]
    %v189 = vld [vmem:[#allocation3 + $0x24] sm:$0x1]
    %v190 = vld [vmem:[#allocation8] sm:$0xf]
    %v191 = vld [vmem:[#allocation8 + $0x4] sm:$0xf]
    %v192 = vld [vmem:[#allocation8 + $0x8] sm:$0xf]
    %v193 = vld [vmem:[#allocation8 + $0xc] sm:$0xf]
    %v194 = vld [vmem:[#allocation3] sm:$0xe]
    %s195 = scalar_lea.vmem [#allocation8], 16
    %v196 = vld [vmem:[%s195] sm:$0xf]
    %v197 = vld [vmem:[%s195 + $0x4] sm:$0xf]
    %v198 = vld [vmem:[%s195 + $0x8] sm:$0xf]
    %v199 = vld [vmem:[%s195 + $0xc] sm:$0xf]
    %v210 = vunpack.c.l.b16 %v194
    %v211 = vunpack.c.l.b16 %v181
    %v212 = vunpack.c.l.b16 %v182
    %v213 = vunpack.c.l.b16 %v183
    %v214 = vunpack.c.l.b16 %v184
    %v215 = vunpack.c.l.b16 %v185
    %v216 = vunpack.c.l.b16 %v186
    %v217 = vunpack.c.l.b16 %v187
    %v218 = vunpack.c.l.b16 %v188
    %v219 = vunpack.c.l.b16 %v189
    %v220 = vpack.c.b16 %v211, %v210
    %v221 = vpack.c.b16 %v213, %v212
    %v222 = vpack.c.b16 %v215, %v214
    %v223 = vpack.c.b16 %v217, %v216
    %v224 = vpack.c.b16 %v219, %v218
    %vm225 = vcmask 1046528
    %v226 = vrot.slane %v220, 1
    %v227 = vrot.slane %v221, 1
    %v228 = vsel %vm225, %v226, %v227
    %v229 = vrot.slane %v222, 1
    %v230 = vsel %vm225, %v227, %v229
    %v231 = vrot.slane %v223, 1
    %v232 = vsel %vm225, %v229, %v231
    %v233 = vrot.slane %v224, 1
    %v234 = vsel %vm225, %v231, %v233
    %v239 = vunpack.c.l.b16 %v196
    %v240 = vunpack.c.l.b16 %v197
    %v241 = vunpack.c.l.b16 %v198
    %v242 = vunpack.c.l.b16 %v199
    %v243 = vpack.c.b16 %v240, %v239
    %v244 = vpack.c.b16 %v242, %v241
    %vm247 = vcmask 261120
    %v249 = vsel %vm247, %v228, 0
    %v252 = vsel %vm247, %v230, 0
    %v255 = vsel %vm247, %v232, 0
    %v258 = vsel %vm247, %v234, 0
    %v261 = vsel %vm247, %v233, 0
    %263 = vmatprep.subr.bf16.mxu0 0
    %264 = vmatpush1.bf16.msra.mxu0 %v243
    %265 = vmatprep.subr.bf16.mxu0 0
    %266 = vmatpush1.bf16.msra.mxu0 %v244
    %267 = vmatprep.subr.bf16.mxu0 0
    %268 = vmatpush1.bf16.msra.mxu0 0
    %269 = vmatprep.subr.bf16.mxu0 0
    %270 = vmatpush1.bf16.msra.mxu0 0
    %271 = vmatprep.subr.bf16.mxu0 0
    %272 = vmatpush1.bf16.msra.mxu0 0
    %273 = vmatprep.subr.bf16.mxu0 0
    %274 = vmatpush1.bf16.msra.mxu0 0
    %275 = vmatprep.subr.bf16.mxu0 0
    %276 = vmatpush1.bf16.msra.mxu0 0
    %277 = vmatprep.subr.bf16.mxu0 0
    %278 = vmatpush1.bf16.msra.mxu0 0
    %279 = vmatprep.subr.bf16.mxu0 0
    %280 = vmatpush1.bf16.msra.mxu0 0
    %281 = vmatprep.subr.bf16.mxu0 0
    %282 = vmatpush1.bf16.msra.mxu0 0
    %283 = vmatprep.subr.bf16.mxu0 0
    %284 = vmatpush1.bf16.msra.mxu0 0
    %285 = vmatprep.subr.bf16.mxu0 0
    %286 = vmatpush1.bf16.msra.mxu0 0
    %287 = vmatprep.subr.bf16.mxu0 0
    %288 = vmatpush1.bf16.msra.mxu0 0
    %289 = vmatprep.subr.bf16.mxu0 0
    %290 = vmatpush1.bf16.msra.mxu0 0
    %291 = vmatprep.subr.bf16.mxu0 0
    %292 = vmatpush1.bf16.msra.mxu0 0
    %293 = vmatprep.subr.bf16.mxu0 0
    %294 = vmatpush1.bf16.msra.mxu0 0
    %295 = vmatprep.mubr.bf16.mxu0 0
    %296 = vmatmul.mubr.bf16.gmra.mrb[0].mxu0 %v249
    %v297 = vpop.f32.mrb[0].mxu0
    %v298 = vadd.f32 0.0, %v297
    %v299 = vpop.f32.mrb[0].mxu0
    %v300 = vpop.f32.mrb[0].mxu0
    %v301 = vadd.f32 0.0, %v300
    %v302 = vpop.f32.mrb[0].mxu0
    %303 = vmatprep.mubr.bf16.mxu0 0
    %304 = vmatmul.mubr.bf16.gmra.mrb[0].mxu0 %v252
    %v305 = vpop.f32.mrb[0].mxu0
    %v306 = vadd.f32 0.0, %v305
    %v307 = vpop.f32.mrb[0].mxu0
    %v308 = vpop.f32.mrb[0].mxu0
    %v309 = vadd.f32 0.0, %v308
    %v310 = vpop.f32.mrb[0].mxu0
    %311 = vmatprep.mubr.bf16.mxu0 0
    %312 = vmatmul.mubr.bf16.gmra.mrb[0].mxu0 %v255
    %v313 = vpop.f32.mrb[0].mxu0
    %v314 = vadd.f32 0.0, %v313
    %v315 = vpop.f32.mrb[0].mxu0
    %v316 = vpop.f32.mrb[0].mxu0
    %v317 = vadd.f32 0.0, %v316
    %v318 = vpop.f32.mrb[0].mxu0
    %319 = vmatprep.mubr.bf16.mxu0 0
    %320 = vmatmul.mubr.bf16.gmra.mrb[0].mxu0 %v258
    %v321 = vpop.f32.mrb[0].mxu0
    %v322 = vadd.f32 0.0, %v321
    %v323 = vpop.f32.mrb[0].mxu0
    %v324 = vpop.f32.mrb[0].mxu0
    %v325 = vadd.f32 0.0, %v324
    %v326 = vpop.f32.mrb[0].mxu0
    %327 = vmatprep.mubr.bf16.mxu0 0
    %328 = vmatmul.mubr.bf16.gmra.mrb[0].mxu0 %v261
    %v329 = vpop.f32.mrb[0].mxu0
    %v330 = vadd.f32 0.0, %v329
    %v331 = vpop.f32.mrb[0].mxu0
    %v332 = vpop.f32.mrb[0].mxu0
    %v333 = vpop.f32.mrb[0].mxu0
    %334 = vdwg.mxu0
    %v336 = vunpack.c.l.b16 %v180
    %v337 = vpack.c.b16 %v211, %v336
    %vm338 = vsmask.f32 7424
    %v340 = vshrl.u32 %v337, 16
    %v342 = vshll.u32 %v337, 16
    %v344 = vrot.slane %v342, 1
    %v345 = vor.u32 %v340, %v344
    %v347 = vshll.u32 %v221, 16
    %v349 = vrot.slane %v347, 1
    %v350 = vsel %vm338, %v345, %v349
    %v351 = vshrl.u32 %v221, 16
    %v353 = vor.u32 %v351, %v349
    %v355 = vshll.u32 %v222, 16
    %v357 = vrot.slane %v355, 1
    %v358 = vsel %vm338, %v353, %v357
    %v359 = vshrl.u32 %v222, 16
    %v361 = vor.u32 %v359, %v357
    %v363 = vshll.u32 %v223, 16
    %v365 = vrot.slane %v363, 1
    %v366 = vsel %vm338, %v361, %v365
    %v367 = vshrl.u32 %v223, 16
    %v369 = vor.u32 %v367, %v365
    %v371 = vshll.u32 %v224, 16
    %v373 = vrot.slane %v371, 1
    %v374 = vsel %vm338, %v369, %v373
    %v375 = vshrl.u32 %v224, 16
    %v377 = vor.u32 %v375, %v373
    %v382 = vunpack.c.l.b16 %v190
    %v383 = vunpack.c.l.b16 %v191
    %v384 = vunpack.c.l.b16 %v192
    %v385 = vunpack.c.l.b16 %v193
    %v386 = vpack.c.b16 %v383, %v382
    %v387 = vpack.c.b16 %v385, %v384
    %v391 = vsel %vm247, %v350, 0
    %v394 = vsel %vm247, %v358, 0
    %v397 = vsel %vm247, %v366, 0
    %v400 = vsel %vm247, %v374, 0
    %v403 = vsel %vm247, %v377, 0
    %405 = vmatprep.subr.bf16.mxu0 0
    %406 = vmatpush1.bf16.msra.mxu0 %v386
    %407 = vmatprep.subr.bf16.mxu0 0
    %408 = vmatpush1.bf16.msra.mxu0 %v387
    %409 = vmatprep.subr.bf16.mxu0 0
    %410 = vmatpush1.bf16.msra.mxu0 0
    %411 = vmatprep.subr.bf16.mxu0 0
    %412 = vmatpush1.bf16.msra.mxu0 0
    %413 = vmatprep.subr.bf16.mxu0 0
    %414 = vmatpush1.bf16.msra.mxu0 0
    %415 = vmatprep.subr.bf16.mxu0 0
    %416 = vmatpush1.bf16.msra.mxu0 0
    %417 = vmatprep.subr.bf16.mxu0 0
    %418 = vmatpush1.bf16.msra.mxu0 0
    %419 = vmatprep.subr.bf16.mxu0 0
    %420 = vmatpush1.bf16.msra.mxu0 0
    %421 = vmatprep.subr.bf16.mxu0 0
    %422 = vmatpush1.bf16.msra.mxu0 0
    %423 = vmatprep.subr.bf16.mxu0 0
    %424 = vmatpush1.bf16.msra.mxu0 0
    %425 = vmatprep.subr.bf16.mxu0 0
    %426 = vmatpush1.bf16.msra.mxu0 0
    %427 = vmatprep.subr.bf16.mxu0 0
    %428 = vmatpush1.bf16.msra.mxu0 0
    %429 = vmatprep.subr.bf16.mxu0 0
    %430 = vmatpush1.bf16.msra.mxu0 0
    %431 = vmatprep.subr.bf16.mxu0 0
    %432 = vmatpush1.bf16.msra.mxu0 0
    %433 = vmatprep.subr.bf16.mxu0 0
    %434 = vmatpush1.bf16.msra.mxu0 0
    %435 = vmatprep.subr.bf16.mxu0 0
    %436 = vmatpush1.bf16.msra.mxu0 0
    %437 = vmatprep.mubr.bf16.mxu0 0
    %438 = vmatmul.mubr.bf16.gmra.mrb[0].mxu0 %v391
    %v439 = vpop.f32.mrb[0].mxu0
    %v440 = vadd.f32 %v298, %v439
    %v441 = vpop.f32.mrb[0].mxu0
    %v442 = vpop.f32.mrb[0].mxu0
    %v443 = vadd.f32 %v301, %v442
    %v444 = vpop.f32.mrb[0].mxu0
    %445 = vmatprep.mubr.bf16.mxu0 0
    %446 = vmatmul.mubr.bf16.gmra.mrb[0].mxu0 %v394
    %v447 = vpop.f32.mrb[0].mxu0
    %v448 = vadd.f32 %v306, %v447
    %v449 = vpop.f32.mrb[0].mxu0
    %v450 = vpop.f32.mrb[0].mxu0
    %v451 = vadd.f32 %v309, %v450
    %v452 = vpop.f32.mrb[0].mxu0
    %453 = vmatprep.mubr.bf16.mxu0 0
    %454 = vmatmul.mubr.bf16.gmra.mrb[0].mxu0 %v397
    %v455 = vpop.f32.mrb[0].mxu0
    %v456 = vadd.f32 %v314, %v455
    %v457 = vpop.f32.mrb[0].mxu0
    %v458 = vpop.f32.mrb[0].mxu0
    %v459 = vadd.f32 %v317, %v458
    %v460 = vpop.f32.mrb[0].mxu0
    %461 = vmatprep.mubr.bf16.mxu0 0
    %462 = vmatmul.mubr.bf16.gmra.mrb[0].mxu0 %v400
    %v463 = vpop.f32.mrb[0].mxu0
    %v464 = vadd.f32 %v322, %v463
    %v465 = vpop.f32.mrb[0].mxu0
    %v466 = vpop.f32.mrb[0].mxu0
    %v467 = vadd.f32 %v325, %v466
    %v468 = vpop.f32.mrb[0].mxu0
    %469 = vmatprep.mubr.bf16.mxu0 0
    %470 = vmatmul.mubr.bf16.gmra.mrb[0].mxu0 %v403
    %v471 = vpop.f32.mrb[0].mxu0
    %v472 = vadd.f32 %v330, %v471
    %v473 = vpop.f32.mrb[0].mxu0
    %v474 = vpop.f32.mrb[0].mxu0
    %v475 = vpop.f32.mrb[0].mxu0
    %476 = vdwg.mxu0
    %v477 = vld [vmem:[#allocation3 + $0x24] sm:$0x3]
    %s478 = scalar_lea.vmem [#allocation8], 32
    %v479 = vld [vmem:[%s478] sm:$0xf]
    %v480 = vld [vmem:[%s478 + $0x4] sm:$0xf]
    %v481 = vld [vmem:[%s478 + $0x8] sm:$0xf]
    %v482 = vld [vmem:[%s478 + $0xc] sm:$0xf]
    %v484 = vunpack.c.l.b16 %v477
    %v485 = vpack.c.b16 %v484, %v218
    %vm486 = vsmask.f32 6400
    %v488 = vshrl.u32 %v220, 16
    %v490 = vrot.slane %v488, 1
    %v491 = vshll.u32 %v220, 16
    %v493 = vrot.slane %v491, 2
    %v494 = vor.u32 %v490, %v493
    %v495 = vrot.slane %v351, 1
    %v496 = vrot.slane %v347, 2
    %v497 = vor.u32 %v495, %v496
    %v498 = vsel %vm486, %v494, %v497
    %v499 = vrot.slane %v359, 1
    %v500 = vrot.slane %v355, 2
    %v501 = vor.u32 %v499, %v500
    %v502 = vsel %vm486, %v497, %v501
    %v503 = vrot.slane %v367, 1
    %v504 = vrot.slane %v363, 2
    %v505 = vor.u32 %v503, %v504
    %v506 = vsel %vm486, %v501, %v505
    %v508 = vshrl.u32 %v485, 16
    %v510 = vrot.slane %v508, 1
    %v511 = vshll.u32 %v485, 16
    %v513 = vrot.slane %v511, 2
    %v514 = vor.u32 %v510, %v513
    %v515 = vsel %vm486, %v505, %v514
    %v520 = vunpack.c.l.b16 %v479
    %v521 = vunpack.c.l.b16 %v480
    %v522 = vunpack.c.l.b16 %v481
    %v523 = vunpack.c.l.b16 %v482
    %v524 = vpack.c.b16 %v521, %v520
    %v525 = vpack.c.b16 %v523, %v522
    %v529 = vsel %vm247, %v498, 0
    %v532 = vsel %vm247, %v502, 0
    %v535 = vsel %vm247, %v506, 0
    %v538 = vsel %vm247, %v515, 0
    %v541 = vsel %vm247, %v514, 0
    %543 = vmatprep.subr.bf16.mxu0 0
    %544 = vmatpush1.bf16.msra.mxu0 %v524
    %545 = vmatprep.subr.bf16.mxu0 0
    %546 = vmatpush1.bf16.msra.mxu0 %v525
    %547 = vmatprep.subr.bf16.mxu0 0
    %548 = vmatpush1.bf16.msra.mxu0 0
    %549 = vmatprep.subr.bf16.mxu0 0
    %550 = vmatpush1.bf16.msra.mxu0 0
    %551 = vmatprep.subr.bf16.mxu0 0
    %552 = vmatpush1.bf16.msra.mxu0 0
    %553 = vmatprep.subr.bf16.mxu0 0
    %554 = vmatpush1.bf16.msra.mxu0 0
    %555 = vmatprep.subr.bf16.mxu0 0
    %556 = vmatpush1.bf16.msra.mxu0 0
    %557 = vmatprep.subr.bf16.mxu0 0
    %558 = vmatpush1.bf16.msra.mxu0 0
    %559 = vmatprep.subr.bf16.mxu0 0
    %560 = vmatpush1.bf16.msra.mxu0 0
    %561 = vmatprep.subr.bf16.mxu0 0
    %562 = vmatpush1.bf16.msra.mxu0 0
    %563 = vmatprep.subr.bf16.mxu0 0
    %564 = vmatpush1.bf16.msra.mxu0 0
    %565 = vmatprep.subr.bf16.mxu0 0
    %566 = vmatpush1.bf16.msra.mxu0 0
    %567 = vmatprep.subr.bf16.mxu0 0
    %568 = vmatpush1.bf16.msra.mxu0 0
    %569 = vmatprep.subr.bf16.mxu0 0
    %570 = vmatpush1.bf16.msra.mxu0 0
    %571 = vmatprep.subr.bf16.mxu0 0
    %572 = vmatpush1.bf16.msra.mxu0 0
    %573 = vmatprep.subr.bf16.mxu0 0
    %574 = vmatpush1.bf16.msra.mxu0 0
    %575 = vmatprep.mubr.bf16.mxu0 0
    %576 = vmatmul.mubr.bf16.gmra.mrb[0].mxu0 %v529
    %v577 = vpop.f32.mrb[0].mxu0
    %v578 = vadd.f32 0.0, %v577
    %v579 = vpop.f32.mrb[0].mxu0
    %v580 = vpop.f32.mrb[0].mxu0
    %v581 = vadd.f32 0.0, %v580
    %v582 = vpop.f32.mrb[0].mxu0
    %583 = vmatprep.mubr.bf16.mxu0 0
    %584 = vmatmul.mubr.bf16.gmra.mrb[0].mxu0 %v532
    %v585 = vpop.f32.mrb[0].mxu0
    %v586 = vadd.f32 0.0, %v585
    %v587 = vpop.f32.mrb[0].mxu0
    %v588 = vpop.f32.mrb[0].mxu0
    %v589 = vadd.f32 0.0, %v588
    %v590 = vpop.f32.mrb[0].mxu0
    %591 = vmatprep.mubr.bf16.mxu0 0
    %592 = vmatmul.mubr.bf16.gmra.mrb[0].mxu0 %v535
    %v593 = vpop.f32.mrb[0].mxu0
    %v594 = vadd.f32 0.0, %v593
    %v595 = vpop.f32.mrb[0].mxu0
    %v596 = vpop.f32.mrb[0].mxu0
    %v597 = vadd.f32 0.0, %v596
    %v598 = vpop.f32.mrb[0].mxu0
    %599 = vmatprep.mubr.bf16.mxu0 0
    %600 = vmatmul.mubr.bf16.gmra.mrb[0].mxu0 %v538
    %v601 = vpop.f32.mrb[0].mxu0
    %v602 = vadd.f32 0.0, %v601
    %v603 = vpop.f32.mrb[0].mxu0
    %v604 = vpop.f32.mrb[0].mxu0
    %v605 = vadd.f32 0.0, %v604
    %v606 = vpop.f32.mrb[0].mxu0
    %607 = vmatprep.mubr.bf16.mxu0 0
    %608 = vmatmul.mubr.bf16.gmra.mrb[0].mxu0 %v541
    %v609 = vpop.f32.mrb[0].mxu0
    %v610 = vadd.f32 0.0, %v609
    %v611 = vpop.f32.mrb[0].mxu0
    %v612 = vpop.f32.mrb[0].mxu0
    %v613 = vpop.f32.mrb[0].mxu0
    %614 = vdwg.mxu0
    %v615 = vadd.f32 %v440, %v578
    %v616 = vadd.f32 %v443, %v581
    %v617 = vadd.f32 %v448, %v586
    %v618 = vadd.f32 %v451, %v589
    %v619 = vadd.f32 %v456, %v594
    %v620 = vadd.f32 %v459, %v597
    %v621 = vadd.f32 %v464, %v602
    %v622 = vadd.f32 %v467, %v605
    %v623 = vadd.f32 %v472, %v610
    %v624 = vld [vmem:[#allocation3] sm:$0x8]
    %v625 = vld [vmem:[#allocation3 + $0x24] sm:$0xf]
    %s626 = scalar_lea.vmem [#allocation8], 48
    %v627 = vld [vmem:[%s626] sm:$0xf]
    %v628 = vld [vmem:[%s626 + $0x4] sm:$0xf]
    %v629 = vld [vmem:[%s626 + $0x8] sm:$0xf]
    %v630 = vld [vmem:[%s626 + $0xc] sm:$0xf]
    %v633 = vunpack.c.l.b16 %v624
    %v634 = vunpack.c.l.b16 %v625
    %v635 = vpack.c.b16 %v211, %v633
    %v636 = vpack.c.b16 %v634, %v218
    %vm637 = vsmask.f32 4352
    %v639 = vshrl.u32 %v635, 16
    %v641 = vrot.slane %v639, 3
    %v642 = vshll.u32 %v635, 16
    %v644 = vrot.slane %v642, 4
    %v645 = vor.u32 %v641, %v644
    %v646 = vrot.slane %v351, 3
    %v647 = vrot.slane %v347, 4
    %v648 = vor.u32 %v646, %v647
    %v649 = vsel %vm637, %v645, %v648
    %v650 = vrot.slane %v359, 3
    %v651 = vrot.slane %v355, 4
    %v652 = vor.u32 %v650, %v651
    %v653 = vsel %vm637, %v648, %v652
    %v654 = vrot.slane %v367, 3
    %v655 = vrot.slane %v363, 4
    %v656 = vor.u32 %v654, %v655
    %v657 = vsel %vm637, %v652, %v656
    %v659 = vshrl.u32 %v636, 16
    %v661 = vrot.slane %v659, 3
    %v662 = vshll.u32 %v636, 16
    %v664 = vrot.slane %v662, 4
    %v665 = vor.u32 %v661, %v664
    %v666 = vsel %vm637, %v656, %v665
    %v671 = vunpack.c.l.b16 %v627
    %v672 = vunpack.c.l.b16 %v628
    %v673 = vunpack.c.l.b16 %v629
    %v674 = vunpack.c.l.b16 %v630
    %v675 = vpack.c.b16 %v672, %v671
    %v676 = vpack.c.b16 %v674, %v673
    %v680 = vsel %vm247, %v649, 0
    %v683 = vsel %vm247, %v653, 0
    %v686 = vsel %vm247, %v657, 0
    %v689 = vsel %vm247, %v666, 0
    %v692 = vsel %vm247, %v665, 0
    %694 = vmatprep.subr.bf16.mxu0 0
    %695 = vmatpush1.bf16.msra.mxu0 %v675
    %696 = vmatprep.subr.bf16.mxu0 0
    %697 = vmatpush1.bf16.msra.mxu0 %v676
    %698 = vmatprep.subr.bf16.mxu0 0
    %699 = vmatpush1.bf16.msra.mxu0 0
    %700 = vmatprep.subr.bf16.mxu0 0
    %701 = vmatpush1.bf16.msra.mxu0 0
    %702 = vmatprep.subr.bf16.mxu0 0
    %703 = vmatpush1.bf16.msra.mxu0 0
    %704 = vmatprep.subr.bf16.mxu0 0
    %705 = vmatpush1.bf16.msra.mxu0 0
    %706 = vmatprep.subr.bf16.mxu0 0
    %707 = vmatpush1.bf16.msra.mxu0 0
    %708 = vmatprep.subr.bf16.mxu0 0
    %709 = vmatpush1.bf16.msra.mxu0 0
    %710 = vmatprep.subr.bf16.mxu0 0
    %711 = vmatpush1.bf16.msra.mxu0 0
    %712 = vmatprep.subr.bf16.mxu0 0
    %713 = vmatpush1.bf16.msra.mxu0 0
    %714 = vmatprep.subr.bf16.mxu0 0
    %715 = vmatpush1.bf16.msra.mxu0 0
    %716 = vmatprep.subr.bf16.mxu0 0
    %717 = vmatpush1.bf16.msra.mxu0 0
    %718 = vmatprep.subr.bf16.mxu0 0
    %719 = vmatpush1.bf16.msra.mxu0 0
    %720 = vmatprep.subr.bf16.mxu0 0
    %721 = vmatpush1.bf16.msra.mxu0 0
    %722 = vmatprep.subr.bf16.mxu0 0
    %723 = vmatpush1.bf16.msra.mxu0 0
    %724 = vmatprep.subr.bf16.mxu0 0
    %725 = vmatpush1.bf16.msra.mxu0 0
    %726 = vmatprep.mubr.bf16.mxu0 0
    %727 = vmatmul.mubr.bf16.gmra.mrb[0].mxu0 %v680
    %v728 = vpop.f32.mrb[0].mxu0
    %v729 = vadd.f32 0.0, %v728
    %v730 = vpop.f32.mrb[0].mxu0
    %v731 = vpop.f32.mrb[0].mxu0
    %v732 = vadd.f32 0.0, %v731
    %v733 = vpop.f32.mrb[0].mxu0
    %734 = vmatprep.mubr.bf16.mxu0 0
    %735 = vmatmul.mubr.bf16.gmra.mrb[0].mxu0 %v683
    %v736 = vpop.f32.mrb[0].mxu0
    %v737 = vadd.f32 0.0, %v736
    %v738 = vpop.f32.mrb[0].mxu0
    %v739 = vpop.f32.mrb[0].mxu0
    %v740 = vadd.f32 0.0, %v739
    %v741 = vpop.f32.mrb[0].mxu0
    %742 = vmatprep.mubr.bf16.mxu0 0
    %743 = vmatmul.mubr.bf16.gmra.mrb[0].mxu0 %v686
    %v744 = vpop.f32.mrb[0].mxu0
    %v745 = vadd.f32 0.0, %v744
    %v746 = vpop.f32.mrb[0].mxu0
    %v747 = vpop.f32.mrb[0].mxu0
    %v748 = vadd.f32 0.0, %v747
    %v749 = vpop.f32.mrb[0].mxu0
    %750 = vmatprep.mubr.bf16.mxu0 0
    %751 = vmatmul.mubr.bf16.gmra.mrb[0].mxu0 %v689
    %v752 = vpop.f32.mrb[0].mxu0
    %v753 = vadd.f32 0.0, %v752
    %v754 = vpop.f32.mrb[0].mxu0
    %v755 = vpop.f32.mrb[0].mxu0
    %v756 = vadd.f32 0.0, %v755
    %v757 = vpop.f32.mrb[0].mxu0
    %758 = vmatprep.mubr.bf16.mxu0 0
    %759 = vmatmul.mubr.bf16.gmra.mrb[0].mxu0 %v692
    %v760 = vpop.f32.mrb[0].mxu0
    %v761 = vadd.f32 0.0, %v760
    %v762 = vpop.f32.mrb[0].mxu0
    %v763 = vpop.f32.mrb[0].mxu0
    %v764 = vpop.f32.mrb[0].mxu0
    %765 = vdwg.mxu0
    %v766 = vadd.f32 %v615, %v729
    %v767 = vadd.f32 %v616, %v732
    %v768 = vadd.f32 %v617, %v737
    %v769 = vadd.f32 %v618, %v740
    %v770 = vadd.f32 %v619, %v745
    %v771 = vadd.f32 %v620, %v748
    %v772 = vadd.f32 %v621, %v753
    %v773 = vadd.f32 %v622, %v756
    %v774 = vadd.f32 %v623, %v761
    %s775 = scalar_lea.vmem [#allocation8], 64
    %v776 = vld [vmem:[%s775] sm:$0xf]
    %v777 = vld [vmem:[%s775 + $0x4] sm:$0xf]
    %v778 = vld [vmem:[%s775 + $0x8] sm:$0xf]
    %v779 = vld [vmem:[%s775 + $0xc] sm:$0xf]
    %v780 = vpack.c.b16 %v212, %v211
    %v781 = vpack.c.b16 %v214, %v213
    %v782 = vpack.c.b16 %v216, %v215
    %v783 = vpack.c.b16 %v218, %v217
    %v784 = vpack.c.b16 %v634, %v634
    %v789 = vunpack.c.l.b16 %v776
    %v790 = vunpack.c.l.b16 %v777
    %v791 = vunpack.c.l.b16 %v778
    %v792 = vunpack.c.l.b16 %v779
    %v793 = vpack.c.b16 %v790, %v789
    %v794 = vpack.c.b16 %v792, %v791
    %v798 = vsel %vm247, %v780, 0
    %v801 = vsel %vm247, %v781, 0
    %v804 = vsel %vm247, %v782, 0
    %v807 = vsel %vm247, %v783, 0
    %v810 = vsel %vm247, %v784, 0
    %812 = vmatprep.subr.bf16.mxu0 0
    %813 = vmatpush1.bf16.msra.mxu0 %v793
    %814 = vmatprep.subr.bf16.mxu0 0
    %815 = vmatpush1.bf16.msra.mxu0 %v794
    %816 = vmatprep.subr.bf16.mxu0 0
    %817 = vmatpush1.bf16.msra.mxu0 0
    %818 = vmatprep.subr.bf16.mxu0 0
    %819 = vmatpush1.bf16.msra.mxu0 0
    %820 = vmatprep.subr.bf16.mxu0 0
    %821 = vmatpush1.bf16.msra.mxu0 0
    %822 = vmatprep.subr.bf16.mxu0 0
    %823 = vmatpush1.bf16.msra.mxu0 0
    %824 = vmatprep.subr.bf16.mxu0 0
    %825 = vmatpush1.bf16.msra.mxu0 0
    %826 = vmatprep.subr.bf16.mxu0 0
    %827 = vmatpush1.bf16.msra.mxu0 0
    %828 = vmatprep.subr.bf16.mxu0 0
    %829 = vmatpush1.bf16.msra.mxu0 0
    %830 = vmatprep.subr.bf16.mxu0 0
    %831 = vmatpush1.bf16.msra.mxu0 0
    %832 = vmatprep.subr.bf16.mxu0 0
    %833 = vmatpush1.bf16.msra.mxu0 0
    %834 = vmatprep.subr.bf16.mxu0 0
    %835 = vmatpush1.bf16.msra.mxu0 0
    %836 = vmatprep.subr.bf16.mxu0 0
    %837 = vmatpush1.bf16.msra.mxu0 0
    %838 = vmatprep.subr.bf16.mxu0 0
    %839 = vmatpush1.bf16.msra.mxu0 0
    %840 = vmatprep.subr.bf16.mxu0 0
    %841 = vmatpush1.bf16.msra.mxu0 0
    %842 = vmatprep.subr.bf16.mxu0 0
    %843 = vmatpush1.bf16.msra.mxu0 0
    %844 = vmatprep.mubr.bf16.mxu0 0
    %845 = vmatmul.mubr.bf16.gmra.mrb[0].mxu0 %v798
    %v846 = vpop.f32.mrb[0].mxu0
    %v847 = vadd.f32 0.0, %v846
    %v848 = vpop.f32.mrb[0].mxu0
    %v849 = vpop.f32.mrb[0].mxu0
    %v850 = vadd.f32 0.0, %v849
    %v851 = vpop.f32.mrb[0].mxu0
    %852 = vmatprep.mubr.bf16.mxu0 0
    %853 = vmatmul.mubr.bf16.gmra.mrb[0].mxu0 %v801
    %v854 = vpop.f32.mrb[0].mxu0
    %v855 = vadd.f32 0.0, %v854
    %v856 = vpop.f32.mrb[0].mxu0
    %v857 = vpop.f32.mrb[0].mxu0
    %v858 = vadd.f32 0.0, %v857
    %v859 = vpop.f32.mrb[0].mxu0
    %860 = vmatprep.mubr.bf16.mxu0 0
    %861 = vmatmul.mubr.bf16.gmra.mrb[0].mxu0 %v804
    %v862 = vpop.f32.mrb[0].mxu0
    %v863 = vadd.f32 0.0, %v862
    %v864 = vpop.f32.mrb[0].mxu0
    %v865 = vpop.f32.mrb[0].mxu0
    %v866 = vadd.f32 0.0, %v865
    %v867 = vpop.f32.mrb[0].mxu0
    %868 = vmatprep.mubr.bf16.mxu0 0
    %869 = vmatmul.mubr.bf16.gmra.mrb[0].mxu0 %v807
    %v870 = vpop.f32.mrb[0].mxu0
    %v871 = vadd.f32 0.0, %v870
    %v872 = vpop.f32.mrb[0].mxu0
    %v873 = vpop.f32.mrb[0].mxu0
    %v874 = vadd.f32 0.0, %v873
    %v875 = vpop.f32.mrb[0].mxu0
    %876 = vmatprep.mubr.bf16.mxu0 0
    %877 = vmatmul.mubr.bf16.gmra.mrb[0].mxu0 %v810
    %v878 = vpop.f32.mrb[0].mxu0
    %v879 = vadd.f32 0.0, %v878
    %v880 = vpop.f32.mrb[0].mxu0
    %v881 = vpop.f32.mrb[0].mxu0
    %v882 = vpop.f32.mrb[0].mxu0
    %883 = vdwg.mxu0
    %v884 = vadd.f32 %v766, %v847
    %v885 = vadd.f32 %v767, %v850
    %v886 = vadd.f32 %v768, %v855
    %v887 = vadd.f32 %v769, %v858
    %v888 = vadd.f32 %v770, %v863
    %v889 = vadd.f32 %v771, %v866
    %v890 = vadd.f32 %v772, %v871
    %v891 = vadd.f32 %v773, %v874
    %v892 = vadd.f32 %v774, %v879
    %v893 = vld [vmem:[#allocation3 + $0x4] sm:$0xf]
    %v894 = vld [vmem:[#allocation3 + $0x8] sm:$0xf]
    %v895 = vld [vmem:[#allocation3 + $0xc] sm:$0xf]
    %v896 = vld [vmem:[#allocation3 + $0x10] sm:$0xf]
    %v897 = vld [vmem:[#allocation3 + $0x14] sm:$0xf]
    %v898 = vld [vmem:[#allocation3 + $0x18] sm:$0xf]
    %v899 = vld [vmem:[#allocation3 + $0x1c] sm:$0xf]
    %v900 = vld [vmem:[#allocation3 + $0x20] sm:$0xf]
    %v901 = vld [vmem:[#allocation3 + $0x24] sm:$0xf]
    %v902 = vld [vmem:[#allocation3 + $0x28] sm:$0x1]
    %s903 = scalar_lea.vmem [#allocation8], 80
    %v904 = vld [vmem:[%s903] sm:$0xf]
    %v905 = vld [vmem:[%s903 + $0x4] sm:$0xf]
    %v906 = vld [vmem:[%s903 + $0x8] sm:$0xf]
    %v907 = vld [vmem:[%s903 + $0xc] sm:$0xf]
    %v918 = vunpack.c.l.b16 %v893
    %v919 = vunpack.c.l.b16 %v894
    %v920 = vunpack.c.l.b16 %v895
    %v921 = vunpack.c.l.b16 %v896
    %v922 = vunpack.c.l.b16 %v897
    %v923 = vunpack.c.l.b16 %v898
    %v924 = vunpack.c.l.b16 %v899
    %v925 = vunpack.c.l.b16 %v900
    %v926 = vunpack.c.l.b16 %v901
    %v927 = vunpack.c.l.b16 %v902
    %v928 = vpack.c.b16 %v919, %v918
    %v929 = vpack.c.b16 %v921, %v920
    %v930 = vpack.c.b16 %v923, %v922
    %v931 = vpack.c.b16 %v925, %v924
    %v932 = vpack.c.b16 %v927, %v926
    %v934 = vshrl.u32 %v928, 16
    %v936 = vshll.u32 %v928, 16
    %v938 = vrot.slane %v936, 1
    %v939 = vor.u32 %v934, %v938
    %v941 = vshll.u32 %v929, 16
    %v943 = vrot.slane %v941, 1
    %v944 = vsel %vm338, %v939, %v943
    %v945 = vshrl.u32 %v929, 16
    %v947 = vor.u32 %v945, %v943
    %v949 = vshll.u32 %v930, 16
    %v951 = vrot.slane %v949, 1
    %v952 = vsel %vm338, %v947, %v951
    %v953 = vshrl.u32 %v930, 16
    %v955 = vor.u32 %v953, %v951
    %v957 = vshll.u32 %v931, 16
    %v959 = vrot.slane %v957, 1
    %v960 = vsel %vm338, %v955, %v959
    %v961 = vshrl.u32 %v931, 16
    %v963 = vor.u32 %v961, %v959
    %v965 = vshll.u32 %v932, 16
    %v967 = vrot.slane %v965, 1
    %v968 = vsel %vm338, %v963, %v967
    %v969 = vshrl.u32 %v932, 16
    %v971 = vor.u32 %v969, %v967
    %v976 = vunpack.c.l.b16 %v904
    %v977 = vunpack.c.l.b16 %v905
    %v978 = vunpack.c.l.b16 %v906
    %v979 = vunpack.c.l.b16 %v907
    %v980 = vpack.c.b16 %v977, %v976
    %v981 = vpack.c.b16 %v979, %v978
    %v985 = vsel %vm247, %v944, 0
    %v988 = vsel %vm247, %v952, 0
    %v991 = vsel %vm247, %v960, 0
    %v994 = vsel %vm247, %v968, 0
    %v997 = vsel %vm247, %v971, 0
    %999 = vmatprep.subr.bf16.mxu0 0
    %1000 = vmatpush1.bf16.msra.mxu0 %v980
    %1001 = vmatprep.subr.bf16.mxu0 0
    %1002 = vmatpush1.bf16.msra.mxu0 %v981
    %1003 = vmatprep.subr.bf16.mxu0 0
    %1004 = vmatpush1.bf16.msra.mxu0 0
    %1005 = vmatprep.subr.bf16.mxu0 0
    %1006 = vmatpush1.bf16.msra.mxu0 0
    %1007 = vmatprep.subr.bf16.mxu0 0
    %1008 = vmatpush1.bf16.msra.mxu0 0
    %1009 = vmatprep.subr.bf16.mxu0 0
    %1010 = vmatpush1.bf16.msra.mxu0 0
    %1011 = vmatprep.subr.bf16.mxu0 0
    %1012 = vmatpush1.bf16.msra.mxu0 0
    %1013 = vmatprep.subr.bf16.mxu0 0
    %1014 = vmatpush1.bf16.msra.mxu0 0
    %1015 = vmatprep.subr.bf16.mxu0 0
    %1016 = vmatpush1.bf16.msra.mxu0 0
    %1017 = vmatprep.subr.bf16.mxu0 0
    %1018 = vmatpush1.bf16.msra.mxu0 0
    %1019 = vmatprep.subr.bf16.mxu0 0
    %1020 = vmatpush1.bf16.msra.mxu0 0
    %1021 = vmatprep.subr.bf16.mxu0 0
    %1022 = vmatpush1.bf16.msra.mxu0 0
    %1023 = vmatprep.subr.bf16.mxu0 0
    %1024 = vmatpush1.bf16.msra.mxu0 0
    %1025 = vmatprep.subr.bf16.mxu0 0
    %1026 = vmatpush1.bf16.msra.mxu0 0
    %1027 = vmatprep.subr.bf16.mxu0 0
    %1028 = vmatpush1.bf16.msra.mxu0 0
    %1029 = vmatprep.subr.bf16.mxu0 0
    %1030 = vmatpush1.bf16.msra.mxu0 0
    %1031 = vmatprep.mubr.bf16.mxu0 0
    %1032 = vmatmul.mubr.bf16.gmra.mrb[0].mxu0 %v985
    %v1033 = vpop.f32.mrb[0].mxu0
    %v1034 = vadd.f32 0.0, %v1033
    %v1035 = vpop.f32.mrb[0].mxu0
    %v1036 = vpop.f32.mrb[0].mxu0
    %v1037 = vadd.f32 0.0, %v1036
    %v1038 = vpop.f32.mrb[0].mxu0
    %1039 = vmatprep.mubr.bf16.mxu0 0
    %1040 = vmatmul.mubr.bf16.gmra.mrb[0].mxu0 %v988
    %v1041 = vpop.f32.mrb[0].mxu0
    %v1042 = vadd.f32 0.0, %v1041
    %v1043 = vpop.f32.mrb[0].mxu0
    %v1044 = vpop.f32.mrb[0].mxu0
    %v1045 = vadd.f32 0.0, %v1044
    %v1046 = vpop.f32.mrb[0].mxu0
    %1047 = vmatprep.mubr.bf16.mxu0 0
    %1048 = vmatmul.mubr.bf16.gmra.mrb[0].mxu0 %v991
    %v1049 = vpop.f32.mrb[0].mxu0
    %v1050 = vadd.f32 0.0, %v1049
    %v1051 = vpop.f32.mrb[0].mxu0
    %v1052 = vpop.f32.mrb[0].mxu0
    %v1053 = vadd.f32 0.0, %v1052
    %v1054 = vpop.f32.mrb[0].mxu0
    %1055 = vmatprep.mubr.bf16.mxu0 0
    %1056 = vmatmul.mubr.bf16.gmra.mrb[0].mxu0 %v994
    %v1057 = vpop.f32.mrb[0].mxu0
    %v1058 = vadd.f32 0.0, %v1057
    %v1059 = vpop.f32.mrb[0].mxu0
    %v1060 = vpop.f32.mrb[0].mxu0
    %v1061 = vadd.f32 0.0, %v1060
    %v1062 = vpop.f32.mrb[0].mxu0
    %1063 = vmatprep.mubr.bf16.mxu0 0
    %1064 = vmatmul.mubr.bf16.gmra.mrb[0].mxu0 %v997
    %v1065 = vpop.f32.mrb[0].mxu0
    %v1066 = vadd.f32 0.0, %v1065
    %v1067 = vpop.f32.mrb[0].mxu0
    %v1068 = vpop.f32.mrb[0].mxu0
    %v1069 = vpop.f32.mrb[0].mxu0
    %1070 = vdwg.mxu0
    %v1071 = vadd.f32 %v884, %v1034
    %v1072 = vadd.f32 %v885, %v1037
    %v1073 = vadd.f32 %v886, %v1042
    %v1074 = vadd.f32 %v887, %v1045
    %v1075 = vadd.f32 %v888, %v1050
    %v1076 = vadd.f32 %v889, %v1053
    %v1077 = vadd.f32 %v890, %v1058
    %v1078 = vadd.f32 %v891, %v1061
    %v1079 = vadd.f32 %v892, %v1066
    %v1080 = vld [vmem:[#allocation3 + $0x4] sm:$0xc]
    %v1081 = vld [vmem:[#allocation3 + $0x28] sm:$0x7]
    %s1082 = scalar_lea.vmem [#allocation8], 96
    %v1083 = vld [vmem:[%s1082] sm:$0xf]
    %v1084 = vld [vmem:[%s1082 + $0x4] sm:$0xf]
    %v1085 = vld [vmem:[%s1082 + $0x8] sm:$0xf]
    %v1086 = vld [vmem:[%s1082 + $0xc] sm:$0xf]
    %v1089 = vunpack.c.l.b16 %v1080
    %v1090 = vunpack.c.l.b16 %v1081
    %v1091 = vpack.c.b16 %v919, %v1089
    %v1092 = vpack.c.b16 %v1090, %v926
    %vm1093 = vsmask.f32 5376
    %v1095 = vshrl.u32 %v1091, 16
    %v1097 = vrot.slane %v1095, 2
    %v1098 = vshll.u32 %v1091, 16
    %v1100 = vrot.slane %v1098, 3
    %v1101 = vor.u32 %v1097, %v1100
    %v1102 = vrot.slane %v945, 2
    %v1103 = vrot.slane %v941, 3
    %v1104 = vor.u32 %v1102, %v1103
    %v1105 = vsel %vm1093, %v1101, %v1104
    %v1106 = vrot.slane %v953, 2
    %v1107 = vrot.slane %v949, 3
    %v1108 = vor.u32 %v1106, %v1107
    %v1109 = vsel %vm1093, %v1104, %v1108
    %v1110 = vrot.slane %v961, 2
    %v1111 = vrot.slane %v957, 3
    %v1112 = vor.u32 %v1110, %v1111
    %v1113 = vsel %vm1093, %v1108, %v1112
    %v1115 = vshrl.u32 %v1092, 16
    %v1117 = vrot.slane %v1115, 2
    %v1118 = vshll.u32 %v1092, 16
    %v1120 = vrot.slane %v1118, 3
    %v1121 = vor.u32 %v1117, %v1120
    %v1122 = vsel %vm1093, %v1112, %v1121
    %v1127 = vunpack.c.l.b16 %v1083
    %v1128 = vunpack.c.l.b16 %v1084
    %v1129 = vunpack.c.l.b16 %v1085
    %v1130 = vunpack.c.l.b16 %v1086
    %v1131 = vpack.c.b16 %v1128, %v1127
    %v1132 = vpack.c.b16 %v1130, %v1129
    %v1136 = vsel %vm247, %v1105, 0
    %v1139 = vsel %vm247, %v1109, 0
    %v1142 = vsel %vm247, %v1113, 0
    %v1145 = vsel %vm247, %v1122, 0
    %v1148 = vsel %vm247, %v1121, 0
    %1150 = vmatprep.subr.bf16.mxu0 0
    %1151 = vmatpush1.bf16.msra.mxu0 %v1131
    %1152 = vmatprep.subr.bf16.mxu0 0
    %1153 = vmatpush1.bf16.msra.mxu0 %v1132
    %1154 = vmatprep.subr.bf16.mxu0 0
    %1155 = vmatpush1.bf16.msra.mxu0 0
    %1156 = vmatprep.subr.bf16.mxu0 0
    %1157 = vmatpush1.bf16.msra.mxu0 0
    %1158 = vmatprep.subr.bf16.mxu0 0
    %1159 = vmatpush1.bf16.msra.mxu0 0
    %1160 = vmatprep.subr.bf16.mxu0 0
    %1161 = vmatpush1.bf16.msra.mxu0 0
    %1162 = vmatprep.subr.bf16.mxu0 0
    %1163 = vmatpush1.bf16.msra.mxu0 0
    %1164 = vmatprep.subr.bf16.mxu0 0
    %1165 = vmatpush1.bf16.msra.mxu0 0
    %1166 = vmatprep.subr.bf16.mxu0 0
    %1167 = vmatpush1.bf16.msra.mxu0 0
    %1168 = vmatprep.subr.bf16.mxu0 0
    %1169 = vmatpush1.bf16.msra.mxu0 0
    %1170 = vmatprep.subr.bf16.mxu0 0
    %1171 = vmatpush1.bf16.msra.mxu0 0
    %1172 = vmatprep.subr.bf16.mxu0 0
    %1173 = vmatpush1.bf16.msra.mxu0 0
    %1174 = vmatprep.subr.bf16.mxu0 0
    %1175 = vmatpush1.bf16.msra.mxu0 0
    %1176 = vmatprep.subr.bf16.mxu0 0
    %1177 = vmatpush1.bf16.msra.mxu0 0
    %1178 = vmatprep.subr.bf16.mxu0 0
    %1179 = vmatpush1.bf16.msra.mxu0 0
    %1180 = vmatprep.subr.bf16.mxu0 0
    %1181 = vmatpush1.bf16.msra.mxu0 0
    %1182 = vmatprep.mubr.bf16.mxu0 0
    %1183 = vmatmul.mubr.bf16.gmra.mrb[0].mxu0 %v1136
    %v1184 = vpop.f32.mrb[0].mxu0
    %v1185 = vadd.f32 0.0, %v1184
    %v1186 = vpop.f32.mrb[0].mxu0
    %v1187 = vpop.f32.mrb[0].mxu0
    %v1188 = vadd.f32 0.0, %v1187
    %v1189 = vpop.f32.mrb[0].mxu0
    %1190 = vmatprep.mubr.bf16.mxu0 0
    %1191 = vmatmul.mubr.bf16.gmra.mrb[0].mxu0 %v1139
    %v1192 = vpop.f32.mrb[0].mxu0
    %v1193 = vadd.f32 0.0, %v1192
    %v1194 = vpop.f32.mrb[0].mxu0
    %v1195 = vpop.f32.mrb[0].mxu0
    %v1196 = vadd.f32 0.0, %v1195
    %v1197 = vpop.f32.mrb[0].mxu0
    %1198 = vmatprep.mubr.bf16.mxu0 0
    %1199 = vmatmul.mubr.bf16.gmra.mrb[0].mxu0 %v1142
    %v1200 = vpop.f32.mrb[0].mxu0
    %v1201 = vadd.f32 0.0, %v1200
    %v1202 = vpop.f32.mrb[0].mxu0
    %v1203 = vpop.f32.mrb[0].mxu0
    %v1204 = vadd.f32 0.0, %v1203
    %v1205 = vpop.f32.mrb[0].mxu0
    %1206 = vmatprep.mubr.bf16.mxu0 0
    %1207 = vmatmul.mubr.bf16.gmra.mrb[0].mxu0 %v1145
    %v1208 = vpop.f32.mrb[0].mxu0
    %v1209 = vadd.f32 0.0, %v1208
    %v1210 = vpop.f32.mrb[0].mxu0
    %v1211 = vpop.f32.mrb[0].mxu0
    %v1212 = vadd.f32 0.0, %v1211
    %v1213 = vpop.f32.mrb[0].mxu0
    %1214 = vmatprep.mubr.bf16.mxu0 0
    %1215 = vmatmul.mubr.bf16.gmra.mrb[0].mxu0 %v1148
    %v1216 = vpop.f32.mrb[0].mxu0
    %v1217 = vadd.f32 0.0, %v1216
    %v1218 = vpop.f32.mrb[0].mxu0
    %v1219 = vpop.f32.mrb[0].mxu0
    %v1220 = vpop.f32.mrb[0].mxu0
    %1221 = vdwg.mxu0
    %v1222 = vadd.f32 %v1071, %v1185
    %v1223 = vadd.f32 %v1072, %v1188
    %v1224 = vadd.f32 %v1073, %v1193
    %v1225 = vadd.f32 %v1074, %v1196
    %v1226 = vadd.f32 %v1075, %v1201
    %v1227 = vadd.f32 %v1076, %v1204
    %v1228 = vadd.f32 %v1077, %v1209
    %v1229 = vadd.f32 %v1078, %v1212
    %v1230 = vadd.f32 %v1079, %v1217
    %v1231 = vld [vmem:[#allocation3 + $0x4] sm:$0x8]
    %s1232 = scalar_lea.vmem [#allocation8], 112
    %v1233 = vld [vmem:[%s1232] sm:$0xf]
    %v1234 = vld [vmem:[%s1232 + $0x4] sm:$0xf]
    %v1235 = vld [vmem:[%s1232 + $0x8] sm:$0xf]
    %v1236 = vld [vmem:[%s1232 + $0xc] sm:$0xf]
    %v1238 = vunpack.c.l.b16 %v1231
    %v1239 = vpack.c.b16 %v919, %v1238
    %vm1240 = vcmask 1044480
    %v1241 = vrot.slane %v1239, 3
    %v1242 = vrot.slane %v929, 3
    %v1243 = vsel %vm1240, %v1241, %v1242
    %v1244 = vrot.slane %v930, 3
    %v1245 = vsel %vm1240, %v1242, %v1244
    %v1246 = vrot.slane %v931, 3
    %v1247 = vsel %vm1240, %v1244, %v1246
    %v1248 = vrot.slane %v1092, 3
    %v1249 = vsel %vm1240, %v1246, %v1248
    %v1254 = vunpack.c.l.b16 %v1233
    %v1255 = vunpack.c.l.b16 %v1234
    %v1256 = vunpack.c.l.b16 %v1235
    %v1257 = vunpack.c.l.b16 %v1236
    %v1258 = vpack.c.b16 %v1255, %v1254
    %v1259 = vpack.c.b16 %v1257, %v1256
    %v1263 = vsel %vm247, %v1243, 0
    %v1266 = vsel %vm247, %v1245, 0
    %v1269 = vsel %vm247, %v1247, 0
    %v1272 = vsel %vm247, %v1249, 0
    %v1275 = vsel %vm247, %v1248, 0
    %1277 = vmatprep.subr.bf16.mxu0 0
    %1278 = vmatpush1.bf16.msra.mxu0 %v1258
    %1279 = vmatprep.subr.bf16.mxu0 0
    %1280 = vmatpush1.bf16.msra.mxu0 %v1259
    %1281 = vmatprep.subr.bf16.mxu0 0
    %1282 = vmatpush1.bf16.msra.mxu0 0
    %1283 = vmatprep.subr.bf16.mxu0 0
    %1284 = vmatpush1.bf16.msra.mxu0 0
    %1285 = vmatprep.subr.bf16.mxu0 0
    %1286 = vmatpush1.bf16.msra.mxu0 0
    %1287 = vmatprep.subr.bf16.mxu0 0
    %1288 = vmatpush1.bf16.msra.mxu0 0
    %1289 = vmatprep.subr.bf16.mxu0 0
    %1290 = vmatpush1.bf16.msra.mxu0 0
    %1291 = vmatprep.subr.bf16.mxu0 0
    %1292 = vmatpush1.bf16.msra.mxu0 0
    %1293 = vmatprep.subr.bf16.mxu0 0
    %1294 = vmatpush1.bf16.msra.mxu0 0
    %1295 = vmatprep.subr.bf16.mxu0 0
    %1296 = vmatpush1.bf16.msra.mxu0 0
    %1297 = vmatprep.subr.bf16.mxu0 0
    %1298 = vmatpush1.bf16.msra.mxu0 0
    %1299 = vmatprep.subr.bf16.mxu0 0
    %1300 = vmatpush1.bf16.msra.mxu0 0
    %1301 = vmatprep.subr.bf16.mxu0 0
    %1302 = vmatpush1.bf16.msra.mxu0 0
    %1303 = vmatprep.subr.bf16.mxu0 0
    %1304 = vmatpush1.bf16.msra.mxu0 0
    %1305 = vmatprep.subr.bf16.mxu0 0
    %1306 = vmatpush1.bf16.msra.mxu0 0
    %1307 = vmatprep.subr.bf16.mxu0 0
    %1308 = vmatpush1.bf16.msra.mxu0 0
    %1309 = vmatprep.mubr.bf16.mxu0 0
    %1310 = vmatmul.mubr.bf16.gmra.mrb[0].mxu0 %v1263
    %v1311 = vpop.f32.mrb[0].mxu0
    %v1312 = vadd.f32 0.0, %v1311
    %v1313 = vpop.f32.mrb[0].mxu0
    %v1314 = vpop.f32.mrb[0].mxu0
    %v1315 = vadd.f32 0.0, %v1314
    %v1316 = vpop.f32.mrb[0].mxu0
    %1317 = vmatprep.mubr.bf16.mxu0 0
    %1318 = vmatmul.mubr.bf16.gmra.mrb[0].mxu0 %v1266
    %v1319 = vpop.f32.mrb[0].mxu0
    %v1320 = vadd.f32 0.0, %v1319
    %v1321 = vpop.f32.mrb[0].mxu0
    %v1322 = vpop.f32.mrb[0].mxu0
    %v1323 = vadd.f32 0.0, %v1322
    %v1324 = vpop.f32.mrb[0].mxu0
    %1325 = vmatprep.mubr.bf16.mxu0 0
    %1326 = vmatmul.mubr.bf16.gmra.mrb[0].mxu0 %v1269
    %v1327 = vpop.f32.mrb[0].mxu0
    %v1328 = vadd.f32 0.0, %v1327
    %v1329 = vpop.f32.mrb[0].mxu0
    %v1330 = vpop.f32.mrb[0].mxu0
    %v1331 = vadd.f32 0.0, %v1330
    %v1332 = vpop.f32.mrb[0].mxu0
    %1333 = vmatprep.mubr.bf16.mxu0 0
    %1334 = vmatmul.mubr.bf16.gmra.mrb[0].mxu0 %v1272
    %v1335 = vpop.f32.mrb[0].mxu0
    %v1336 = vadd.f32 0.0, %v1335
    %v1337 = vpop.f32.mrb[0].mxu0
    %v1338 = vpop.f32.mrb[0].mxu0
    %v1339 = vadd.f32 0.0, %v1338
    %v1340 = vpop.f32.mrb[0].mxu0
    %1341 = vmatprep.mubr.bf16.mxu0 0
    %1342 = vmatmul.mubr.bf16.gmra.mrb[0].mxu0 %v1275
    %v1343 = vpop.f32.mrb[0].mxu0
    %v1344 = vadd.f32 0.0, %v1343
    %v1345 = vpop.f32.mrb[0].mxu0
    %v1346 = vpop.f32.mrb[0].mxu0
    %v1347 = vpop.f32.mrb[0].mxu0
    %1348 = vdwg.mxu0
    %v1349 = vadd.f32 %v1222, %v1312
    %v1350 = vadd.f32 %v1223, %v1315
    %v1351 = vadd.f32 %v1224, %v1320
    %v1352 = vadd.f32 %v1225, %v1323
    %v1353 = vadd.f32 %v1226, %v1328
    %v1354 = vadd.f32 %v1227, %v1331
    %v1355 = vadd.f32 %v1228, %v1336
    %v1356 = vadd.f32 %v1229, %v1339
    %v1357 = vadd.f32 %v1230, %v1344
    %v1358 = vld [vmem:[#allocation3 + $0x28] sm:$0xf]
    %s1359 = scalar_lea.vmem [#allocation8], 128
    %v1360 = vld [vmem:[%s1359] sm:$0xf]
    %v1361 = vld [vmem:[%s1359 + $0x4] sm:$0xf]
    %v1362 = vld [vmem:[%s1359 + $0x8] sm:$0xf]
    %v1363 = vld [vmem:[%s1359 + $0xc] sm:$0xf]
    %v1365 = vunpack.c.l.b16 %v1358
    %v1366 = vpack.c.b16 %v1365, %v926
    %v1368 = vshrl.u32 %v1239, 16
    %v1370 = vrot.slane %v1368, 3
    %v1371 = vshll.u32 %v1239, 16
    %v1373 = vrot.slane %v1371, 4
    %v1374 = vor.u32 %v1370, %v1373
    %v1375 = vrot.slane %v945, 3
    %v1376 = vrot.slane %v941, 4
    %v1377 = vor.u32 %v1375, %v1376
    %v1378 = vsel %vm637, %v1374, %v1377
    %v1379 = vrot.slane %v953, 3
    %v1380 = vrot.slane %v949, 4
    %v1381 = vor.u32 %v1379, %v1380
    %v1382 = vsel %vm637, %v1377, %v1381
    %v1383 = vrot.slane %v961, 3
    %v1384 = vrot.slane %v957, 4
    %v1385 = vor.u32 %v1383, %v1384
    %v1386 = vsel %vm637, %v1381, %v1385
    %v1388 = vshrl.u32 %v1366, 16
    %v1390 = vrot.slane %v1388, 3
    %v1391 = vshll.u32 %v1366, 16
    %v1393 = vrot.slane %v1391, 4
    %v1394 = vor.u32 %v1390, %v1393
    %v1395 = vsel %vm637, %v1385, %v1394
    %v1400 = vunpack.c.l.b16 %v1360
    %v1401 = vunpack.c.l.b16 %v1361
    %v1402 = vunpack.c.l.b16 %v1362
    %v1403 = vunpack.c.l.b16 %v1363
    %v1404 = vpack.c.b16 %v1401, %v1400
    %v1405 = vpack.c.b16 %v1403, %v1402
    %v1409 = vsel %vm247, %v1378, 0
    %v1412 = vsel %vm247, %v1382, 0
    %v1415 = vsel %vm247, %v1386, 0
    %v1418 = vsel %vm247, %v1395, 0
    %v1421 = vsel %vm247, %v1394, 0
    %1423 = vmatprep.subr.bf16.mxu0 0
    %1424 = vmatpush1.bf16.msra.mxu0 %v1404
    %1425 = vmatprep.subr.bf16.mxu0 0
    %1426 = vmatpush1.bf16.msra.mxu0 %v1405
    %1427 = vmatprep.subr.bf16.mxu0 0
    %1428 = vmatpush1.bf16.msra.mxu0 0
    %1429 = vmatprep.subr.bf16.mxu0 0
    %1430 = vmatpush1.bf16.msra.mxu0 0
    %1431 = vmatprep.subr.bf16.mxu0 0
    %1432 = vmatpush1.bf16.msra.mxu0 0
    %1433 = vmatprep.subr.bf16.mxu0 0
    %1434 = vmatpush1.bf16.msra.mxu0 0
    %1435 = vmatprep.subr.bf16.mxu0 0
    %1436 = vmatpush1.bf16.msra.mxu0 0
    %1437 = vmatprep.subr.bf16.mxu0 0
    %1438 = vmatpush1.bf16.msra.mxu0 0
    %1439 = vmatprep.subr.bf16.mxu0 0
    %1440 = vmatpush1.bf16.msra.mxu0 0
    %1441 = vmatprep.subr.bf16.mxu0 0
    %1442 = vmatpush1.bf16.msra.mxu0 0
    %1443 = vmatprep.subr.bf16.mxu0 0
    %1444 = vmatpush1.bf16.msra.mxu0 0
    %1445 = vmatprep.subr.bf16.mxu0 0
    %1446 = vmatpush1.bf16.msra.mxu0 0
    %1447 = vmatprep.subr.bf16.mxu0 0
    %1448 = vmatpush1.bf16.msra.mxu0 0
    %1449 = vmatprep.subr.bf16.mxu0 0
    %1450 = vmatpush1.bf16.msra.mxu0 0
    %1451 = vmatprep.subr.bf16.mxu0 0
    %1452 = vmatpush1.bf16.msra.mxu0 0
    %1453 = vmatprep.subr.bf16.mxu0 0
    %1454 = vmatpush1.bf16.msra.mxu0 0
    %1455 = vmatprep.mubr.bf16.mxu0 0
    %1456 = vmatmul.mubr.bf16.gmra.mrb[0].mxu0 %v1409
    %v1457 = vpop.f32.mrb[0].mxu0
    %v1458 = vadd.f32 0.0, %v1457
    %v1459 = vpop.f32.mrb[0].mxu0
    %v1460 = vpop.f32.mrb[0].mxu0
    %v1461 = vadd.f32 0.0, %v1460
    %v1462 = vpop.f32.mrb[0].mxu0
    %1463 = vmatprep.mubr.bf16.mxu0 0
    %1464 = vmatmul.mubr.bf16.gmra.mrb[0].mxu0 %v1412
    %v1465 = vpop.f32.mrb[0].mxu0
    %v1466 = vadd.f32 0.0, %v1465
    %v1467 = vpop.f32.mrb[0].mxu0
    %v1468 = vpop.f32.mrb[0].mxu0
    %v1469 = vadd.f32 0.0, %v1468
    %v1470 = vpop.f32.mrb[0].mxu0
    %1471 = vmatprep.mubr.bf16.mxu0 0
    %1472 = vmatmul.mubr.bf16.gmra.mrb[0].mxu0 %v1415
    %v1473 = vpop.f32.mrb[0].mxu0
    %v1474 = vadd.f32 0.0, %v1473
    %v1475 = vpop.f32.mrb[0].mxu0
    %v1476 = vpop.f32.mrb[0].mxu0
    %v1477 = vadd.f32 0.0, %v1476
    %v1478 = vpop.f32.mrb[0].mxu0
    %1479 = vmatprep.mubr.bf16.mxu0 0
    %1480 = vmatmul.mubr.bf16.gmra.mrb[0].mxu0 %v1418
    %v1481 = vpop.f32.mrb[0].mxu0
    %v1482 = vadd.f32 0.0, %v1481
    %v1483 = vpop.f32.mrb[0].mxu0
    %v1484 = vpop.f32.mrb[0].mxu0
    %v1485 = vadd.f32 0.0, %v1484
    %v1486 = vpop.f32.mrb[0].mxu0
    %1487 = vmatprep.mubr.bf16.mxu0 0
    %1488 = vmatmul.mubr.bf16.gmra.mrb[0].mxu0 %v1421
    %v1489 = vpop.f32.mrb[0].mxu0
    %v1490 = vadd.f32 0.0, %v1489
    %v1491 = vpop.f32.mrb[0].mxu0
    %v1492 = vpop.f32.mrb[0].mxu0
    %v1493 = vpop.f32.mrb[0].mxu0
    %1494 = vdwg.mxu0
    %v1495 = vadd.f32 %v1349, %v1458
    %v1496 = vadd.f32 %v1350, %v1461
    %v1497 = vadd.f32 %v1351, %v1466
    %v1498 = vadd.f32 %v1352, %v1469
    %v1499 = vadd.f32 %v1353, %v1474
    %v1500 = vadd.f32 %v1354, %v1477
    %v1501 = vadd.f32 %v1355, %v1482
    %v1502 = vadd.f32 %v1356, %v1485
    %v1503 = vadd.f32 %v1357, %v1490
    %v1504 = vld [vmem:[#allocation9] sm:$0x1]
    %v1506 = vlaneseq
    %v1507 = vshrl.u32 %v1506, 7
    %v1508 = vsub.s32 0, %v1507
    %v1509 = vrot.slane %v1504, %v1508
    %v1511 = vadd.f32 %v1495, %v1509
    %v1512 = vadd.f32 %v1496, %v1509
    %v1513 = vadd.f32 %v1497, %v1509
    %v1514 = vadd.f32 %v1498, %v1509
    %v1515 = vadd.f32 %v1499, %v1509
    %v1516 = vadd.f32 %v1500, %v1509
    %v1517 = vadd.f32 %v1501, %v1509
    %v1518 = vadd.f32 %v1502, %v1509
    %v1519 = vadd.f32 %v1503, %v1509
    %1521 = vset.pattern.permute.xlu0 0
    %1522 = vperm.xlu0 %1521, %v171
    %v1523 = vpop.permute.xlu0 %1522
    %1526 = vset.pattern.permute.xlu0 0
    %1527 = vperm.xlu0 %1526, %v172
    %v1528 = vpop.permute.xlu0 %1527
    %1531 = vset.pattern.permute.xlu0 0
    %1532 = vperm.xlu0 %1531, %v173
    %v1533 = vpop.permute.xlu0 %1532
    %1536 = vset.pattern.permute.xlu0 0
    %1537 = vperm.xlu0 %1536, %v174
    %v1538 = vpop.permute.xlu0 %1537
    %1541 = vset.pattern.permute.xlu0 0
    %1542 = vperm.xlu0 %1541, %v175
    %v1543 = vpop.permute.xlu0 %1542
    %1546 = vset.pattern.permute.xlu0 0
    %1547 = vperm.xlu0 %1546, %v176
    %v1548 = vpop.permute.xlu0 %1547
    %1551 = vset.pattern.permute.xlu0 0
    %1552 = vperm.xlu0 %1551, %v177
    %v1553 = vpop.permute.xlu0 %1552
    %1556 = vset.pattern.permute.xlu0 0
    %1557 = vperm.xlu0 %1556, %v178
    %v1558 = vpop.permute.xlu0 %1557
    %1561 = vset.pattern.permute.xlu0 0
    %1562 = vperm.xlu0 %1561, %v179
    %v1563 = vpop.permute.xlu0 %1562
    %v1565 = vmul.f32 %v1511, %v1523
    %v1566 = vmul.f32 %v1512, %v1528
    %v1567 = vmul.f32 %v1513, %v1533
    %v1568 = vmul.f32 %v1514, %v1538
    %v1569 = vmul.f32 %v1515, %v1543
    %v1570 = vmul.f32 %v1516, %v1548
    %v1571 = vmul.f32 %v1517, %v1553
    %v1572 = vmul.f32 %v1518, %v1558
    %v1573 = vmul.f32 %v1519, %v1563
    %1574 = vst.msk [vmem:[#allocation2] sm:$0xff] %vm247, 0.0
    %1575 = vst.msk [vmem:[#allocation2 + $0x8] sm:$0xff] %vm247, 0.0
    %1576 = vst.msk [vmem:[#allocation2 + $0x10] sm:$0xff] %vm247, 0.0
    %1577 = vst.msk [vmem:[#allocation2 + $0x18] sm:$0xff] %vm247, 0.0
    %1578 = vst.msk [vmem:[#allocation2 + $0x20] sm:$0xff] %vm247, 0.0
    %1579 = vst.msk [vmem:[#allocation2 + $0x28] sm:$0xff] %vm247, 0.0
    %1580 = vst.msk [vmem:[#allocation2 + $0x30] sm:$0xff] %vm247, 0.0
    %1581 = vst.msk [vmem:[#allocation2 + $0x38] sm:$0xff] %vm247, 0.0
    %1582 = vst.msk [vmem:[#allocation2 + $0x40] sm:$0xff] %vm247, 0.0
    %1583 = vst.msk [vmem:[#allocation2 + $0x48] sm:$0xff] %vm247, 0.0
    %1584 = vst.msk [vmem:[#allocation2 + $0x50] sm:$0xff] %vm247, 0.0
    %vm1585 = vcmp.ge.f32.partialorder %v1565, 0.0
    %vm1586 = vcmp.ge.f32.partialorder %v1566, 0.0
    %vm1587 = vcmp.ge.f32.partialorder %v1567, 0.0
    %vm1588 = vcmp.ge.f32.partialorder %v1568, 0.0
    %vm1589 = vcmp.ge.f32.partialorder %v1569, 0.0
    %vm1590 = vcmp.ge.f32.partialorder %v1570, 0.0
    %vm1591 = vcmp.ge.f32.partialorder %v1571, 0.0
    %vm1592 = vcmp.ge.f32.partialorder %v1572, 0.0
    %vm1593 = vcmp.ge.f32.partialorder %v1573, 0.0
    %v1594 = vmul.f32 %v1565, 0.01
    %v1595 = vmul.f32 %v1566, 0.01
    %v1596 = vmul.f32 %v1567, 0.01
    %v1597 = vmul.f32 %v1568, 0.01
    %v1598 = vmul.f32 %v1569, 0.01
    %v1599 = vmul.f32 %v1570, 0.01
    %v1600 = vmul.f32 %v1571, 0.01
    %v1601 = vmul.f32 %v1572, 0.01
    %v1602 = vmul.f32 %v1573, 0.01
    %v1603 = vsel %vm1585, %v1565, %v1594
    %v1604 = vsel %vm1586, %v1566, %v1595
    %v1605 = vsel %vm1587, %v1567, %v1596
    %v1606 = vsel %vm1588, %v1568, %v1597
    %v1607 = vsel %vm1589, %v1569, %v1598
    %v1608 = vsel %vm1590, %v1570, %v1599
    %v1609 = vsel %vm1591, %v1571, %v1600
    %v1610 = vsel %vm1592, %v1572, %v1601
    %v1611 = vsel %vm1593, %v1573, %v1602
    %1612 = vst.msk [vmem:[#allocation2 + $0x8] sm:$0xff] %vm247, %v1603
    %1613 = vst.msk [vmem:[#allocation2 + $0x10] sm:$0xff] %vm247, %v1604
    %1614 = vst.msk [vmem:[#allocation2 + $0x18] sm:$0xff] %vm247, %v1605
    %1615 = vst.msk [vmem:[#allocation2 + $0x20] sm:$0xff] %vm247, %v1606
    %1616 = vst.msk [vmem:[#allocation2 + $0x28] sm:$0xff] %vm247, %v1607
    %1617 = vst.msk [vmem:[#allocation2 + $0x30] sm:$0xff] %vm247, %v1608
    %1618 = vst.msk [vmem:[#allocation2 + $0x38] sm:$0xff] %vm247, %v1609
    %1619 = vst.msk [vmem:[#allocation2 + $0x40] sm:$0xff] %vm247, %v1610
    %1620 = vst.msk [vmem:[#allocation2 + $0x48] sm:$0xff] %vm247, %v1611
    %v1621 = vld [vmem:[#allocation2 + $0x1] sm:$0xff]
    %v1622 = vld [vmem:[#allocation2 + $0x9] sm:$0xff]
    %v1623 = vld [vmem:[#allocation2 + $0x11] sm:$0xff]
    %v1624 = vld [vmem:[#allocation2 + $0x19] sm:$0xff]
    %v1625 = vld [vmem:[#allocation2 + $0x21] sm:$0xff]
    %v1626 = vld [vmem:[#allocation2 + $0x29] sm:$0xff]
    %v1627 = vld [vmem:[#allocation2 + $0x31] sm:$0xff]
    %v1628 = vld [vmem:[#allocation2 + $0x39] sm:$0xff]
    %v1629 = vld [vmem:[#allocation2 + $0x41] sm:$0xff]
    %v1630 = vld [vmem:[#allocation11] sm:$0xff]
    %v1631 = vld [vmem:[#allocation11 + $0x8] sm:$0xff]
    %v1632 = vld [vmem:[#allocation11 + $0x10] sm:$0xff]
    %v1633 = vld [vmem:[#allocation11 + $0x18] sm:$0xff]
    %v1634 = vld [vmem:[#allocation2 + $0x2] sm:$0xff]
    %v1635 = vld [vmem:[#allocation2 + $0xa] sm:$0xff]
    %v1636 = vld [vmem:[#allocation2 + $0x12] sm:$0xff]
    %v1637 = vld [vmem:[#allocation2 + $0x1a] sm:$0xff]
    %v1638 = vld [vmem:[#allocation2 + $0x22] sm:$0xff]
    %v1639 = vld [vmem:[#allocation2 + $0x2a] sm:$0xff]
    %v1640 = vld [vmem:[#allocation2 + $0x32] sm:$0xff]
    %v1641 = vld [vmem:[#allocation2 + $0x3a] sm:$0xff]
    %v1642 = vld [vmem:[#allocation2 + $0x42] sm:$0xff]
    %s1643 = scalar_lea.vmem [#allocation11], 32
    %v1644 = vld [vmem:[%s1643] sm:$0xff]
    %v1645 = vld [vmem:[%s1643 + $0x8] sm:$0xff]
    %v1646 = vld [vmem:[%s1643 + $0x10] sm:$0xff]
    %v1647 = vld [vmem:[%s1643 + $0x18] sm:$0xff]
    %v1649 = vsel %vm247, %v1634, 0
    %v1652 = vsel %vm247, %v1635, 0
    %v1655 = vsel %vm247, %v1636, 0
    %v1658 = vsel %vm247, %v1637, 0
    %v1661 = vsel %vm247, %v1638, 0
    %v1664 = vsel %vm247, %v1639, 0
    %v1667 = vsel %vm247, %v1640, 0
    %v1670 = vsel %vm247, %v1641, 0
    %v1673 = vsel %vm247, %v1642, 0
    %1675 = vmatprep.subr.mxu0 0.0
    %1676 = vmatpush1.msra.mxu0 %v1644
    %1677 = vmatprep.subr.mxu0 0.0
    %1678 = vmatpush1.msra.mxu0 %v1645
    %1679 = vmatprep.subr.mxu0 0.0
    %1680 = vmatpush1.msra.mxu0 %v1646
    %1681 = vmatprep.subr.mxu0 0.0
    %1682 = vmatpush1.msra.mxu0 %v1647
    %1683 = vmatprep.subr.mxu0 0.0
    %1684 = vmatpush1.msra.mxu0 0.0
    %1685 = vmatprep.subr.mxu0 0.0
    %1686 = vmatpush1.msra.mxu0 0.0
    %1687 = vmatprep.subr.mxu0 0.0
    %1688 = vmatpush1.msra.mxu0 0.0
    %1689 = vmatprep.subr.mxu0 0.0
    %1690 = vmatpush1.msra.mxu0 0.0
    %1691 = vmatprep.subr.mxu0 0.0
    %1692 = vmatpush1.msra.mxu0 0.0
    %1693 = vmatprep.subr.mxu0 0.0
    %1694 = vmatpush1.msra.mxu0 0.0
    %1695 = vmatprep.subr.mxu0 0.0
    %1696 = vmatpush1.msra.mxu0 0.0
    %1697 = vmatprep.subr.mxu0 0.0
    %1698 = vmatpush1.msra.mxu0 0.0
    %1699 = vmatprep.subr.mxu0 0.0
    %1700 = vmatpush1.msra.mxu0 0.0
    %1701 = vmatprep.subr.mxu0 0.0
    %1702 = vmatpush1.msra.mxu0 0.0
    %1703 = vmatprep.subr.mxu0 0.0
    %1704 = vmatpush1.msra.mxu0 0.0
    %1705 = vmatprep.subr.mxu0 0.0
    %1706 = vmatpush1.msra.mxu0 0.0
    %1707 = vmatprep.subr.mxu0 0.0
    %1708 = vmatpush1.msra.mxu0 0.0
    %1709 = vmatprep.subr.mxu0 0.0
    %1710 = vmatpush1.msra.mxu0 0.0
    %1711 = vmatprep.subr.mxu0 0.0
    %1712 = vmatpush1.msra.mxu0 0.0
    %1713 = vmatprep.subr.mxu0 0.0
    %1714 = vmatpush1.msra.mxu0 0.0
    %1715 = vmatprep.subr.mxu0 0.0
    %1716 = vmatpush1.msra.mxu0 0.0
    %1717 = vmatprep.subr.mxu0 0.0
    %1718 = vmatpush1.msra.mxu0 0.0
    %1719 = vmatprep.subr.mxu0 0.0
    %1720 = vmatpush1.msra.mxu0 0.0
    %1721 = vmatprep.subr.mxu0 0.0
    %1722 = vmatpush1.msra.mxu0 0.0
    %1723 = vmatprep.subr.mxu0 0.0
    %1724 = vmatpush1.msra.mxu0 0.0
    %1725 = vmatprep.subr.mxu0 0.0
    %1726 = vmatpush1.msra.mxu0 0.0
    %1727 = vmatprep.subr.mxu0 0.0
    %1728 = vmatpush1.msra.mxu0 0.0
    %1729 = vmatprep.subr.mxu0 0.0
    %1730 = vmatpush1.msra.mxu0 0.0
    %1731 = vmatprep.subr.mxu0 0.0
    %1732 = vmatpush1.msra.mxu0 0.0
    %1733 = vmatprep.subr.mxu0 0.0
    %1734 = vmatpush1.msra.mxu0 0.0
    %1735 = vmatprep.subr.mxu0 0.0
    %1736 = vmatpush1.msra.mxu0 0.0
    %1737 = vmatprep.subr.mxu0 0.0
    %1738 = vmatpush1.msra.mxu0 0.0
    %1739 = vmatprep.mubr.f32.mxu0 0.0
    %1740 = vmatmul.mubr.f32.gmra.mrb[0].mxu0 %v1649
    %v1741 = vpop.f32.mrb[0].mxu0
    %v1742 = vadd.f32 0.0, %v1741
    %v1743 = vpop.f32.mrb[0].mxu0
    %1744 = vmatprep.mubr.f32.mxu0 0.0
    %1745 = vmatmul.mubr.f32.gmra.mrb[0].mxu0 %v1652
    %v1746 = vpop.f32.mrb[0].mxu0
    %v1747 = vadd.f32 0.0, %v1746
    %v1748 = vpop.f32.mrb[0].mxu0
    %1749 = vmatprep.mubr.f32.mxu0 0.0
    %1750 = vmatmul.mubr.f32.gmra.mrb[0].mxu0 %v1655
    %v1751 = vpop.f32.mrb[0].mxu0
    %v1752 = vadd.f32 0.0, %v1751
    %v1753 = vpop.f32.mrb[0].mxu0
    %1754 = vmatprep.mubr.f32.mxu0 0.0
    %1755 = vmatmul.mubr.f32.gmra.mrb[0].mxu0 %v1658
    %v1756 = vpop.f32.mrb[0].mxu0
    %v1757 = vadd.f32 0.0, %v1756
    %v1758 = vpop.f32.mrb[0].mxu0
    %1759 = vmatprep.mubr.f32.mxu0 0.0
    %1760 = vmatmul.mubr.f32.gmra.mrb[0].mxu0 %v1661
    %v1761 = vpop.f32.mrb[0].mxu0
    %v1762 = vadd.f32 0.0, %v1761
    %v1763 = vpop.f32.mrb[0].mxu0
    %1764 = vmatprep.mubr.f32.mxu0 0.0
    %1765 = vmatmul.mubr.f32.gmra.mrb[0].mxu0 %v1664
    %v1766 = vpop.f32.mrb[0].mxu0
    %v1767 = vadd.f32 0.0, %v1766
    %v1768 = vpop.f32.mrb[0].mxu0
    %1769 = vmatprep.mubr.f32.mxu0 0.0
    %1770 = vmatmul.mubr.f32.gmra.mrb[0].mxu0 %v1667
    %v1771 = vpop.f32.mrb[0].mxu0
    %v1772 = vadd.f32 0.0, %v1771
    %v1773 = vpop.f32.mrb[0].mxu0
    %1774 = vmatprep.mubr.f32.mxu0 0.0
    %1775 = vmatmul.mubr.f32.gmra.mrb[0].mxu0 %v1670
    %v1776 = vpop.f32.mrb[0].mxu0
    %v1777 = vadd.f32 0.0, %v1776
    %v1778 = vpop.f32.mrb[0].mxu0
    %1779 = vmatprep.mubr.f32.mxu0 0.0
    %1780 = vmatmul.mubr.f32.gmra.mrb[0].mxu0 %v1673
    %v1781 = vpop.f32.mrb[0].mxu0
    %v1782 = vadd.f32 0.0, %v1781
    %v1783 = vpop.f32.mrb[0].mxu0
    %1784 = vdwg.mxu0
    %v1786 = vsel %vm247, %v1621, 0
    %v1789 = vsel %vm247, %v1622, 0
    %v1792 = vsel %vm247, %v1623, 0
    %v1795 = vsel %vm247, %v1624, 0
    %v1798 = vsel %vm247, %v1625, 0
    %v1801 = vsel %vm247, %v1626, 0
    %v1804 = vsel %vm247, %v1627, 0
    %v1807 = vsel %vm247, %v1628, 0
    %v1810 = vsel %vm247, %v1629, 0
    %1812 = vmatprep.subr.mxu0 0.0
    %1813 = vmatpush1.msra.mxu0 %v1630
    %1814 = vmatprep.subr.mxu0 0.0
    %1815 = vmatpush1.msra.mxu0 %v1631
    %1816 = vmatprep.subr.mxu0 0.0
    %1817 = vmatpush1.msra.mxu0 %v1632
    %1818 = vmatprep.subr.mxu0 0.0
    %1819 = vmatpush1.msra.mxu0 %v1633
    %1820 = vmatprep.subr.mxu0 0.0
    %1821 = vmatpush1.msra.mxu0 0.0
    %1822 = vmatprep.subr.mxu0 0.0
    %1823 = vmatpush1.msra.mxu0 0.0
    %1824 = vmatprep.subr.mxu0 0.0
    %1825 = vmatpush1.msra.mxu0 0.0
    %1826 = vmatprep.subr.mxu0 0.0
    %1827 = vmatpush1.msra.mxu0 0.0
    %1828 = vmatprep.subr.mxu0 0.0
    %1829 = vmatpush1.msra.mxu0 0.0
    %1830 = vmatprep.subr.mxu0 0.0
    %1831 = vmatpush1.msra.mxu0 0.0
    %1832 = vmatprep.subr.mxu0 0.0
    %1833 = vmatpush1.msra.mxu0 0.0
    %1834 = vmatprep.subr.mxu0 0.0
    %1835 = vmatpush1.msra.mxu0 0.0
    %1836 = vmatprep.subr.mxu0 0.0
    %1837 = vmatpush1.msra.mxu0 0.0
    %1838 = vmatprep.subr.mxu0 0.0
    %1839 = vmatpush1.msra.mxu0 0.0
    %1840 = vmatprep.subr.mxu0 0.0
    %1841 = vmatpush1.msra.mxu0 0.0
    %1842 = vmatprep.subr.mxu0 0.0
    %1843 = vmatpush1.msra.mxu0 0.0
    %1844 = vmatprep.subr.mxu0 0.0
    %1845 = vmatpush1.msra.mxu0 0.0
    %1846 = vmatprep.subr.mxu0 0.0
    %1847 = vmatpush1.msra.mxu0 0.0
    %1848 = vmatprep.subr.mxu0 0.0
    %1849 = vmatpush1.msra.mxu0 0.0
    %1850 = vmatprep.subr.mxu0 0.0
    %1851 = vmatpush1.msra.mxu0 0.0
    %1852 = vmatprep.subr.mxu0 0.0
    %1853 = vmatpush1.msra.mxu0 0.0
    %1854 = vmatprep.subr.mxu0 0.0
    %1855 = vmatpush1.msra.mxu0 0.0
    %1856 = vmatprep.subr.mxu0 0.0
    %1857 = vmatpush1.msra.mxu0 0.0
    %1858 = vmatprep.subr.mxu0 0.0
    %1859 = vmatpush1.msra.mxu0 0.0
    %1860 = vmatprep.subr.mxu0 0.0
    %1861 = vmatpush1.msra.mxu0 0.0
    %1862 = vmatprep.subr.mxu0 0.0
    %1863 = vmatpush1.msra.mxu0 0.0
    %1864 = vmatprep.subr.mxu0 0.0
    %1865 = vmatpush1.msra.mxu0 0.0
    %1866 = vmatprep.subr.mxu0 0.0
    %1867 = vmatpush1.msra.mxu0 0.0
    %1868 = vmatprep.subr.mxu0 0.0
    %1869 = vmatpush1.msra.mxu0 0.0
    %1870 = vmatprep.subr.mxu0 0.0
    %1871 = vmatpush1.msra.mxu0 0.0
    %1872 = vmatprep.subr.mxu0 0.0
    %1873 = vmatpush1.msra.mxu0 0.0
    %1874 = vmatprep.subr.mxu0 0.0
    %1875 = vmatpush1.msra.mxu0 0.0
    %1876 = vmatprep.mubr.f32.mxu0 0.0
    %1877 = vmatmul.mubr.f32.gmra.mrb[0].mxu0 %v1786
    %v1878 = vpop.f32.mrb[0].mxu0
    %v1879 = vadd.f32 %v1742, %v1878
    %v1880 = vpop.f32.mrb[0].mxu0
    %1881 = vmatprep.mubr.f32.mxu0 0.0
    %1882 = vmatmul.mubr.f32.gmra.mrb[0].mxu0 %v1789
    %v1883 = vpop.f32.mrb[0].mxu0
    %v1884 = vadd.f32 %v1747, %v1883
    %v1885 = vpop.f32.mrb[0].mxu0
    %1886 = vmatprep.mubr.f32.mxu0 0.0
    %1887 = vmatmul.mubr.f32.gmra.mrb[0].mxu0 %v1792
    %v1888 = vpop.f32.mrb[0].mxu0
    %v1889 = vadd.f32 %v1752, %v1888
    %v1890 = vpop.f32.mrb[0].mxu0
    %1891 = vmatprep.mubr.f32.mxu0 0.0
    %1892 = vmatmul.mubr.f32.gmra.mrb[0].mxu0 %v1795
    %v1893 = vpop.f32.mrb[0].mxu0
    %v1894 = vadd.f32 %v1757, %v1893
    %v1895 = vpop.f32.mrb[0].mxu0
    %1896 = vmatprep.mubr.f32.mxu0 0.0
    %1897 = vmatmul.mubr.f32.gmra.mrb[0].mxu0 %v1798
    %v1898 = vpop.f32.mrb[0].mxu0
    %v1899 = vadd.f32 %v1762, %v1898
    %v1900 = vpop.f32.mrb[0].mxu0
    %1901 = vmatprep.mubr.f32.mxu0 0.0
    %1902 = vmatmul.mubr.f32.gmra.mrb[0].mxu0 %v1801
    %v1903 = vpop.f32.mrb[0].mxu0
    %v1904 = vadd.f32 %v1767, %v1903
    %v1905 = vpop.f32.mrb[0].mxu0
    %1906 = vmatprep.mubr.f32.mxu0 0.0
    %1907 = vmatmul.mubr.f32.gmra.mrb[0].mxu0 %v1804
    %v1908 = vpop.f32.mrb[0].mxu0
    %v1909 = vadd.f32 %v1772, %v1908
    %v1910 = vpop.f32.mrb[0].mxu0
    %1911 = vmatprep.mubr.f32.mxu0 0.0
    %1912 = vmatmul.mubr.f32.gmra.mrb[0].mxu0 %v1807
    %v1913 = vpop.f32.mrb[0].mxu0
    %v1914 = vadd.f32 %v1777, %v1913
    %v1915 = vpop.f32.mrb[0].mxu0
    %1916 = vmatprep.mubr.f32.mxu0 0.0
    %1917 = vmatmul.mubr.f32.gmra.mrb[0].mxu0 %v1810
    %v1918 = vpop.f32.mrb[0].mxu0
    %v1919 = vadd.f32 %v1782, %v1918
    %v1920 = vpop.f32.mrb[0].mxu0
    %1921 = vdwg.mxu0
    %v1922 = vld [vmem:[#allocation2 + $0x3] sm:$0xff]
    %v1923 = vld [vmem:[#allocation2 + $0xb] sm:$0xff]
    %v1924 = vld [vmem:[#allocation2 + $0x13] sm:$0xff]
    %v1925 = vld [vmem:[#allocation2 + $0x1b] sm:$0xff]
    %v1926 = vld [vmem:[#allocation2 + $0x23] sm:$0xff]
    %v1927 = vld [vmem:[#allocation2 + $0x2b] sm:$0xff]
    %v1928 = vld [vmem:[#allocation2 + $0x33] sm:$0xff]
    %v1929 = vld [vmem:[#allocation2 + $0x3b] sm:$0xff]
    %v1930 = vld [vmem:[#allocation2 + $0x43] sm:$0xff]
    %s1931 = scalar_lea.vmem [#allocation11], 64
    %v1932 = vld [vmem:[%s1931] sm:$0xff]
    %v1933 = vld [vmem:[%s1931 + $0x8] sm:$0xff]
    %v1934 = vld [vmem:[%s1931 + $0x10] sm:$0xff]
    %v1935 = vld [vmem:[%s1931 + $0x18] sm:$0xff]
    %v1937 = vsel %vm247, %v1922, 0
    %v1940 = vsel %vm247, %v1923, 0
    %v1943 = vsel %vm247, %v1924, 0
    %v1946 = vsel %vm247, %v1925, 0
    %v1949 = vsel %vm247, %v1926, 0
    %v1952 = vsel %vm247, %v1927, 0
    %v1955 = vsel %vm247, %v1928, 0
    %v1958 = vsel %vm247, %v1929, 0
    %v1961 = vsel %vm247, %v1930, 0
    %1963 = vmatprep.subr.mxu0 0.0
    %1964 = vmatpush1.msra.mxu0 %v1932
    %1965 = vmatprep.subr.mxu0 0.0
    %1966 = vmatpush1.msra.mxu0 %v1933
    %1967 = vmatprep.subr.mxu0 0.0
    %1968 = vmatpush1.msra.mxu0 %v1934
    %1969 = vmatprep.subr.mxu0 0.0
    %1970 = vmatpush1.msra.mxu0 %v1935
    %1971 = vmatprep.subr.mxu0 0.0
    %1972 = vmatpush1.msra.mxu0 0.0
    %1973 = vmatprep.subr.mxu0 0.0
    %1974 = vmatpush1.msra.mxu0 0.0
    %1975 = vmatprep.subr.mxu0 0.0
    %1976 = vmatpush1.msra.mxu0 0.0
    %1977 = vmatprep.subr.mxu0 0.0
    %1978 = vmatpush1.msra.mxu0 0.0
    %1979 = vmatprep.subr.mxu0 0.0
    %1980 = vmatpush1.msra.mxu0 0.0
    %1981 = vmatprep.subr.mxu0 0.0
    %1982 = vmatpush1.msra.mxu0 0.0
    %1983 = vmatprep.subr.mxu0 0.0
    %1984 = vmatpush1.msra.mxu0 0.0
    %1985 = vmatprep.subr.mxu0 0.0
    %1986 = vmatpush1.msra.mxu0 0.0
    %1987 = vmatprep.subr.mxu0 0.0
    %1988 = vmatpush1.msra.mxu0 0.0
    %1989 = vmatprep.subr.mxu0 0.0
    %1990 = vmatpush1.msra.mxu0 0.0
    %1991 = vmatprep.subr.mxu0 0.0
    %1992 = vmatpush1.msra.mxu0 0.0
    %1993 = vmatprep.subr.mxu0 0.0
    %1994 = vmatpush1.msra.mxu0 0.0
    %1995 = vmatprep.subr.mxu0 0.0
    %1996 = vmatpush1.msra.mxu0 0.0
    %1997 = vmatprep.subr.mxu0 0.0
    %1998 = vmatpush1.msra.mxu0 0.0
    %1999 = vmatprep.subr.mxu0 0.0
    %2000 = vmatpush1.msra.mxu0 0.0
    %2001 = vmatprep.subr.mxu0 0.0
    %2002 = vmatpush1.msra.mxu0 0.0
    %2003 = vmatprep.subr.mxu0 0.0
    %2004 = vmatpush1.msra.mxu0 0.0
    %2005 = vmatprep.subr.mxu0 0.0
    %2006 = vmatpush1.msra.mxu0 0.0
    %2007 = vmatprep.subr.mxu0 0.0
    %2008 = vmatpush1.msra.mxu0 0.0
    %2009 = vmatprep.subr.mxu0 0.0
    %2010 = vmatpush1.msra.mxu0 0.0
    %2011 = vmatprep.subr.mxu0 0.0
    %2012 = vmatpush1.msra.mxu0 0.0
    %2013 = vmatprep.subr.mxu0 0.0
    %2014 = vmatpush1.msra.mxu0 0.0
    %2015 = vmatprep.subr.mxu0 0.0
    %2016 = vmatpush1.msra.mxu0 0.0
    %2017 = vmatprep.subr.mxu0 0.0
    %2018 = vmatpush1.msra.mxu0 0.0
    %2019 = vmatprep.subr.mxu0 0.0
    %2020 = vmatpush1.msra.mxu0 0.0
    %2021 = vmatprep.subr.mxu0 0.0
    %2022 = vmatpush1.msra.mxu0 0.0
    %2023 = vmatprep.subr.mxu0 0.0
    %2024 = vmatpush1.msra.mxu0 0.0
    %2025 = vmatprep.subr.mxu0 0.0
    %2026 = vmatpush1.msra.mxu0 0.0
    %2027 = vmatprep.mubr.f32.mxu0 0.0
    %2028 = vmatmul.mubr.f32.gmra.mrb[0].mxu0 %v1937
    %v2029 = vpop.f32.mrb[0].mxu0
    %v2030 = vadd.f32 0.0, %v2029
    %v2031 = vpop.f32.mrb[0].mxu0
    %2032 = vmatprep.mubr.f32.mxu0 0.0
    %2033 = vmatmul.mubr.f32.gmra.mrb[0].mxu0 %v1940
    %v2034 = vpop.f32.mrb[0].mxu0
    %v2035 = vadd.f32 0.0, %v2034
    %v2036 = vpop.f32.mrb[0].mxu0
    %2037 = vmatprep.mubr.f32.mxu0 0.0
    %2038 = vmatmul.mubr.f32.gmra.mrb[0].mxu0 %v1943
    %v2039 = vpop.f32.mrb[0].mxu0
    %v2040 = vadd.f32 0.0, %v2039
    %v2041 = vpop.f32.mrb[0].mxu0
    %2042 = vmatprep.mubr.f32.mxu0 0.0
    %2043 = vmatmul.mubr.f32.gmra.mrb[0].mxu0 %v1946
    %v2044 = vpop.f32.mrb[0].mxu0
    %v2045 = vadd.f32 0.0, %v2044
    %v2046 = vpop.f32.mrb[0].mxu0
    %2047 = vmatprep.mubr.f32.mxu0 0.0
    %2048 = vmatmul.mubr.f32.gmra.mrb[0].mxu0 %v1949
    %v2049 = vpop.f32.mrb[0].mxu0
    %v2050 = vadd.f32 0.0, %v2049
    %v2051 = vpop.f32.mrb[0].mxu0
    %2052 = vmatprep.mubr.f32.mxu0 0.0
    %2053 = vmatmul.mubr.f32.gmra.mrb[0].mxu0 %v1952
    %v2054 = vpop.f32.mrb[0].mxu0
    %v2055 = vadd.f32 0.0, %v2054
    %v2056 = vpop.f32.mrb[0].mxu0
    %2057 = vmatprep.mubr.f32.mxu0 0.0
    %2058 = vmatmul.mubr.f32.gmra.mrb[0].mxu0 %v1955
    %v2059 = vpop.f32.mrb[0].mxu0
    %v2060 = vadd.f32 0.0, %v2059
    %v2061 = vpop.f32.mrb[0].mxu0
    %2062 = vmatprep.mubr.f32.mxu0 0.0
    %2063 = vmatmul.mubr.f32.gmra.mrb[0].mxu0 %v1958
    %v2064 = vpop.f32.mrb[0].mxu0
    %v2065 = vadd.f32 0.0, %v2064
    %v2066 = vpop.f32.mrb[0].mxu0
    %2067 = vmatprep.mubr.f32.mxu0 0.0
    %2068 = vmatmul.mubr.f32.gmra.mrb[0].mxu0 %v1961
    %v2069 = vpop.f32.mrb[0].mxu0
    %v2070 = vadd.f32 0.0, %v2069
    %v2071 = vpop.f32.mrb[0].mxu0
    %2072 = vdwg.mxu0
    %v2073 = vadd.f32 %v1879, %v2030
    %v2074 = vadd.f32 %v1884, %v2035
    %v2075 = vadd.f32 %v1889, %v2040
    %v2076 = vadd.f32 %v1894, %v2045
    %v2077 = vadd.f32 %v1899, %v2050
    %v2078 = vadd.f32 %v1904, %v2055
    %v2079 = vadd.f32 %v1909, %v2060
    %v2080 = vadd.f32 %v1914, %v2065
    %v2081 = vadd.f32 %v1919, %v2070
    %v2082 = vld [vmem:[#allocation2 + $0x7] sm:$0xff]
    %v2083 = vld [vmem:[#allocation2 + $0xf] sm:$0xff]
    %v2084 = vld [vmem:[#allocation2 + $0x17] sm:$0xff]
    %v2085 = vld [vmem:[#allocation2 + $0x1f] sm:$0xff]
    %v2086 = vld [vmem:[#allocation2 + $0x27] sm:$0xff]
    %v2087 = vld [vmem:[#allocation2 + $0x2f] sm:$0xff]
    %v2088 = vld [vmem:[#allocation2 + $0x37] sm:$0xff]
    %v2089 = vld [vmem:[#allocation2 + $0x3f] sm:$0xff]
    %v2090 = vld [vmem:[#allocation2 + $0x47] sm:$0xff]
    %s2091 = scalar_lea.vmem [#allocation11], 96
    %v2092 = vld [vmem:[%s2091] sm:$0xff]
    %v2093 = vld [vmem:[%s2091 + $0x8] sm:$0xff]
    %v2094 = vld [vmem:[%s2091 + $0x10] sm:$0xff]
    %v2095 = vld [vmem:[%s2091 + $0x18] sm:$0xff]
    %v2097 = vsel %vm247, %v2082, 0
    %v2100 = vsel %vm247, %v2083, 0
    %v2103 = vsel %vm247, %v2084, 0
    %v2106 = vsel %vm247, %v2085, 0
    %v2109 = vsel %vm247, %v2086, 0
    %v2112 = vsel %vm247, %v2087, 0
    %v2115 = vsel %vm247, %v2088, 0
    %v2118 = vsel %vm247, %v2089, 0
    %v2121 = vsel %vm247, %v2090, 0
    %2123 = vmatprep.subr.mxu0 0.0
    %2124 = vmatpush1.msra.mxu0 %v2092
    %2125 = vmatprep.subr.mxu0 0.0
    %2126 = vmatpush1.msra.mxu0 %v2093
    %2127 = vmatprep.subr.mxu0 0.0
    %2128 = vmatpush1.msra.mxu0 %v2094
    %2129 = vmatprep.subr.mxu0 0.0
    %2130 = vmatpush1.msra.mxu0 %v2095
    %2131 = vmatprep.subr.mxu0 0.0
    %2132 = vmatpush1.msra.mxu0 0.0
    %2133 = vmatprep.subr.mxu0 0.0
    %2134 = vmatpush1.msra.mxu0 0.0
    %2135 = vmatprep.subr.mxu0 0.0
    %2136 = vmatpush1.msra.mxu0 0.0
    %2137 = vmatprep.subr.mxu0 0.0
    %2138 = vmatpush1.msra.mxu0 0.0
    %2139 = vmatprep.subr.mxu0 0.0
    %2140 = vmatpush1.msra.mxu0 0.0
    %2141 = vmatprep.subr.mxu0 0.0
    %2142 = vmatpush1.msra.mxu0 0.0
    %2143 = vmatprep.subr.mxu0 0.0
    %2144 = vmatpush1.msra.mxu0 0.0
    %2145 = vmatprep.subr.mxu0 0.0
    %2146 = vmatpush1.msra.mxu0 0.0
    %2147 = vmatprep.subr.mxu0 0.0
    %2148 = vmatpush1.msra.mxu0 0.0
    %2149 = vmatprep.subr.mxu0 0.0
    %2150 = vmatpush1.msra.mxu0 0.0
    %2151 = vmatprep.subr.mxu0 0.0
    %2152 = vmatpush1.msra.mxu0 0.0
    %2153 = vmatprep.subr.mxu0 0.0
    %2154 = vmatpush1.msra.mxu0 0.0
    %2155 = vmatprep.subr.mxu0 0.0
    %2156 = vmatpush1.msra.mxu0 0.0
    %2157 = vmatprep.subr.mxu0 0.0
    %2158 = vmatpush1.msra.mxu0 0.0
    %2159 = vmatprep.subr.mxu0 0.0
    %2160 = vmatpush1.msra.mxu0 0.0
    %2161 = vmatprep.subr.mxu0 0.0
    %2162 = vmatpush1.msra.mxu0 0.0
    %2163 = vmatprep.subr.mxu0 0.0
    %2164 = vmatpush1.msra.mxu0 0.0
    %2165 = vmatprep.subr.mxu0 0.0
    %2166 = vmatpush1.msra.mxu0 0.0
    %2167 = vmatprep.subr.mxu0 0.0
    %2168 = vmatpush1.msra.mxu0 0.0
    %2169 = vmatprep.subr.mxu0 0.0
    %2170 = vmatpush1.msra.mxu0 0.0
    %2171 = vmatprep.subr.mxu0 0.0
    %2172 = vmatpush1.msra.mxu0 0.0
    %2173 = vmatprep.subr.mxu0 0.0
    %2174 = vmatpush1.msra.mxu0 0.0
    %2175 = vmatprep.subr.mxu0 0.0
    %2176 = vmatpush1.msra.mxu0 0.0
    %2177 = vmatprep.subr.mxu0 0.0
    %2178 = vmatpush1.msra.mxu0 0.0
    %2179 = vmatprep.subr.mxu0 0.0
    %2180 = vmatpush1.msra.mxu0 0.0
    %2181 = vmatprep.subr.mxu0 0.0
    %2182 = vmatpush1.msra.mxu0 0.0
    %2183 = vmatprep.subr.mxu0 0.0
    %2184 = vmatpush1.msra.mxu0 0.0
    %2185 = vmatprep.subr.mxu0 0.0
    %2186 = vmatpush1.msra.mxu0 0.0
    %2187 = vmatprep.mubr.f32.mxu0 0.0
    %2188 = vmatmul.mubr.f32.gmra.mrb[0].mxu0 %v2097
    %v2189 = vpop.f32.mrb[0].mxu0
    %v2190 = vadd.f32 0.0, %v2189
    %v2191 = vpop.f32.mrb[0].mxu0
    %2192 = vmatprep.mubr.f32.mxu0 0.0
    %2193 = vmatmul.mubr.f32.gmra.mrb[0].mxu0 %v2100
    %v2194 = vpop.f32.mrb[0].mxu0
    %v2195 = vadd.f32 0.0, %v2194
    %v2196 = vpop.f32.mrb[0].mxu0
    %2197 = vmatprep.mubr.f32.mxu0 0.0
    %2198 = vmatmul.mubr.f32.gmra.mrb[0].mxu0 %v2103
    %v2199 = vpop.f32.mrb[0].mxu0
    %v2200 = vadd.f32 0.0, %v2199
    %v2201 = vpop.f32.mrb[0].mxu0
    %2202 = vmatprep.mubr.f32.mxu0 0.0
    %2203 = vmatmul.mubr.f32.gmra.mrb[0].mxu0 %v2106
    %v2204 = vpop.f32.mrb[0].mxu0
    %v2205 = vadd.f32 0.0, %v2204
    %v2206 = vpop.f32.mrb[0].mxu0
    %2207 = vmatprep.mubr.f32.mxu0 0.0
    %2208 = vmatmul.mubr.f32.gmra.mrb[0].mxu0 %v2109
    %v2209 = vpop.f32.mrb[0].mxu0
    %v2210 = vadd.f32 0.0, %v2209
    %v2211 = vpop.f32.mrb[0].mxu0
    %2212 = vmatprep.mubr.f32.mxu0 0.0
    %2213 = vmatmul.mubr.f32.gmra.mrb[0].mxu0 %v2112
    %v2214 = vpop.f32.mrb[0].mxu0
    %v2215 = vadd.f32 0.0, %v2214
    %v2216 = vpop.f32.mrb[0].mxu0
    %2217 = vmatprep.mubr.f32.mxu0 0.0
    %2218 = vmatmul.mubr.f32.gmra.mrb[0].mxu0 %v2115
    %v2219 = vpop.f32.mrb[0].mxu0
    %v2220 = vadd.f32 0.0, %v2219
    %v2221 = vpop.f32.mrb[0].mxu0
    %2222 = vmatprep.mubr.f32.mxu0 0.0
    %2223 = vmatmul.mubr.f32.gmra.mrb[0].mxu0 %v2118
    %v2224 = vpop.f32.mrb[0].mxu0
    %v2225 = vadd.f32 0.0, %v2224
    %v2226 = vpop.f32.mrb[0].mxu0
    %2227 = vmatprep.mubr.f32.mxu0 0.0
    %2228 = vmatmul.mubr.f32.gmra.mrb[0].mxu0 %v2121
    %v2229 = vpop.f32.mrb[0].mxu0
    %v2230 = vadd.f32 0.0, %v2229
    %v2231 = vpop.f32.mrb[0].mxu0
    %2232 = vdwg.mxu0
    %v2233 = vadd.f32 %v2073, %v2190
    %v2234 = vadd.f32 %v2074, %v2195
    %v2235 = vadd.f32 %v2075, %v2200
    %v2236 = vadd.f32 %v2076, %v2205
    %v2237 = vadd.f32 %v2077, %v2210
    %v2238 = vadd.f32 %v2078, %v2215
    %v2239 = vadd.f32 %v2079, %v2220
    %v2240 = vadd.f32 %v2080, %v2225
    %v2241 = vadd.f32 %v2081, %v2230
    %v2242 = vld [vmem:[#allocation2 + $0x8] sm:$0xff]
    %v2243 = vld [vmem:[#allocation2 + $0x10] sm:$0xff]
    %v2244 = vld [vmem:[#allocation2 + $0x18] sm:$0xff]
    %v2245 = vld [vmem:[#allocation2 + $0x20] sm:$0xff]
    %v2246 = vld [vmem:[#allocation2 + $0x28] sm:$0xff]
    %v2247 = vld [vmem:[#allocation2 + $0x30] sm:$0xff]
    %v2248 = vld [vmem:[#allocation2 + $0x38] sm:$0xff]
    %v2249 = vld [vmem:[#allocation2 + $0x40] sm:$0xff]
    %v2250 = vld [vmem:[#allocation2 + $0x48] sm:$0xff]
    %s2251 = scalar_lea.vmem [#allocation11], 128
    %v2252 = vld [vmem:[%s2251] sm:$0xff]
    %v2253 = vld [vmem:[%s2251 + $0x8] sm:$0xff]
    %v2254 = vld [vmem:[%s2251 + $0x10] sm:$0xff]
    %v2255 = vld [vmem:[%s2251 + $0x18] sm:$0xff]
    %v2257 = vsel %vm247, %v2242, 0
    %v2260 = vsel %vm247, %v2243, 0
    %v2263 = vsel %vm247, %v2244, 0
    %v2266 = vsel %vm247, %v2245, 0
    %v2269 = vsel %vm247, %v2246, 0
    %v2272 = vsel %vm247, %v2247, 0
    %v2275 = vsel %vm247, %v2248, 0
    %v2278 = vsel %vm247, %v2249, 0
    %v2281 = vsel %vm247, %v2250, 0
    %2283 = vmatprep.subr.mxu0 0.0
    %2284 = vmatpush1.msra.mxu0 %v2252
    %2285 = vmatprep.subr.mxu0 0.0
    %2286 = vmatpush1.msra.mxu0 %v2253
    %2287 = vmatprep.subr.mxu0 0.0
    %2288 = vmatpush1.msra.mxu0 %v2254
    %2289 = vmatprep.subr.mxu0 0.0
    %2290 = vmatpush1.msra.mxu0 %v2255
    %2291 = vmatprep.subr.mxu0 0.0
    %2292 = vmatpush1.msra.mxu0 0.0
    %2293 = vmatprep.subr.mxu0 0.0
    %2294 = vmatpush1.msra.mxu0 0.0
    %2295 = vmatprep.subr.mxu0 0.0
    %2296 = vmatpush1.msra.mxu0 0.0
    %2297 = vmatprep.subr.mxu0 0.0
    %2298 = vmatpush1.msra.mxu0 0.0
    %2299 = vmatprep.subr.mxu0 0.0
    %2300 = vmatpush1.msra.mxu0 0.0
    %2301 = vmatprep.subr.mxu0 0.0
    %2302 = vmatpush1.msra.mxu0 0.0
    %2303 = vmatprep.subr.mxu0 0.0
    %2304 = vmatpush1.msra.mxu0 0.0
    %2305 = vmatprep.subr.mxu0 0.0
    %2306 = vmatpush1.msra.mxu0 0.0
    %2307 = vmatprep.subr.mxu0 0.0
    %2308 = vmatpush1.msra.mxu0 0.0
    %2309 = vmatprep.subr.mxu0 0.0
    %2310 = vmatpush1.msra.mxu0 0.0
    %2311 = vmatprep.subr.mxu0 0.0
    %2312 = vmatpush1.msra.mxu0 0.0
    %2313 = vmatprep.subr.mxu0 0.0
    %2314 = vmatpush1.msra.mxu0 0.0
    %2315 = vmatprep.subr.mxu0 0.0
    %2316 = vmatpush1.msra.mxu0 0.0
    %2317 = vmatprep.subr.mxu0 0.0
    %2318 = vmatpush1.msra.mxu0 0.0
    %2319 = vmatprep.subr.mxu0 0.0
    %2320 = vmatpush1.msra.mxu0 0.0
    %2321 = vmatprep.subr.mxu0 0.0
    %2322 = vmatpush1.msra.mxu0 0.0
    %2323 = vmatprep.subr.mxu0 0.0
    %2324 = vmatpush1.msra.mxu0 0.0
    %2325 = vmatprep.subr.mxu0 0.0
    %2326 = vmatpush1.msra.mxu0 0.0
    %2327 = vmatprep.subr.mxu0 0.0
    %2328 = vmatpush1.msra.mxu0 0.0
    %2329 = vmatprep.subr.mxu0 0.0
    %2330 = vmatpush1.msra.mxu0 0.0
    %2331 = vmatprep.subr.mxu0 0.0
    %2332 = vmatpush1.msra.mxu0 0.0
    %2333 = vmatprep.subr.mxu0 0.0
    %2334 = vmatpush1.msra.mxu0 0.0
    %2335 = vmatprep.subr.mxu0 0.0
    %2336 = vmatpush1.msra.mxu0 0.0
    %2337 = vmatprep.subr.mxu0 0.0
    %2338 = vmatpush1.msra.mxu0 0.0
    %2339 = vmatprep.subr.mxu0 0.0
    %2340 = vmatpush1.msra.mxu0 0.0
    %2341 = vmatprep.subr.mxu0 0.0
    %2342 = vmatpush1.msra.mxu0 0.0
    %2343 = vmatprep.subr.mxu0 0.0
    %2344 = vmatpush1.msra.mxu0 0.0
    %2345 = vmatprep.subr.mxu0 0.0
    %2346 = vmatpush1.msra.mxu0 0.0
    %2347 = vmatprep.mubr.f32.mxu0 0.0
    %2348 = vmatmul.mubr.f32.gmra.mrb[0].mxu0 %v2257
    %v2349 = vpop.f32.mrb[0].mxu0
    %v2350 = vadd.f32 0.0, %v2349
    %v2351 = vpop.f32.mrb[0].mxu0
    %2352 = vmatprep.mubr.f32.mxu0 0.0
    %2353 = vmatmul.mubr.f32.gmra.mrb[0].mxu0 %v2260
    %v2354 = vpop.f32.mrb[0].mxu0
    %v2355 = vadd.f32 0.0, %v2354
    %v2356 = vpop.f32.mrb[0].mxu0
    %2357 = vmatprep.mubr.f32.mxu0 0.0
    %2358 = vmatmul.mubr.f32.gmra.mrb[0].mxu0 %v2263
    %v2359 = vpop.f32.mrb[0].mxu0
    %v2360 = vadd.f32 0.0, %v2359
    %v2361 = vpop.f32.mrb[0].mxu0
    %2362 = vmatprep.mubr.f32.mxu0 0.0
    %2363 = vmatmul.mubr.f32.gmra.mrb[0].mxu0 %v2266
    %v2364 = vpop.f32.mrb[0].mxu0
    %v2365 = vadd.f32 0.0, %v2364
    %v2366 = vpop.f32.mrb[0].mxu0
    %2367 = vmatprep.mubr.f32.mxu0 0.0
    %2368 = vmatmul.mubr.f32.gmra.mrb[0].mxu0 %v2269
    %v2369 = vpop.f32.mrb[0].mxu0
    %v2370 = vadd.f32 0.0, %v2369
    %v2371 = vpop.f32.mrb[0].mxu0
    %2372 = vmatprep.mubr.f32.mxu0 0.0
    %2373 = vmatmul.mubr.f32.gmra.mrb[0].mxu0 %v2272
    %v2374 = vpop.f32.mrb[0].mxu0
    %v2375 = vadd.f32 0.0, %v2374
    %v2376 = vpop.f32.mrb[0].mxu0
    %2377 = vmatprep.mubr.f32.mxu0 0.0
    %2378 = vmatmul.mubr.f32.gmra.mrb[0].mxu0 %v2275
    %v2379 = vpop.f32.mrb[0].mxu0
    %v2380 = vadd.f32 0.0, %v2379
    %v2381 = vpop.f32.mrb[0].mxu0
    %2382 = vmatprep.mubr.f32.mxu0 0.0
    %2383 = vmatmul.mubr.f32.gmra.mrb[0].mxu0 %v2278
    %v2384 = vpop.f32.mrb[0].mxu0
    %v2385 = vadd.f32 0.0, %v2384
    %v2386 = vpop.f32.mrb[0].mxu0
    %2387 = vmatprep.mubr.f32.mxu0 0.0
    %2388 = vmatmul.mubr.f32.gmra.mrb[0].mxu0 %v2281
    %v2389 = vpop.f32.mrb[0].mxu0
    %v2390 = vadd.f32 0.0, %v2389
    %v2391 = vpop.f32.mrb[0].mxu0
    %2392 = vdwg.mxu0
    %v2393 = vadd.f32 %v2233, %v2350
    %v2394 = vadd.f32 %v2234, %v2355
    %v2395 = vadd.f32 %v2235, %v2360
    %v2396 = vadd.f32 %v2236, %v2365
    %v2397 = vadd.f32 %v2237, %v2370
    %v2398 = vadd.f32 %v2238, %v2375
    %v2399 = vadd.f32 %v2239, %v2380
    %v2400 = vadd.f32 %v2240, %v2385
    %v2401 = vadd.f32 %v2241, %v2390
    %v2402 = vld [vmem:[#allocation2 + $0x9] sm:$0xff]
    %v2403 = vld [vmem:[#allocation2 + $0x11] sm:$0xff]
    %v2404 = vld [vmem:[#allocation2 + $0x19] sm:$0xff]
    %v2405 = vld [vmem:[#allocation2 + $0x21] sm:$0xff]
    %v2406 = vld [vmem:[#allocation2 + $0x29] sm:$0xff]
    %v2407 = vld [vmem:[#allocation2 + $0x31] sm:$0xff]
    %v2408 = vld [vmem:[#allocation2 + $0x39] sm:$0xff]
    %v2409 = vld [vmem:[#allocation2 + $0x41] sm:$0xff]
    %v2410 = vld [vmem:[#allocation2 + $0x49] sm:$0xff]
    %s2411 = scalar_lea.vmem [#allocation11], 160
    %v2412 = vld [vmem:[%s2411] sm:$0xff]
    %v2413 = vld [vmem:[%s2411 + $0x8] sm:$0xff]
    %v2414 = vld [vmem:[%s2411 + $0x10] sm:$0xff]
    %v2415 = vld [vmem:[%s2411 + $0x18] sm:$0xff]
    %v2417 = vsel %vm247, %v2402, 0
    %v2420 = vsel %vm247, %v2403, 0
    %v2423 = vsel %vm247, %v2404, 0
    %v2426 = vsel %vm247, %v2405, 0
    %v2429 = vsel %vm247, %v2406, 0
    %v2432 = vsel %vm247, %v2407, 0
    %v2435 = vsel %vm247, %v2408, 0
    %v2438 = vsel %vm247, %v2409, 0
    %v2441 = vsel %vm247, %v2410, 0
    %2443 = vmatprep.subr.mxu0 0.0
    %2444 = vmatpush1.msra.mxu0 %v2412
    %2445 = vmatprep.subr.mxu0 0.0
    %2446 = vmatpush1.msra.mxu0 %v2413
    %2447 = vmatprep.subr.mxu0 0.0
    %2448 = vmatpush1.msra.mxu0 %v2414
    %2449 = vmatprep.subr.mxu0 0.0
    %2450 = vmatpush1.msra.mxu0 %v2415
    %2451 = vmatprep.subr.mxu0 0.0
    %2452 = vmatpush1.msra.mxu0 0.0
    %2453 = vmatprep.subr.mxu0 0.0
    %2454 = vmatpush1.msra.mxu0 0.0
    %2455 = vmatprep.subr.mxu0 0.0
    %2456 = vmatpush1.msra.mxu0 0.0
    %2457 = vmatprep.subr.mxu0 0.0
    %2458 = vmatpush1.msra.mxu0 0.0
    %2459 = vmatprep.subr.mxu0 0.0
    %2460 = vmatpush1.msra.mxu0 0.0
    %2461 = vmatprep.subr.mxu0 0.0
    %2462 = vmatpush1.msra.mxu0 0.0
    %2463 = vmatprep.subr.mxu0 0.0
    %2464 = vmatpush1.msra.mxu0 0.0
    %2465 = vmatprep.subr.mxu0 0.0
    %2466 = vmatpush1.msra.mxu0 0.0
    %2467 = vmatprep.subr.mxu0 0.0
    %2468 = vmatpush1.msra.mxu0 0.0
    %2469 = vmatprep.subr.mxu0 0.0
    %2470 = vmatpush1.msra.mxu0 0.0
    %2471 = vmatprep.subr.mxu0 0.0
    %2472 = vmatpush1.msra.mxu0 0.0
    %2473 = vmatprep.subr.mxu0 0.0
    %2474 = vmatpush1.msra.mxu0 0.0
    %2475 = vmatprep.subr.mxu0 0.0
    %2476 = vmatpush1.msra.mxu0 0.0
    %2477 = vmatprep.subr.mxu0 0.0
    %2478 = vmatpush1.msra.mxu0 0.0
    %2479 = vmatprep.subr.mxu0 0.0
    %2480 = vmatpush1.msra.mxu0 0.0
    %2481 = vmatprep.subr.mxu0 0.0
    %2482 = vmatpush1.msra.mxu0 0.0
    %2483 = vmatprep.subr.mxu0 0.0
    %2484 = vmatpush1.msra.mxu0 0.0
    %2485 = vmatprep.subr.mxu0 0.0
    %2486 = vmatpush1.msra.mxu0 0.0
    %2487 = vmatprep.subr.mxu0 0.0
    %2488 = vmatpush1.msra.mxu0 0.0
    %2489 = vmatprep.subr.mxu0 0.0
    %2490 = vmatpush1.msra.mxu0 0.0
    %2491 = vmatprep.subr.mxu0 0.0
    %2492 = vmatpush1.msra.mxu0 0.0
    %2493 = vmatprep.subr.mxu0 0.0
    %2494 = vmatpush1.msra.mxu0 0.0
    %2495 = vmatprep.subr.mxu0 0.0
    %2496 = vmatpush1.msra.mxu0 0.0
    %2497 = vmatprep.subr.mxu0 0.0
    %2498 = vmatpush1.msra.mxu0 0.0
    %2499 = vmatprep.subr.mxu0 0.0
    %2500 = vmatpush1.msra.mxu0 0.0
    %2501 = vmatprep.subr.mxu0 0.0
    %2502 = vmatpush1.msra.mxu0 0.0
    %2503 = vmatprep.subr.mxu0 0.0
    %2504 = vmatpush1.msra.mxu0 0.0
    %2505 = vmatprep.subr.mxu0 0.0
    %2506 = vmatpush1.msra.mxu0 0.0
    %2507 = vmatprep.mubr.f32.mxu0 0.0
    %2508 = vmatmul.mubr.f32.gmra.mrb[0].mxu0 %v2417
    %v2509 = vpop.f32.mrb[0].mxu0
    %v2510 = vadd.f32 0.0, %v2509
    %v2511 = vpop.f32.mrb[0].mxu0
    %2512 = vmatprep.mubr.f32.mxu0 0.0
    %2513 = vmatmul.mubr.f32.gmra.mrb[0].mxu0 %v2420
    %v2514 = vpop.f32.mrb[0].mxu0
    %v2515 = vadd.f32 0.0, %v2514
    %v2516 = vpop.f32.mrb[0].mxu0
    %2517 = vmatprep.mubr.f32.mxu0 0.0
    %2518 = vmatmul.mubr.f32.gmra.mrb[0].mxu0 %v2423
    %v2519 = vpop.f32.mrb[0].mxu0
    %v2520 = vadd.f32 0.0, %v2519
    %v2521 = vpop.f32.mrb[0].mxu0
    %2522 = vmatprep.mubr.f32.mxu0 0.0
    %2523 = vmatmul.mubr.f32.gmra.mrb[0].mxu0 %v2426
    %v2524 = vpop.f32.mrb[0].mxu0
    %v2525 = vadd.f32 0.0, %v2524
    %v2526 = vpop.f32.mrb[0].mxu0
    %2527 = vmatprep.mubr.f32.mxu0 0.0
    %2528 = vmatmul.mubr.f32.gmra.mrb[0].mxu0 %v2429
    %v2529 = vpop.f32.mrb[0].mxu0
    %v2530 = vadd.f32 0.0, %v2529
    %v2531 = vpop.f32.mrb[0].mxu0
    %2532 = vmatprep.mubr.f32.mxu0 0.0
    %2533 = vmatmul.mubr.f32.gmra.mrb[0].mxu0 %v2432
    %v2534 = vpop.f32.mrb[0].mxu0
    %v2535 = vadd.f32 0.0, %v2534
    %v2536 = vpop.f32.mrb[0].mxu0
    %2537 = vmatprep.mubr.f32.mxu0 0.0
    %2538 = vmatmul.mubr.f32.gmra.mrb[0].mxu0 %v2435
    %v2539 = vpop.f32.mrb[0].mxu0
    %v2540 = vadd.f32 0.0, %v2539
    %v2541 = vpop.f32.mrb[0].mxu0
    %2542 = vmatprep.mubr.f32.mxu0 0.0
    %2543 = vmatmul.mubr.f32.gmra.mrb[0].mxu0 %v2438
    %v2544 = vpop.f32.mrb[0].mxu0
    %v2545 = vadd.f32 0.0, %v2544
    %v2546 = vpop.f32.mrb[0].mxu0
    %2547 = vmatprep.mubr.f32.mxu0 0.0
    %2548 = vmatmul.mubr.f32.gmra.mrb[0].mxu0 %v2441
    %v2549 = vpop.f32.mrb[0].mxu0
    %v2550 = vadd.f32 0.0, %v2549
    %v2551 = vpop.f32.mrb[0].mxu0
    %2552 = vdwg.mxu0
    %v2553 = vadd.f32 %v2393, %v2510
    %v2554 = vadd.f32 %v2394, %v2515
    %v2555 = vadd.f32 %v2395, %v2520
    %v2556 = vadd.f32 %v2396, %v2525
    %v2557 = vadd.f32 %v2397, %v2530
    %v2558 = vadd.f32 %v2398, %v2535
    %v2559 = vadd.f32 %v2399, %v2540
    %v2560 = vadd.f32 %v2400, %v2545
    %v2561 = vadd.f32 %v2401, %v2550
    %v2562 = vld [vmem:[#allocation2 + $0xd] sm:$0xff]
    %v2563 = vld [vmem:[#allocation2 + $0x15] sm:$0xff]
    %v2564 = vld [vmem:[#allocation2 + $0x1d] sm:$0xff]
    %v2565 = vld [vmem:[#allocation2 + $0x25] sm:$0xff]
    %v2566 = vld [vmem:[#allocation2 + $0x2d] sm:$0xff]
    %v2567 = vld [vmem:[#allocation2 + $0x35] sm:$0xff]
    %v2568 = vld [vmem:[#allocation2 + $0x3d] sm:$0xff]
    %v2569 = vld [vmem:[#allocation2 + $0x45] sm:$0xff]
    %v2570 = vld [vmem:[#allocation2 + $0x4d] sm:$0xff]
    %s2571 = scalar_lea.vmem [#allocation11], 192
    %v2572 = vld [vmem:[%s2571] sm:$0xff]
    %v2573 = vld [vmem:[%s2571 + $0x8] sm:$0xff]
    %v2574 = vld [vmem:[%s2571 + $0x10] sm:$0xff]
    %v2575 = vld [vmem:[%s2571 + $0x18] sm:$0xff]
    %v2577 = vsel %vm247, %v2562, 0
    %v2580 = vsel %vm247, %v2563, 0
    %v2583 = vsel %vm247, %v2564, 0
    %v2586 = vsel %vm247, %v2565, 0
    %v2589 = vsel %vm247, %v2566, 0
    %v2592 = vsel %vm247, %v2567, 0
    %v2595 = vsel %vm247, %v2568, 0
    %v2598 = vsel %vm247, %v2569, 0
    %v2601 = vsel %vm247, %v2570, 0
    %2603 = vmatprep.subr.mxu0 0.0
    %2604 = vmatpush1.msra.mxu0 %v2572
    %2605 = vmatprep.subr.mxu0 0.0
    %2606 = vmatpush1.msra.mxu0 %v2573
    %2607 = vmatprep.subr.mxu0 0.0
    %2608 = vmatpush1.msra.mxu0 %v2574
    %2609 = vmatprep.subr.mxu0 0.0
    %2610 = vmatpush1.msra.mxu0 %v2575
    %2611 = vmatprep.subr.mxu0 0.0
    %2612 = vmatpush1.msra.mxu0 0.0
    %2613 = vmatprep.subr.mxu0 0.0
    %2614 = vmatpush1.msra.mxu0 0.0
    %2615 = vmatprep.subr.mxu0 0.0
    %2616 = vmatpush1.msra.mxu0 0.0
    %2617 = vmatprep.subr.mxu0 0.0
    %2618 = vmatpush1.msra.mxu0 0.0
    %2619 = vmatprep.subr.mxu0 0.0
    %2620 = vmatpush1.msra.mxu0 0.0
    %2621 = vmatprep.subr.mxu0 0.0
    %2622 = vmatpush1.msra.mxu0 0.0
    %2623 = vmatprep.subr.mxu0 0.0
    %2624 = vmatpush1.msra.mxu0 0.0
    %2625 = vmatprep.subr.mxu0 0.0
    %2626 = vmatpush1.msra.mxu0 0.0
    %2627 = vmatprep.subr.mxu0 0.0
    %2628 = vmatpush1.msra.mxu0 0.0
    %2629 = vmatprep.subr.mxu0 0.0
    %2630 = vmatpush1.msra.mxu0 0.0
    %2631 = vmatprep.subr.mxu0 0.0
    %2632 = vmatpush1.msra.mxu0 0.0
    %2633 = vmatprep.subr.mxu0 0.0
    %2634 = vmatpush1.msra.mxu0 0.0
    %2635 = vmatprep.subr.mxu0 0.0
    %2636 = vmatpush1.msra.mxu0 0.0
    %2637 = vmatprep.subr.mxu0 0.0
    %2638 = vmatpush1.msra.mxu0 0.0
    %2639 = vmatprep.subr.mxu0 0.0
    %2640 = vmatpush1.msra.mxu0 0.0
    %2641 = vmatprep.subr.mxu0 0.0
    %2642 = vmatpush1.msra.mxu0 0.0
    %2643 = vmatprep.subr.mxu0 0.0
    %2644 = vmatpush1.msra.mxu0 0.0
    %2645 = vmatprep.subr.mxu0 0.0
    %2646 = vmatpush1.msra.mxu0 0.0
    %2647 = vmatprep.subr.mxu0 0.0
    %2648 = vmatpush1.msra.mxu0 0.0
    %2649 = vmatprep.subr.mxu0 0.0
    %2650 = vmatpush1.msra.mxu0 0.0
    %2651 = vmatprep.subr.mxu0 0.0
    %2652 = vmatpush1.msra.mxu0 0.0
    %2653 = vmatprep.subr.mxu0 0.0
    %2654 = vmatpush1.msra.mxu0 0.0
    %2655 = vmatprep.subr.mxu0 0.0
    %2656 = vmatpush1.msra.mxu0 0.0
    %2657 = vmatprep.subr.mxu0 0.0
    %2658 = vmatpush1.msra.mxu0 0.0
    %2659 = vmatprep.subr.mxu0 0.0
    %2660 = vmatpush1.msra.mxu0 0.0
    %2661 = vmatprep.subr.mxu0 0.0
    %2662 = vmatpush1.msra.mxu0 0.0
    %2663 = vmatprep.subr.mxu0 0.0
    %2664 = vmatpush1.msra.mxu0 0.0
    %2665 = vmatprep.subr.mxu0 0.0
    %2666 = vmatpush1.msra.mxu0 0.0
    %2667 = vmatprep.mubr.f32.mxu0 0.0
    %2668 = vmatmul.mubr.f32.gmra.mrb[0].mxu0 %v2577
    %v2669 = vpop.f32.mrb[0].mxu0
    %v2670 = vadd.f32 0.0, %v2669
    %v2671 = vpop.f32.mrb[0].mxu0
    %2672 = vmatprep.mubr.f32.mxu0 0.0
    %2673 = vmatmul.mubr.f32.gmra.mrb[0].mxu0 %v2580
    %v2674 = vpop.f32.mrb[0].mxu0
    %v2675 = vadd.f32 0.0, %v2674
    %v2676 = vpop.f32.mrb[0].mxu0
    %2677 = vmatprep.mubr.f32.mxu0 0.0
    %2678 = vmatmul.mubr.f32.gmra.mrb[0].mxu0 %v2583
    %v2679 = vpop.f32.mrb[0].mxu0
    %v2680 = vadd.f32 0.0, %v2679
    %v2681 = vpop.f32.mrb[0].mxu0
    %2682 = vmatprep.mubr.f32.mxu0 0.0
    %2683 = vmatmul.mubr.f32.gmra.mrb[0].mxu0 %v2586
    %v2684 = vpop.f32.mrb[0].mxu0
    %v2685 = vadd.f32 0.0, %v2684
    %v2686 = vpop.f32.mrb[0].mxu0
    %2687 = vmatprep.mubr.f32.mxu0 0.0
    %2688 = vmatmul.mubr.f32.gmra.mrb[0].mxu0 %v2589
    %v2689 = vpop.f32.mrb[0].mxu0
    %v2690 = vadd.f32 0.0, %v2689
    %v2691 = vpop.f32.mrb[0].mxu0
    %2692 = vmatprep.mubr.f32.mxu0 0.0
    %2693 = vmatmul.mubr.f32.gmra.mrb[0].mxu0 %v2592
    %v2694 = vpop.f32.mrb[0].mxu0
    %v2695 = vadd.f32 0.0, %v2694
    %v2696 = vpop.f32.mrb[0].mxu0
    %2697 = vmatprep.mubr.f32.mxu0 0.0
    %2698 = vmatmul.mubr.f32.gmra.mrb[0].mxu0 %v2595
    %v2699 = vpop.f32.mrb[0].mxu0
    %v2700 = vadd.f32 0.0, %v2699
    %v2701 = vpop.f32.mrb[0].mxu0
    %2702 = vmatprep.mubr.f32.mxu0 0.0
    %2703 = vmatmul.mubr.f32.gmra.mrb[0].mxu0 %v2598
    %v2704 = vpop.f32.mrb[0].mxu0
    %v2705 = vadd.f32 0.0, %v2704
    %v2706 = vpop.f32.mrb[0].mxu0
    %2707 = vmatprep.mubr.f32.mxu0 0.0
    %2708 = vmatmul.mubr.f32.gmra.mrb[0].mxu0 %v2601
    %v2709 = vpop.f32.mrb[0].mxu0
    %v2710 = vadd.f32 0.0, %v2709
    %v2711 = vpop.f32.mrb[0].mxu0
    %2712 = vdwg.mxu0
    %v2713 = vadd.f32 %v2553, %v2670
    %v2714 = vadd.f32 %v2554, %v2675
    %v2715 = vadd.f32 %v2555, %v2680
    %v2716 = vadd.f32 %v2556, %v2685
    %v2717 = vadd.f32 %v2557, %v2690
    %v2718 = vadd.f32 %v2558, %v2695
    %v2719 = vadd.f32 %v2559, %v2700
    %v2720 = vadd.f32 %v2560, %v2705
    %v2721 = vadd.f32 %v2561, %v2710
    %v2722 = vld [vmem:[#allocation2 + $0xe] sm:$0xff]
    %v2723 = vld [vmem:[#allocation2 + $0x16] sm:$0xff]
    %v2724 = vld [vmem:[#allocation2 + $0x1e] sm:$0xff]
    %v2725 = vld [vmem:[#allocation2 + $0x26] sm:$0xff]
    %v2726 = vld [vmem:[#allocation2 + $0x2e] sm:$0xff]
    %v2727 = vld [vmem:[#allocation2 + $0x36] sm:$0xff]
    %v2728 = vld [vmem:[#allocation2 + $0x3e] sm:$0xff]
    %v2729 = vld [vmem:[#allocation2 + $0x46] sm:$0xff]
    %v2730 = vld [vmem:[#allocation2 + $0x4e] sm:$0xff]
    %s2731 = scalar_lea.vmem [#allocation11], 224
    %v2732 = vld [vmem:[%s2731] sm:$0xff]
    %v2733 = vld [vmem:[%s2731 + $0x8] sm:$0xff]
    %v2734 = vld [vmem:[%s2731 + $0x10] sm:$0xff]
    %v2735 = vld [vmem:[%s2731 + $0x18] sm:$0xff]
    %v2737 = vsel %vm247, %v2722, 0
    %v2740 = vsel %vm247, %v2723, 0
    %v2743 = vsel %vm247, %v2724, 0
    %v2746 = vsel %vm247, %v2725, 0
    %v2749 = vsel %vm247, %v2726, 0
    %v2752 = vsel %vm247, %v2727, 0
    %v2755 = vsel %vm247, %v2728, 0
    %v2758 = vsel %vm247, %v2729, 0
    %v2761 = vsel %vm247, %v2730, 0
    %2763 = vmatprep.subr.mxu0 0.0
    %2764 = vmatpush1.msra.mxu0 %v2732
    %2765 = vmatprep.subr.mxu0 0.0
    %2766 = vmatpush1.msra.mxu0 %v2733
    %2767 = vmatprep.subr.mxu0 0.0
    %2768 = vmatpush1.msra.mxu0 %v2734
    %2769 = vmatprep.subr.mxu0 0.0
    %2770 = vmatpush1.msra.mxu0 %v2735
    %2771 = vmatprep.subr.mxu0 0.0
    %2772 = vmatpush1.msra.mxu0 0.0
    %2773 = vmatprep.subr.mxu0 0.0
    %2774 = vmatpush1.msra.mxu0 0.0
    %2775 = vmatprep.subr.mxu0 0.0
    %2776 = vmatpush1.msra.mxu0 0.0
    %2777 = vmatprep.subr.mxu0 0.0
    %2778 = vmatpush1.msra.mxu0 0.0
    %2779 = vmatprep.subr.mxu0 0.0
    %2780 = vmatpush1.msra.mxu0 0.0
    %2781 = vmatprep.subr.mxu0 0.0
    %2782 = vmatpush1.msra.mxu0 0.0
    %2783 = vmatprep.subr.mxu0 0.0
    %2784 = vmatpush1.msra.mxu0 0.0
    %2785 = vmatprep.subr.mxu0 0.0
    %2786 = vmatpush1.msra.mxu0 0.0
    %2787 = vmatprep.subr.mxu0 0.0
    %2788 = vmatpush1.msra.mxu0 0.0
    %2789 = vmatprep.subr.mxu0 0.0
    %2790 = vmatpush1.msra.mxu0 0.0
    %2791 = vmatprep.subr.mxu0 0.0
    %2792 = vmatpush1.msra.mxu0 0.0
    %2793 = vmatprep.subr.mxu0 0.0
    %2794 = vmatpush1.msra.mxu0 0.0
    %2795 = vmatprep.subr.mxu0 0.0
    %2796 = vmatpush1.msra.mxu0 0.0
    %2797 = vmatprep.subr.mxu0 0.0
    %2798 = vmatpush1.msra.mxu0 0.0
    %2799 = vmatprep.subr.mxu0 0.0
    %2800 = vmatpush1.msra.mxu0 0.0
    %2801 = vmatprep.subr.mxu0 0.0
    %2802 = vmatpush1.msra.mxu0 0.0
    %2803 = vmatprep.subr.mxu0 0.0
    %2804 = vmatpush1.msra.mxu0 0.0
    %2805 = vmatprep.subr.mxu0 0.0
    %2806 = vmatpush1.msra.mxu0 0.0
    %2807 = vmatprep.subr.mxu0 0.0
    %2808 = vmatpush1.msra.mxu0 0.0
    %2809 = vmatprep.subr.mxu0 0.0
    %2810 = vmatpush1.msra.mxu0 0.0
    %2811 = vmatprep.subr.mxu0 0.0
    %2812 = vmatpush1.msra.mxu0 0.0
    %2813 = vmatprep.subr.mxu0 0.0
    %2814 = vmatpush1.msra.mxu0 0.0
    %2815 = vmatprep.subr.mxu0 0.0
    %2816 = vmatpush1.msra.mxu0 0.0
    %2817 = vmatprep.subr.mxu0 0.0
    %2818 = vmatpush1.msra.mxu0 0.0
    %2819 = vmatprep.subr.mxu0 0.0
    %2820 = vmatpush1.msra.mxu0 0.0
    %2821 = vmatprep.subr.mxu0 0.0
    %2822 = vmatpush1.msra.mxu0 0.0
    %2823 = vmatprep.subr.mxu0 0.0
    %2824 = vmatpush1.msra.mxu0 0.0
    %2825 = vmatprep.subr.mxu0 0.0
    %2826 = vmatpush1.msra.mxu0 0.0
    %2827 = vmatprep.mubr.f32.mxu0 0.0
    %2828 = vmatmul.mubr.f32.gmra.mrb[0].mxu0 %v2737
    %v2829 = vpop.f32.mrb[0].mxu0
    %v2830 = vadd.f32 0.0, %v2829
    %v2831 = vpop.f32.mrb[0].mxu0
    %2832 = vmatprep.mubr.f32.mxu0 0.0
    %2833 = vmatmul.mubr.f32.gmra.mrb[0].mxu0 %v2740
    %v2834 = vpop.f32.mrb[0].mxu0
    %v2835 = vadd.f32 0.0, %v2834
    %v2836 = vpop.f32.mrb[0].mxu0
    %2837 = vmatprep.mubr.f32.mxu0 0.0
    %2838 = vmatmul.mubr.f32.gmra.mrb[0].mxu0 %v2743
    %v2839 = vpop.f32.mrb[0].mxu0
    %v2840 = vadd.f32 0.0, %v2839
    %v2841 = vpop.f32.mrb[0].mxu0
    %2842 = vmatprep.mubr.f32.mxu0 0.0
    %2843 = vmatmul.mubr.f32.gmra.mrb[0].mxu0 %v2746
    %v2844 = vpop.f32.mrb[0].mxu0
    %v2845 = vadd.f32 0.0, %v2844
    %v2846 = vpop.f32.mrb[0].mxu0
    %2847 = vmatprep.mubr.f32.mxu0 0.0
    %2848 = vmatmul.mubr.f32.gmra.mrb[0].mxu0 %v2749
    %v2849 = vpop.f32.mrb[0].mxu0
    %v2850 = vadd.f32 0.0, %v2849
    %v2851 = vpop.f32.mrb[0].mxu0
    %2852 = vmatprep.mubr.f32.mxu0 0.0
    %2853 = vmatmul.mubr.f32.gmra.mrb[0].mxu0 %v2752
    %v2854 = vpop.f32.mrb[0].mxu0
    %v2855 = vadd.f32 0.0, %v2854
    %v2856 = vpop.f32.mrb[0].mxu0
    %2857 = vmatprep.mubr.f32.mxu0 0.0
    %2858 = vmatmul.mubr.f32.gmra.mrb[0].mxu0 %v2755
    %v2859 = vpop.f32.mrb[0].mxu0
    %v2860 = vadd.f32 0.0, %v2859
    %v2861 = vpop.f32.mrb[0].mxu0
    %2862 = vmatprep.mubr.f32.mxu0 0.0
    %2863 = vmatmul.mubr.f32.gmra.mrb[0].mxu0 %v2758
    %v2864 = vpop.f32.mrb[0].mxu0
    %v2865 = vadd.f32 0.0, %v2864
    %v2866 = vpop.f32.mrb[0].mxu0
    %2867 = vmatprep.mubr.f32.mxu0 0.0
    %2868 = vmatmul.mubr.f32.gmra.mrb[0].mxu0 %v2761
    %v2869 = vpop.f32.mrb[0].mxu0
    %v2870 = vadd.f32 0.0, %v2869
    %v2871 = vpop.f32.mrb[0].mxu0
    %2872 = vdwg.mxu0
    %v2873 = vadd.f32 %v2713, %v2830
    %v2874 = vadd.f32 %v2714, %v2835
    %v2875 = vadd.f32 %v2715, %v2840
    %v2876 = vadd.f32 %v2716, %v2845
    %v2877 = vadd.f32 %v2717, %v2850
    %v2878 = vadd.f32 %v2718, %v2855
    %v2879 = vadd.f32 %v2719, %v2860
    %v2880 = vadd.f32 %v2720, %v2865
    %v2881 = vadd.f32 %v2721, %v2870
    %v2882 = vld [vmem:[#allocation2 + $0xf] sm:$0xff]
    %v2883 = vld [vmem:[#allocation2 + $0x17] sm:$0xff]
    %v2884 = vld [vmem:[#allocation2 + $0x1f] sm:$0xff]
    %v2885 = vld [vmem:[#allocation2 + $0x27] sm:$0xff]
    %v2886 = vld [vmem:[#allocation2 + $0x2f] sm:$0xff]
    %v2887 = vld [vmem:[#allocation2 + $0x37] sm:$0xff]
    %v2888 = vld [vmem:[#allocation2 + $0x3f] sm:$0xff]
    %v2889 = vld [vmem:[#allocation2 + $0x47] sm:$0xff]
    %v2890 = vld [vmem:[#allocation2 + $0x4f] sm:$0xff]
    %s2891 = scalar_lea.vmem [#allocation11], 256
    %v2892 = vld [vmem:[%s2891] sm:$0xff]
    %v2893 = vld [vmem:[%s2891 + $0x8] sm:$0xff]
    %v2894 = vld [vmem:[%s2891 + $0x10] sm:$0xff]
    %v2895 = vld [vmem:[%s2891 + $0x18] sm:$0xff]
    %v2897 = vsel %vm247, %v2882, 0
    %v2900 = vsel %vm247, %v2883, 0
    %v2903 = vsel %vm247, %v2884, 0
    %v2906 = vsel %vm247, %v2885, 0
    %v2909 = vsel %vm247, %v2886, 0
    %v2912 = vsel %vm247, %v2887, 0
    %v2915 = vsel %vm247, %v2888, 0
    %v2918 = vsel %vm247, %v2889, 0
    %v2921 = vsel %vm247, %v2890, 0
    %2923 = vmatprep.subr.mxu0 0.0
    %2924 = vmatpush1.msra.mxu0 %v2892
    %2925 = vmatprep.subr.mxu0 0.0
    %2926 = vmatpush1.msra.mxu0 %v2893
    %2927 = vmatprep.subr.mxu0 0.0
    %2928 = vmatpush1.msra.mxu0 %v2894
    %2929 = vmatprep.subr.mxu0 0.0
    %2930 = vmatpush1.msra.mxu0 %v2895
    %2931 = vmatprep.subr.mxu0 0.0
    %2932 = vmatpush1.msra.mxu0 0.0
    %2933 = vmatprep.subr.mxu0 0.0
    %2934 = vmatpush1.msra.mxu0 0.0
    %2935 = vmatprep.subr.mxu0 0.0
    %2936 = vmatpush1.msra.mxu0 0.0
    %2937 = vmatprep.subr.mxu0 0.0
    %2938 = vmatpush1.msra.mxu0 0.0
    %2939 = vmatprep.subr.mxu0 0.0
    %2940 = vmatpush1.msra.mxu0 0.0
    %2941 = vmatprep.subr.mxu0 0.0
    %2942 = vmatpush1.msra.mxu0 0.0
    %2943 = vmatprep.subr.mxu0 0.0
    %2944 = vmatpush1.msra.mxu0 0.0
    %2945 = vmatprep.subr.mxu0 0.0
    %2946 = vmatpush1.msra.mxu0 0.0
    %2947 = vmatprep.subr.mxu0 0.0
    %2948 = vmatpush1.msra.mxu0 0.0
    %2949 = vmatprep.subr.mxu0 0.0
    %2950 = vmatpush1.msra.mxu0 0.0
    %2951 = vmatprep.subr.mxu0 0.0
    %2952 = vmatpush1.msra.mxu0 0.0
    %2953 = vmatprep.subr.mxu0 0.0
    %2954 = vmatpush1.msra.mxu0 0.0
    %2955 = vmatprep.subr.mxu0 0.0
    %2956 = vmatpush1.msra.mxu0 0.0
    %2957 = vmatprep.subr.mxu0 0.0
    %2958 = vmatpush1.msra.mxu0 0.0
    %2959 = vmatprep.subr.mxu0 0.0
    %2960 = vmatpush1.msra.mxu0 0.0
    %2961 = vmatprep.subr.mxu0 0.0
    %2962 = vmatpush1.msra.mxu0 0.0
    %2963 = vmatprep.subr.mxu0 0.0
    %2964 = vmatpush1.msra.mxu0 0.0
    %2965 = vmatprep.subr.mxu0 0.0
    %2966 = vmatpush1.msra.mxu0 0.0
    %2967 = vmatprep.subr.mxu0 0.0
    %2968 = vmatpush1.msra.mxu0 0.0
    %2969 = vmatprep.subr.mxu0 0.0
    %2970 = vmatpush1.msra.mxu0 0.0
    %2971 = vmatprep.subr.mxu0 0.0
    %2972 = vmatpush1.msra.mxu0 0.0
    %2973 = vmatprep.subr.mxu0 0.0
    %2974 = vmatpush1.msra.mxu0 0.0
    %2975 = vmatprep.subr.mxu0 0.0
    %2976 = vmatpush1.msra.mxu0 0.0
    %2977 = vmatprep.subr.mxu0 0.0
    %2978 = vmatpush1.msra.mxu0 0.0
    %2979 = vmatprep.subr.mxu0 0.0
    %2980 = vmatpush1.msra.mxu0 0.0
    %2981 = vmatprep.subr.mxu0 0.0
    %2982 = vmatpush1.msra.mxu0 0.0
    %2983 = vmatprep.subr.mxu0 0.0
    %2984 = vmatpush1.msra.mxu0 0.0
    %2985 = vmatprep.subr.mxu0 0.0
    %2986 = vmatpush1.msra.mxu0 0.0
    %2987 = vmatprep.mubr.f32.mxu0 0.0
    %2988 = vmatmul.mubr.f32.gmra.mrb[0].mxu0 %v2897
    %v2989 = vpop.f32.mrb[0].mxu0
    %v2990 = vadd.f32 0.0, %v2989
    %v2991 = vpop.f32.mrb[0].mxu0
    %2992 = vmatprep.mubr.f32.mxu0 0.0
    %2993 = vmatmul.mubr.f32.gmra.mrb[0].mxu0 %v2900
    %v2994 = vpop.f32.mrb[0].mxu0
    %v2995 = vadd.f32 0.0, %v2994
    %v2996 = vpop.f32.mrb[0].mxu0
    %2997 = vmatprep.mubr.f32.mxu0 0.0
    %2998 = vmatmul.mubr.f32.gmra.mrb[0].mxu0 %v2903
    %v2999 = vpop.f32.mrb[0].mxu0
    %v3000 = vadd.f32 0.0, %v2999
    %v3001 = vpop.f32.mrb[0].mxu0
    %3002 = vmatprep.mubr.f32.mxu0 0.0
    %3003 = vmatmul.mubr.f32.gmra.mrb[0].mxu0 %v2906
    %v3004 = vpop.f32.mrb[0].mxu0
    %v3005 = vadd.f32 0.0, %v3004
    %v3006 = vpop.f32.mrb[0].mxu0
    %3007 = vmatprep.mubr.f32.mxu0 0.0
    %3008 = vmatmul.mubr.f32.gmra.mrb[0].mxu0 %v2909
    %v3009 = vpop.f32.mrb[0].mxu0
    %v3010 = vadd.f32 0.0, %v3009
    %v3011 = vpop.f32.mrb[0].mxu0
    %3012 = vmatprep.mubr.f32.mxu0 0.0
    %3013 = vmatmul.mubr.f32.gmra.mrb[0].mxu0 %v2912
    %v3014 = vpop.f32.mrb[0].mxu0
    %v3015 = vadd.f32 0.0, %v3014
    %v3016 = vpop.f32.mrb[0].mxu0
    %3017 = vmatprep.mubr.f32.mxu0 0.0
    %3018 = vmatmul.mubr.f32.gmra.mrb[0].mxu0 %v2915
    %v3019 = vpop.f32.mrb[0].mxu0
    %v3020 = vadd.f32 0.0, %v3019
    %v3021 = vpop.f32.mrb[0].mxu0
    %3022 = vmatprep.mubr.f32.mxu0 0.0
    %3023 = vmatmul.mubr.f32.gmra.mrb[0].mxu0 %v2918
    %v3024 = vpop.f32.mrb[0].mxu0
    %v3025 = vadd.f32 0.0, %v3024
    %v3026 = vpop.f32.mrb[0].mxu0
    %3027 = vmatprep.mubr.f32.mxu0 0.0
    %3028 = vmatmul.mubr.f32.gmra.mrb[0].mxu0 %v2921
    %v3029 = vpop.f32.mrb[0].mxu0
    %v3030 = vadd.f32 0.0, %v3029
    %v3031 = vpop.f32.mrb[0].mxu0
    %3032 = vdwg.mxu0
    %v3033 = vadd.f32 %v2873, %v2990
    %v3034 = vadd.f32 %v2874, %v2995
    %v3035 = vadd.f32 %v2875, %v3000
    %v3036 = vadd.f32 %v2876, %v3005
    %v3037 = vadd.f32 %v2877, %v3010
    %v3038 = vadd.f32 %v2878, %v3015
    %v3039 = vadd.f32 %v2879, %v3020
    %v3040 = vadd.f32 %v2880, %v3025
    %v3041 = vadd.f32 %v2881, %v3030
    %v3042 = vmul.f32 %v3033, %v1523
    %v3043 = vmul.f32 %v3034, %v1528
    %v3044 = vmul.f32 %v3035, %v1533
    %v3045 = vmul.f32 %v3036, %v1538
    %v3046 = vmul.f32 %v3037, %v1543
    %v3047 = vmul.f32 %v3038, %v1548
    %v3048 = vmul.f32 %v3039, %v1553
    %v3049 = vmul.f32 %v3040, %v1558
    %v3050 = vmul.f32 %v3041, %v1563
    %vm3051 = vcmask 64512
    %v3052 = vsel %vm3051, %v3042, 0.0
    %v3053 = vsel %vm3051, %v3043, 0.0
    %v3054 = vadd.f32 %v3052, %v3053
    %v3055 = vsel %vm3051, %v3044, 0.0
    %v3056 = vadd.f32 %v3054, %v3055
    %v3057 = vsel %vm3051, %v3045, 0.0
    %v3058 = vadd.f32 %v3056, %v3057
    %v3059 = vsel %vm3051, %v3046, 0.0
    %v3060 = vadd.f32 %v3058, %v3059
    %v3061 = vsel %vm3051, %v3047, 0.0
    %v3062 = vadd.f32 %v3060, %v3061
    %v3063 = vsel %vm3051, %v3048, 0.0
    %v3064 = vadd.f32 %v3062, %v3063
    %v3065 = vsel %vm3051, %v3049, 0.0
    %v3066 = vadd.f32 %v3064, %v3065
    %v3067 = vsel %vm3051, %v3050, 0.0
    %v3068 = vadd.f32 %v3066, %v3067
    %v3069 = vrot.slane %v3068, 4
    %v3070 = vadd.f32 %v3068, %v3069
    %v3071 = vrot.slane %v3070, 2
    %v3072 = vadd.f32 %v3070, %v3071
    %v3073 = vrot.slane %v3072, 1
    %v3074 = vadd.f32 %v3072, %v3073
    %v3075 = vmul.f32 %v3074, 0.03125
    %v3076 = vsub.f32 %v3033, %v3075
    %v3077 = vsub.f32 %v3034, %v3075
    %v3078 = vsub.f32 %v3035, %v3075
    %v3079 = vsub.f32 %v3036, %v3075
    %v3080 = vsub.f32 %v3037, %v3075
    %v3081 = vsub.f32 %v3038, %v3075
    %v3082 = vsub.f32 %v3039, %v3075
    %v3083 = vsub.f32 %v3040, %v3075
    %v3084 = vsub.f32 %v3041, %v3075
    %v3085 = vmul.f32 %v3076, %v1523
    %v3086 = vmul.f32 %v3077, %v1528
    %v3087 = vmul.f32 %v3078, %v1533
    %v3088 = vmul.f32 %v3079, %v1538
    %v3089 = vmul.f32 %v3080, %v1543
    %v3090 = vmul.f32 %v3081, %v1548
    %v3091 = vmul.f32 %v3082, %v1553
    %v3092 = vmul.f32 %v3083, %v1558
    %v3093 = vmul.f32 %v3084, %v1563
    %v3094 = vmul.f32 %v3085, %v3085
    %v3095 = vmul.f32 %v3086, %v3086
    %v3096 = vmul.f32 %v3087, %v3087
    %v3097 = vmul.f32 %v3088, %v3088
    %v3098 = vmul.f32 %v3089, %v3089
    %v3099 = vmul.f32 %v3090, %v3090
    %v3100 = vmul.f32 %v3091, %v3091
    %v3101 = vmul.f32 %v3092, %v3092
    %v3102 = vmul.f32 %v3093, %v3093
    %v3103 = vsel %vm3051, %v3094, 0.0
    %v3104 = vsel %vm3051, %v3095, 0.0
    %v3105 = vadd.f32 %v3103, %v3104
    %v3106 = vsel %vm3051, %v3096, 0.0
    %v3107 = vadd.f32 %v3105, %v3106
    %v3108 = vsel %vm3051, %v3097, 0.0
    %v3109 = vadd.f32 %v3107, %v3108
    %v3110 = vsel %vm3051, %v3098, 0.0
    %v3111 = vadd.f32 %v3109, %v3110
    %v3112 = vsel %vm3051, %v3099, 0.0
    %v3113 = vadd.f32 %v3111, %v3112
    %v3114 = vsel %vm3051, %v3100, 0.0
    %v3115 = vadd.f32 %v3113, %v3114
    %v3116 = vsel %vm3051, %v3101, 0.0
    %v3117 = vadd.f32 %v3115, %v3116
    %v3118 = vsel %vm3051, %v3102, 0.0
    %v3119 = vadd.f32 %v3117, %v3118
    %v3120 = vrot.slane %v3119, 4
    %v3121 = vadd.f32 %v3119, %v3120
    %v3122 = vrot.slane %v3121, 2
    %v3123 = vadd.f32 %v3121, %v3122
    %v3124 = vrot.slane %v3123, 1
    %v3125 = vadd.f32 %v3123, %v3124
    %v3126 = vmul.f32 %v3125, 0.03125
    %v3127 = vld [vmem:[#allocation12] sm:$0x1]
    %v3128 = vadd.f32 %v3126, 1e-05
    %v3129 = vrsqrt.pop %v3128
    %v3130 = vmul.f32 %v3127, %v3129
    %v3132 = vlaneseq
    %v3133 = vshrl.u32 %v3132, 7
    %v3134 = vsub.s32 0, %v3133
    %v3135 = vrot.slane %v3130, %v3134
    %v3137 = vmul.f32 %v3085, %v3135
    %v3138 = vmul.f32 %v3086, %v3135
    %v3139 = vmul.f32 %v3087, %v3135
    %v3140 = vmul.f32 %v3088, %v3135
    %v3141 = vmul.f32 %v3089, %v3135
    %v3142 = vmul.f32 %v3090, %v3135
    %v3143 = vmul.f32 %v3091, %v3135
    %v3144 = vmul.f32 %v3092, %v3135
    %v3145 = vmul.f32 %v3093, %v3135
    %v3146 = vld [vmem:[#allocation14] sm:$0x1]
    %v3148 = vlaneseq
    %v3149 = vshrl.u32 %v3148, 7
    %v3150 = vsub.s32 0, %v3149
    %v3151 = vrot.slane %v3146, %v3150
    %v3153 = vadd.f32 %v3137, %v3151
    %v3154 = vadd.f32 %v3138, %v3151
    %v3155 = vadd.f32 %v3139, %v3151
    %v3156 = vadd.f32 %v3140, %v3151
    %v3157 = vadd.f32 %v3141, %v3151
    %v3158 = vadd.f32 %v3142, %v3151
    %v3159 = vadd.f32 %v3143, %v3151
    %v3160 = vadd.f32 %v3144, %v3151
    %v3161 = vadd.f32 %v3145, %v3151
    %vm3162 = vcmp.ge.f32.partialorder %v3153, 0.0
    %vm3163 = vcmp.ge.f32.partialorder %v3154, 0.0
    %vm3164 = vcmp.ge.f32.partialorder %v3155, 0.0
    %vm3165 = vcmp.ge.f32.partialorder %v3156, 0.0
    %vm3166 = vcmp.ge.f32.partialorder %v3157, 0.0
    %vm3167 = vcmp.ge.f32.partialorder %v3158, 0.0
    %vm3168 = vcmp.ge.f32.partialorder %v3159, 0.0
    %vm3169 = vcmp.ge.f32.partialorder %v3160, 0.0
    %vm3170 = vcmp.ge.f32.partialorder %v3161, 0.0
    %v3171 = vmul.f32 %v3153, 0.01
    %v3172 = vmul.f32 %v3154, 0.01
    %v3173 = vmul.f32 %v3155, 0.01
    %v3174 = vmul.f32 %v3156, 0.01
    %v3175 = vmul.f32 %v3157, 0.01
    %v3176 = vmul.f32 %v3158, 0.01
    %v3177 = vmul.f32 %v3159, 0.01
    %v3178 = vmul.f32 %v3160, 0.01
    %v3179 = vmul.f32 %v3161, 0.01
    %v3180 = vsel %vm3162, %v3153, %v3171
    %v3181 = vsel %vm3163, %v3154, %v3172
    %v3182 = vsel %vm3164, %v3155, %v3173
    %v3183 = vsel %vm3165, %v3156, %v3174
    %v3184 = vsel %vm3166, %v3157, %v3175
    %v3185 = vsel %vm3167, %v3158, %v3176
    %v3186 = vsel %vm3168, %v3159, %v3177
    %v3187 = vsel %vm3169, %v3160, %v3178
    %v3188 = vsel %vm3170, %v3161, %v3179
    %v3189 = vld [vmem:[#allocation15] sm:$0xff]
    %v3191 = vsel %vm3051, %v3180, 0
    %v3194 = vsel %vm3051, %v3181, 0
    %v3197 = vsel %vm3051, %v3182, 0
    %v3200 = vsel %vm3051, %v3183, 0
    %v3203 = vsel %vm3051, %v3184, 0
    %v3206 = vsel %vm3051, %v3185, 0
    %v3209 = vsel %vm3051, %v3186, 0
    %v3212 = vsel %vm3051, %v3187, 0
    %v3215 = vsel %vm3051, %v3188, 0
    %3217 = vmatprep.subr.mxu0 0.0
    %3218 = vmatpush1.msra.mxu0 %v3189
    %3219 = vmatprep.subr.mxu0 0.0
    %3220 = vmatpush1.msra.mxu0 0.0
    %3221 = vmatprep.subr.mxu0 0.0
    %3222 = vmatpush1.msra.mxu0 0.0
    %3223 = vmatprep.subr.mxu0 0.0
    %3224 = vmatpush1.msra.mxu0 0.0
    %3225 = vmatprep.subr.mxu0 0.0
    %3226 = vmatpush1.msra.mxu0 0.0
    %3227 = vmatprep.subr.mxu0 0.0
    %3228 = vmatpush1.msra.mxu0 0.0
    %3229 = vmatprep.subr.mxu0 0.0
    %3230 = vmatpush1.msra.mxu0 0.0
    %3231 = vmatprep.subr.mxu0 0.0
    %3232 = vmatpush1.msra.mxu0 0.0
    %3233 = vmatprep.subr.mxu0 0.0
    %3234 = vmatpush1.msra.mxu0 0.0
    %3235 = vmatprep.subr.mxu0 0.0
    %3236 = vmatpush1.msra.mxu0 0.0
    %3237 = vmatprep.subr.mxu0 0.0
    %3238 = vmatpush1.msra.mxu0 0.0
    %3239 = vmatprep.subr.mxu0 0.0
    %3240 = vmatpush1.msra.mxu0 0.0
    %3241 = vmatprep.subr.mxu0 0.0
    %3242 = vmatpush1.msra.mxu0 0.0
    %3243 = vmatprep.subr.mxu0 0.0
    %3244 = vmatpush1.msra.mxu0 0.0
    %3245 = vmatprep.subr.mxu0 0.0
    %3246 = vmatpush1.msra.mxu0 0.0
    %3247 = vmatprep.subr.mxu0 0.0
    %3248 = vmatpush1.msra.mxu0 0.0
    %3249 = vmatprep.subr.mxu0 0.0
    %3250 = vmatpush1.msra.mxu0 0.0
    %3251 = vmatprep.subr.mxu0 0.0
    %3252 = vmatpush1.msra.mxu0 0.0
    %3253 = vmatprep.subr.mxu0 0.0
    %3254 = vmatpush1.msra.mxu0 0.0
    %3255 = vmatprep.subr.mxu0 0.0
    %3256 = vmatpush1.msra.mxu0 0.0
    %3257 = vmatprep.subr.mxu0 0.0
    %3258 = vmatpush1.msra.mxu0 0.0
    %3259 = vmatprep.subr.mxu0 0.0
    %3260 = vmatpush1.msra.mxu0 0.0
    %3261 = vmatprep.subr.mxu0 0.0
    %3262 = vmatpush1.msra.mxu0 0.0
    %3263 = vmatprep.subr.mxu0 0.0
    %3264 = vmatpush1.msra.mxu0 0.0
    %3265 = vmatprep.subr.mxu0 0.0
    %3266 = vmatpush1.msra.mxu0 0.0
    %3267 = vmatprep.subr.mxu0 0.0
    %3268 = vmatpush1.msra.mxu0 0.0
    %3269 = vmatprep.subr.mxu0 0.0
    %3270 = vmatpush1.msra.mxu0 0.0
    %3271 = vmatprep.subr.mxu0 0.0
    %3272 = vmatpush1.msra.mxu0 0.0
    %3273 = vmatprep.subr.mxu0 0.0
    %3274 = vmatpush1.msra.mxu0 0.0
    %3275 = vmatprep.subr.mxu0 0.0
    %3276 = vmatpush1.msra.mxu0 0.0
    %3277 = vmatprep.subr.mxu0 0.0
    %3278 = vmatpush1.msra.mxu0 0.0
    %3279 = vmatprep.subr.mxu0 0.0
    %3280 = vmatpush1.msra.mxu0 0.0
    %3281 = vmatprep.mubr.f32.mxu0 0.0
    %3282 = vmatmul.mubr.f32.gmra.mrb[0].mxu0 %v3191
    %v3283 = vpop.f32.mrb[0].mxu0
    %v3284 = vadd.f32 0.0, %v3283
    %v3285 = vpop.f32.mrb[0].mxu0
    %3286 = vmatprep.mubr.f32.mxu0 0.0
    %3287 = vmatmul.mubr.f32.gmra.mrb[0].mxu0 %v3194
    %v3288 = vpop.f32.mrb[0].mxu0
    %v3289 = vadd.f32 0.0, %v3288
    %v3290 = vpop.f32.mrb[0].mxu0
    %3291 = vmatprep.mubr.f32.mxu0 0.0
    %3292 = vmatmul.mubr.f32.gmra.mrb[0].mxu0 %v3197
    %v3293 = vpop.f32.mrb[0].mxu0
    %v3294 = vadd.f32 0.0, %v3293
    %v3295 = vpop.f32.mrb[0].mxu0
    %3296 = vmatprep.mubr.f32.mxu0 0.0
    %3297 = vmatmul.mubr.f32.gmra.mrb[0].mxu0 %v3200
    %v3298 = vpop.f32.mrb[0].mxu0
    %v3299 = vadd.f32 0.0, %v3298
    %v3300 = vpop.f32.mrb[0].mxu0
    %3301 = vmatprep.mubr.f32.mxu0 0.0
    %3302 = vmatmul.mubr.f32.gmra.mrb[0].mxu0 %v3203
    %v3303 = vpop.f32.mrb[0].mxu0
    %v3304 = vadd.f32 0.0, %v3303
    %v3305 = vpop.f32.mrb[0].mxu0
    %3306 = vmatprep.mubr.f32.mxu0 0.0
    %3307 = vmatmul.mubr.f32.gmra.mrb[0].mxu0 %v3206
    %v3308 = vpop.f32.mrb[0].mxu0
    %v3309 = vadd.f32 0.0, %v3308
    %v3310 = vpop.f32.mrb[0].mxu0
    %3311 = vmatprep.mubr.f32.mxu0 0.0
    %3312 = vmatmul.mubr.f32.gmra.mrb[0].mxu0 %v3209
    %v3313 = vpop.f32.mrb[0].mxu0
    %v3314 = vadd.f32 0.0, %v3313
    %v3315 = vpop.f32.mrb[0].mxu0
    %3316 = vmatprep.mubr.f32.mxu0 0.0
    %3317 = vmatmul.mubr.f32.gmra.mrb[0].mxu0 %v3212
    %v3318 = vpop.f32.mrb[0].mxu0
    %v3319 = vadd.f32 0.0, %v3318
    %v3320 = vpop.f32.mrb[0].mxu0
    %3321 = vmatprep.mubr.f32.mxu0 0.0
    %3322 = vmatmul.mubr.f32.gmra.mrb[0].mxu0 %v3215
    %v3323 = vpop.f32.mrb[0].mxu0
    %v3324 = vadd.f32 0.0, %v3323
    %v3325 = vpop.f32.mrb[0].mxu0
    %3326 = vdwg.mxu0
    %v3327 = vmul.f32 %v3284, %v1523
    %v3328 = vmul.f32 %v3289, %v1528
    %v3329 = vmul.f32 %v3294, %v1533
    %v3330 = vmul.f32 %v3299, %v1538
    %v3331 = vmul.f32 %v3304, %v1543
    %v3332 = vmul.f32 %v3309, %v1548
    %v3333 = vmul.f32 %v3314, %v1553
    %v3334 = vmul.f32 %v3319, %v1558
    %v3335 = vmul.f32 %v3324, %v1563
    %v3336 = vsel %vm247, %v3327, 0.0
    %v3337 = vsel %vm247, %v3328, 0.0
    %v3338 = vadd.f32 %v3336, %v3337
    %v3339 = vsel %vm247, %v3329, 0.0
    %v3340 = vadd.f32 %v3338, %v3339
    %v3341 = vsel %vm247, %v3330, 0.0
    %v3342 = vadd.f32 %v3340, %v3341
    %v3343 = vsel %vm247, %v3331, 0.0
    %v3344 = vadd.f32 %v3342, %v3343
    %v3345 = vsel %vm247, %v3332, 0.0
    %v3346 = vadd.f32 %v3344, %v3345
    %v3347 = vsel %vm247, %v3333, 0.0
    %v3348 = vadd.f32 %v3346, %v3347
    %v3349 = vsel %vm247, %v3334, 0.0
    %v3350 = vadd.f32 %v3348, %v3349
    %v3351 = vsel %vm247, %v3335, 0.0
    %v3352 = vadd.f32 %v3350, %v3351
    %v3353 = vrot.slane %v3352, 4
    %v3354 = vadd.f32 %v3352, %v3353
    %v3355 = vrot.slane %v3354, 2
    %v3356 = vadd.f32 %v3354, %v3355
    %v3357 = vrot.slane %v3356, 1
    %v3358 = vadd.f32 %v3356, %v3357
    %v3359 = vmul.f32 %v3358, 0.03125
    %v3360 = vsub.f32 %v3284, %v3359
    %v3361 = vsub.f32 %v3289, %v3359
    %v3362 = vsub.f32 %v3294, %v3359
    %v3363 = vsub.f32 %v3299, %v3359
    %v3364 = vsub.f32 %v3304, %v3359
    %v3365 = vsub.f32 %v3309, %v3359
    %v3366 = vsub.f32 %v3314, %v3359
    %v3367 = vsub.f32 %v3319, %v3359
    %v3368 = vsub.f32 %v3324, %v3359
    %v3369 = vmul.f32 %v3360, %v1523
    %v3370 = vmul.f32 %v3361, %v1528
    %v3371 = vmul.f32 %v3362, %v1533
    %v3372 = vmul.f32 %v3363, %v1538
    %v3373 = vmul.f32 %v3364, %v1543
    %v3374 = vmul.f32 %v3365, %v1548
    %v3375 = vmul.f32 %v3366, %v1553
    %v3376 = vmul.f32 %v3367, %v1558
    %v3377 = vmul.f32 %v3368, %v1563
    %v3378 = vmul.f32 %v3369, %v3369
    %v3379 = vmul.f32 %v3370, %v3370
    %v3380 = vmul.f32 %v3371, %v3371
    %v3381 = vmul.f32 %v3372, %v3372
    %v3382 = vmul.f32 %v3373, %v3373
    %v3383 = vmul.f32 %v3374, %v3374
    %v3384 = vmul.f32 %v3375, %v3375
    %v3385 = vmul.f32 %v3376, %v3376
    %v3386 = vmul.f32 %v3377, %v3377
    %v3387 = vsel %vm247, %v3378, 0.0
    %v3388 = vsel %vm247, %v3379, 0.0
    %v3389 = vadd.f32 %v3387, %v3388
    %v3390 = vsel %vm247, %v3380, 0.0
    %v3391 = vadd.f32 %v3389, %v3390
    %v3392 = vsel %vm247, %v3381, 0.0
    %v3393 = vadd.f32 %v3391, %v3392
    %v3394 = vsel %vm247, %v3382, 0.0
    %v3395 = vadd.f32 %v3393, %v3394
    %v3396 = vsel %vm247, %v3383, 0.0
    %v3397 = vadd.f32 %v3395, %v3396
    %v3398 = vsel %vm247, %v3384, 0.0
    %v3399 = vadd.f32 %v3397, %v3398
    %v3400 = vsel %vm247, %v3385, 0.0
    %v3401 = vadd.f32 %v3399, %v3400
    %v3402 = vsel %vm247, %v3386, 0.0
    %v3403 = vadd.f32 %v3401, %v3402
    %v3404 = vrot.slane %v3403, 4
    %v3405 = vadd.f32 %v3403, %v3404
    %v3406 = vrot.slane %v3405, 2
    %v3407 = vadd.f32 %v3405, %v3406
    %v3408 = vrot.slane %v3407, 1
    %v3409 = vadd.f32 %v3407, %v3408
    %v3410 = vmul.f32 %v3409, 0.03125
    %v3411 = vld [vmem:[#allocation17] sm:$0x1]
    %v3412 = vadd.f32 %v3410, 1e-05
    %v3413 = vrsqrt.pop %v3412
    %v3414 = vmul.f32 %v3411, %v3413
    %v3416 = vlaneseq
    %v3417 = vshrl.u32 %v3416, 7
    %v3418 = vsub.s32 0, %v3417
    %v3419 = vrot.slane %v3414, %v3418
    %v3421 = vmul.f32 %v3369, %v3419
    %v3422 = vmul.f32 %v3370, %v3419
    %v3423 = vmul.f32 %v3371, %v3419
    %v3424 = vmul.f32 %v3372, %v3419
    %v3425 = vmul.f32 %v3373, %v3419
    %v3426 = vmul.f32 %v3374, %v3419
    %v3427 = vmul.f32 %v3375, %v3419
    %v3428 = vmul.f32 %v3376, %v3419
    %v3429 = vmul.f32 %v3377, %v3419
    %v3430 = vld [vmem:[#allocation18] sm:$0x1]
    %v3432 = vlaneseq
    %v3433 = vshrl.u32 %v3432, 7
    %v3434 = vsub.s32 0, %v3433
    %v3435 = vrot.slane %v3430, %v3434
    %v3437 = vadd.f32 %v3421, %v3435
    %v3438 = vadd.f32 %v3422, %v3435
    %v3439 = vadd.f32 %v3423, %v3435
    %v3440 = vadd.f32 %v3424, %v3435
    %v3441 = vadd.f32 %v3425, %v3435
    %v3442 = vadd.f32 %v3426, %v3435
    %v3443 = vadd.f32 %v3427, %v3435
    %v3444 = vadd.f32 %v3428, %v3435
    %v3445 = vadd.f32 %v3429, %v3435
    %v3446 = vadd.f32 %v3437, %v1603
    %v3447 = vadd.f32 %v3438, %v1604
    %v3448 = vadd.f32 %v3439, %v1605
    %v3449 = vadd.f32 %v3440, %v1606
    %v3450 = vadd.f32 %v3441, %v1607
    %v3451 = vadd.f32 %v3442, %v1608
    %v3452 = vadd.f32 %v3443, %v1609
    %v3453 = vadd.f32 %v3444, %v1610
    %v3454 = vadd.f32 %v3445, %v1611
    %v3455 = vmul.f32 %v3446, %v1523
    %v3456 = vmul.f32 %v3447, %v1528
    %v3457 = vmul.f32 %v3448, %v1533
    %v3458 = vmul.f32 %v3449, %v1538
    %v3459 = vmul.f32 %v3450, %v1543
    %v3460 = vmul.f32 %v3451, %v1548
    %v3461 = vmul.f32 %v3452, %v1553
    %v3462 = vmul.f32 %v3453, %v1558
    %v3463 = vmul.f32 %v3454, %v1563
    %vm3464 = vcmp.ge.f32.partialorder %v3455, 0.0
    %vm3465 = vcmp.ge.f32.partialorder %v3456, 0.0
    %vm3466 = vcmp.ge.f32.partialorder %v3457, 0.0
    %vm3467 = vcmp.ge.f32.partialorder %v3458, 0.0
    %vm3468 = vcmp.ge.f32.partialorder %v3459, 0.0
    %vm3469 = vcmp.ge.f32.partialorder %v3460, 0.0
    %vm3470 = vcmp.ge.f32.partialorder %v3461, 0.0
    %vm3471 = vcmp.ge.f32.partialorder %v3462, 0.0
    %vm3472 = vcmp.ge.f32.partialorder %v3463, 0.0
    %v3473 = vmul.f32 %v3455, 0.01
    %v3474 = vmul.f32 %v3456, 0.01
    %v3475 = vmul.f32 %v3457, 0.01
    %v3476 = vmul.f32 %v3458, 0.01
    %v3477 = vmul.f32 %v3459, 0.01
    %v3478 = vmul.f32 %v3460, 0.01
    %v3479 = vmul.f32 %v3461, 0.01
    %v3480 = vmul.f32 %v3462, 0.01
    %v3481 = vmul.f32 %v3463, 0.01
    %v3482 = vsel %vm3464, %v3455, %v3473
    %v3483 = vsel %vm3465, %v3456, %v3474
    %v3484 = vsel %vm3466, %v3457, %v3475
    %v3485 = vsel %vm3467, %v3458, %v3476
    %v3486 = vsel %vm3468, %v3459, %v3477
    %v3487 = vsel %vm3469, %v3460, %v3478
    %v3488 = vsel %vm3470, %v3461, %v3479
    %v3489 = vsel %vm3471, %v3462, %v3480
    %v3490 = vsel %vm3472, %v3463, %v3481
    %3491 = vst.msk [vmem:[#allocation2 + $0x8] sm:$0xff] %vm247, %v3482
    %3492 = vst.msk [vmem:[#allocation2 + $0x10] sm:$0xff] %vm247, %v3483
    %3493 = vst.msk [vmem:[#allocation2 + $0x18] sm:$0xff] %vm247, %v3484
    %3494 = vst.msk [vmem:[#allocation2 + $0x20] sm:$0xff] %vm247, %v3485
    %3495 = vst.msk [vmem:[#allocation2 + $0x28] sm:$0xff] %vm247, %v3486
    %3496 = vst.msk [vmem:[#allocation2 + $0x30] sm:$0xff] %vm247, %v3487
    %3497 = vst.msk [vmem:[#allocation2 + $0x38] sm:$0xff] %vm247, %v3488
    %3498 = vst.msk [vmem:[#allocation2 + $0x40] sm:$0xff] %vm247, %v3489
    %3499 = vst.msk [vmem:[#allocation2 + $0x48] sm:$0xff] %vm247, %v3490
    %v3500 = vld [vmem:[#allocation2 + $0x1] sm:$0xff]
    %v3501 = vld [vmem:[#allocation2 + $0x9] sm:$0xff]
    %v3502 = vld [vmem:[#allocation2 + $0x11] sm:$0xff]
    %v3503 = vld [vmem:[#allocation2 + $0x19] sm:$0xff]
    %v3504 = vld [vmem:[#allocation2 + $0x21] sm:$0xff]
    %v3505 = vld [vmem:[#allocation2 + $0x29] sm:$0xff]
    %v3506 = vld [vmem:[#allocation2 + $0x31] sm:$0xff]
    %v3507 = vld [vmem:[#allocation2 + $0x39] sm:$0xff]
    %v3508 = vld [vmem:[#allocation2 + $0x41] sm:$0xff]
    %s3509 = scalar_lea.vmem [#allocation11], 288
    %v3510 = vld [vmem:[%s3509] sm:$0xff]
    %v3511 = vld [vmem:[%s3509 + $0x8] sm:$0xff]
    %v3512 = vld [vmem:[%s3509 + $0x10] sm:$0xff]
    %v3513 = vld [vmem:[%s3509 + $0x18] sm:$0xff]
    %v3514 = vld [vmem:[#allocation2 + $0x2] sm:$0xff]
    %v3515 = vld [vmem:[#allocation2 + $0xa] sm:$0xff]
    %v3516 = vld [vmem:[#allocation2 + $0x12] sm:$0xff]
    %v3517 = vld [vmem:[#allocation2 + $0x1a] sm:$0xff]
    %v3518 = vld [vmem:[#allocation2 + $0x22] sm:$0xff]
    %v3519 = vld [vmem:[#allocation2 + $0x2a] sm:$0xff]
    %v3520 = vld [vmem:[#allocation2 + $0x32] sm:$0xff]
    %v3521 = vld [vmem:[#allocation2 + $0x3a] sm:$0xff]
    %v3522 = vld [vmem:[#allocation2 + $0x42] sm:$0xff]
    %s3523 = scalar_lea.vmem [#allocation11], 320
    %v3524 = vld [vmem:[%s3523] sm:$0xff]
    %v3525 = vld [vmem:[%s3523 + $0x8] sm:$0xff]
    %v3526 = vld [vmem:[%s3523 + $0x10] sm:$0xff]
    %v3527 = vld [vmem:[%s3523 + $0x18] sm:$0xff]
    %v3529 = vsel %vm247, %v3514, 0
    %v3532 = vsel %vm247, %v3515, 0
    %v3535 = vsel %vm247, %v3516, 0
    %v3538 = vsel %vm247, %v3517, 0
    %v3541 = vsel %vm247, %v3518, 0
    %v3544 = vsel %vm247, %v3519, 0
    %v3547 = vsel %vm247, %v3520, 0
    %v3550 = vsel %vm247, %v3521, 0
    %v3553 = vsel %vm247, %v3522, 0
    %3555 = vmatprep.subr.mxu0 0.0
    %3556 = vmatpush1.msra.mxu0 %v3524
    %3557 = vmatprep.subr.mxu0 0.0
    %3558 = vmatpush1.msra.mxu0 %v3525
    %3559 = vmatprep.subr.mxu0 0.0
    %3560 = vmatpush1.msra.mxu0 %v3526
    %3561 = vmatprep.subr.mxu0 0.0
    %3562 = vmatpush1.msra.mxu0 %v3527
    %3563 = vmatprep.subr.mxu0 0.0
    %3564 = vmatpush1.msra.mxu0 0.0
    %3565 = vmatprep.subr.mxu0 0.0
    %3566 = vmatpush1.msra.mxu0 0.0
    %3567 = vmatprep.subr.mxu0 0.0
    %3568 = vmatpush1.msra.mxu0 0.0
    %3569 = vmatprep.subr.mxu0 0.0
    %3570 = vmatpush1.msra.mxu0 0.0
    %3571 = vmatprep.subr.mxu0 0.0
    %3572 = vmatpush1.msra.mxu0 0.0
    %3573 = vmatprep.subr.mxu0 0.0
    %3574 = vmatpush1.msra.mxu0 0.0
    %3575 = vmatprep.subr.mxu0 0.0
    %3576 = vmatpush1.msra.mxu0 0.0
    %3577 = vmatprep.subr.mxu0 0.0
    %3578 = vmatpush1.msra.mxu0 0.0
    %3579 = vmatprep.subr.mxu0 0.0
    %3580 = vmatpush1.msra.mxu0 0.0
    %3581 = vmatprep.subr.mxu0 0.0
    %3582 = vmatpush1.msra.mxu0 0.0
    %3583 = vmatprep.subr.mxu0 0.0
    %3584 = vmatpush1.msra.mxu0 0.0
    %3585 = vmatprep.subr.mxu0 0.0
    %3586 = vmatpush1.msra.mxu0 0.0
    %3587 = vmatprep.subr.mxu0 0.0
    %3588 = vmatpush1.msra.mxu0 0.0
    %3589 = vmatprep.subr.mxu0 0.0
    %3590 = vmatpush1.msra.mxu0 0.0
    %3591 = vmatprep.subr.mxu0 0.0
    %3592 = vmatpush1.msra.mxu0 0.0
    %3593 = vmatprep.subr.mxu0 0.0
    %3594 = vmatpush1.msra.mxu0 0.0
    %3595 = vmatprep.subr.mxu0 0.0
    %3596 = vmatpush1.msra.mxu0 0.0
    %3597 = vmatprep.subr.mxu0 0.0
    %3598 = vmatpush1.msra.mxu0 0.0
    %3599 = vmatprep.subr.mxu0 0.0
    %3600 = vmatpush1.msra.mxu0 0.0
    %3601 = vmatprep.subr.mxu0 0.0
    %3602 = vmatpush1.msra.mxu0 0.0
    %3603 = vmatprep.subr.mxu0 0.0
    %3604 = vmatpush1.msra.mxu0 0.0
    %3605 = vmatprep.subr.mxu0 0.0
    %3606 = vmatpush1.msra.mxu0 0.0
    %3607 = vmatprep.subr.mxu0 0.0
    %3608 = vmatpush1.msra.mxu0 0.0
    %3609 = vmatprep.subr.mxu0 0.0
    %3610 = vmatpush1.msra.mxu0 0.0
    %3611 = vmatprep.subr.mxu0 0.0
    %3612 = vmatpush1.msra.mxu0 0.0
    %3613 = vmatprep.subr.mxu0 0.0
    %3614 = vmatpush1.msra.mxu0 0.0
    %3615 = vmatprep.subr.mxu0 0.0
    %3616 = vmatpush1.msra.mxu0 0.0
    %3617 = vmatprep.subr.mxu0 0.0
    %3618 = vmatpush1.msra.mxu0 0.0
    %3619 = vmatprep.mubr.f32.mxu0 0.0
    %3620 = vmatmul.mubr.f32.gmra.mrb[0].mxu0 %v3529
    %v3621 = vpop.f32.mrb[0].mxu0
    %v3622 = vadd.f32 0.0, %v3621
    %v3623 = vpop.f32.mrb[0].mxu0
    %3624 = vmatprep.mubr.f32.mxu0 0.0
    %3625 = vmatmul.mubr.f32.gmra.mrb[0].mxu0 %v3532
    %v3626 = vpop.f32.mrb[0].mxu0
    %v3627 = vadd.f32 0.0, %v3626
    %v3628 = vpop.f32.mrb[0].mxu0
    %3629 = vmatprep.mubr.f32.mxu0 0.0
    %3630 = vmatmul.mubr.f32.gmra.mrb[0].mxu0 %v3535
    %v3631 = vpop.f32.mrb[0].mxu0
    %v3632 = vadd.f32 0.0, %v3631
    %v3633 = vpop.f32.mrb[0].mxu0
    %3634 = vmatprep.mubr.f32.mxu0 0.0
    %3635 = vmatmul.mubr.f32.gmra.mrb[0].mxu0 %v3538
    %v3636 = vpop.f32.mrb[0].mxu0
    %v3637 = vadd.f32 0.0, %v3636
    %v3638 = vpop.f32.mrb[0].mxu0
    %3639 = vmatprep.mubr.f32.mxu0 0.0
    %3640 = vmatmul.mubr.f32.gmra.mrb[0].mxu0 %v3541
    %v3641 = vpop.f32.mrb[0].mxu0
    %v3642 = vadd.f32 0.0, %v3641
    %v3643 = vpop.f32.mrb[0].mxu0
    %3644 = vmatprep.mubr.f32.mxu0 0.0
    %3645 = vmatmul.mubr.f32.gmra.mrb[0].mxu0 %v3544
    %v3646 = vpop.f32.mrb[0].mxu0
    %v3647 = vadd.f32 0.0, %v3646
    %v3648 = vpop.f32.mrb[0].mxu0
    %3649 = vmatprep.mubr.f32.mxu0 0.0
    %3650 = vmatmul.mubr.f32.gmra.mrb[0].mxu0 %v3547
    %v3651 = vpop.f32.mrb[0].mxu0
    %v3652 = vadd.f32 0.0, %v3651
    %v3653 = vpop.f32.mrb[0].mxu0
    %3654 = vmatprep.mubr.f32.mxu0 0.0
    %3655 = vmatmul.mubr.f32.gmra.mrb[0].mxu0 %v3550
    %v3656 = vpop.f32.mrb[0].mxu0
    %v3657 = vadd.f32 0.0, %v3656
    %v3658 = vpop.f32.mrb[0].mxu0
    %3659 = vmatprep.mubr.f32.mxu0 0.0
    %3660 = vmatmul.mubr.f32.gmra.mrb[0].mxu0 %v3553
    %v3661 = vpop.f32.mrb[0].mxu0
    %v3662 = vadd.f32 0.0, %v3661
    %v3663 = vpop.f32.mrb[0].mxu0
    %3664 = vdwg.mxu0
    %v3666 = vsel %vm247, %v3500, 0
    %v3669 = vsel %vm247, %v3501, 0
    %v3672 = vsel %vm247, %v3502, 0
    %v3675 = vsel %vm247, %v3503, 0
    %v3678 = vsel %vm247, %v3504, 0
    %v3681 = vsel %vm247, %v3505, 0
    %v3684 = vsel %vm247, %v3506, 0
    %v3687 = vsel %vm247, %v3507, 0
    %v3690 = vsel %vm247, %v3508, 0
    %3692 = vmatprep.subr.mxu0 0.0
    %3693 = vmatpush1.msra.mxu0 %v3510
    %3694 = vmatprep.subr.mxu0 0.0
    %3695 = vmatpush1.msra.mxu0 %v3511
    %3696 = vmatprep.subr.mxu0 0.0
    %3697 = vmatpush1.msra.mxu0 %v3512
    %3698 = vmatprep.subr.mxu0 0.0
    %3699 = vmatpush1.msra.mxu0 %v3513
    %3700 = vmatprep.subr.mxu0 0.0
    %3701 = vmatpush1.msra.mxu0 0.0
    %3702 = vmatprep.subr.mxu0 0.0
    %3703 = vmatpush1.msra.mxu0 0.0
    %3704 = vmatprep.subr.mxu0 0.0
    %3705 = vmatpush1.msra.mxu0 0.0
    %3706 = vmatprep.subr.mxu0 0.0
    %3707 = vmatpush1.msra.mxu0 0.0
    %3708 = vmatprep.subr.mxu0 0.0
    %3709 = vmatpush1.msra.mxu0 0.0
    %3710 = vmatprep.subr.mxu0 0.0
    %3711 = vmatpush1.msra.mxu0 0.0
    %3712 = vmatprep.subr.mxu0 0.0
    %3713 = vmatpush1.msra.mxu0 0.0
    %3714 = vmatprep.subr.mxu0 0.0
    %3715 = vmatpush1.msra.mxu0 0.0
    %3716 = vmatprep.subr.mxu0 0.0
    %3717 = vmatpush1.msra.mxu0 0.0
    %3718 = vmatprep.subr.mxu0 0.0
    %3719 = vmatpush1.msra.mxu0 0.0
    %3720 = vmatprep.subr.mxu0 0.0
    %3721 = vmatpush1.msra.mxu0 0.0
    %3722 = vmatprep.subr.mxu0 0.0
    %3723 = vmatpush1.msra.mxu0 0.0
    %3724 = vmatprep.subr.mxu0 0.0
    %3725 = vmatpush1.msra.mxu0 0.0
    %3726 = vmatprep.subr.mxu0 0.0
    %3727 = vmatpush1.msra.mxu0 0.0
    %3728 = vmatprep.subr.mxu0 0.0
    %3729 = vmatpush1.msra.mxu0 0.0
    %3730 = vmatprep.subr.mxu0 0.0
    %3731 = vmatpush1.msra.mxu0 0.0
    %3732 = vmatprep.subr.mxu0 0.0
    %3733 = vmatpush1.msra.mxu0 0.0
    %3734 = vmatprep.subr.mxu0 0.0
    %3735 = vmatpush1.msra.mxu0 0.0
    %3736 = vmatprep.subr.mxu0 0.0
    %3737 = vmatpush1.msra.mxu0 0.0
    %3738 = vmatprep.subr.mxu0 0.0
    %3739 = vmatpush1.msra.mxu0 0.0
    %3740 = vmatprep.subr.mxu0 0.0
    %3741 = vmatpush1.msra.mxu0 0.0
    %3742 = vmatprep.subr.mxu0 0.0
    %3743 = vmatpush1.msra.mxu0 0.0
    %3744 = vmatprep.subr.mxu0 0.0
    %3745 = vmatpush1.msra.mxu0 0.0
    %3746 = vmatprep.subr.mxu0 0.0
    %3747 = vmatpush1.msra.mxu0 0.0
    %3748 = vmatprep.subr.mxu0 0.0
    %3749 = vmatpush1.msra.mxu0 0.0
    %3750 = vmatprep.subr.mxu0 0.0
    %3751 = vmatpush1.msra.mxu0 0.0
    %3752 = vmatprep.subr.mxu0 0.0
    %3753 = vmatpush1.msra.mxu0 0.0
    %3754 = vmatprep.subr.mxu0 0.0
    %3755 = vmatpush1.msra.mxu0 0.0
    %3756 = vmatprep.mubr.f32.mxu0 0.0
    %3757 = vmatmul.mubr.f32.gmra.mrb[0].mxu0 %v3666
    %v3758 = vpop.f32.mrb[0].mxu0
    %v3759 = vadd.f32 %v3622, %v3758
    %v3760 = vpop.f32.mrb[0].mxu0
    %3761 = vmatprep.mubr.f32.mxu0 0.0
    %3762 = vmatmul.mubr.f32.gmra.mrb[0].mxu0 %v3669
    %v3763 = vpop.f32.mrb[0].mxu0
    %v3764 = vadd.f32 %v3627, %v3763
    %v3765 = vpop.f32.mrb[0].mxu0
    %3766 = vmatprep.mubr.f32.mxu0 0.0
    %3767 = vmatmul.mubr.f32.gmra.mrb[0].mxu0 %v3672
    %v3768 = vpop.f32.mrb[0].mxu0
    %v3769 = vadd.f32 %v3632, %v3768
    %v3770 = vpop.f32.mrb[0].mxu0
    %3771 = vmatprep.mubr.f32.mxu0 0.0
    %3772 = vmatmul.mubr.f32.gmra.mrb[0].mxu0 %v3675
    %v3773 = vpop.f32.mrb[0].mxu0
    %v3774 = vadd.f32 %v3637, %v3773
    %v3775 = vpop.f32.mrb[0].mxu0
    %3776 = vmatprep.mubr.f32.mxu0 0.0
    %3777 = vmatmul.mubr.f32.gmra.mrb[0].mxu0 %v3678
    %v3778 = vpop.f32.mrb[0].mxu0
    %v3779 = vadd.f32 %v3642, %v3778
    %v3780 = vpop.f32.mrb[0].mxu0
    %3781 = vmatprep.mubr.f32.mxu0 0.0
    %3782 = vmatmul.mubr.f32.gmra.mrb[0].mxu0 %v3681
    %v3783 = vpop.f32.mrb[0].mxu0
    %v3784 = vadd.f32 %v3647, %v3783
    %v3785 = vpop.f32.mrb[0].mxu0
    %3786 = vmatprep.mubr.f32.mxu0 0.0
    %3787 = vmatmul.mubr.f32.gmra.mrb[0].mxu0 %v3684
    %v3788 = vpop.f32.mrb[0].mxu0
    %v3789 = vadd.f32 %v3652, %v3788
    %v3790 = vpop.f32.mrb[0].mxu0
    %3791 = vmatprep.mubr.f32.mxu0 0.0
    %3792 = vmatmul.mubr.f32.gmra.mrb[0].mxu0 %v3687
    %v3793 = vpop.f32.mrb[0].mxu0
    %v3794 = vadd.f32 %v3657, %v3793
    %v3795 = vpop.f32.mrb[0].mxu0
    %3796 = vmatprep.mubr.f32.mxu0 0.0
    %3797 = vmatmul.mubr.f32.gmra.mrb[0].mxu0 %v3690
    %v3798 = vpop.f32.mrb[0].mxu0
    %v3799 = vadd.f32 %v3662, %v3798
    %v3800 = vpop.f32.mrb[0].mxu0
    %3801 = vdwg.mxu0
    %v3802 = vld [vmem:[#allocation2 + $0x3] sm:$0xff]
    %v3803 = vld [vmem:[#allocation2 + $0xb] sm:$0xff]
    %v3804 = vld [vmem:[#allocation2 + $0x13] sm:$0xff]
    %v3805 = vld [vmem:[#allocation2 + $0x1b] sm:$0xff]
    %v3806 = vld [vmem:[#allocation2 + $0x23] sm:$0xff]
    %v3807 = vld [vmem:[#allocation2 + $0x2b] sm:$0xff]
    %v3808 = vld [vmem:[#allocation2 + $0x33] sm:$0xff]
    %v3809 = vld [vmem:[#allocation2 + $0x3b] sm:$0xff]
    %v3810 = vld [vmem:[#allocation2 + $0x43] sm:$0xff]
    %s3811 = scalar_lea.vmem [#allocation11], 352
    %v3812 = vld [vmem:[%s3811] sm:$0xff]
    %v3813 = vld [vmem:[%s3811 + $0x8] sm:$0xff]
    %v3814 = vld [vmem:[%s3811 + $0x10] sm:$0xff]
    %v3815 = vld [vmem:[%s3811 + $0x18] sm:$0xff]
    %v3817 = vsel %vm247, %v3802, 0
    %v3820 = vsel %vm247, %v3803, 0
    %v3823 = vsel %vm247, %v3804, 0
    %v3826 = vsel %vm247, %v3805, 0
    %v3829 = vsel %vm247, %v3806, 0
    %v3832 = vsel %vm247, %v3807, 0
    %v3835 = vsel %vm247, %v3808, 0
    %v3838 = vsel %vm247, %v3809, 0
    %v3841 = vsel %vm247, %v3810, 0
    %3843 = vmatprep.subr.mxu0 0.0
    %3844 = vmatpush1.msra.mxu0 %v3812
    %3845 = vmatprep.subr.mxu0 0.0
    %3846 = vmatpush1.msra.mxu0 %v3813
    %3847 = vmatprep.subr.mxu0 0.0
    %3848 = vmatpush1.msra.mxu0 %v3814
    %3849 = vmatprep.subr.mxu0 0.0
    %3850 = vmatpush1.msra.mxu0 %v3815
    %3851 = vmatprep.subr.mxu0 0.0
    %3852 = vmatpush1.msra.mxu0 0.0
    %3853 = vmatprep.subr.mxu0 0.0
    %3854 = vmatpush1.msra.mxu0 0.0
    %3855 = vmatprep.subr.mxu0 0.0
    %3856 = vmatpush1.msra.mxu0 0.0
    %3857 = vmatprep.subr.mxu0 0.0
    %3858 = vmatpush1.msra.mxu0 0.0
    %3859 = vmatprep.subr.mxu0 0.0
    %3860 = vmatpush1.msra.mxu0 0.0
    %3861 = vmatprep.subr.mxu0 0.0
    %3862 = vmatpush1.msra.mxu0 0.0
    %3863 = vmatprep.subr.mxu0 0.0
    %3864 = vmatpush1.msra.mxu0 0.0
    %3865 = vmatprep.subr.mxu0 0.0
    %3866 = vmatpush1.msra.mxu0 0.0
    %3867 = vmatprep.subr.mxu0 0.0
    %3868 = vmatpush1.msra.mxu0 0.0
    %3869 = vmatprep.subr.mxu0 0.0
    %3870 = vmatpush1.msra.mxu0 0.0
    %3871 = vmatprep.subr.mxu0 0.0
    %3872 = vmatpush1.msra.mxu0 0.0
    %3873 = vmatprep.subr.mxu0 0.0
    %3874 = vmatpush1.msra.mxu0 0.0
    %3875 = vmatprep.subr.mxu0 0.0
    %3876 = vmatpush1.msra.mxu0 0.0
    %3877 = vmatprep.subr.mxu0 0.0
    %3878 = vmatpush1.msra.mxu0 0.0
    %3879 = vmatprep.subr.mxu0 0.0
    %3880 = vmatpush1.msra.mxu0 0.0
    %3881 = vmatprep.subr.mxu0 0.0
    %3882 = vmatpush1.msra.mxu0 0.0
    %3883 = vmatprep.subr.mxu0 0.0
    %3884 = vmatpush1.msra.mxu0 0.0
    %3885 = vmatprep.subr.mxu0 0.0
    %3886 = vmatpush1.msra.mxu0 0.0
    %3887 = vmatprep.subr.mxu0 0.0
    %3888 = vmatpush1.msra.mxu0 0.0
    %3889 = vmatprep.subr.mxu0 0.0
    %3890 = vmatpush1.msra.mxu0 0.0
    %3891 = vmatprep.subr.mxu0 0.0
    %3892 = vmatpush1.msra.mxu0 0.0
    %3893 = vmatprep.subr.mxu0 0.0
    %3894 = vmatpush1.msra.mxu0 0.0
    %3895 = vmatprep.subr.mxu0 0.0
    %3896 = vmatpush1.msra.mxu0 0.0
    %3897 = vmatprep.subr.mxu0 0.0
    %3898 = vmatpush1.msra.mxu0 0.0
    %3899 = vmatprep.subr.mxu0 0.0
    %3900 = vmatpush1.msra.mxu0 0.0
    %3901 = vmatprep.subr.mxu0 0.0
    %3902 = vmatpush1.msra.mxu0 0.0
    %3903 = vmatprep.subr.mxu0 0.0
    %3904 = vmatpush1.msra.mxu0 0.0
    %3905 = vmatprep.subr.mxu0 0.0
    %3906 = vmatpush1.msra.mxu0 0.0
    %3907 = vmatprep.mubr.f32.mxu0 0.0
    %3908 = vmatmul.mubr.f32.gmra.mrb[0].mxu0 %v3817
    %v3909 = vpop.f32.mrb[0].mxu0
    %v3910 = vadd.f32 0.0, %v3909
    %v3911 = vpop.f32.mrb[0].mxu0
    %3912 = vmatprep.mubr.f32.mxu0 0.0
    %3913 = vmatmul.mubr.f32.gmra.mrb[0].mxu0 %v3820
    %v3914 = vpop.f32.mrb[0].mxu0
    %v3915 = vadd.f32 0.0, %v3914
    %v3916 = vpop.f32.mrb[0].mxu0
    %3917 = vmatprep.mubr.f32.mxu0 0.0
    %3918 = vmatmul.mubr.f32.gmra.mrb[0].mxu0 %v3823
    %v3919 = vpop.f32.mrb[0].mxu0
    %v3920 = vadd.f32 0.0, %v3919
    %v3921 = vpop.f32.mrb[0].mxu0
    %3922 = vmatprep.mubr.f32.mxu0 0.0
    %3923 = vmatmul.mubr.f32.gmra.mrb[0].mxu0 %v3826
    %v3924 = vpop.f32.mrb[0].mxu0
    %v3925 = vadd.f32 0.0, %v3924
    %v3926 = vpop.f32.mrb[0].mxu0
    %3927 = vmatprep.mubr.f32.mxu0 0.0
    %3928 = vmatmul.mubr.f32.gmra.mrb[0].mxu0 %v3829
    %v3929 = vpop.f32.mrb[0].mxu0
    %v3930 = vadd.f32 0.0, %v3929
    %v3931 = vpop.f32.mrb[0].mxu0
    %3932 = vmatprep.mubr.f32.mxu0 0.0
    %3933 = vmatmul.mubr.f32.gmra.mrb[0].mxu0 %v3832
    %v3934 = vpop.f32.mrb[0].mxu0
    %v3935 = vadd.f32 0.0, %v3934
    %v3936 = vpop.f32.mrb[0].mxu0
    %3937 = vmatprep.mubr.f32.mxu0 0.0
    %3938 = vmatmul.mubr.f32.gmra.mrb[0].mxu0 %v3835
    %v3939 = vpop.f32.mrb[0].mxu0
    %v3940 = vadd.f32 0.0, %v3939
    %v3941 = vpop.f32.mrb[0].mxu0
    %3942 = vmatprep.mubr.f32.mxu0 0.0
    %3943 = vmatmul.mubr.f32.gmra.mrb[0].mxu0 %v3838
    %v3944 = vpop.f32.mrb[0].mxu0
    %v3945 = vadd.f32 0.0, %v3944
    %v3946 = vpop.f32.mrb[0].mxu0
    %3947 = vmatprep.mubr.f32.mxu0 0.0
    %3948 = vmatmul.mubr.f32.gmra.mrb[0].mxu0 %v3841
    %v3949 = vpop.f32.mrb[0].mxu0
    %v3950 = vadd.f32 0.0, %v3949
    %v3951 = vpop.f32.mrb[0].mxu0
    %3952 = vdwg.mxu0
    %v3953 = vadd.f32 %v3759, %v3910
    %v3954 = vadd.f32 %v3764, %v3915
    %v3955 = vadd.f32 %v3769, %v3920
    %v3956 = vadd.f32 %v3774, %v3925
    %v3957 = vadd.f32 %v3779, %v3930
    %v3958 = vadd.f32 %v3784, %v3935
    %v3959 = vadd.f32 %v3789, %v3940
    %v3960 = vadd.f32 %v3794, %v3945
    %v3961 = vadd.f32 %v3799, %v3950
    %v3962 = vld [vmem:[#allocation2 + $0x7] sm:$0xff]
    %v3963 = vld [vmem:[#allocation2 + $0xf] sm:$0xff]
    %v3964 = vld [vmem:[#allocation2 + $0x17] sm:$0xff]
    %v3965 = vld [vmem:[#allocation2 + $0x1f] sm:$0xff]
    %v3966 = vld [vmem:[#allocation2 + $0x27] sm:$0xff]
    %v3967 = vld [vmem:[#allocation2 + $0x2f] sm:$0xff]
    %v3968 = vld [vmem:[#allocation2 + $0x37] sm:$0xff]
    %v3969 = vld [vmem:[#allocation2 + $0x3f] sm:$0xff]
    %v3970 = vld [vmem:[#allocation2 + $0x47] sm:$0xff]
    %s3971 = scalar_lea.vmem [#allocation11], 384
    %v3972 = vld [vmem:[%s3971] sm:$0xff]
    %v3973 = vld [vmem:[%s3971 + $0x8] sm:$0xff]
    %v3974 = vld [vmem:[%s3971 + $0x10] sm:$0xff]
    %v3975 = vld [vmem:[%s3971 + $0x18] sm:$0xff]
    %v3977 = vsel %vm247, %v3962, 0
    %v3980 = vsel %vm247, %v3963, 0
    %v3983 = vsel %vm247, %v3964, 0
    %v3986 = vsel %vm247, %v3965, 0
    %v3989 = vsel %vm247, %v3966, 0
    %v3992 = vsel %vm247, %v3967, 0
    %v3995 = vsel %vm247, %v3968, 0
    %v3998 = vsel %vm247, %v3969, 0
    %v4001 = vsel %vm247, %v3970, 0
    %4003 = vmatprep.subr.mxu0 0.0
    %4004 = vmatpush1.msra.mxu0 %v3972
    %4005 = vmatprep.subr.mxu0 0.0
    %4006 = vmatpush1.msra.mxu0 %v3973
    %4007 = vmatprep.subr.mxu0 0.0
    %4008 = vmatpush1.msra.mxu0 %v3974
    %4009 = vmatprep.subr.mxu0 0.0
    %4010 = vmatpush1.msra.mxu0 %v3975
    %4011 = vmatprep.subr.mxu0 0.0
    %4012 = vmatpush1.msra.mxu0 0.0
    %4013 = vmatprep.subr.mxu0 0.0
    %4014 = vmatpush1.msra.mxu0 0.0
    %4015 = vmatprep.subr.mxu0 0.0
    %4016 = vmatpush1.msra.mxu0 0.0
    %4017 = vmatprep.subr.mxu0 0.0
    %4018 = vmatpush1.msra.mxu0 0.0
    %4019 = vmatprep.subr.mxu0 0.0
    %4020 = vmatpush1.msra.mxu0 0.0
    %4021 = vmatprep.subr.mxu0 0.0
    %4022 = vmatpush1.msra.mxu0 0.0
    %4023 = vmatprep.subr.mxu0 0.0
    %4024 = vmatpush1.msra.mxu0 0.0
    %4025 = vmatprep.subr.mxu0 0.0
    %4026 = vmatpush1.msra.mxu0 0.0
    %4027 = vmatprep.subr.mxu0 0.0
    %4028 = vmatpush1.msra.mxu0 0.0
    %4029 = vmatprep.subr.mxu0 0.0
    %4030 = vmatpush1.msra.mxu0 0.0
    %4031 = vmatprep.subr.mxu0 0.0
    %4032 = vmatpush1.msra.mxu0 0.0
    %4033 = vmatprep.subr.mxu0 0.0
    %4034 = vmatpush1.msra.mxu0 0.0
    %4035 = vmatprep.subr.mxu0 0.0
    %4036 = vmatpush1.msra.mxu0 0.0
    %4037 = vmatprep.subr.mxu0 0.0
    %4038 = vmatpush1.msra.mxu0 0.0
    %4039 = vmatprep.subr.mxu0 0.0
    %4040 = vmatpush1.msra.mxu0 0.0
    %4041 = vmatprep.subr.mxu0 0.0
    %4042 = vmatpush1.msra.mxu0 0.0
    %4043 = vmatprep.subr.mxu0 0.0
    %4044 = vmatpush1.msra.mxu0 0.0
    %4045 = vmatprep.subr.mxu0 0.0
    %4046 = vmatpush1.msra.mxu0 0.0
    %4047 = vmatprep.subr.mxu0 0.0
    %4048 = vmatpush1.msra.mxu0 0.0
    %4049 = vmatprep.subr.mxu0 0.0
    %4050 = vmatpush1.msra.mxu0 0.0
    %4051 = vmatprep.subr.mxu0 0.0
    %4052 = vmatpush1.msra.mxu0 0.0
    %4053 = vmatprep.subr.mxu0 0.0
    %4054 = vmatpush1.msra.mxu0 0.0
    %4055 = vmatprep.subr.mxu0 0.0
    %4056 = vmatpush1.msra.mxu0 0.0
    %4057 = vmatprep.subr.mxu0 0.0
    %4058 = vmatpush1.msra.mxu0 0.0
    %4059 = vmatprep.subr.mxu0 0.0
    %4060 = vmatpush1.msra.mxu0 0.0
    %4061 = vmatprep.subr.mxu0 0.0
    %4062 = vmatpush1.msra.mxu0 0.0
    %4063 = vmatprep.subr.mxu0 0.0
    %4064 = vmatpush1.msra.mxu0 0.0
    %4065 = vmatprep.subr.mxu0 0.0
    %4066 = vmatpush1.msra.mxu0 0.0
    %4067 = vmatprep.mubr.f32.mxu0 0.0
    %4068 = vmatmul.mubr.f32.gmra.mrb[0].mxu0 %v3977
    %v4069 = vpop.f32.mrb[0].mxu0
    %v4070 = vadd.f32 0.0, %v4069
    %v4071 = vpop.f32.mrb[0].mxu0
    %4072 = vmatprep.mubr.f32.mxu0 0.0
    %4073 = vmatmul.mubr.f32.gmra.mrb[0].mxu0 %v3980
    %v4074 = vpop.f32.mrb[0].mxu0
    %v4075 = vadd.f32 0.0, %v4074
    %v4076 = vpop.f32.mrb[0].mxu0
    %4077 = vmatprep.mubr.f32.mxu0 0.0
    %4078 = vmatmul.mubr.f32.gmra.mrb[0].mxu0 %v3983
    %v4079 = vpop.f32.mrb[0].mxu0
    %v4080 = vadd.f32 0.0, %v4079
    %v4081 = vpop.f32.mrb[0].mxu0
    %4082 = vmatprep.mubr.f32.mxu0 0.0
    %4083 = vmatmul.mubr.f32.gmra.mrb[0].mxu0 %v3986
    %v4084 = vpop.f32.mrb[0].mxu0
    %v4085 = vadd.f32 0.0, %v4084
    %v4086 = vpop.f32.mrb[0].mxu0
    %4087 = vmatprep.mubr.f32.mxu0 0.0
    %4088 = vmatmul.mubr.f32.gmra.mrb[0].mxu0 %v3989
    %v4089 = vpop.f32.mrb[0].mxu0
    %v4090 = vadd.f32 0.0, %v4089
    %v4091 = vpop.f32.mrb[0].mxu0
    %4092 = vmatprep.mubr.f32.mxu0 0.0
    %4093 = vmatmul.mubr.f32.gmra.mrb[0].mxu0 %v3992
    %v4094 = vpop.f32.mrb[0].mxu0
    %v4095 = vadd.f32 0.0, %v4094
    %v4096 = vpop.f32.mrb[0].mxu0
    %4097 = vmatprep.mubr.f32.mxu0 0.0
    %4098 = vmatmul.mubr.f32.gmra.mrb[0].mxu0 %v3995
    %v4099 = vpop.f32.mrb[0].mxu0
    %v4100 = vadd.f32 0.0, %v4099
    %v4101 = vpop.f32.mrb[0].mxu0
    %4102 = vmatprep.mubr.f32.mxu0 0.0
    %4103 = vmatmul.mubr.f32.gmra.mrb[0].mxu0 %v3998
    %v4104 = vpop.f32.mrb[0].mxu0
    %v4105 = vadd.f32 0.0, %v4104
    %v4106 = vpop.f32.mrb[0].mxu0
    %4107 = vmatprep.mubr.f32.mxu0 0.0
    %4108 = vmatmul.mubr.f32.gmra.mrb[0].mxu0 %v4001
    %v4109 = vpop.f32.mrb[0].mxu0
    %v4110 = vadd.f32 0.0, %v4109
    %v4111 = vpop.f32.mrb[0].mxu0
    %4112 = vdwg.mxu0
    %v4113 = vadd.f32 %v3953, %v4070
    %v4114 = vadd.f32 %v3954, %v4075
    %v4115 = vadd.f32 %v3955, %v4080
    %v4116 = vadd.f32 %v3956, %v4085
    %v4117 = vadd.f32 %v3957, %v4090
    %v4118 = vadd.f32 %v3958, %v4095
    %v4119 = vadd.f32 %v3959, %v4100
    %v4120 = vadd.f32 %v3960, %v4105
    %v4121 = vadd.f32 %v3961, %v4110
    %v4122 = vld [vmem:[#allocation2 + $0x8] sm:$0xff]
    %v4123 = vld [vmem:[#allocation2 + $0x10] sm:$0xff]
    %v4124 = vld [vmem:[#allocation2 + $0x18] sm:$0xff]
    %v4125 = vld [vmem:[#allocation2 + $0x20] sm:$0xff]
    %v4126 = vld [vmem:[#allocation2 + $0x28] sm:$0xff]
    %v4127 = vld [vmem:[#allocation2 + $0x30] sm:$0xff]
    %v4128 = vld [vmem:[#allocation2 + $0x38] sm:$0xff]
    %v4129 = vld [vmem:[#allocation2 + $0x40] sm:$0xff]
    %v4130 = vld [vmem:[#allocation2 + $0x48] sm:$0xff]
    %s4131 = scalar_lea.vmem [#allocation11], 416
    %v4132 = vld [vmem:[%s4131] sm:$0xff]
    %v4133 = vld [vmem:[%s4131 + $0x8] sm:$0xff]
    %v4134 = vld [vmem:[%s4131 + $0x10] sm:$0xff]
    %v4135 = vld [vmem:[%s4131 + $0x18] sm:$0xff]
    %v4137 = vsel %vm247, %v4122, 0
    %v4140 = vsel %vm247, %v4123, 0
    %v4143 = vsel %vm247, %v4124, 0
    %v4146 = vsel %vm247, %v4125, 0
    %v4149 = vsel %vm247, %v4126, 0
    %v4152 = vsel %vm247, %v4127, 0
    %v4155 = vsel %vm247, %v4128, 0
    %v4158 = vsel %vm247, %v4129, 0
    %v4161 = vsel %vm247, %v4130, 0
    %4163 = vmatprep.subr.mxu0 0.0
    %4164 = vmatpush1.msra.mxu0 %v4132
    %4165 = vmatprep.subr.mxu0 0.0
    %4166 = vmatpush1.msra.mxu0 %v4133
    %4167 = vmatprep.subr.mxu0 0.0
    %4168 = vmatpush1.msra.mxu0 %v4134
    %4169 = vmatprep.subr.mxu0 0.0
    %4170 = vmatpush1.msra.mxu0 %v4135
    %4171 = vmatprep.subr.mxu0 0.0
    %4172 = vmatpush1.msra.mxu0 0.0
    %4173 = vmatprep.subr.mxu0 0.0
    %4174 = vmatpush1.msra.mxu0 0.0
    %4175 = vmatprep.subr.mxu0 0.0
    %4176 = vmatpush1.msra.mxu0 0.0
    %4177 = vmatprep.subr.mxu0 0.0
    %4178 = vmatpush1.msra.mxu0 0.0
    %4179 = vmatprep.subr.mxu0 0.0
    %4180 = vmatpush1.msra.mxu0 0.0
    %4181 = vmatprep.subr.mxu0 0.0
    %4182 = vmatpush1.msra.mxu0 0.0
    %4183 = vmatprep.subr.mxu0 0.0
    %4184 = vmatpush1.msra.mxu0 0.0
    %4185 = vmatprep.subr.mxu0 0.0
    %4186 = vmatpush1.msra.mxu0 0.0
    %4187 = vmatprep.subr.mxu0 0.0
    %4188 = vmatpush1.msra.mxu0 0.0
    %4189 = vmatprep.subr.mxu0 0.0
    %4190 = vmatpush1.msra.mxu0 0.0
    %4191 = vmatprep.subr.mxu0 0.0
    %4192 = vmatpush1.msra.mxu0 0.0
    %4193 = vmatprep.subr.mxu0 0.0
    %4194 = vmatpush1.msra.mxu0 0.0
    %4195 = vmatprep.subr.mxu0 0.0
    %4196 = vmatpush1.msra.mxu0 0.0
    %4197 = vmatprep.subr.mxu0 0.0
    %4198 = vmatpush1.msra.mxu0 0.0
    %4199 = vmatprep.subr.mxu0 0.0
    %4200 = vmatpush1.msra.mxu0 0.0
    %4201 = vmatprep.subr.mxu0 0.0
    %4202 = vmatpush1.msra.mxu0 0.0
    %4203 = vmatprep.subr.mxu0 0.0
    %4204 = vmatpush1.msra.mxu0 0.0
    %4205 = vmatprep.subr.mxu0 0.0
    %4206 = vmatpush1.msra.mxu0 0.0
    %4207 = vmatprep.subr.mxu0 0.0
    %4208 = vmatpush1.msra.mxu0 0.0
    %4209 = vmatprep.subr.mxu0 0.0
    %4210 = vmatpush1.msra.mxu0 0.0
    %4211 = vmatprep.subr.mxu0 0.0
    %4212 = vmatpush1.msra.mxu0 0.0
    %4213 = vmatprep.subr.mxu0 0.0
    %4214 = vmatpush1.msra.mxu0 0.0
    %4215 = vmatprep.subr.mxu0 0.0
    %4216 = vmatpush1.msra.mxu0 0.0
    %4217 = vmatprep.subr.mxu0 0.0
    %4218 = vmatpush1.msra.mxu0 0.0
    %4219 = vmatprep.subr.mxu0 0.0
    %4220 = vmatpush1.msra.mxu0 0.0
    %4221 = vmatprep.subr.mxu0 0.0
    %4222 = vmatpush1.msra.mxu0 0.0
    %4223 = vmatprep.subr.mxu0 0.0
    %4224 = vmatpush1.msra.mxu0 0.0
    %4225 = vmatprep.subr.mxu0 0.0
    %4226 = vmatpush1.msra.mxu0 0.0
    %4227 = vmatprep.mubr.f32.mxu0 0.0
    %4228 = vmatmul.mubr.f32.gmra.mrb[0].mxu0 %v4137
    %v4229 = vpop.f32.mrb[0].mxu0
    %v4230 = vadd.f32 0.0, %v4229
    %v4231 = vpop.f32.mrb[0].mxu0
    %4232 = vmatprep.mubr.f32.mxu0 0.0
    %4233 = vmatmul.mubr.f32.gmra.mrb[0].mxu0 %v4140
    %v4234 = vpop.f32.mrb[0].mxu0
    %v4235 = vadd.f32 0.0, %v4234
    %v4236 = vpop.f32.mrb[0].mxu0
    %4237 = vmatprep.mubr.f32.mxu0 0.0
    %4238 = vmatmul.mubr.f32.gmra.mrb[0].mxu0 %v4143
    %v4239 = vpop.f32.mrb[0].mxu0
    %v4240 = vadd.f32 0.0, %v4239
    %v4241 = vpop.f32.mrb[0].mxu0
    %4242 = vmatprep.mubr.f32.mxu0 0.0
    %4243 = vmatmul.mubr.f32.gmra.mrb[0].mxu0 %v4146
    %v4244 = vpop.f32.mrb[0].mxu0
    %v4245 = vadd.f32 0.0, %v4244
    %v4246 = vpop.f32.mrb[0].mxu0
    %4247 = vmatprep.mubr.f32.mxu0 0.0
    %4248 = vmatmul.mubr.f32.gmra.mrb[0].mxu0 %v4149
    %v4249 = vpop.f32.mrb[0].mxu0
    %v4250 = vadd.f32 0.0, %v4249
    %v4251 = vpop.f32.mrb[0].mxu0
    %4252 = vmatprep.mubr.f32.mxu0 0.0
    %4253 = vmatmul.mubr.f32.gmra.mrb[0].mxu0 %v4152
    %v4254 = vpop.f32.mrb[0].mxu0
    %v4255 = vadd.f32 0.0, %v4254
    %v4256 = vpop.f32.mrb[0].mxu0
    %4257 = vmatprep.mubr.f32.mxu0 0.0
    %4258 = vmatmul.mubr.f32.gmra.mrb[0].mxu0 %v4155
    %v4259 = vpop.f32.mrb[0].mxu0
    %v4260 = vadd.f32 0.0, %v4259
    %v4261 = vpop.f32.mrb[0].mxu0
    %4262 = vmatprep.mubr.f32.mxu0 0.0
    %4263 = vmatmul.mubr.f32.gmra.mrb[0].mxu0 %v4158
    %v4264 = vpop.f32.mrb[0].mxu0
    %v4265 = vadd.f32 0.0, %v4264
    %v4266 = vpop.f32.mrb[0].mxu0
    %4267 = vmatprep.mubr.f32.mxu0 0.0
    %4268 = vmatmul.mubr.f32.gmra.mrb[0].mxu0 %v4161
    %v4269 = vpop.f32.mrb[0].mxu0
    %v4270 = vadd.f32 0.0, %v4269
    %v4271 = vpop.f32.mrb[0].mxu0
    %4272 = vdwg.mxu0
    %v4273 = vadd.f32 %v4113, %v4230
    %v4274 = vadd.f32 %v4114, %v4235
    %v4275 = vadd.f32 %v4115, %v4240
    %v4276 = vadd.f32 %v4116, %v4245
    %v4277 = vadd.f32 %v4117, %v4250
    %v4278 = vadd.f32 %v4118, %v4255
    %v4279 = vadd.f32 %v4119, %v4260
    %v4280 = vadd.f32 %v4120, %v4265
    %v4281 = vadd.f32 %v4121, %v4270
    %v4282 = vld [vmem:[#allocation2 + $0x9] sm:$0xff]
    %v4283 = vld [vmem:[#allocation2 + $0x11] sm:$0xff]
    %v4284 = vld [vmem:[#allocation2 + $0x19] sm:$0xff]
    %v4285 = vld [vmem:[#allocation2 + $0x21] sm:$0xff]
    %v4286 = vld [vmem:[#allocation2 + $0x29] sm:$0xff]
    %v4287 = vld [vmem:[#allocation2 + $0x31] sm:$0xff]
    %v4288 = vld [vmem:[#allocation2 + $0x39] sm:$0xff]
    %v4289 = vld [vmem:[#allocation2 + $0x41] sm:$0xff]
    %v4290 = vld [vmem:[#allocation2 + $0x49] sm:$0xff]
    %s4291 = scalar_lea.vmem [#allocation11], 448
    %v4292 = vld [vmem:[%s4291] sm:$0xff]
    %v4293 = vld [vmem:[%s4291 + $0x8] sm:$0xff]
    %v4294 = vld [vmem:[%s4291 + $0x10] sm:$0xff]
    %v4295 = vld [vmem:[%s4291 + $0x18] sm:$0xff]
    %v4297 = vsel %vm247, %v4282, 0
    %v4300 = vsel %vm247, %v4283, 0
    %v4303 = vsel %vm247, %v4284, 0
    %v4306 = vsel %vm247, %v4285, 0
    %v4309 = vsel %vm247, %v4286, 0
    %v4312 = vsel %vm247, %v4287, 0
    %v4315 = vsel %vm247, %v4288, 0
    %v4318 = vsel %vm247, %v4289, 0
    %v4321 = vsel %vm247, %v4290, 0
    %4323 = vmatprep.subr.mxu0 0.0
    %4324 = vmatpush1.msra.mxu0 %v4292
    %4325 = vmatprep.subr.mxu0 0.0
    %4326 = vmatpush1.msra.mxu0 %v4293
    %4327 = vmatprep.subr.mxu0 0.0
    %4328 = vmatpush1.msra.mxu0 %v4294
    %4329 = vmatprep.subr.mxu0 0.0
    %4330 = vmatpush1.msra.mxu0 %v4295
    %4331 = vmatprep.subr.mxu0 0.0
    %4332 = vmatpush1.msra.mxu0 0.0
    %4333 = vmatprep.subr.mxu0 0.0
    %4334 = vmatpush1.msra.mxu0 0.0
    %4335 = vmatprep.subr.mxu0 0.0
    %4336 = vmatpush1.msra.mxu0 0.0
    %4337 = vmatprep.subr.mxu0 0.0
    %4338 = vmatpush1.msra.mxu0 0.0
    %4339 = vmatprep.subr.mxu0 0.0
    %4340 = vmatpush1.msra.mxu0 0.0
    %4341 = vmatprep.subr.mxu0 0.0
    %4342 = vmatpush1.msra.mxu0 0.0
    %4343 = vmatprep.subr.mxu0 0.0
    %4344 = vmatpush1.msra.mxu0 0.0
    %4345 = vmatprep.subr.mxu0 0.0
    %4346 = vmatpush1.msra.mxu0 0.0
    %4347 = vmatprep.subr.mxu0 0.0
    %4348 = vmatpush1.msra.mxu0 0.0
    %4349 = vmatprep.subr.mxu0 0.0
    %4350 = vmatpush1.msra.mxu0 0.0
    %4351 = vmatprep.subr.mxu0 0.0
    %4352 = vmatpush1.msra.mxu0 0.0
    %4353 = vmatprep.subr.mxu0 0.0
    %4354 = vmatpush1.msra.mxu0 0.0
    %4355 = vmatprep.subr.mxu0 0.0
    %4356 = vmatpush1.msra.mxu0 0.0
    %4357 = vmatprep.subr.mxu0 0.0
    %4358 = vmatpush1.msra.mxu0 0.0
    %4359 = vmatprep.subr.mxu0 0.0
    %4360 = vmatpush1.msra.mxu0 0.0
    %4361 = vmatprep.subr.mxu0 0.0
    %4362 = vmatpush1.msra.mxu0 0.0
    %4363 = vmatprep.subr.mxu0 0.0
    %4364 = vmatpush1.msra.mxu0 0.0
    %4365 = vmatprep.subr.mxu0 0.0
    %4366 = vmatpush1.msra.mxu0 0.0
    %4367 = vmatprep.subr.mxu0 0.0
    %4368 = vmatpush1.msra.mxu0 0.0
    %4369 = vmatprep.subr.mxu0 0.0
    %4370 = vmatpush1.msra.mxu0 0.0
    %4371 = vmatprep.subr.mxu0 0.0
    %4372 = vmatpush1.msra.mxu0 0.0
    %4373 = vmatprep.subr.mxu0 0.0
    %4374 = vmatpush1.msra.mxu0 0.0
    %4375 = vmatprep.subr.mxu0 0.0
    %4376 = vmatpush1.msra.mxu0 0.0
    %4377 = vmatprep.subr.mxu0 0.0
    %4378 = vmatpush1.msra.mxu0 0.0
    %4379 = vmatprep.subr.mxu0 0.0
    %4380 = vmatpush1.msra.mxu0 0.0
    %4381 = vmatprep.subr.mxu0 0.0
    %4382 = vmatpush1.msra.mxu0 0.0
    %4383 = vmatprep.subr.mxu0 0.0
    %4384 = vmatpush1.msra.mxu0 0.0
    %4385 = vmatprep.subr.mxu0 0.0
    %4386 = vmatpush1.msra.mxu0 0.0
    %4387 = vmatprep.mubr.f32.mxu0 0.0
    %4388 = vmatmul.mubr.f32.gmra.mrb[0].mxu0 %v4297
    %v4389 = vpop.f32.mrb[0].mxu0
    %v4390 = vadd.f32 0.0, %v4389
    %v4391 = vpop.f32.mrb[0].mxu0
    %4392 = vmatprep.mubr.f32.mxu0 0.0
    %4393 = vmatmul.mubr.f32.gmra.mrb[0].mxu0 %v4300
    %v4394 = vpop.f32.mrb[0].mxu0
    %v4395 = vadd.f32 0.0, %v4394
    %v4396 = vpop.f32.mrb[0].mxu0
    %4397 = vmatprep.mubr.f32.mxu0 0.0
    %4398 = vmatmul.mubr.f32.gmra.mrb[0].mxu0 %v4303
    %v4399 = vpop.f32.mrb[0].mxu0
    %v4400 = vadd.f32 0.0, %v4399
    %v4401 = vpop.f32.mrb[0].mxu0
    %4402 = vmatprep.mubr.f32.mxu0 0.0
    %4403 = vmatmul.mubr.f32.gmra.mrb[0].mxu0 %v4306
    %v4404 = vpop.f32.mrb[0].mxu0
    %v4405 = vadd.f32 0.0, %v4404
    %v4406 = vpop.f32.mrb[0].mxu0
    %4407 = vmatprep.mubr.f32.mxu0 0.0
    %4408 = vmatmul.mubr.f32.gmra.mrb[0].mxu0 %v4309
    %v4409 = vpop.f32.mrb[0].mxu0
    %v4410 = vadd.f32 0.0, %v4409
    %v4411 = vpop.f32.mrb[0].mxu0
    %4412 = vmatprep.mubr.f32.mxu0 0.0
    %4413 = vmatmul.mubr.f32.gmra.mrb[0].mxu0 %v4312
    %v4414 = vpop.f32.mrb[0].mxu0
    %v4415 = vadd.f32 0.0, %v4414
    %v4416 = vpop.f32.mrb[0].mxu0
    %4417 = vmatprep.mubr.f32.mxu0 0.0
    %4418 = vmatmul.mubr.f32.gmra.mrb[0].mxu0 %v4315
    %v4419 = vpop.f32.mrb[0].mxu0
    %v4420 = vadd.f32 0.0, %v4419
    %v4421 = vpop.f32.mrb[0].mxu0
    %4422 = vmatprep.mubr.f32.mxu0 0.0
    %4423 = vmatmul.mubr.f32.gmra.mrb[0].mxu0 %v4318
    %v4424 = vpop.f32.mrb[0].mxu0
    %v4425 = vadd.f32 0.0, %v4424
    %v4426 = vpop.f32.mrb[0].mxu0
    %4427 = vmatprep.mubr.f32.mxu0 0.0
    %4428 = vmatmul.mubr.f32.gmra.mrb[0].mxu0 %v4321
    %v4429 = vpop.f32.mrb[0].mxu0
    %v4430 = vadd.f32 0.0, %v4429
    %v4431 = vpop.f32.mrb[0].mxu0
    %4432 = vdwg.mxu0
    %v4433 = vadd.f32 %v4273, %v4390
    %v4434 = vadd.f32 %v4274, %v4395
    %v4435 = vadd.f32 %v4275, %v4400
    %v4436 = vadd.f32 %v4276, %v4405
    %v4437 = vadd.f32 %v4277, %v4410
    %v4438 = vadd.f32 %v4278, %v4415
    %v4439 = vadd.f32 %v4279, %v4420
    %v4440 = vadd.f32 %v4280, %v4425
    %v4441 = vadd.f32 %v4281, %v4430
    %v4442 = vld [vmem:[#allocation2 + $0xd] sm:$0xff]
    %v4443 = vld [vmem:[#allocation2 + $0x15] sm:$0xff]
    %v4444 = vld [vmem:[#allocation2 + $0x1d] sm:$0xff]
    %v4445 = vld [vmem:[#allocation2 + $0x25] sm:$0xff]
    %v4446 = vld [vmem:[#allocation2 + $0x2d] sm:$0xff]
    %v4447 = vld [vmem:[#allocation2 + $0x35] sm:$0xff]
    %v4448 = vld [vmem:[#allocation2 + $0x3d] sm:$0xff]
    %v4449 = vld [vmem:[#allocation2 + $0x45] sm:$0xff]
    %v4450 = vld [vmem:[#allocation2 + $0x4d] sm:$0xff]
    %s4451 = scalar_lea.vmem [#allocation11], 480
    %v4452 = vld [vmem:[%s4451] sm:$0xff]
    %v4453 = vld [vmem:[%s4451 + $0x8] sm:$0xff]
    %v4454 = vld [vmem:[%s4451 + $0x10] sm:$0xff]
    %v4455 = vld [vmem:[%s4451 + $0x18] sm:$0xff]
    %v4457 = vsel %vm247, %v4442, 0
    %v4460 = vsel %vm247, %v4443, 0
    %v4463 = vsel %vm247, %v4444, 0
    %v4466 = vsel %vm247, %v4445, 0
    %v4469 = vsel %vm247, %v4446, 0
    %v4472 = vsel %vm247, %v4447, 0
    %v4475 = vsel %vm247, %v4448, 0
    %v4478 = vsel %vm247, %v4449, 0
    %v4481 = vsel %vm247, %v4450, 0
    %4483 = vmatprep.subr.mxu0 0.0
    %4484 = vmatpush1.msra.mxu0 %v4452
    %4485 = vmatprep.subr.mxu0 0.0
    %4486 = vmatpush1.msra.mxu0 %v4453
    %4487 = vmatprep.subr.mxu0 0.0
    %4488 = vmatpush1.msra.mxu0 %v4454
    %4489 = vmatprep.subr.mxu0 0.0
    %4490 = vmatpush1.msra.mxu0 %v4455
    %4491 = vmatprep.subr.mxu0 0.0
    %4492 = vmatpush1.msra.mxu0 0.0
    %4493 = vmatprep.subr.mxu0 0.0
    %4494 = vmatpush1.msra.mxu0 0.0
    %4495 = vmatprep.subr.mxu0 0.0
    %4496 = vmatpush1.msra.mxu0 0.0
    %4497 = vmatprep.subr.mxu0 0.0
    %4498 = vmatpush1.msra.mxu0 0.0
    %4499 = vmatprep.subr.mxu0 0.0
    %4500 = vmatpush1.msra.mxu0 0.0
    %4501 = vmatprep.subr.mxu0 0.0
    %4502 = vmatpush1.msra.mxu0 0.0
    %4503 = vmatprep.subr.mxu0 0.0
    %4504 = vmatpush1.msra.mxu0 0.0
    %4505 = vmatprep.subr.mxu0 0.0
    %4506 = vmatpush1.msra.mxu0 0.0
    %4507 = vmatprep.subr.mxu0 0.0
    %4508 = vmatpush1.msra.mxu0 0.0
    %4509 = vmatprep.subr.mxu0 0.0
    %4510 = vmatpush1.msra.mxu0 0.0
    %4511 = vmatprep.subr.mxu0 0.0
    %4512 = vmatpush1.msra.mxu0 0.0
    %4513 = vmatprep.subr.mxu0 0.0
    %4514 = vmatpush1.msra.mxu0 0.0
    %4515 = vmatprep.subr.mxu0 0.0
    %4516 = vmatpush1.msra.mxu0 0.0
    %4517 = vmatprep.subr.mxu0 0.0
    %4518 = vmatpush1.msra.mxu0 0.0
    %4519 = vmatprep.subr.mxu0 0.0
    %4520 = vmatpush1.msra.mxu0 0.0
    %4521 = vmatprep.subr.mxu0 0.0
    %4522 = vmatpush1.msra.mxu0 0.0
    %4523 = vmatprep.subr.mxu0 0.0
    %4524 = vmatpush1.msra.mxu0 0.0
    %4525 = vmatprep.subr.mxu0 0.0
    %4526 = vmatpush1.msra.mxu0 0.0
    %4527 = vmatprep.subr.mxu0 0.0
    %4528 = vmatpush1.msra.mxu0 0.0
    %4529 = vmatprep.subr.mxu0 0.0
    %4530 = vmatpush1.msra.mxu0 0.0
    %4531 = vmatprep.subr.mxu0 0.0
    %4532 = vmatpush1.msra.mxu0 0.0
    %4533 = vmatprep.subr.mxu0 0.0
    %4534 = vmatpush1.msra.mxu0 0.0
    %4535 = vmatprep.subr.mxu0 0.0
    %4536 = vmatpush1.msra.mxu0 0.0
    %4537 = vmatprep.subr.mxu0 0.0
    %4538 = vmatpush1.msra.mxu0 0.0
    %4539 = vmatprep.subr.mxu0 0.0
    %4540 = vmatpush1.msra.mxu0 0.0
    %4541 = vmatprep.subr.mxu0 0.0
    %4542 = vmatpush1.msra.mxu0 0.0
    %4543 = vmatprep.subr.mxu0 0.0
    %4544 = vmatpush1.msra.mxu0 0.0
    %4545 = vmatprep.subr.mxu0 0.0
    %4546 = vmatpush1.msra.mxu0 0.0
    %4547 = vmatprep.mubr.f32.mxu0 0.0
    %4548 = vmatmul.mubr.f32.gmra.mrb[0].mxu0 %v4457
    %v4549 = vpop.f32.mrb[0].mxu0
    %v4550 = vadd.f32 0.0, %v4549
    %v4551 = vpop.f32.mrb[0].mxu0
    %4552 = vmatprep.mubr.f32.mxu0 0.0
    %4553 = vmatmul.mubr.f32.gmra.mrb[0].mxu0 %v4460
    %v4554 = vpop.f32.mrb[0].mxu0
    %v4555 = vadd.f32 0.0, %v4554
    %v4556 = vpop.f32.mrb[0].mxu0
    %4557 = vmatprep.mubr.f32.mxu0 0.0
    %4558 = vmatmul.mubr.f32.gmra.mrb[0].mxu0 %v4463
    %v4559 = vpop.f32.mrb[0].mxu0
    %v4560 = vadd.f32 0.0, %v4559
    %v4561 = vpop.f32.mrb[0].mxu0
    %4562 = vmatprep.mubr.f32.mxu0 0.0
    %4563 = vmatmul.mubr.f32.gmra.mrb[0].mxu0 %v4466
    %v4564 = vpop.f32.mrb[0].mxu0
    %v4565 = vadd.f32 0.0, %v4564
    %v4566 = vpop.f32.mrb[0].mxu0
    %4567 = vmatprep.mubr.f32.mxu0 0.0
    %4568 = vmatmul.mubr.f32.gmra.mrb[0].mxu0 %v4469
    %v4569 = vpop.f32.mrb[0].mxu0
    %v4570 = vadd.f32 0.0, %v4569
    %v4571 = vpop.f32.mrb[0].mxu0
    %4572 = vmatprep.mubr.f32.mxu0 0.0
    %4573 = vmatmul.mubr.f32.gmra.mrb[0].mxu0 %v4472
    %v4574 = vpop.f32.mrb[0].mxu0
    %v4575 = vadd.f32 0.0, %v4574
    %v4576 = vpop.f32.mrb[0].mxu0
    %4577 = vmatprep.mubr.f32.mxu0 0.0
    %4578 = vmatmul.mubr.f32.gmra.mrb[0].mxu0 %v4475
    %v4579 = vpop.f32.mrb[0].mxu0
    %v4580 = vadd.f32 0.0, %v4579
    %v4581 = vpop.f32.mrb[0].mxu0
    %4582 = vmatprep.mubr.f32.mxu0 0.0
    %4583 = vmatmul.mubr.f32.gmra.mrb[0].mxu0 %v4478
    %v4584 = vpop.f32.mrb[0].mxu0
    %v4585 = vadd.f32 0.0, %v4584
    %v4586 = vpop.f32.mrb[0].mxu0
    %4587 = vmatprep.mubr.f32.mxu0 0.0
    %4588 = vmatmul.mubr.f32.gmra.mrb[0].mxu0 %v4481
    %v4589 = vpop.f32.mrb[0].mxu0
    %v4590 = vadd.f32 0.0, %v4589
    %v4591 = vpop.f32.mrb[0].mxu0
    %4592 = vdwg.mxu0
    %v4593 = vadd.f32 %v4433, %v4550
    %v4594 = vadd.f32 %v4434, %v4555
    %v4595 = vadd.f32 %v4435, %v4560
    %v4596 = vadd.f32 %v4436, %v4565
    %v4597 = vadd.f32 %v4437, %v4570
    %v4598 = vadd.f32 %v4438, %v4575
    %v4599 = vadd.f32 %v4439, %v4580
    %v4600 = vadd.f32 %v4440, %v4585
    %v4601 = vadd.f32 %v4441, %v4590
    %v4602 = vld [vmem:[#allocation2 + $0xe] sm:$0xff]
    %v4603 = vld [vmem:[#allocation2 + $0x16] sm:$0xff]
    %v4604 = vld [vmem:[#allocation2 + $0x1e] sm:$0xff]
    %v4605 = vld [vmem:[#allocation2 + $0x26] sm:$0xff]
    %v4606 = vld [vmem:[#allocation2 + $0x2e] sm:$0xff]
    %v4607 = vld [vmem:[#allocation2 + $0x36] sm:$0xff]
    %v4608 = vld [vmem:[#allocation2 + $0x3e] sm:$0xff]
    %v4609 = vld [vmem:[#allocation2 + $0x46] sm:$0xff]
    %v4610 = vld [vmem:[#allocation2 + $0x4e] sm:$0xff]
    %s4611 = scalar_lea.vmem [#allocation11], 512
    %v4612 = vld [vmem:[%s4611] sm:$0xff]
    %v4613 = vld [vmem:[%s4611 + $0x8] sm:$0xff]
    %v4614 = vld [vmem:[%s4611 + $0x10] sm:$0xff]
    %v4615 = vld [vmem:[%s4611 + $0x18] sm:$0xff]
    %v4617 = vsel %vm247, %v4602, 0
    %v4620 = vsel %vm247, %v4603, 0
    %v4623 = vsel %vm247, %v4604, 0
    %v4626 = vsel %vm247, %v4605, 0
    %v4629 = vsel %vm247, %v4606, 0
    %v4632 = vsel %vm247, %v4607, 0
    %v4635 = vsel %vm247, %v4608, 0
    %v4638 = vsel %vm247, %v4609, 0
    %v4641 = vsel %vm247, %v4610, 0
    %4643 = vmatprep.subr.mxu0 0.0
    %4644 = vmatpush1.msra.mxu0 %v4612
    %4645 = vmatprep.subr.mxu0 0.0
    %4646 = vmatpush1.msra.mxu0 %v4613
    %4647 = vmatprep.subr.mxu0 0.0
    %4648 = vmatpush1.msra.mxu0 %v4614
    %4649 = vmatprep.subr.mxu0 0.0
    %4650 = vmatpush1.msra.mxu0 %v4615
    %4651 = vmatprep.subr.mxu0 0.0
    %4652 = vmatpush1.msra.mxu0 0.0
    %4653 = vmatprep.subr.mxu0 0.0
    %4654 = vmatpush1.msra.mxu0 0.0
    %4655 = vmatprep.subr.mxu0 0.0
    %4656 = vmatpush1.msra.mxu0 0.0
    %4657 = vmatprep.subr.mxu0 0.0
    %4658 = vmatpush1.msra.mxu0 0.0
    %4659 = vmatprep.subr.mxu0 0.0
    %4660 = vmatpush1.msra.mxu0 0.0
    %4661 = vmatprep.subr.mxu0 0.0
    %4662 = vmatpush1.msra.mxu0 0.0
    %4663 = vmatprep.subr.mxu0 0.0
    %4664 = vmatpush1.msra.mxu0 0.0
    %4665 = vmatprep.subr.mxu0 0.0
    %4666 = vmatpush1.msra.mxu0 0.0
    %4667 = vmatprep.subr.mxu0 0.0
    %4668 = vmatpush1.msra.mxu0 0.0
    %4669 = vmatprep.subr.mxu0 0.0
    %4670 = vmatpush1.msra.mxu0 0.0
    %4671 = vmatprep.subr.mxu0 0.0
    %4672 = vmatpush1.msra.mxu0 0.0
    %4673 = vmatprep.subr.mxu0 0.0
    %4674 = vmatpush1.msra.mxu0 0.0
    %4675 = vmatprep.subr.mxu0 0.0
    %4676 = vmatpush1.msra.mxu0 0.0
    %4677 = vmatprep.subr.mxu0 0.0
    %4678 = vmatpush1.msra.mxu0 0.0
    %4679 = vmatprep.subr.mxu0 0.0
    %4680 = vmatpush1.msra.mxu0 0.0
    %4681 = vmatprep.subr.mxu0 0.0
    %4682 = vmatpush1.msra.mxu0 0.0
    %4683 = vmatprep.subr.mxu0 0.0
    %4684 = vmatpush1.msra.mxu0 0.0
    %4685 = vmatprep.subr.mxu0 0.0
    %4686 = vmatpush1.msra.mxu0 0.0
    %4687 = vmatprep.subr.mxu0 0.0
    %4688 = vmatpush1.msra.mxu0 0.0
    %4689 = vmatprep.subr.mxu0 0.0
    %4690 = vmatpush1.msra.mxu0 0.0
    %4691 = vmatprep.subr.mxu0 0.0
    %4692 = vmatpush1.msra.mxu0 0.0
    %4693 = vmatprep.subr.mxu0 0.0
    %4694 = vmatpush1.msra.mxu0 0.0
    %4695 = vmatprep.subr.mxu0 0.0
    %4696 = vmatpush1.msra.mxu0 0.0
    %4697 = vmatprep.subr.mxu0 0.0
    %4698 = vmatpush1.msra.mxu0 0.0
    %4699 = vmatprep.subr.mxu0 0.0
    %4700 = vmatpush1.msra.mxu0 0.0
    %4701 = vmatprep.subr.mxu0 0.0
    %4702 = vmatpush1.msra.mxu0 0.0
    %4703 = vmatprep.subr.mxu0 0.0
    %4704 = vmatpush1.msra.mxu0 0.0
    %4705 = vmatprep.subr.mxu0 0.0
    %4706 = vmatpush1.msra.mxu0 0.0
    %4707 = vmatprep.mubr.f32.mxu0 0.0
    %4708 = vmatmul.mubr.f32.gmra.mrb[0].mxu0 %v4617
    %v4709 = vpop.f32.mrb[0].mxu0
    %v4710 = vadd.f32 0.0, %v4709
    %v4711 = vpop.f32.mrb[0].mxu0
    %4712 = vmatprep.mubr.f32.mxu0 0.0
    %4713 = vmatmul.mubr.f32.gmra.mrb[0].mxu0 %v4620
    %v4714 = vpop.f32.mrb[0].mxu0
    %v4715 = vadd.f32 0.0, %v4714
    %v4716 = vpop.f32.mrb[0].mxu0
    %4717 = vmatprep.mubr.f32.mxu0 0.0
    %4718 = vmatmul.mubr.f32.gmra.mrb[0].mxu0 %v4623
    %v4719 = vpop.f32.mrb[0].mxu0
    %v4720 = vadd.f32 0.0, %v4719
    %v4721 = vpop.f32.mrb[0].mxu0
    %4722 = vmatprep.mubr.f32.mxu0 0.0
    %4723 = vmatmul.mubr.f32.gmra.mrb[0].mxu0 %v4626
    %v4724 = vpop.f32.mrb[0].mxu0
    %v4725 = vadd.f32 0.0, %v4724
    %v4726 = vpop.f32.mrb[0].mxu0
    %4727 = vmatprep.mubr.f32.mxu0 0.0
    %4728 = vmatmul.mubr.f32.gmra.mrb[0].mxu0 %v4629
    %v4729 = vpop.f32.mrb[0].mxu0
    %v4730 = vadd.f32 0.0, %v4729
    %v4731 = vpop.f32.mrb[0].mxu0
    %4732 = vmatprep.mubr.f32.mxu0 0.0
    %4733 = vmatmul.mubr.f32.gmra.mrb[0].mxu0 %v4632
    %v4734 = vpop.f32.mrb[0].mxu0
    %v4735 = vadd.f32 0.0, %v4734
    %v4736 = vpop.f32.mrb[0].mxu0
    %4737 = vmatprep.mubr.f32.mxu0 0.0
    %4738 = vmatmul.mubr.f32.gmra.mrb[0].mxu0 %v4635
    %v4739 = vpop.f32.mrb[0].mxu0
    %v4740 = vadd.f32 0.0, %v4739
    %v4741 = vpop.f32.mrb[0].mxu0
    %4742 = vmatprep.mubr.f32.mxu0 0.0
    %4743 = vmatmul.mubr.f32.gmra.mrb[0].mxu0 %v4638
    %v4744 = vpop.f32.mrb[0].mxu0
    %v4745 = vadd.f32 0.0, %v4744
    %v4746 = vpop.f32.mrb[0].mxu0
    %4747 = vmatprep.mubr.f32.mxu0 0.0
    %4748 = vmatmul.mubr.f32.gmra.mrb[0].mxu0 %v4641
    %v4749 = vpop.f32.mrb[0].mxu0
    %v4750 = vadd.f32 0.0, %v4749
    %v4751 = vpop.f32.mrb[0].mxu0
    %4752 = vdwg.mxu0
    %v4753 = vadd.f32 %v4593, %v4710
    %v4754 = vadd.f32 %v4594, %v4715
    %v4755 = vadd.f32 %v4595, %v4720
    %v4756 = vadd.f32 %v4596, %v4725
    %v4757 = vadd.f32 %v4597, %v4730
    %v4758 = vadd.f32 %v4598, %v4735
    %v4759 = vadd.f32 %v4599, %v4740
    %v4760 = vadd.f32 %v4600, %v4745
    %v4761 = vadd.f32 %v4601, %v4750
    %v4762 = vld [vmem:[#allocation2 + $0xf] sm:$0xff]
    %v4763 = vld [vmem:[#allocation2 + $0x17] sm:$0xff]
    %v4764 = vld [vmem:[#allocation2 + $0x1f] sm:$0xff]
    %v4765 = vld [vmem:[#allocation2 + $0x27] sm:$0xff]
    %v4766 = vld [vmem:[#allocation2 + $0x2f] sm:$0xff]
    %v4767 = vld [vmem:[#allocation2 + $0x37] sm:$0xff]
    %v4768 = vld [vmem:[#allocation2 + $0x3f] sm:$0xff]
    %v4769 = vld [vmem:[#allocation2 + $0x47] sm:$0xff]
    %v4770 = vld [vmem:[#allocation2 + $0x4f] sm:$0xff]
    %s4771 = scalar_lea.vmem [#allocation11], 544
    %v4772 = vld [vmem:[%s4771] sm:$0xff]
    %v4773 = vld [vmem:[%s4771 + $0x8] sm:$0xff]
    %v4774 = vld [vmem:[%s4771 + $0x10] sm:$0xff]
    %v4775 = vld [vmem:[%s4771 + $0x18] sm:$0xff]
    %v4777 = vsel %vm247, %v4762, 0
    %v4780 = vsel %vm247, %v4763, 0
    %v4783 = vsel %vm247, %v4764, 0
    %v4786 = vsel %vm247, %v4765, 0
    %v4789 = vsel %vm247, %v4766, 0
    %v4792 = vsel %vm247, %v4767, 0
    %v4795 = vsel %vm247, %v4768, 0
    %v4798 = vsel %vm247, %v4769, 0
    %v4801 = vsel %vm247, %v4770, 0
    %4803 = vmatprep.subr.mxu0 0.0
    %4804 = vmatpush1.msra.mxu0 %v4772
    %4805 = vmatprep.subr.mxu0 0.0
    %4806 = vmatpush1.msra.mxu0 %v4773
    %4807 = vmatprep.subr.mxu0 0.0
    %4808 = vmatpush1.msra.mxu0 %v4774
    %4809 = vmatprep.subr.mxu0 0.0
    %4810 = vmatpush1.msra.mxu0 %v4775
    %4811 = vmatprep.subr.mxu0 0.0
    %4812 = vmatpush1.msra.mxu0 0.0
    %4813 = vmatprep.subr.mxu0 0.0
    %4814 = vmatpush1.msra.mxu0 0.0
    %4815 = vmatprep.subr.mxu0 0.0
    %4816 = vmatpush1.msra.mxu0 0.0
    %4817 = vmatprep.subr.mxu0 0.0
    %4818 = vmatpush1.msra.mxu0 0.0
    %4819 = vmatprep.subr.mxu0 0.0
    %4820 = vmatpush1.msra.mxu0 0.0
    %4821 = vmatprep.subr.mxu0 0.0
    %4822 = vmatpush1.msra.mxu0 0.0
    %4823 = vmatprep.subr.mxu0 0.0
    %4824 = vmatpush1.msra.mxu0 0.0
    %4825 = vmatprep.subr.mxu0 0.0
    %4826 = vmatpush1.msra.mxu0 0.0
    %4827 = vmatprep.subr.mxu0 0.0
    %4828 = vmatpush1.msra.mxu0 0.0
    %4829 = vmatprep.subr.mxu0 0.0
    %4830 = vmatpush1.msra.mxu0 0.0
    %4831 = vmatprep.subr.mxu0 0.0
    %4832 = vmatpush1.msra.mxu0 0.0
    %4833 = vmatprep.subr.mxu0 0.0
    %4834 = vmatpush1.msra.mxu0 0.0
    %4835 = vmatprep.subr.mxu0 0.0
    %4836 = vmatpush1.msra.mxu0 0.0
    %4837 = vmatprep.subr.mxu0 0.0
    %4838 = vmatpush1.msra.mxu0 0.0
    %4839 = vmatprep.subr.mxu0 0.0
    %4840 = vmatpush1.msra.mxu0 0.0
    %4841 = vmatprep.subr.mxu0 0.0
    %4842 = vmatpush1.msra.mxu0 0.0
    %4843 = vmatprep.subr.mxu0 0.0
    %4844 = vmatpush1.msra.mxu0 0.0
    %4845 = vmatprep.subr.mxu0 0.0
    %4846 = vmatpush1.msra.mxu0 0.0
    %4847 = vmatprep.subr.mxu0 0.0
    %4848 = vmatpush1.msra.mxu0 0.0
    %4849 = vmatprep.subr.mxu0 0.0
    %4850 = vmatpush1.msra.mxu0 0.0
    %4851 = vmatprep.subr.mxu0 0.0
    %4852 = vmatpush1.msra.mxu0 0.0
    %4853 = vmatprep.subr.mxu0 0.0
    %4854 = vmatpush1.msra.mxu0 0.0
    %4855 = vmatprep.subr.mxu0 0.0
    %4856 = vmatpush1.msra.mxu0 0.0
    %4857 = vmatprep.subr.mxu0 0.0
    %4858 = vmatpush1.msra.mxu0 0.0
    %4859 = vmatprep.subr.mxu0 0.0
    %4860 = vmatpush1.msra.mxu0 0.0
    %4861 = vmatprep.subr.mxu0 0.0
    %4862 = vmatpush1.msra.mxu0 0.0
    %4863 = vmatprep.subr.mxu0 0.0
    %4864 = vmatpush1.msra.mxu0 0.0
    %4865 = vmatprep.subr.mxu0 0.0
    %4866 = vmatpush1.msra.mxu0 0.0
    %4867 = vmatprep.mubr.f32.mxu0 0.0
    %4868 = vmatmul.mubr.f32.gmra.mrb[0].mxu0 %v4777
    %v4869 = vpop.f32.mrb[0].mxu0
    %v4870 = vadd.f32 0.0, %v4869
    %v4871 = vpop.f32.mrb[0].mxu0
    %4872 = vmatprep.mubr.f32.mxu0 0.0
    %4873 = vmatmul.mubr.f32.gmra.mrb[0].mxu0 %v4780
    %v4874 = vpop.f32.mrb[0].mxu0
    %v4875 = vadd.f32 0.0, %v4874
    %v4876 = vpop.f32.mrb[0].mxu0
    %4877 = vmatprep.mubr.f32.mxu0 0.0
    %4878 = vmatmul.mubr.f32.gmra.mrb[0].mxu0 %v4783
    %v4879 = vpop.f32.mrb[0].mxu0
    %v4880 = vadd.f32 0.0, %v4879
    %v4881 = vpop.f32.mrb[0].mxu0
    %4882 = vmatprep.mubr.f32.mxu0 0.0
    %4883 = vmatmul.mubr.f32.gmra.mrb[0].mxu0 %v4786
    %v4884 = vpop.f32.mrb[0].mxu0
    %v4885 = vadd.f32 0.0, %v4884
    %v4886 = vpop.f32.mrb[0].mxu0
    %4887 = vmatprep.mubr.f32.mxu0 0.0
    %4888 = vmatmul.mubr.f32.gmra.mrb[0].mxu0 %v4789
    %v4889 = vpop.f32.mrb[0].mxu0
    %v4890 = vadd.f32 0.0, %v4889
    %v4891 = vpop.f32.mrb[0].mxu0
    %4892 = vmatprep.mubr.f32.mxu0 0.0
    %4893 = vmatmul.mubr.f32.gmra.mrb[0].mxu0 %v4792
    %v4894 = vpop.f32.mrb[0].mxu0
    %v4895 = vadd.f32 0.0, %v4894
    %v4896 = vpop.f32.mrb[0].mxu0
    %4897 = vmatprep.mubr.f32.mxu0 0.0
    %4898 = vmatmul.mubr.f32.gmra.mrb[0].mxu0 %v4795
    %v4899 = vpop.f32.mrb[0].mxu0
    %v4900 = vadd.f32 0.0, %v4899
    %v4901 = vpop.f32.mrb[0].mxu0
    %4902 = vmatprep.mubr.f32.mxu0 0.0
    %4903 = vmatmul.mubr.f32.gmra.mrb[0].mxu0 %v4798
    %v4904 = vpop.f32.mrb[0].mxu0
    %v4905 = vadd.f32 0.0, %v4904
    %v4906 = vpop.f32.mrb[0].mxu0
    %4907 = vmatprep.mubr.f32.mxu0 0.0
    %4908 = vmatmul.mubr.f32.gmra.mrb[0].mxu0 %v4801
    %v4909 = vpop.f32.mrb[0].mxu0
    %v4910 = vadd.f32 0.0, %v4909
    %v4911 = vpop.f32.mrb[0].mxu0
    %4912 = vdwg.mxu0
    %v4913 = vadd.f32 %v4753, %v4870
    %v4914 = vadd.f32 %v4754, %v4875
    %v4915 = vadd.f32 %v4755, %v4880
    %v4916 = vadd.f32 %v4756, %v4885
    %v4917 = vadd.f32 %v4757, %v4890
    %v4918 = vadd.f32 %v4758, %v4895
    %v4919 = vadd.f32 %v4759, %v4900
    %v4920 = vadd.f32 %v4760, %v4905
    %v4921 = vadd.f32 %v4761, %v4910
    %v4922 = vmul.f32 %v4913, %v1523
    %v4923 = vmul.f32 %v4914, %v1528
    %v4924 = vmul.f32 %v4915, %v1533
    %v4925 = vmul.f32 %v4916, %v1538
    %v4926 = vmul.f32 %v4917, %v1543
    %v4927 = vmul.f32 %v4918, %v1548
    %v4928 = vmul.f32 %v4919, %v1553
    %v4929 = vmul.f32 %v4920, %v1558
    %v4930 = vmul.f32 %v4921, %v1563
    %v4931 = vsel %vm3051, %v4922, 0.0
    %v4932 = vsel %vm3051, %v4923, 0.0
    %v4933 = vadd.f32 %v4931, %v4932
    %v4934 = vsel %vm3051, %v4924, 0.0
    %v4935 = vadd.f32 %v4933, %v4934
    %v4936 = vsel %vm3051, %v4925, 0.0
    %v4937 = vadd.f32 %v4935, %v4936
    %v4938 = vsel %vm3051, %v4926, 0.0
    %v4939 = vadd.f32 %v4937, %v4938
    %v4940 = vsel %vm3051, %v4927, 0.0
    %v4941 = vadd.f32 %v4939, %v4940
    %v4942 = vsel %vm3051, %v4928, 0.0
    %v4943 = vadd.f32 %v4941, %v4942
    %v4944 = vsel %vm3051, %v4929, 0.0
    %v4945 = vadd.f32 %v4943, %v4944
    %v4946 = vsel %vm3051, %v4930, 0.0
    %v4947 = vadd.f32 %v4945, %v4946
    %v4948 = vrot.slane %v4947, 4
    %v4949 = vadd.f32 %v4947, %v4948
    %v4950 = vrot.slane %v4949, 2
    %v4951 = vadd.f32 %v4949, %v4950
    %v4952 = vrot.slane %v4951, 1
    %v4953 = vadd.f32 %v4951, %v4952
    %v4954 = vmul.f32 %v4953, 0.03125
    %v4955 = vsub.f32 %v4913, %v4954
    %v4956 = vsub.f32 %v4914, %v4954
    %v4957 = vsub.f32 %v4915, %v4954
    %v4958 = vsub.f32 %v4916, %v4954
    %v4959 = vsub.f32 %v4917, %v4954
    %v4960 = vsub.f32 %v4918, %v4954
    %v4961 = vsub.f32 %v4919, %v4954
    %v4962 = vsub.f32 %v4920, %v4954
    %v4963 = vsub.f32 %v4921, %v4954
    %v4964 = vmul.f32 %v4955, %v1523
    %v4965 = vmul.f32 %v4956, %v1528
    %v4966 = vmul.f32 %v4957, %v1533
    %v4967 = vmul.f32 %v4958, %v1538
    %v4968 = vmul.f32 %v4959, %v1543
    %v4969 = vmul.f32 %v4960, %v1548
    %v4970 = vmul.f32 %v4961, %v1553
    %v4971 = vmul.f32 %v4962, %v1558
    %v4972 = vmul.f32 %v4963, %v1563
    %v4973 = vmul.f32 %v4964, %v4964
    %v4974 = vmul.f32 %v4965, %v4965
    %v4975 = vmul.f32 %v4966, %v4966
    %v4976 = vmul.f32 %v4967, %v4967
    %v4977 = vmul.f32 %v4968, %v4968
    %v4978 = vmul.f32 %v4969, %v4969
    %v4979 = vmul.f32 %v4970, %v4970
    %v4980 = vmul.f32 %v4971, %v4971
    %v4981 = vmul.f32 %v4972, %v4972
    %v4982 = vsel %vm3051, %v4973, 0.0
    %v4983 = vsel %vm3051, %v4974, 0.0
    %v4984 = vadd.f32 %v4982, %v4983
    %v4985 = vsel %vm3051, %v4975, 0.0
    %v4986 = vadd.f32 %v4984, %v4985
    %v4987 = vsel %vm3051, %v4976, 0.0
    %v4988 = vadd.f32 %v4986, %v4987
    %v4989 = vsel %vm3051, %v4977, 0.0
    %v4990 = vadd.f32 %v4988, %v4989
    %v4991 = vsel %vm3051, %v4978, 0.0
    %v4992 = vadd.f32 %v4990, %v4991
    %v4993 = vsel %vm3051, %v4979, 0.0
    %v4994 = vadd.f32 %v4992, %v4993
    %v4995 = vsel %vm3051, %v4980, 0.0
    %v4996 = vadd.f32 %v4994, %v4995
    %v4997 = vsel %vm3051, %v4981, 0.0
    %v4998 = vadd.f32 %v4996, %v4997
    %v4999 = vrot.slane %v4998, 4
    %v5000 = vadd.f32 %v4998, %v4999
    %v5001 = vrot.slane %v5000, 2
    %v5002 = vadd.f32 %v5000, %v5001
    %v5003 = vrot.slane %v5002, 1
    %v5004 = vadd.f32 %v5002, %v5003
    %v5005 = vmul.f32 %v5004, 0.03125
    %s5006 = scalar_lea.vmem [#allocation12], 1
    %v5007 = vld [vmem:[%s5006] sm:$0x1]
    %v5008 = vadd.f32 %v5005, 1e-05
    %v5009 = vrsqrt.pop %v5008
    %v5010 = vmul.f32 %v5007, %v5009
    %v5012 = vlaneseq
    %v5013 = vshrl.u32 %v5012, 7
    %v5014 = vsub.s32 0, %v5013
    %v5015 = vrot.slane %v5010, %v5014
    %v5017 = vmul.f32 %v4964, %v5015
    %v5018 = vmul.f32 %v4965, %v5015
    %v5019 = vmul.f32 %v4966, %v5015
    %v5020 = vmul.f32 %v4967, %v5015
    %v5021 = vmul.f32 %v4968, %v5015
    %v5022 = vmul.f32 %v4969, %v5015
    %v5023 = vmul.f32 %v4970, %v5015
    %v5024 = vmul.f32 %v4971, %v5015
    %v5025 = vmul.f32 %v4972, %v5015
    %s5026 = scalar_lea.vmem [#allocation14], 1
    %v5027 = vld [vmem:[%s5026] sm:$0x1]
    %v5029 = vlaneseq
    %v5030 = vshrl.u32 %v5029, 7
    %v5031 = vsub.s32 0, %v5030
    %v5032 = vrot.slane %v5027, %v5031
    %v5034 = vadd.f32 %v5017, %v5032
    %v5035 = vadd.f32 %v5018, %v5032
    %v5036 = vadd.f32 %v5019, %v5032
    %v5037 = vadd.f32 %v5020, %v5032
    %v5038 = vadd.f32 %v5021, %v5032
    %v5039 = vadd.f32 %v5022, %v5032
    %v5040 = vadd.f32 %v5023, %v5032
    %v5041 = vadd.f32 %v5024, %v5032
    %v5042 = vadd.f32 %v5025, %v5032
    %vm5043 = vcmp.ge.f32.partialorder %v5034, 0.0
    %vm5044 = vcmp.ge.f32.partialorder %v5035, 0.0
    %vm5045 = vcmp.ge.f32.partialorder %v5036, 0.0
    %vm5046 = vcmp.ge.f32.partialorder %v5037, 0.0
    %vm5047 = vcmp.ge.f32.partialorder %v5038, 0.0
    %vm5048 = vcmp.ge.f32.partialorder %v5039, 0.0
    %vm5049 = vcmp.ge.f32.partialorder %v5040, 0.0
    %vm5050 = vcmp.ge.f32.partialorder %v5041, 0.0
    %vm5051 = vcmp.ge.f32.partialorder %v5042, 0.0
    %v5052 = vmul.f32 %v5034, 0.01
    %v5053 = vmul.f32 %v5035, 0.01
    %v5054 = vmul.f32 %v5036, 0.01
    %v5055 = vmul.f32 %v5037, 0.01
    %v5056 = vmul.f32 %v5038, 0.01
    %v5057 = vmul.f32 %v5039, 0.01
    %v5058 = vmul.f32 %v5040, 0.01
    %v5059 = vmul.f32 %v5041, 0.01
    %v5060 = vmul.f32 %v5042, 0.01
    %v5061 = vsel %vm5043, %v5034, %v5052
    %v5062 = vsel %vm5044, %v5035, %v5053
    %v5063 = vsel %vm5045, %v5036, %v5054
    %v5064 = vsel %vm5046, %v5037, %v5055
    %v5065 = vsel %vm5047, %v5038, %v5056
    %v5066 = vsel %vm5048, %v5039, %v5057
    %v5067 = vsel %vm5049, %v5040, %v5058
    %v5068 = vsel %vm5050, %v5041, %v5059
    %v5069 = vsel %vm5051, %v5042, %v5060
    %s5070 = scalar_lea.vmem [#allocation15], 8
    %v5071 = vld [vmem:[%s5070] sm:$0xff]
    %v5073 = vsel %vm3051, %v5061, 0
    %v5076 = vsel %vm3051, %v5062, 0
    %v5079 = vsel %vm3051, %v5063, 0
    %v5082 = vsel %vm3051, %v5064, 0
    %v5085 = vsel %vm3051, %v5065, 0
    %v5088 = vsel %vm3051, %v5066, 0
    %v5091 = vsel %vm3051, %v5067, 0
    %v5094 = vsel %vm3051, %v5068, 0
    %v5097 = vsel %vm3051, %v5069, 0
    %5099 = vmatprep.subr.mxu0 0.0
    %5100 = vmatpush1.msra.mxu0 %v5071
    %5101 = vmatprep.subr.mxu0 0.0
    %5102 = vmatpush1.msra.mxu0 0.0
    %5103 = vmatprep.subr.mxu0 0.0
    %5104 = vmatpush1.msra.mxu0 0.0
    %5105 = vmatprep.subr.mxu0 0.0
    %5106 = vmatpush1.msra.mxu0 0.0
    %5107 = vmatprep.subr.mxu0 0.0
    %5108 = vmatpush1.msra.mxu0 0.0
    %5109 = vmatprep.subr.mxu0 0.0
    %5110 = vmatpush1.msra.mxu0 0.0
    %5111 = vmatprep.subr.mxu0 0.0
    %5112 = vmatpush1.msra.mxu0 0.0
    %5113 = vmatprep.subr.mxu0 0.0
    %5114 = vmatpush1.msra.mxu0 0.0
    %5115 = vmatprep.subr.mxu0 0.0
    %5116 = vmatpush1.msra.mxu0 0.0
    %5117 = vmatprep.subr.mxu0 0.0
    %5118 = vmatpush1.msra.mxu0 0.0
    %5119 = vmatprep.subr.mxu0 0.0
    %5120 = vmatpush1.msra.mxu0 0.0
    %5121 = vmatprep.subr.mxu0 0.0
    %5122 = vmatpush1.msra.mxu0 0.0
    %5123 = vmatprep.subr.mxu0 0.0
    %5124 = vmatpush1.msra.mxu0 0.0
    %5125 = vmatprep.subr.mxu0 0.0
    %5126 = vmatpush1.msra.mxu0 0.0
    %5127 = vmatprep.subr.mxu0 0.0
    %5128 = vmatpush1.msra.mxu0 0.0
    %5129 = vmatprep.subr.mxu0 0.0
    %5130 = vmatpush1.msra.mxu0 0.0
    %5131 = vmatprep.subr.mxu0 0.0
    %5132 = vmatpush1.msra.mxu0 0.0
    %5133 = vmatprep.subr.mxu0 0.0
    %5134 = vmatpush1.msra.mxu0 0.0
    %5135 = vmatprep.subr.mxu0 0.0
    %5136 = vmatpush1.msra.mxu0 0.0
    %5137 = vmatprep.subr.mxu0 0.0
    %5138 = vmatpush1.msra.mxu0 0.0
    %5139 = vmatprep.subr.mxu0 0.0
    %5140 = vmatpush1.msra.mxu0 0.0
    %5141 = vmatprep.subr.mxu0 0.0
    %5142 = vmatpush1.msra.mxu0 0.0
    %5143 = vmatprep.subr.mxu0 0.0
    %5144 = vmatpush1.msra.mxu0 0.0
    %5145 = vmatprep.subr.mxu0 0.0
    %5146 = vmatpush1.msra.mxu0 0.0
    %5147 = vmatprep.subr.mxu0 0.0
    %5148 = vmatpush1.msra.mxu0 0.0
    %5149 = vmatprep.subr.mxu0 0.0
    %5150 = vmatpush1.msra.mxu0 0.0
    %5151 = vmatprep.subr.mxu0 0.0
    %5152 = vmatpush1.msra.mxu0 0.0
    %5153 = vmatprep.subr.mxu0 0.0
    %5154 = vmatpush1.msra.mxu0 0.0
    %5155 = vmatprep.subr.mxu0 0.0
    %5156 = vmatpush1.msra.mxu0 0.0
    %5157 = vmatprep.subr.mxu0 0.0
    %5158 = vmatpush1.msra.mxu0 0.0
    %5159 = vmatprep.subr.mxu0 0.0
    %5160 = vmatpush1.msra.mxu0 0.0
    %5161 = vmatprep.subr.mxu0 0.0
    %5162 = vmatpush1.msra.mxu0 0.0
    %5163 = vmatprep.mubr.f32.mxu0 0.0
    %5164 = vmatmul.mubr.f32.gmra.mrb[0].mxu0 %v5073
    %v5165 = vpop.f32.mrb[0].mxu0
    %v5166 = vadd.f32 0.0, %v5165
    %v5167 = vpop.f32.mrb[0].mxu0
    %5168 = vmatprep.mubr.f32.mxu0 0.0
    %5169 = vmatmul.mubr.f32.gmra.mrb[0].mxu0 %v5076
    %v5170 = vpop.f32.mrb[0].mxu0
    %v5171 = vadd.f32 0.0, %v5170
    %v5172 = vpop.f32.mrb[0].mxu0
    %5173 = vmatprep.mubr.f32.mxu0 0.0
    %5174 = vmatmul.mubr.f32.gmra.mrb[0].mxu0 %v5079
    %v5175 = vpop.f32.mrb[0].mxu0
    %v5176 = vadd.f32 0.0, %v5175
    %v5177 = vpop.f32.mrb[0].mxu0
    %5178 = vmatprep.mubr.f32.mxu0 0.0
    %5179 = vmatmul.mubr.f32.gmra.mrb[0].mxu0 %v5082
    %v5180 = vpop.f32.mrb[0].mxu0
    %v5181 = vadd.f32 0.0, %v5180
    %v5182 = vpop.f32.mrb[0].mxu0
    %5183 = vmatprep.mubr.f32.mxu0 0.0
    %5184 = vmatmul.mubr.f32.gmra.mrb[0].mxu0 %v5085
    %v5185 = vpop.f32.mrb[0].mxu0
    %v5186 = vadd.f32 0.0, %v5185
    %v5187 = vpop.f32.mrb[0].mxu0
    %5188 = vmatprep.mubr.f32.mxu0 0.0
    %5189 = vmatmul.mubr.f32.gmra.mrb[0].mxu0 %v5088
    %v5190 = vpop.f32.mrb[0].mxu0
    %v5191 = vadd.f32 0.0, %v5190
    %v5192 = vpop.f32.mrb[0].mxu0
    %5193 = vmatprep.mubr.f32.mxu0 0.0
    %5194 = vmatmul.mubr.f32.gmra.mrb[0].mxu0 %v5091
    %v5195 = vpop.f32.mrb[0].mxu0
    %v5196 = vadd.f32 0.0, %v5195
    %v5197 = vpop.f32.mrb[0].mxu0
    %5198 = vmatprep.mubr.f32.mxu0 0.0
    %5199 = vmatmul.mubr.f32.gmra.mrb[0].mxu0 %v5094
    %v5200 = vpop.f32.mrb[0].mxu0
    %v5201 = vadd.f32 0.0, %v5200
    %v5202 = vpop.f32.mrb[0].mxu0
    %5203 = vmatprep.mubr.f32.mxu0 0.0
    %5204 = vmatmul.mubr.f32.gmra.mrb[0].mxu0 %v5097
    %v5205 = vpop.f32.mrb[0].mxu0
    %v5206 = vadd.f32 0.0, %v5205
    %v5207 = vpop.f32.mrb[0].mxu0
    %5208 = vdwg.mxu0
    %v5209 = vmul.f32 %v5166, %v1523
    %v5210 = vmul.f32 %v5171, %v1528
    %v5211 = vmul.f32 %v5176, %v1533
    %v5212 = vmul.f32 %v5181, %v1538
    %v5213 = vmul.f32 %v5186, %v1543
    %v5214 = vmul.f32 %v5191, %v1548
    %v5215 = vmul.f32 %v5196, %v1553
    %v5216 = vmul.f32 %v5201, %v1558
    %v5217 = vmul.f32 %v5206, %v1563
    %v5218 = vsel %vm247, %v5209, 0.0
    %v5219 = vsel %vm247, %v5210, 0.0
    %v5220 = vadd.f32 %v5218, %v5219
    %v5221 = vsel %vm247, %v5211, 0.0
    %v5222 = vadd.f32 %v5220, %v5221
    %v5223 = vsel %vm247, %v5212, 0.0
    %v5224 = vadd.f32 %v5222, %v5223
    %v5225 = vsel %vm247, %v5213, 0.0
    %v5226 = vadd.f32 %v5224, %v5225
    %v5227 = vsel %vm247, %v5214, 0.0
    %v5228 = vadd.f32 %v5226, %v5227
    %v5229 = vsel %vm247, %v5215, 0.0
    %v5230 = vadd.f32 %v5228, %v5229
    %v5231 = vsel %vm247, %v5216, 0.0
    %v5232 = vadd.f32 %v5230, %v5231
    %v5233 = vsel %vm247, %v5217, 0.0
    %v5234 = vadd.f32 %v5232, %v5233
    %v5235 = vrot.slane %v5234, 4
    %v5236 = vadd.f32 %v5234, %v5235
    %v5237 = vrot.slane %v5236, 2
    %v5238 = vadd.f32 %v5236, %v5237
    %v5239 = vrot.slane %v5238, 1
    %v5240 = vadd.f32 %v5238, %v5239
    %v5241 = vmul.f32 %v5240, 0.03125
    %v5242 = vsub.f32 %v5166, %v5241
    %v5243 = vsub.f32 %v5171, %v5241
    %v5244 = vsub.f32 %v5176, %v5241
    %v5245 = vsub.f32 %v5181, %v5241
    %v5246 = vsub.f32 %v5186, %v5241
    %v5247 = vsub.f32 %v5191, %v5241
    %v5248 = vsub.f32 %v5196, %v5241
    %v5249 = vsub.f32 %v5201, %v5241
    %v5250 = vsub.f32 %v5206, %v5241
    %v5251 = vmul.f32 %v5242, %v1523
    %v5252 = vmul.f32 %v5243, %v1528
    %v5253 = vmul.f32 %v5244, %v1533
    %v5254 = vmul.f32 %v5245, %v1538
    %v5255 = vmul.f32 %v5246, %v1543
    %v5256 = vmul.f32 %v5247, %v1548
    %v5257 = vmul.f32 %v5248, %v1553
    %v5258 = vmul.f32 %v5249, %v1558
    %v5259 = vmul.f32 %v5250, %v1563
    %v5260 = vmul.f32 %v5251, %v5251
    %v5261 = vmul.f32 %v5252, %v5252
    %v5262 = vmul.f32 %v5253, %v5253
    %v5263 = vmul.f32 %v5254, %v5254
    %v5264 = vmul.f32 %v5255, %v5255
    %v5265 = vmul.f32 %v5256, %v5256
    %v5266 = vmul.f32 %v5257, %v5257
    %v5267 = vmul.f32 %v5258, %v5258
    %v5268 = vmul.f32 %v5259, %v5259
    %v5269 = vsel %vm247, %v5260, 0.0
    %v5270 = vsel %vm247, %v5261, 0.0
    %v5271 = vadd.f32 %v5269, %v5270
    %v5272 = vsel %vm247, %v5262, 0.0
    %v5273 = vadd.f32 %v5271, %v5272
    %v5274 = vsel %vm247, %v5263, 0.0
    %v5275 = vadd.f32 %v5273, %v5274
    %v5276 = vsel %vm247, %v5264, 0.0
    %v5277 = vadd.f32 %v5275, %v5276
    %v5278 = vsel %vm247, %v5265, 0.0
    %v5279 = vadd.f32 %v5277, %v5278
    %v5280 = vsel %vm247, %v5266, 0.0
    %v5281 = vadd.f32 %v5279, %v5280
    %v5282 = vsel %vm247, %v5267, 0.0
    %v5283 = vadd.f32 %v5281, %v5282
    %v5284 = vsel %vm247, %v5268, 0.0
    %v5285 = vadd.f32 %v5283, %v5284
    %v5286 = vrot.slane %v5285, 4
    %v5287 = vadd.f32 %v5285, %v5286
    %v5288 = vrot.slane %v5287, 2
    %v5289 = vadd.f32 %v5287, %v5288
    %v5290 = vrot.slane %v5289, 1
    %v5291 = vadd.f32 %v5289, %v5290
    %v5292 = vmul.f32 %v5291, 0.03125
    %s5293 = scalar_lea.vmem [#allocation17], 1
    %v5294 = vld [vmem:[%s5293] sm:$0x1]
    %v5295 = vadd.f32 %v5292, 1e-05
    %v5296 = vrsqrt.pop %v5295
    %v5297 = vmul.f32 %v5294, %v5296
    %v5299 = vlaneseq
    %v5300 = vshrl.u32 %v5299, 7
    %v5301 = vsub.s32 0, %v5300
    %v5302 = vrot.slane %v5297, %v5301
    %v5304 = vmul.f32 %v5251, %v5302
    %v5305 = vmul.f32 %v5252, %v5302
    %v5306 = vmul.f32 %v5253, %v5302
    %v5307 = vmul.f32 %v5254, %v5302
    %v5308 = vmul.f32 %v5255, %v5302
    %v5309 = vmul.f32 %v5256, %v5302
    %v5310 = vmul.f32 %v5257, %v5302
    %v5311 = vmul.f32 %v5258, %v5302
    %v5312 = vmul.f32 %v5259, %v5302
    %s5313 = scalar_lea.vmem [#allocation18], 1
    %v5314 = vld [vmem:[%s5313] sm:$0x1]
    %v5316 = vlaneseq
    %v5317 = vshrl.u32 %v5316, 7
    %v5318 = vsub.s32 0, %v5317
    %v5319 = vrot.slane %v5314, %v5318
    %v5321 = vadd.f32 %v5304, %v5319
    %v5322 = vadd.f32 %v5305, %v5319
    %v5323 = vadd.f32 %v5306, %v5319
    %v5324 = vadd.f32 %v5307, %v5319
    %v5325 = vadd.f32 %v5308, %v5319
    %v5326 = vadd.f32 %v5309, %v5319
    %v5327 = vadd.f32 %v5310, %v5319
    %v5328 = vadd.f32 %v5311, %v5319
    %v5329 = vadd.f32 %v5312, %v5319
    %v5330 = vadd.f32 %v5321, %v3482
    %v5331 = vadd.f32 %v5322, %v3483
    %v5332 = vadd.f32 %v5323, %v3484
    %v5333 = vadd.f32 %v5324, %v3485
    %v5334 = vadd.f32 %v5325, %v3486
    %v5335 = vadd.f32 %v5326, %v3487
    %v5336 = vadd.f32 %v5327, %v3488
    %v5337 = vadd.f32 %v5328, %v3489
    %v5338 = vadd.f32 %v5329, %v3490
    %v5339 = vmul.f32 %v5330, %v1523
    %v5340 = vmul.f32 %v5331, %v1528
    %v5341 = vmul.f32 %v5332, %v1533
    %v5342 = vmul.f32 %v5333, %v1538
    %v5343 = vmul.f32 %v5334, %v1543
    %v5344 = vmul.f32 %v5335, %v1548
    %v5345 = vmul.f32 %v5336, %v1553
    %v5346 = vmul.f32 %v5337, %v1558
    %v5347 = vmul.f32 %v5338, %v1563
    %v5348 = vmax.f32 %v5339, 0.0
    %v5349 = vmax.f32 %v5340, 0.0
    %v5350 = vmax.f32 %v5341, 0.0
    %v5351 = vmax.f32 %v5342, 0.0
    %v5352 = vmax.f32 %v5343, 0.0
    %v5353 = vmax.f32 %v5344, 0.0
    %v5354 = vmax.f32 %v5345, 0.0
    %v5355 = vmax.f32 %v5346, 0.0
    %v5356 = vmax.f32 %v5347, 0.0
    %5357 = vst.msk [vmem:[#allocation20] sm:$0xff] %vm247, %v5348
    %5358 = vst.msk [vmem:[#allocation20 + $0x8] sm:$0xff] %vm247, %v5349
    %5359 = vst.msk [vmem:[#allocation20 + $0x10] sm:$0xff] %vm247, %v5350
    %5360 = vst.msk [vmem:[#allocation20 + $0x18] sm:$0xff] %vm247, %v5351
    %5361 = vst.msk [vmem:[#allocation20 + $0x20] sm:$0xff] %vm247, %v5352
    %5362 = vst.msk [vmem:[#allocation20 + $0x28] sm:$0xff] %vm247, %v5353
    %5363 = vst.msk [vmem:[#allocation20 + $0x30] sm:$0xff] %vm247, %v5354
    %5364 = vst.msk [vmem:[#allocation20 + $0x38] sm:$0xff] %vm247, %v5355
    %5365 = vst.msk [vmem:[#allocation20 + $0x40] sm:$0xff] %vm247, %v5356
    // Predicated region
    $region82: #{encoder_forward.5} parent=1 // pred_check
      _
    $region83: #{encoder_forward.5} parent=1 // pred_check_branch
      %5367 = sbr.rel (0) target = $region85
    $region84: #{encoder_forward.5} parent=1 // pred_region
      %s5369 = ssub.s32 1152, 1152
      %5370 = vsyncadd [#allocation5], %s5369
      %s5371 = sshll.u32 [#allocation20], 4
      %s5372 = int_to_ptr.vmem [resolvable:$true] %s5371
      %5377 = dma.vmem_to_hbm [thread:$0]  %s5372, 1152, %s10, [#allocation5], 128, 128, 8
    $region85: #{encoder_forward.5} parent=1 // pred_fallthru
      _
    // Predicated region
    $region86: #{encoder_forward.5} parent=1 // pred_check
      _
    $region87: #{encoder_forward.5} parent=1 // pred_check_branch
      %5379 = sbr.rel (0) target = $region89
    $region88: #{encoder_forward.5} parent=1 // pred_region
      %5380 = dma.done [#allocation5], 1152
    $region89: #{encoder_forward.5} parent=1 // pred_fallthru
      _
    %5381 = vsyncpa [#allocation4], 1
    %5382 = vsyncpa [#allocation7], 1
    %5383 = vsyncpa [#allocation10], 1
    %5384 = vsyncpa [#allocation13], 1
    %5385 = vsyncpa [#allocation16], 1
    %5386 = vsyncpa [#allocation19], 1
    %5387 = vsyncpa [#allocation5], 1

</llo_original>
